<compile_context>
chip_gen: v6e
topology: v6e:2x2x1
jax: 0.10.0
libtpu: 0.0.40
codegen_flags: <defaults>
</compile_context>

<pallas_src>
import functools

import jax
import jax.numpy as jnp
from jax.experimental import pallas as pl
from jax.experimental.pallas import tpu as pltpu


# --------------------------------------------------------------------------
# Kernel: conv3x3+bn1+relu -> conv3x3+bn2 -> (+ 1x1 shortcut) -> relu
# One grid step handles one batch element (NHWC, zero-padded spatially).
# --------------------------------------------------------------------------
def _residual_block_kernel(
    xpad_ref,   # (1, H+2, W+2, Cin)       bf16  zero-padded input
    w1_ref,     # (9*Cin, Cout)            bf16  conv1 weight (BN1 folded), im2col layout
    w2_ref,     # (9*Cout, Cout)           bf16  conv2 weight (BN2 folded), im2col layout
    wsc_ref,    # (Cin, Cout)              bf16  1x1 shortcut weight (BN folded)
    bias_ref,   # (2, Cout)                f32   row0 = bn1 bias, row1 = bn2 + shortcut bias
    out_ref,    # (1, H, W, Cout)          f32
    col1_ref,   # scratch (HW, 9*Cin)      bf16  im2col of x for conv1
    hpad_ref,   # scratch (H+2, W+2, Cout) f32   conv1 activation with zero halo
    col2_ref,   # scratch (HW, 9*Cout)     bf16  im2col of h for conv2
    *, H, W, Cin, Cout,
):
    HW = H * W

    # ---- im2col of the padded input: one (HW, 9*Cin) bf16 slab -------------
    for dy in range(3):
        for dx in range(3):
            tap = dy * 3 + dx
            col1_ref[:, tap * Cin:(tap + 1) * Cin] = (
                xpad_ref[0, dy:dy + H, dx:dx + W, :].reshape(HW, Cin))

    # ---- conv1 (3x3) + bn1 + relu: single K=9*Cin MXU matmul, f32 acc ------
    h = jnp.dot(col1_ref[...], w1_ref[...], preferred_element_type=jnp.float32)
    h = jnp.maximum(h + bias_ref[0:1, :], 0.0)                  # (HW, Cout) f32

    # ---- stage h with a zero halo for conv2 (zero only the borders) --------
    zrow = jnp.zeros((1, W + 2, Cout), jnp.float32)
    hpad_ref[0:1, :, :] = zrow
    hpad_ref[H + 1:H + 2, :, :] = zrow
    zcol = jnp.zeros((H, 1, Cout), jnp.float32)
    hpad_ref[1:H + 1, 0:1, :] = zcol
    hpad_ref[1:H + 1, W + 1:W + 2, :] = zcol
    hpad_ref[1:H + 1, 1:W + 1, :] = h.reshape(H, W, Cout)

    # ---- im2col of h for conv2 (cast to bf16 on the way) -------------------
    for dy in range(3):
        for dx in range(3):
            tap = dy * 3 + dx
            col2_ref[:, tap * Cout:(tap + 1) * Cout] = (
                hpad_ref[dy:dy + H, dx:dx + W, :]
                .reshape(HW, Cout).astype(jnp.bfloat16))

    # ---- shortcut (1x1+bn) + conv2 (3x3+bn2): fused residual, final ReLU ---
    # The center tap of col1 is exactly the un-padded input — reuse it.
    x_center = col1_ref[:, 4 * Cin:5 * Cin]
    acc = jnp.dot(x_center, wsc_ref[...], preferred_element_type=jnp.float32)
    acc = acc + jnp.dot(col2_ref[...], w2_ref[...],
                        preferred_element_type=jnp.float32)
    out = jnp.maximum(acc + bias_ref[1:2, :], 0.0)
    out_ref[...] = out.reshape(1, H, W, Cout)


# --------------------------------------------------------------------------
# BatchNorm folding (inference mode):  bn(conv(x, w)) == conv(x, w*s) + b
#   s = gamma / sqrt(var + eps),  b = beta - mean * s
# --------------------------------------------------------------------------
def _fold_bn(w, gamma, beta, mean, var, eps=1e-5):
    s = gamma * jax.lax.rsqrt(var + eps)
    w_f = (w * s).astype(jnp.float32)                  # scale along Cout (last) axis
    b_f = (beta - mean * s).reshape(1, -1).astype(jnp.float32)
    return w_f, b_f


# --------------------------------------------------------------------------
# Wrapper
# --------------------------------------------------------------------------
@jax.jit
def residual_block_forward(params, x_nchw):
    B, Cin, H, W = x_nchw.shape
    Cout = params["w1"].shape[-1]

    # NCHW -> NHWC so channels live on lanes; bf16 matmul operands; zero pad.
    x = jnp.transpose(x_nchw, (0, 2, 3, 1)).astype(jnp.bfloat16)
    xpad = jnp.pad(x, ((0, 0), (1, 1), (1, 1), (0, 0)))

    w1f, b1f = _fold_bn(params["w1"], **params["bn1"])
    w2f, b2f = _fold_bn(params["w2"], **params["bn2"])
    if "wsc" in params:
        wscf, bscf = _fold_bn(params["wsc"], **params["bnsc"])
    else:
        # identity shortcut expressed as a 1x1 eye matmul (single kernel path)
        assert Cin == Cout, "identity shortcut requires Cin == Cout"
        wscf = jnp.eye(Cin, dtype=jnp.float32)
        bscf = jnp.zeros((1, Cout), jnp.float32)

    # bf16 weights in im2col-compatible layout; biases packed into one array.
    w1b = w1f.reshape(9 * Cin, Cout).astype(jnp.bfloat16)
    w2b = w2f.reshape(9 * Cout, Cout).astype(jnp.bfloat16)
    wscb = wscf.astype(jnp.bfloat16)
    bias = jnp.concatenate([b1f, b2f + bscf], axis=0)          # (2, Cout) f32

    kernel = functools.partial(
        _residual_block_kernel, H=H, W=W, Cin=Cin, Cout=Cout)

    grid_spec = pltpu.PrefetchScalarGridSpec(
        num_scalar_prefetch=0,
        grid=(B,),
        in_specs=[
            pl.BlockSpec((1, H + 2, W + 2, Cin), lambda b: (b, 0, 0, 0)),
            pl.BlockSpec((9 * Cin, Cout), lambda b: (0, 0)),
            pl.BlockSpec((9 * Cout, Cout), lambda b: (0, 0)),
            pl.BlockSpec((Cin, Cout), lambda b: (0, 0)),
            pl.BlockSpec((2, Cout), lambda b: (0, 0)),
        ],
        out_specs=pl.BlockSpec((1, H, W, Cout), lambda b: (b, 0, 0, 0)),
        scratch_shapes=[
            pltpu.VMEM((H * W, 9 * Cin), jnp.bfloat16),
            pltpu.VMEM((H + 2, W + 2, Cout), jnp.float32),
            pltpu.VMEM((H * W, 9 * Cout), jnp.bfloat16),
        ],
    )

    out_nhwc = pl.pallas_call(
        kernel,
        out_shape=jax.ShapeDtypeStruct((B, H, W, Cout), jnp.float32),
        grid_spec=grid_spec,
        compiler_params=pltpu.CompilerParams(
            dimension_semantics=("parallel",),     # megacore sharding on v7x
            vmem_limit_bytes=32 * 1024 * 1024,     # explicit VMEM budget
        ),
    )(xpad, w1b, w2b, wscb, bias)

    return jnp.transpose(out_nhwc, (0, 3, 1, 2))     # back to NCHW


# --------------------------------------------------------------------------
# Parameters (PyTorch-default-like init) and a pure-JAX reference.
# --------------------------------------------------------------------------
def init_params(key, in_channels, out_channels):
    ks = jax.random.split(key, 6)

    def conv_w(k, kh, kw, cin, cout):
        bound = 1.0 / jnp.sqrt(jnp.float32(cin * kh * kw))
        return jax.random.uniform(k, (kh, kw, cin, cout), jnp.float32, -bound, bound)

    def bn(k, c):
        k1, k2, k3, k4 = jax.random.split(k, 4)
        return {
            "gamma": jax.random.uniform(k1, (c,), jnp.float32, 0.5, 1.5),
            "beta": 0.1 * jax.random.normal(k2, (c,), jnp.float32),
            "mean": 0.1 * jax.random.normal(k3, (c,), jnp.float32),
            "var": jax.random.uniform(k4, (c,), jnp.float32, 0.5, 1.5),
        }

    params = {
        "w1": conv_w(ks[0], 3, 3, in_channels, out_channels),
        "bn1": bn(ks[1], out_channels),
        "w2": conv_w(ks[2], 3, 3, out_channels, out_channels),
        "bn2": bn(ks[3], out_channels),
    }
    if in_channels != out_channels:   # projection shortcut (stride=1 demo)
        params["wsc"] = conv_w(ks[4], 1, 1, in_channels, out_channels)[0, 0]
        params["bnsc"] = bn(ks[5], out_channels)
    return params


def _bn_ref(y, p, eps=1e-5):
    return (y - p["mean"]) * (p["gamma"] * jax.lax.rsqrt(p["var"] + eps)) + p["beta"]


def reference_forward(params, x_nchw):
    x = jnp.transpose(x_nchw, (0, 2, 3, 1)).astype(jnp.float32)
    conv3 = lambda a, w: jax.lax.conv_general_dilated(
        a, w, (1, 1), ((1, 1), (1, 1)),
        dimension_numbers=("NHWC", "HWIO", "NHWC"))
    out = jax.nn.relu(_bn_ref(conv3(x, params["w1"]), params["bn1"]))
    out = _bn_ref(conv3(out, params["w2"]), params["bn2"])
    if "wsc" in params:
        sc = jax.lax.conv_general_dilated(
            x, params["wsc"][None, None], (1, 1), ((0, 0), (0, 0)),
            dimension_numbers=("NHWC", "HWIO", "NHWC"))
        sc = _bn_ref(sc, params["bnsc"])
    else:
        sc = x
    out = jax.nn.relu(out + sc)
    return jnp.transpose(out, (0, 3, 1, 2))


if __name__ == "__main__":
    key = jax.random.PRNGKey(0)
    k_param, k_x = jax.random.split(key)

    B, Cin, Cout, H, W = 2, 64, 128, 16, 16   # projection shortcut (Cin != Cout)
    params = init_params(k_param, Cin, Cout)
    x = jax.random.normal(k_x, (B, Cin, H, W), jnp.float32)

    out = residual_block_forward(params, x)
    jax.block_until_ready(out)

    assert out.shape == (B, Cout, H, W)
    ref = reference_forward(params, x)
    err = float(jnp.max(jnp.abs(out - ref)))
    assert err < 5e-2, f"max abs error vs reference too large: {err}"

    print("KERNEL_OK")
</pallas_src>

<mosaic_0001>
module attributes {stable_mosaic.version = 11 : i64} {
  func.func @_residual_block_kernel(%arg0: i32, %arg1: memref<1x18x18x64xbf16, #tpu.memory_space<vmem>>, %arg2: memref<576x128xbf16, #tpu.memory_space<vmem>>, %arg3: memref<1152x128xbf16, #tpu.memory_space<vmem>>, %arg4: memref<64x128xbf16, #tpu.memory_space<vmem>>, %arg5: memref<2x128xf32, #tpu.memory_space<vmem>>, %arg6: memref<1x16x16x128xf32, #tpu.memory_space<vmem>>, %arg7: memref<256x576xbf16, #tpu.memory_space<vmem>>, %arg8: memref<18x18x128xf32, #tpu.memory_space<vmem>>, %arg9: memref<256x1152xbf16, #tpu.memory_space<vmem>>) attributes {dimension_semantics = [#tpu.dimension_semantics<parallel>], iteration_bounds = array<i64: 2>, scalar_prefetch = 0 : i64, scratch_operands = 3 : i64, tpu.core_type = #tpu.core_type<tc>, window_params = [{transform_indices = @transform_0, window_bounds = array<i64: 1, 18, 18, 64>}, {pipeline_mode = #tpu.pipeline_mode<synchronous>, transform_indices = @transform_1, window_bounds = array<i64: 576, 128>}, {pipeline_mode = #tpu.pipeline_mode<synchronous>, transform_indices = @transform_2, window_bounds = array<i64: 1152, 128>}, {pipeline_mode = #tpu.pipeline_mode<synchronous>, transform_indices = @transform_3, window_bounds = array<i64: 64, 128>}, {pipeline_mode = #tpu.pipeline_mode<synchronous>, transform_indices = @transform_4, window_bounds = array<i64: 2, 128>}, {transform_indices = @transform_5, window_bounds = array<i64: 1, 16, 16, 128>}]} {
    %c0 = arith.constant 0 : index
    %c0_0 = arith.constant 0 : index
    %c0_1 = arith.constant 0 : index
    %c0_2 = arith.constant 0 : index
    %0 = vector.load %arg1[%c0, %c0_0, %c0_1, %c0_2] : memref<1x18x18x64xbf16, #tpu.memory_space<vmem>>, vector<1x16x16x64xbf16>
    %1 = vector.shape_cast %0 : vector<1x16x16x64xbf16> to vector<16x16x64xbf16>
    %2 = vector.shape_cast %1 : vector<16x16x64xbf16> to vector<256x64xbf16>
    %c0_3 = arith.constant 0 : index
    %c0_4 = arith.constant 0 : index
    %3 = vector.load %arg7[%c0_3, %c0_4] : memref<256x576xbf16, #tpu.memory_space<vmem>>, vector<256x64xbf16>
    tpu.vector_store %arg7[%c0_3, %c0_4], %2 {strides = array<i32>} : memref<256x576xbf16, #tpu.memory_space<vmem>>, vector<256x64xbf16>,
    %c0_5 = arith.constant 0 : index
    %c0_6 = arith.constant 0 : index
    %c1 = arith.constant 1 : index
    %c0_7 = arith.constant 0 : index
    %4 = vector.load %arg1[%c0_5, %c0_6, %c1, %c0_7] : memref<1x18x18x64xbf16, #tpu.memory_space<vmem>>, vector<1x16x16x64xbf16>
    %5 = vector.shape_cast %4 : vector<1x16x16x64xbf16> to vector<16x16x64xbf16>
    %6 = vector.shape_cast %5 : vector<16x16x64xbf16> to vector<256x64xbf16>
    %c0_8 = arith.constant 0 : index
    %c64 = arith.constant 64 : index
    %7 = vector.load %arg7[%c0_8, %c64] : memref<256x576xbf16, #tpu.memory_space<vmem>>, vector<256x64xbf16>
    tpu.vector_store %arg7[%c0_8, %c64], %6 {strides = array<i32>} : memref<256x576xbf16, #tpu.memory_space<vmem>>, vector<256x64xbf16>,
    %c0_9 = arith.constant 0 : index
    %c0_10 = arith.constant 0 : index
    %c2 = arith.constant 2 : index
    %c0_11 = arith.constant 0 : index
    %8 = vector.load %arg1[%c0_9, %c0_10, %c2, %c0_11] : memref<1x18x18x64xbf16, #tpu.memory_space<vmem>>, vector<1x16x16x64xbf16>
    %9 = vector.shape_cast %8 : vector<1x16x16x64xbf16> to vector<16x16x64xbf16>
    %10 = vector.shape_cast %9 : vector<16x16x64xbf16> to vector<256x64xbf16>
    %c0_12 = arith.constant 0 : index
    %c128 = arith.constant 128 : index
    %11 = vector.load %arg7[%c0_12, %c128] : memref<256x576xbf16, #tpu.memory_space<vmem>>, vector<256x64xbf16>
    tpu.vector_store %arg7[%c0_12, %c128], %10 {strides = array<i32>} : memref<256x576xbf16, #tpu.memory_space<vmem>>, vector<256x64xbf16>,
    %c0_13 = arith.constant 0 : index
    %c1_14 = arith.constant 1 : index
    %c0_15 = arith.constant 0 : index
    %c0_16 = arith.constant 0 : index
    %12 = vector.load %arg1[%c0_13, %c1_14, %c0_15, %c0_16] : memref<1x18x18x64xbf16, #tpu.memory_space<vmem>>, vector<1x16x16x64xbf16>
    %13 = vector.shape_cast %12 : vector<1x16x16x64xbf16> to vector<16x16x64xbf16>
    %14 = vector.shape_cast %13 : vector<16x16x64xbf16> to vector<256x64xbf16>
    %c0_17 = arith.constant 0 : index
    %c192 = arith.constant 192 : index
    %15 = vector.load %arg7[%c0_17, %c192] : memref<256x576xbf16, #tpu.memory_space<vmem>>, vector<256x64xbf16>
    tpu.vector_store %arg7[%c0_17, %c192], %14 {strides = array<i32>} : memref<256x576xbf16, #tpu.memory_space<vmem>>, vector<256x64xbf16>,
    %c0_18 = arith.constant 0 : index
    %c1_19 = arith.constant 1 : index
    %c1_20 = arith.constant 1 : index
    %c0_21 = arith.constant 0 : index
    %16 = vector.load %arg1[%c0_18, %c1_19, %c1_20, %c0_21] : memref<1x18x18x64xbf16, #tpu.memory_space<vmem>>, vector<1x16x16x64xbf16>
    %17 = vector.shape_cast %16 : vector<1x16x16x64xbf16> to vector<16x16x64xbf16>
    %18 = vector.shape_cast %17 : vector<16x16x64xbf16> to vector<256x64xbf16>
    %c0_22 = arith.constant 0 : index
    %c256 = arith.constant 256 : index
    %19 = vector.load %arg7[%c0_22, %c256] : memref<256x576xbf16, #tpu.memory_space<vmem>>, vector<256x64xbf16>
    tpu.vector_store %arg7[%c0_22, %c256], %18 {strides = array<i32>} : memref<256x576xbf16, #tpu.memory_space<vmem>>, vector<256x64xbf16>,
    %c0_23 = arith.constant 0 : index
    %c1_24 = arith.constant 1 : index
    %c2_25 = arith.constant 2 : index
    %c0_26 = arith.constant 0 : index
    %20 = vector.load %arg1[%c0_23, %c1_24, %c2_25, %c0_26] : memref<1x18x18x64xbf16, #tpu.memory_space<vmem>>, vector<1x16x16x64xbf16>
    %21 = vector.shape_cast %20 : vector<1x16x16x64xbf16> to vector<16x16x64xbf16>
    %22 = vector.shape_cast %21 : vector<16x16x64xbf16> to vector<256x64xbf16>
    %c0_27 = arith.constant 0 : index
    %c320 = arith.constant 320 : index
    %23 = vector.load %arg7[%c0_27, %c320] : memref<256x576xbf16, #tpu.memory_space<vmem>>, vector<256x64xbf16>
    tpu.vector_store %arg7[%c0_27, %c320], %22 {strides = array<i32>} : memref<256x576xbf16, #tpu.memory_space<vmem>>, vector<256x64xbf16>,
    %c0_28 = arith.constant 0 : index
    %c2_29 = arith.constant 2 : index
    %c0_30 = arith.constant 0 : index
    %c0_31 = arith.constant 0 : index
    %24 = vector.load %arg1[%c0_28, %c2_29, %c0_30, %c0_31] : memref<1x18x18x64xbf16, #tpu.memory_space<vmem>>, vector<1x16x16x64xbf16>
    %25 = vector.shape_cast %24 : vector<1x16x16x64xbf16> to vector<16x16x64xbf16>
    %26 = vector.shape_cast %25 : vector<16x16x64xbf16> to vector<256x64xbf16>
    %c0_32 = arith.constant 0 : index
    %c384 = arith.constant 384 : index
    %27 = vector.load %arg7[%c0_32, %c384] : memref<256x576xbf16, #tpu.memory_space<vmem>>, vector<256x64xbf16>
    tpu.vector_store %arg7[%c0_32, %c384], %26 {strides = array<i32>} : memref<256x576xbf16, #tpu.memory_space<vmem>>, vector<256x64xbf16>,
    %c0_33 = arith.constant 0 : index
    %c2_34 = arith.constant 2 : index
    %c1_35 = arith.constant 1 : index
    %c0_36 = arith.constant 0 : index
    %28 = vector.load %arg1[%c0_33, %c2_34, %c1_35, %c0_36] : memref<1x18x18x64xbf16, #tpu.memory_space<vmem>>, vector<1x16x16x64xbf16>
    %29 = vector.shape_cast %28 : vector<1x16x16x64xbf16> to vector<16x16x64xbf16>
    %30 = vector.shape_cast %29 : vector<16x16x64xbf16> to vector<256x64xbf16>
    %c0_37 = arith.constant 0 : index
    %c448 = arith.constant 448 : index
    %31 = vector.load %arg7[%c0_37, %c448] : memref<256x576xbf16, #tpu.memory_space<vmem>>, vector<256x64xbf16>
    tpu.vector_store %arg7[%c0_37, %c448], %30 {strides = array<i32>} : memref<256x576xbf16, #tpu.memory_space<vmem>>, vector<256x64xbf16>,
    %c0_38 = arith.constant 0 : index
    %c2_39 = arith.constant 2 : index
    %c2_40 = arith.constant 2 : index
    %c0_41 = arith.constant 0 : index
    %32 = vector.load %arg1[%c0_38, %c2_39, %c2_40, %c0_41] : memref<1x18x18x64xbf16, #tpu.memory_space<vmem>>, vector<1x16x16x64xbf16>
    %33 = vector.shape_cast %32 : vector<1x16x16x64xbf16> to vector<16x16x64xbf16>
    %34 = vector.shape_cast %33 : vector<16x16x64xbf16> to vector<256x64xbf16>
    %c0_42 = arith.constant 0 : index
    %c512 = arith.constant 512 : index
    %35 = vector.load %arg7[%c0_42, %c512] : memref<256x576xbf16, #tpu.memory_space<vmem>>, vector<256x64xbf16>
    tpu.vector_store %arg7[%c0_42, %c512], %34 {strides = array<i32>} : memref<256x576xbf16, #tpu.memory_space<vmem>>, vector<256x64xbf16>,
    %c0_43 = arith.constant 0 : index
    %c0_44 = arith.constant 0 : index
    %36 = vector.load %arg7[%c0_43, %c0_44] : memref<256x576xbf16, #tpu.memory_space<vmem>>, vector<256x576xbf16>
    %c0_45 = arith.constant 0 : index
    %c0_46 = arith.constant 0 : index
    %37 = vector.load %arg2[%c0_45, %c0_46] : memref<576x128xbf16, #tpu.memory_space<vmem>>, vector<576x128xbf16>
    %cst = arith.constant dense<0.000000e+00> : vector<256x128xf32>
    %38 = tpu.matmul %36, %37, %cst {dimension_numbers = #tpu.dot_dimension_numbers<[1], [0], [0], [1], [0, 0, 1, 1], [], []>} : vector<256x576xbf16>, vector<576x128xbf16>, vector<256x128xf32> -> vector<256x128xf32>
    %c0_47 = arith.constant 0 : index
    %c0_48 = arith.constant 0 : index
    %39 = vector.load %arg5[%c0_47, %c0_48] : memref<2x128xf32, #tpu.memory_space<vmem>>, vector<1x128xf32>
    %40 = vector.broadcast %39 : vector<1x128xf32> to vector<256x128xf32>
    %41 = arith.addf %38, %40 : vector<256x128xf32>
    %cst_49 = arith.constant 0.000000e+00 : f32
    %42 = vector.broadcast %cst_49 : f32 to vector<256x128xf32>
    %43 = arith.maximumf %41, %42 : vector<256x128xf32>
    %cst_50 = arith.constant 0.000000e+00 : f32
    %44 = vector.broadcast %cst_50 : f32 to vector<1x18x128xf32>
    %c0_51 = arith.constant 0 : index
    %c0_52 = arith.constant 0 : index
    %c0_53 = arith.constant 0 : index
    %45 = vector.load %arg8[%c0_51, %c0_52, %c0_53] : memref<18x18x128xf32, #tpu.memory_space<vmem>>, vector<1x18x128xf32>
    tpu.vector_store %arg8[%c0_51, %c0_52, %c0_53], %44 {strides = array<i32>} : memref<18x18x128xf32, #tpu.memory_space<vmem>>, vector<1x18x128xf32>,
    %c17 = arith.constant 17 : index
    %c0_54 = arith.constant 0 : index
    %c0_55 = arith.constant 0 : index
    %46 = vector.load %arg8[%c17, %c0_54, %c0_55] : memref<18x18x128xf32, #tpu.memory_space<vmem>>, vector<1x18x128xf32>
    tpu.vector_store %arg8[%c17, %c0_54, %c0_55], %44 {strides = array<i32>} : memref<18x18x128xf32, #tpu.memory_space<vmem>>, vector<1x18x128xf32>,
    %cst_56 = arith.constant 0.000000e+00 : f32
    %47 = vector.broadcast %cst_56 : f32 to vector<16x1x128xf32>
    %c1_57 = arith.constant 1 : index
    %c0_58 = arith.constant 0 : index
    %c0_59 = arith.constant 0 : index
    %48 = vector.load %arg8[%c1_57, %c0_58, %c0_59] : memref<18x18x128xf32, #tpu.memory_space<vmem>>, vector<16x1x128xf32>
    tpu.vector_store %arg8[%c1_57, %c0_58, %c0_59], %47 {strides = array<i32>} : memref<18x18x128xf32, #tpu.memory_space<vmem>>, vector<16x1x128xf32>,
    %c1_60 = arith.constant 1 : index
    %c17_61 = arith.constant 17 : index
    %c0_62 = arith.constant 0 : index
    %49 = vector.load %arg8[%c1_60, %c17_61, %c0_62] : memref<18x18x128xf32, #tpu.memory_space<vmem>>, vector<16x1x128xf32>
    tpu.vector_store %arg8[%c1_60, %c17_61, %c0_62], %47 {strides = array<i32>} : memref<18x18x128xf32, #tpu.memory_space<vmem>>, vector<16x1x128xf32>,
    %50 = vector.shape_cast %43 : vector<256x128xf32> to vector<16x16x128xf32>
    %c1_63 = arith.constant 1 : index
    %c1_64 = arith.constant 1 : index
    %c0_65 = arith.constant 0 : index
    %51 = vector.load %arg8[%c1_63, %c1_64, %c0_65] : memref<18x18x128xf32, #tpu.memory_space<vmem>>, vector<16x16x128xf32>
    tpu.vector_store %arg8[%c1_63, %c1_64, %c0_65], %50 {strides = array<i32>} : memref<18x18x128xf32, #tpu.memory_space<vmem>>, vector<16x16x128xf32>,
    %c0_66 = arith.constant 0 : index
    %c0_67 = arith.constant 0 : index
    %c0_68 = arith.constant 0 : index
    %52 = vector.load %arg8[%c0_66, %c0_67, %c0_68] : memref<18x18x128xf32, #tpu.memory_space<vmem>>, vector<16x16x128xf32>
    %53 = vector.shape_cast %52 : vector<16x16x128xf32> to vector<256x128xf32>
    %54 = arith.truncf %53 : vector<256x128xf32> to vector<256x128xbf16>
    %c0_69 = arith.constant 0 : index
    %c0_70 = arith.constant 0 : index
    %55 = vector.load %arg9[%c0_69, %c0_70] : memref<256x1152xbf16, #tpu.memory_space<vmem>>, vector<256x128xbf16>
    tpu.vector_store %arg9[%c0_69, %c0_70], %54 {strides = array<i32>} : memref<256x1152xbf16, #tpu.memory_space<vmem>>, vector<256x128xbf16>,
    %c0_71 = arith.constant 0 : index
    %c1_72 = arith.constant 1 : index
    %c0_73 = arith.constant 0 : index
    %56 = vector.load %arg8[%c0_71, %c1_72, %c0_73] : memref<18x18x128xf32, #tpu.memory_space<vmem>>, vector<16x16x128xf32>
    %57 = vector.shape_cast %56 : vector<16x16x128xf32> to vector<256x128xf32>
    %58 = arith.truncf %57 : vector<256x128xf32> to vector<256x128xbf16>
    %c0_74 = arith.constant 0 : index
    %c128_75 = arith.constant 128 : index
    %59 = vector.load %arg9[%c0_74, %c128_75] : memref<256x1152xbf16, #tpu.memory_space<vmem>>, vector<256x128xbf16>
    tpu.vector_store %arg9[%c0_74, %c128_75], %58 {strides = array<i32>} : memref<256x1152xbf16, #tpu.memory_space<vmem>>, vector<256x128xbf16>,
    %c0_76 = arith.constant 0 : index
    %c2_77 = arith.constant 2 : index
    %c0_78 = arith.constant 0 : index
    %60 = vector.load %arg8[%c0_76, %c2_77, %c0_78] : memref<18x18x128xf32, #tpu.memory_space<vmem>>, vector<16x16x128xf32>
    %61 = vector.shape_cast %60 : vector<16x16x128xf32> to vector<256x128xf32>
    %62 = arith.truncf %61 : vector<256x128xf32> to vector<256x128xbf16>
    %c0_79 = arith.constant 0 : index
    %c256_80 = arith.constant 256 : index
    %63 = vector.load %arg9[%c0_79, %c256_80] : memref<256x1152xbf16, #tpu.memory_space<vmem>>, vector<256x128xbf16>
    tpu.vector_store %arg9[%c0_79, %c256_80], %62 {strides = array<i32>} : memref<256x1152xbf16, #tpu.memory_space<vmem>>, vector<256x128xbf16>,
    %c1_81 = arith.constant 1 : index
    %c0_82 = arith.constant 0 : index
    %c0_83 = arith.constant 0 : index
    %64 = vector.load %arg8[%c1_81, %c0_82, %c0_83] : memref<18x18x128xf32, #tpu.memory_space<vmem>>, vector<16x16x128xf32>
    %65 = vector.shape_cast %64 : vector<16x16x128xf32> to vector<256x128xf32>
    %66 = arith.truncf %65 : vector<256x128xf32> to vector<256x128xbf16>
    %c0_84 = arith.constant 0 : index
    %c384_85 = arith.constant 384 : index
    %67 = vector.load %arg9[%c0_84, %c384_85] : memref<256x1152xbf16, #tpu.memory_space<vmem>>, vector<256x128xbf16>
    tpu.vector_store %arg9[%c0_84, %c384_85], %66 {strides = array<i32>} : memref<256x1152xbf16, #tpu.memory_space<vmem>>, vector<256x128xbf16>,
    %c1_86 = arith.constant 1 : index
    %c1_87 = arith.constant 1 : index
    %c0_88 = arith.constant 0 : index
    %68 = vector.load %arg8[%c1_86, %c1_87, %c0_88] : memref<18x18x128xf32, #tpu.memory_space<vmem>>, vector<16x16x128xf32>
    %69 = vector.shape_cast %68 : vector<16x16x128xf32> to vector<256x128xf32>
    %70 = arith.truncf %69 : vector<256x128xf32> to vector<256x128xbf16>
    %c0_89 = arith.constant 0 : index
    %c512_90 = arith.constant 512 : index
    %71 = vector.load %arg9[%c0_89, %c512_90] : memref<256x1152xbf16, #tpu.memory_space<vmem>>, vector<256x128xbf16>
    tpu.vector_store %arg9[%c0_89, %c512_90], %70 {strides = array<i32>} : memref<256x1152xbf16, #tpu.memory_space<vmem>>, vector<256x128xbf16>,
    %c1_91 = arith.constant 1 : index
    %c2_92 = arith.constant 2 : index
    %c0_93 = arith.constant 0 : index
    %72 = vector.load %arg8[%c1_91, %c2_92, %c0_93] : memref<18x18x128xf32, #tpu.memory_space<vmem>>, vector<16x16x128xf32>
    %73 = vector.shape_cast %72 : vector<16x16x128xf32> to vector<256x128xf32>
    %74 = arith.truncf %73 : vector<256x128xf32> to vector<256x128xbf16>
    %c0_94 = arith.constant 0 : index
    %c640 = arith.constant 640 : index
    %75 = vector.load %arg9[%c0_94, %c640] : memref<256x1152xbf16, #tpu.memory_space<vmem>>, vector<256x128xbf16>
    tpu.vector_store %arg9[%c0_94, %c640], %74 {strides = array<i32>} : memref<256x1152xbf16, #tpu.memory_space<vmem>>, vector<256x128xbf16>,
    %c2_95 = arith.constant 2 : index
    %c0_96 = arith.constant 0 : index
    %c0_97 = arith.constant 0 : index
    %76 = vector.load %arg8[%c2_95, %c0_96, %c0_97] : memref<18x18x128xf32, #tpu.memory_space<vmem>>, vector<16x16x128xf32>
    %77 = vector.shape_cast %76 : vector<16x16x128xf32> to vector<256x128xf32>
    %78 = arith.truncf %77 : vector<256x128xf32> to vector<256x128xbf16>
    %c0_98 = arith.constant 0 : index
    %c768 = arith.constant 768 : index
    %79 = vector.load %arg9[%c0_98, %c768] : memref<256x1152xbf16, #tpu.memory_space<vmem>>, vector<256x128xbf16>
    tpu.vector_store %arg9[%c0_98, %c768], %78 {strides = array<i32>} : memref<256x1152xbf16, #tpu.memory_space<vmem>>, vector<256x128xbf16>,
    %c2_99 = arith.constant 2 : index
    %c1_100 = arith.constant 1 : index
    %c0_101 = arith.constant 0 : index
    %80 = vector.load %arg8[%c2_99, %c1_100, %c0_101] : memref<18x18x128xf32, #tpu.memory_space<vmem>>, vector<16x16x128xf32>
    %81 = vector.shape_cast %80 : vector<16x16x128xf32> to vector<256x128xf32>
    %82 = arith.truncf %81 : vector<256x128xf32> to vector<256x128xbf16>
    %c0_102 = arith.constant 0 : index
    %c896 = arith.constant 896 : index
    %83 = vector.load %arg9[%c0_102, %c896] : memref<256x1152xbf16, #tpu.memory_space<vmem>>, vector<256x128xbf16>
    tpu.vector_store %arg9[%c0_102, %c896], %82 {strides = array<i32>} : memref<256x1152xbf16, #tpu.memory_space<vmem>>, vector<256x128xbf16>,
    %c2_103 = arith.constant 2 : index
    %c2_104 = arith.constant 2 : index
    %c0_105 = arith.constant 0 : index
    %84 = vector.load %arg8[%c2_103, %c2_104, %c0_105] : memref<18x18x128xf32, #tpu.memory_space<vmem>>, vector<16x16x128xf32>
    %85 = vector.shape_cast %84 : vector<16x16x128xf32> to vector<256x128xf32>
    %86 = arith.truncf %85 : vector<256x128xf32> to vector<256x128xbf16>
    %c0_106 = arith.constant 0 : index
    %c1024 = arith.constant 1024 : index
    %87 = vector.load %arg9[%c0_106, %c1024] : memref<256x1152xbf16, #tpu.memory_space<vmem>>, vector<256x128xbf16>
    tpu.vector_store %arg9[%c0_106, %c1024], %86 {strides = array<i32>} : memref<256x1152xbf16, #tpu.memory_space<vmem>>, vector<256x128xbf16>,
    %c0_107 = arith.constant 0 : index
    %c256_108 = arith.constant 256 : index
    %88 = vector.load %arg7[%c0_107, %c256_108] : memref<256x576xbf16, #tpu.memory_space<vmem>>, vector<256x64xbf16>
    %c0_109 = arith.constant 0 : index
    %c0_110 = arith.constant 0 : index
    %89 = vector.load %arg4[%c0_109, %c0_110] : memref<64x128xbf16, #tpu.memory_space<vmem>>, vector<64x128xbf16>
    %cst_111 = arith.constant dense<0.000000e+00> : vector<256x128xf32>
    %90 = tpu.matmul %88, %89, %cst_111 {dimension_numbers = #tpu.dot_dimension_numbers<[1], [0], [0], [1], [0, 0, 1, 1], [], []>} : vector<256x64xbf16>, vector<64x128xbf16>, vector<256x128xf32> -> vector<256x128xf32>
    %c0_112 = arith.constant 0 : index
    %c0_113 = arith.constant 0 : index
    %91 = vector.load %arg9[%c0_112, %c0_113] : memref<256x1152xbf16, #tpu.memory_space<vmem>>, vector<256x1152xbf16>
    %c0_114 = arith.constant 0 : index
    %c0_115 = arith.constant 0 : index
    %92 = vector.load %arg3[%c0_114, %c0_115] : memref<1152x128xbf16, #tpu.memory_space<vmem>>, vector<1152x128xbf16>
    %cst_116 = arith.constant dense<0.000000e+00> : vector<256x128xf32>
    %93 = tpu.matmul %91, %92, %cst_116 {dimension_numbers = #tpu.dot_dimension_numbers<[1], [0], [0], [1], [0, 0, 1, 1], [], []>} : vector<256x1152xbf16>, vector<1152x128xbf16>, vector<256x128xf32> -> vector<256x128xf32>
    %94 = arith.addf %90, %93 : vector<256x128xf32>
    %c1_117 = arith.constant 1 : index
    %c0_118 = arith.constant 0 : index
    %95 = vector.load %arg5[%c1_117, %c0_118] : memref<2x128xf32, #tpu.memory_space<vmem>>, vector<1x128xf32>
    %96 = vector.broadcast %95 : vector<1x128xf32> to vector<256x128xf32>
    %97 = arith.addf %94, %96 : vector<256x128xf32>
    %cst_119 = arith.constant 0.000000e+00 : f32
    %98 = vector.broadcast %cst_119 : f32 to vector<256x128xf32>
    %99 = arith.maximumf %97, %98 : vector<256x128xf32>
    %100 = vector.shape_cast %99 : vector<256x128xf32> to vector<1x16x16x128xf32>
    %c0_120 = arith.constant 0 : index
    %c0_121 = arith.constant 0 : index
    %c0_122 = arith.constant 0 : index
    %c0_123 = arith.constant 0 : index
    %101 = vector.load %arg6[%c0_120, %c0_121, %c0_122, %c0_123] : memref<1x16x16x128xf32, #tpu.memory_space<vmem>>, vector<1x16x16x128xf32>
    tpu.vector_store %arg6[%c0_120, %c0_121, %c0_122, %c0_123], %100 {strides = array<i32>} : memref<1x16x16x128xf32, #tpu.memory_space<vmem>>, vector<1x16x16x128xf32>,
    return
  }
  func.func @transform_0(%arg0: i32) -> (i32, i32, i32, i32) {
    %c0_i32 = arith.constant 0 : i32
    %c0_i32_0 = arith.constant 0 : i32
    %c0_i32_1 = arith.constant 0 : i32
    %c0_i32_2 = arith.constant 0 : i32
    return %arg0, %c0_i32, %c0_i32_0, %c0_i32_1 : i32, i32, i32, i32
  }
  func.func @transform_1(%arg0: i32) -> (i32, i32) {
    %c0_i32 = arith.constant 0 : i32
    %c0_i32_0 = arith.constant 0 : i32
    %c0_i32_1 = arith.constant 0 : i32
    return %c0_i32, %c0_i32_0 : i32, i32
  }
  func.func @transform_2(%arg0: i32) -> (i32, i32) {
    %c0_i32 = arith.constant 0 : i32
    %c0_i32_0 = arith.constant 0 : i32
    %c0_i32_1 = arith.constant 0 : i32
    return %c0_i32, %c0_i32_0 : i32, i32
  }
  func.func @transform_3(%arg0: i32) -> (i32, i32) {
    %c0_i32 = arith.constant 0 : i32
    %c0_i32_0 = arith.constant 0 : i32
    %c0_i32_1 = arith.constant 0 : i32
    return %c0_i32, %c0_i32_0 : i32, i32
  }
  func.func @transform_4(%arg0: i32) -> (i32, i32) {
    %c0_i32 = arith.constant 0 : i32
    %c0_i32_0 = arith.constant 0 : i32
    %c0_i32_1 = arith.constant 0 : i32
    return %c0_i32, %c0_i32_0 : i32, i32
  }
  func.func @transform_5(%arg0: i32) -> (i32, i32, i32, i32) {
    %c0_i32 = arith.constant 0 : i32
    %c0_i32_0 = arith.constant 0 : i32
    %c0_i32_1 = arith.constant 0 : i32
    %c0_i32_2 = arith.constant 0 : i32
    return %arg0, %c0_i32, %c0_i32_0, %c0_i32_1 : i32, i32, i32, i32
  }
}

</mosaic_0001>

<llo_original>
// kernel: residual_block_forward.1
$region0: #{residual_block_forward.1}
  #allocation0 [shape = 'u32[]', space=smem, size = 0x4, offset = 0x4, fixed_abs, tag = 'smem constant byte address 0x4 - core index']
  #allocation1 [shape = 'u32[144,128]{1,0:T(1,128)}', space=vmem, size = 0x12000, scoped, tag = 'internal scratch']
  #allocation2 [shape = 'bf16[256,576]{1,0:T(8,128)(2,1)}', space=vmem, size = 0x50000, scoped, tag = 'scratch operand']
  #allocation3 [shape = 'f32[18,18,128]{2,1,0:T(8,128)}', space=vmem, size = 0x36000, scoped, tag = 'scratch operand']
  #allocation4 [shape = 'bf16[256,1152]{1,0:T(8,128)(2,1)}', space=vmem, size = 0x90000, scoped, tag = 'scratch operand']
  %s0 = inlined_call_operand.vmem [shape: bf16[2,18,18,64], index: 0, kind: input, shape index: {}]
  %s1 = inlined_call_operand.vmem [shape: bf16[576,128], index: 1, kind: input, shape index: {}]
  %s2 = inlined_call_operand.vmem [shape: bf16[1152,128], index: 2, kind: input, shape index: {}]
  %s3 = inlined_call_operand.vmem [shape: bf16[64,128], index: 3, kind: input, shape index: {}]
  %s4 = inlined_call_operand.vmem [shape: f32[2,128], index: 4, kind: input, shape index: {}]
  %s5 = inlined_call_operand.hbm [shape: f32[2,16,16,128], index: 5, kind: output, shape index: {}]
  %s6 = sld [smem:[#allocation0]]
  $region53: #{residual_block_forward.1} parent=0
    _
  %s8 = ssub.s32 1, %s6
  %s9 = scalar_select 0, %s8, %s6
  $region1: #{residual_block_forward.1} parent=0
    #allocation5 [shape = 'u8[262144]{0}', space=vmem, size = 0x40000, scoped, tag = 'output window, operand 0']
    #allocation6 [shape = 's32[2]{0}', space=sflag, size = 0x8, scoped, tag = 'scoped memory for residual_block_forward.1']
    %10 = vsyncpa [#allocation6], 0
    %s11 = scalar_lea.sflag [#allocation6], 1
    %12 = vsyncpa %s11, 0
    loop: start=0, step=1, limit=4
    $region2: #{residual_block_forward.1} parent=1 // loop_pre_header
      _
    $region3: #{residual_block_forward.1} parent=1 // loop_header
      %s14 = sphi 0, %s18
      %p15 = scmp.ge.s32.totalorder %s14, 4
      %s24 = sphi 0, %s26
      %s27 = sphi 0, %s24
      %s28 = sphi 0, %s27
      %s44 = sphi 0, %s28
      %s48 = sphi 0, %s48
      %s50 = sphi 0, %s48
      %s51 = sphi 0, %s50
      %s65 = sphi 0, %s51
      %s69 = sphi 0, %s69
      %s71 = sphi 0, %s69
      %s72 = sphi 0, %s71
      %s86 = sphi 0, %s72
      %s90 = sphi 0, %s90
      %s92 = sphi 0, %s90
      %s93 = sphi 0, %s92
      %s107 = sphi 0, %s93
      %s111 = sphi 0, %s111
      %s113 = sphi 0, %s111
      %s114 = sphi 0, %s113
      %s128 = sphi 0, %s114
      %s134 = sphi 0, %s136
      %s137 = sphi 0, %s134
      %s138 = sphi 0, %s137
      %s154 = sphi 0, %s138
    $region4: #{residual_block_forward.1} parent=1 // loop_header_branch
      %17 = sbr.rel (%p15) target = $region8
    $region5: #{residual_block_forward.1} parent=1 // loop_body
      %s19 = ssub.s32 %s14, 1
      %s20 = ssub.s32 %s14, 2
      %s21 = sadd.s32 %s14, 1
      %s22 = ssub.s32 %s14, %s21
      %p23 = scmp.eq.s32.totalorder %s22, 0
      %s25 = sadd.s32 %s24, 1
      %s26 = scalar_select %p23, %s24, %s25
      %p29 = pneg %p23
      %p30 = scmp.eq.s32.totalorder %s14, 1
      %p31 = por %p29, %p30
      %p32 = scmp.ne.s32.totalorder %s24, %s27
      %p33 = scmp.eq.s32.totalorder %s14, 0
      %p34 = por %p32, %p33
      %p35 = scmp.ne.s32.totalorder %s24, %s27
      %p36 = scmp.eq.s32.totalorder %s19, 1
      %p37 = por %p35, %p36
      %p38 = scmp.ne.s32.totalorder %s27, %s28
      %p39 = scmp.eq.s32.totalorder %s19, 0
      %p40 = por %p38, %p39
      %p41 = scmp.ne.s32.totalorder %s27, %s28
      %p42 = scmp.eq.s32.totalorder %s20, 1
      %p43 = por %p41, %p42
      %p45 = scmp.ne.s32.totalorder %s28, %s44
      %p46 = scmp.eq.s32.totalorder %s20, 0
      %p47 = por %p45, %p46
      %s49 = sadd.s32 %s48, 1
      %p52 = scmp.eq.s32.totalorder %s14, 1
      %p53 = scmp.ne.s32.totalorder %s48, %s50
      %p54 = scmp.eq.s32.totalorder %s14, 0
      %p55 = por %p53, %p54
      %p56 = scmp.ne.s32.totalorder %s48, %s50
      %p57 = scmp.eq.s32.totalorder %s19, 1
      %p58 = por %p56, %p57
      %p59 = scmp.ne.s32.totalorder %s50, %s51
      %p60 = scmp.eq.s32.totalorder %s19, 0
      %p61 = por %p59, %p60
      %p62 = scmp.ne.s32.totalorder %s50, %s51
      %p63 = scmp.eq.s32.totalorder %s20, 1
      %p64 = por %p62, %p63
      %p66 = scmp.ne.s32.totalorder %s51, %s65
      %p67 = scmp.eq.s32.totalorder %s20, 0
      %p68 = por %p66, %p67
      %s70 = sadd.s32 %s69, 1
      %p73 = scmp.eq.s32.totalorder %s14, 1
      %p74 = scmp.ne.s32.totalorder %s69, %s71
      %p75 = scmp.eq.s32.totalorder %s14, 0
      %p76 = por %p74, %p75
      %p77 = scmp.ne.s32.totalorder %s69, %s71
      %p78 = scmp.eq.s32.totalorder %s19, 1
      %p79 = por %p77, %p78
      %p80 = scmp.ne.s32.totalorder %s71, %s72
      %p81 = scmp.eq.s32.totalorder %s19, 0
      %p82 = por %p80, %p81
      %p83 = scmp.ne.s32.totalorder %s71, %s72
      %p84 = scmp.eq.s32.totalorder %s20, 1
      %p85 = por %p83, %p84
      %p87 = scmp.ne.s32.totalorder %s72, %s86
      %p88 = scmp.eq.s32.totalorder %s20, 0
      %p89 = por %p87, %p88
      %s91 = sadd.s32 %s90, 1
      %p94 = scmp.eq.s32.totalorder %s14, 1
      %p95 = scmp.ne.s32.totalorder %s90, %s92
      %p96 = scmp.eq.s32.totalorder %s14, 0
      %p97 = por %p95, %p96
      %p98 = scmp.ne.s32.totalorder %s90, %s92
      %p99 = scmp.eq.s32.totalorder %s19, 1
      %p100 = por %p98, %p99
      %p101 = scmp.ne.s32.totalorder %s92, %s93
      %p102 = scmp.eq.s32.totalorder %s19, 0
      %p103 = por %p101, %p102
      %p104 = scmp.ne.s32.totalorder %s92, %s93
      %p105 = scmp.eq.s32.totalorder %s20, 1
      %p106 = por %p104, %p105
      %p108 = scmp.ne.s32.totalorder %s93, %s107
      %p109 = scmp.eq.s32.totalorder %s20, 0
      %p110 = por %p108, %p109
      %s112 = sadd.s32 %s111, 1
      %p115 = scmp.eq.s32.totalorder %s14, 1
      %p116 = scmp.ne.s32.totalorder %s111, %s113
      %p117 = scmp.eq.s32.totalorder %s14, 0
      %p118 = por %p116, %p117
      %p119 = scmp.ne.s32.totalorder %s111, %s113
      %p120 = scmp.eq.s32.totalorder %s19, 1
      %p121 = por %p119, %p120
      %p122 = scmp.ne.s32.totalorder %s113, %s114
      %p123 = scmp.eq.s32.totalorder %s19, 0
      %p124 = por %p122, %p123
      %p125 = scmp.ne.s32.totalorder %s113, %s114
      %p126 = scmp.eq.s32.totalorder %s20, 1
      %p127 = por %p125, %p126
      %p129 = scmp.ne.s32.totalorder %s114, %s128
      %p130 = scmp.eq.s32.totalorder %s20, 0
      %p131 = por %p129, %p130
      %s132 = ssub.s32 %s14, %s21
      %p133 = scmp.eq.s32.totalorder %s132, 0
      %s135 = sadd.s32 %s134, 1
      %s136 = scalar_select %p133, %s134, %s135
      %p139 = pneg %p133
      %p140 = scmp.eq.s32.totalorder %s14, 1
      %p141 = por %p139, %p140
      %p142 = scmp.ne.s32.totalorder %s134, %s137
      %p143 = scmp.eq.s32.totalorder %s14, 0
      %p144 = por %p142, %p143
      %p145 = scmp.ne.s32.totalorder %s134, %s137
      %p146 = scmp.eq.s32.totalorder %s19, 1
      %p147 = por %p145, %p146
      %p148 = scmp.ne.s32.totalorder %s137, %s138
      %p149 = scmp.eq.s32.totalorder %s19, 0
      %p150 = por %p148, %p149
      %p151 = scmp.ne.s32.totalorder %s137, %s138
      %p152 = scmp.eq.s32.totalorder %s20, 1
      %p153 = por %p151, %p152
      %p155 = scmp.ne.s32.totalorder %s138, %s154
      %p156 = scmp.eq.s32.totalorder %s20, 0
      %p157 = por %p155, %p156
      %p158 = scmp.le.s32.totalorder 1, %s14
      %p159 = scmp.lt.s32.totalorder %s14, 3
      %p160 = pnand %p158, %p159
      %p161 = pneg %p160
      // Predicated region
      $region9: #{residual_block_forward.1} parent=5 // pred_check
        _
      $region10: #{residual_block_forward.1} parent=5 // pred_check_branch
        %163 = sbr.rel (%p160) target = $region12
      $region11: #{residual_block_forward.1} parent=5 // pred_region
        %s164 = ssub.s32 %s14, 1
        // Predicated region
        $region13: #{residual_block_forward.1} parent=11 // pred_check
          %p165 = pneg %p61
        $region14: #{residual_block_forward.1} parent=11 // pred_check_branch
          %167 = sbr.rel (%p165) target = $region16
        $region15: #{residual_block_forward.1} parent=11 // pred_region
          _
        $region16: #{residual_block_forward.1} parent=11 // pred_fallthru
          _
        // Predicated region
        $region17: #{residual_block_forward.1} parent=11 // pred_check
          %p168 = pneg %p82
        $region18: #{residual_block_forward.1} parent=11 // pred_check_branch
          %170 = sbr.rel (%p168) target = $region20
        $region19: #{residual_block_forward.1} parent=11 // pred_region
          _
        $region20: #{residual_block_forward.1} parent=11 // pred_fallthru
          _
        // Predicated region
        $region21: #{residual_block_forward.1} parent=11 // pred_check
          %p171 = pneg %p103
        $region22: #{residual_block_forward.1} parent=11 // pred_check_branch
          %173 = sbr.rel (%p171) target = $region24
        $region23: #{residual_block_forward.1} parent=11 // pred_region
          _
        $region24: #{residual_block_forward.1} parent=11 // pred_fallthru
          _
        // Predicated region
        $region25: #{residual_block_forward.1} parent=11 // pred_check
          %p174 = pneg %p124
        $region26: #{residual_block_forward.1} parent=11 // pred_check_branch
          %176 = sbr.rel (%p174) target = $region28
        $region27: #{residual_block_forward.1} parent=11 // pred_region
          _
        $region28: #{residual_block_forward.1} parent=11 // pred_fallthru
          _
      $region12: #{residual_block_forward.1} parent=5 // pred_fallthru
        _
      %p177 = scmp.lt.s32.totalorder %s14, 2
      // Predicated region
      $region29: #{residual_block_forward.1} parent=5 // pred_check
        %p178 = pneg %p177
      $region30: #{residual_block_forward.1} parent=5 // pred_check_branch
        %180 = sbr.rel (%p178) target = $region32
      $region31: #{residual_block_forward.1} parent=5 // pred_region
        // Predicated region
        $region33: #{residual_block_forward.1} parent=31 // pred_check
          %p181 = pneg %p34
        $region34: #{residual_block_forward.1} parent=31 // pred_check_branch
          %183 = sbr.rel (%p181) target = $region36
        $region35: #{residual_block_forward.1} parent=31 // pred_region
          %p184 = scmp.lt.s32.totalorder %s14, 1
          %s185 = scalar_select %p184, %s14, 1
          %s186 = smul.addr %s185, 54
          %s187 = smul.addr %s186, 4
          %s188 = scalar_lea.vmem %s0, %s187
        $region36: #{residual_block_forward.1} parent=31 // pred_fallthru
          _
      $region32: #{residual_block_forward.1} parent=5 // pred_fallthru
        _
      %p189 = scmp.le.s32.totalorder 1, %s14
      %p190 = scmp.lt.s32.totalorder %s14, 3
      %p191 = pnand %p189, %p190
      %p192 = pneg %p191
      // Predicated region
      $region37: #{residual_block_forward.1} parent=5 // pred_check
        _
      $region38: #{residual_block_forward.1} parent=5 // pred_check_branch
        %194 = sbr.rel (%p191) target = $region40
      $region39: #{residual_block_forward.1} parent=5 // pred_region
        %s195 = ssub.s32 %s14, 1
        %p196 = scmp.lt.s32.totalorder %s19, 1
        %s197 = scalar_select %p196, %s19, 1
        %s198 = smul.addr %s197, 54
        %s199 = smul.addr %s198, 4
        %s200 = scalar_lea.vmem %s0, %s199
        %p201 = pneg %p40
        %p202 = pneg %p37
        %p203 = pneg %p61
        %p204 = pneg %p58
        %p205 = pneg %p82
        %p206 = pneg %p79
        %p207 = pneg %p103
        %p208 = pneg %p100
        %p209 = pneg %p124
        %p210 = pneg %p121
        %p211 = pneg %p150
        %p212 = pneg %p147
        %s213 = sand.u32 %s137, 1
        %s214 = scalar_lea.sflag [#allocation6], %s213
        %s215 = sand.u32 %s137, 1
        %s216 = smul.addr %s215, 256
        %s217 = scalar_lea.vmem [#allocation5], %s216
        %p218 = scmp.lt.s32.totalorder %s19, 1
        %s219 = scalar_select %p218, %s19, 1
        %s220 = smul.addr %s219, 54
        %s221 = smul.addr %s220, 4
        %s222 = scalar_lea.vmem %s0, %s221
        %v224 = vld [vmem:[%s222] sm:$0xf]
        %v225 = vld [vmem:[%s222 + $0x4] sm:$0xf]
        %v226 = vld [vmem:[%s222 + $0xc] sm:$0xf]
        %v227 = vld [vmem:[%s222 + $0x10] sm:$0xf]
        %v228 = vld [vmem:[%s222 + $0x18] sm:$0xf]
        %v229 = vld [vmem:[%s222 + $0x1c] sm:$0xf]
        %v230 = vld [vmem:[%s222 + $0x24] sm:$0xf]
        %v231 = vld [vmem:[%s222 + $0x28] sm:$0xf]
        %v232 = vld [vmem:[%s222 + $0x30] sm:$0xf]
        %v233 = vld [vmem:[%s222 + $0x34] sm:$0xf]
        %v234 = vld [vmem:[%s222 + $0x3c] sm:$0xf]
        %v235 = vld [vmem:[%s222 + $0x40] sm:$0xf]
        %v236 = vld [vmem:[%s222 + $0x48] sm:$0xf]
        %v237 = vld [vmem:[%s222 + $0x4c] sm:$0xf]
        %v238 = vld [vmem:[%s222 + $0x54] sm:$0xf]
        %v239 = vld [vmem:[%s222 + $0x58] sm:$0xf]
        %v240 = vld [vmem:[%s222 + $0x60] sm:$0xf]
        %v241 = vld [vmem:[%s222 + $0x64] sm:$0xf]
        %v242 = vld [vmem:[%s222 + $0x6c] sm:$0xf]
        %v243 = vld [vmem:[%s222 + $0x70] sm:$0xf]
        %v244 = vld [vmem:[%s222 + $0x78] sm:$0xf]
        %v245 = vld [vmem:[%s222 + $0x7c] sm:$0xf]
        %v246 = vld [vmem:[%s222 + $0x84] sm:$0xf]
        %v247 = vld [vmem:[%s222 + $0x88] sm:$0xf]
        %v248 = vld [vmem:[%s222 + $0x90] sm:$0xf]
        %v249 = vld [vmem:[%s222 + $0x94] sm:$0xf]
        %v250 = vld [vmem:[%s222 + $0x9c] sm:$0xf]
        %v251 = vld [vmem:[%s222 + $0xa0] sm:$0xf]
        %v252 = vld [vmem:[%s222 + $0xa8] sm:$0xf]
        %v253 = vld [vmem:[%s222 + $0xac] sm:$0xf]
        %v254 = vld [vmem:[%s222 + $0xb4] sm:$0xf]
        %v255 = vld [vmem:[%s222 + $0xb8] sm:$0xf]
        %vm256 = vcmask 519168
        %257 = vst.msk [vmem:[#allocation2] sm:$0xf] %vm256, %v224
        %258 = vst.msk [vmem:[#allocation2 + $0x14] sm:$0xf] %vm256, %v225
        %259 = vst.msk [vmem:[#allocation2 + $0x28] sm:$0xf] %vm256, %v226
        %260 = vst.msk [vmem:[#allocation2 + $0x3c] sm:$0xf] %vm256, %v227
        %261 = vst.msk [vmem:[#allocation2 + $0x50] sm:$0xf] %vm256, %v228
        %262 = vst.msk [vmem:[#allocation2 + $0x64] sm:$0xf] %vm256, %v229
        %263 = vst.msk [vmem:[#allocation2 + $0x78] sm:$0xf] %vm256, %v230
        %264 = vst.msk [vmem:[#allocation2 + $0x8c] sm:$0xf] %vm256, %v231
        %265 = vst.msk [vmem:[#allocation2 + $0xa0] sm:$0xf] %vm256, %v232
        %266 = vst.msk [vmem:[#allocation2 + $0xb4] sm:$0xf] %vm256, %v233
        %267 = vst.msk [vmem:[#allocation2 + $0xc8] sm:$0xf] %vm256, %v234
        %268 = vst.msk [vmem:[#allocation2 + $0xdc] sm:$0xf] %vm256, %v235
        %269 = vst.msk [vmem:[#allocation2 + $0xf0] sm:$0xf] %vm256, %v236
        %270 = vst.msk [vmem:[#allocation2 + $0x104] sm:$0xf] %vm256, %v237
        %271 = vst.msk [vmem:[#allocation2 + $0x118] sm:$0xf] %vm256, %v238
        %272 = vst.msk [vmem:[#allocation2 + $0x12c] sm:$0xf] %vm256, %v239
        %273 = vst.msk [vmem:[#allocation2 + $0x140] sm:$0xf] %vm256, %v240
        %274 = vst.msk [vmem:[#allocation2 + $0x154] sm:$0xf] %vm256, %v241
        %275 = vst.msk [vmem:[#allocation2 + $0x168] sm:$0xf] %vm256, %v242
        %276 = vst.msk [vmem:[#allocation2 + $0x17c] sm:$0xf] %vm256, %v243
        %277 = vst.msk [vmem:[#allocation2 + $0x190] sm:$0xf] %vm256, %v244
        %278 = vst.msk [vmem:[#allocation2 + $0x1a4] sm:$0xf] %vm256, %v245
        %279 = vst.msk [vmem:[#allocation2 + $0x1b8] sm:$0xf] %vm256, %v246
        %280 = vst.msk [vmem:[#allocation2 + $0x1cc] sm:$0xf] %vm256, %v247
        %281 = vst.msk [vmem:[#allocation2 + $0x1e0] sm:$0xf] %vm256, %v248
        %282 = vst.msk [vmem:[#allocation2 + $0x1f4] sm:$0xf] %vm256, %v249
        %283 = vst.msk [vmem:[#allocation2 + $0x208] sm:$0xf] %vm256, %v250
        %284 = vst.msk [vmem:[#allocation2 + $0x21c] sm:$0xf] %vm256, %v251
        %285 = vst.msk [vmem:[#allocation2 + $0x230] sm:$0xf] %vm256, %v252
        %286 = vst.msk [vmem:[#allocation2 + $0x244] sm:$0xf] %vm256, %v253
        %287 = vst.msk [vmem:[#allocation2 + $0x258] sm:$0xf] %vm256, %v254
        %288 = vst.msk [vmem:[#allocation2 + $0x26c] sm:$0xf] %vm256, %v255
        %v289 = vld [vmem:[%s222] sm:$0xf]
        %v290 = vld [vmem:[%s222 + $0x4] sm:$0xf]
        %v291 = vld [vmem:[%s222 + $0x8] sm:$0x1]
        %v292 = vld [vmem:[%s222 + $0xc] sm:$0xf]
        %v293 = vld [vmem:[%s222 + $0x10] sm:$0xf]
        %v294 = vld [vmem:[%s222 + $0x14] sm:$0x1]
        %v295 = vld [vmem:[%s222 + $0x18] sm:$0xf]
        %v296 = vld [vmem:[%s222 + $0x1c] sm:$0xf]
        %v297 = vld [vmem:[%s222 + $0x20] sm:$0x1]
        %v298 = vld [vmem:[%s222 + $0x24] sm:$0xf]
        %v299 = vld [vmem:[%s222 + $0x28] sm:$0xf]
        %v300 = vld [vmem:[%s222 + $0x2c] sm:$0x1]
        %v301 = vld [vmem:[%s222 + $0x30] sm:$0xf]
        %v302 = vld [vmem:[%s222 + $0x34] sm:$0xf]
        %v303 = vld [vmem:[%s222 + $0x38] sm:$0x1]
        %v304 = vld [vmem:[%s222 + $0x3c] sm:$0xf]
        %v305 = vld [vmem:[%s222 + $0x40] sm:$0xf]
        %v306 = vld [vmem:[%s222 + $0x44] sm:$0x1]
        %v307 = vld [vmem:[%s222 + $0x48] sm:$0xf]
        %v308 = vld [vmem:[%s222 + $0x4c] sm:$0xf]
        %v309 = vld [vmem:[%s222 + $0x50] sm:$0x1]
        %v310 = vld [vmem:[%s222 + $0x54] sm:$0xf]
        %v311 = vld [vmem:[%s222 + $0x58] sm:$0xf]
        %v312 = vld [vmem:[%s222 + $0x5c] sm:$0x1]
        %v313 = vld [vmem:[%s222 + $0x60] sm:$0xf]
        %v314 = vld [vmem:[%s222 + $0x64] sm:$0xf]
        %v315 = vld [vmem:[%s222 + $0x68] sm:$0x1]
        %v316 = vld [vmem:[%s222 + $0x6c] sm:$0xf]
        %v317 = vld [vmem:[%s222 + $0x70] sm:$0xf]
        %v318 = vld [vmem:[%s222 + $0x74] sm:$0x1]
        %v319 = vld [vmem:[%s222 + $0x78] sm:$0xf]
        %v320 = vld [vmem:[%s222 + $0x7c] sm:$0xf]
        %v321 = vld [vmem:[%s222 + $0x80] sm:$0x1]
        %v322 = vld [vmem:[%s222 + $0x84] sm:$0xf]
        %v323 = vld [vmem:[%s222 + $0x88] sm:$0xf]
        %v324 = vld [vmem:[%s222 + $0x8c] sm:$0x1]
        %v325 = vld [vmem:[%s222 + $0x90] sm:$0xf]
        %v326 = vld [vmem:[%s222 + $0x94] sm:$0xf]
        %v327 = vld [vmem:[%s222 + $0x98] sm:$0x1]
        %v328 = vld [vmem:[%s222 + $0x9c] sm:$0xf]
        %v329 = vld [vmem:[%s222 + $0xa0] sm:$0xf]
        %v330 = vld [vmem:[%s222 + $0xa4] sm:$0x1]
        %v331 = vld [vmem:[%s222 + $0xa8] sm:$0xf]
        %v332 = vld [vmem:[%s222 + $0xac] sm:$0xf]
        %v333 = vld [vmem:[%s222 + $0xb0] sm:$0x1]
        %v334 = vld [vmem:[%s222 + $0xb4] sm:$0xf]
        %v335 = vld [vmem:[%s222 + $0xb8] sm:$0xf]
        %v336 = vld [vmem:[%s222 + $0xbc] sm:$0x1]
        %vm337 = vsmask.f32 3328
        %vm338 = vsmask.f32 7440
        %vm339 = vmor %vm337, %vm338
        %v341 = vshrl.u32 %v289, 16
        %v343 = vrot.slane %v341, 4
        %v344 = vshll.u32 %v289, 16
        %v346 = vrot.slane %v344, 5
        %v347 = vor.u32 %v343, %v346
        %v348 = vrot.slane %v347, 4
        %v350 = vshll.u32 %v290, 16
        %v352 = vrot.slane %v350, 5
        %v353 = vsel %vm339, %v348, %v352
        %v354 = vshrl.u32 %v290, 16
        %v356 = vrot.slane %v354, 4
        %v357 = vor.u32 %v356, %v352
        %v358 = vrot.slane %v357, 4
        %v360 = vshll.u32 %v291, 16
        %v362 = vrot.slane %v360, 5
        %v363 = vsel %vm339, %v358, %v362
        %v365 = vshrl.u32 %v292, 16
        %v367 = vrot.slane %v365, 4
        %v368 = vshll.u32 %v292, 16
        %v370 = vrot.slane %v368, 5
        %v371 = vor.u32 %v367, %v370
        %v372 = vrot.slane %v371, 4
        %v374 = vshll.u32 %v293, 16
        %v376 = vrot.slane %v374, 5
        %v377 = vsel %vm339, %v372, %v376
        %v378 = vshrl.u32 %v293, 16
        %v380 = vrot.slane %v378, 4
        %v381 = vor.u32 %v380, %v376
        %v382 = vrot.slane %v381, 4
        %v384 = vshll.u32 %v294, 16
        %v386 = vrot.slane %v384, 5
        %v387 = vsel %vm339, %v382, %v386
        %v389 = vshrl.u32 %v295, 16
        %v391 = vrot.slane %v389, 4
        %v392 = vshll.u32 %v295, 16
        %v394 = vrot.slane %v392, 5
        %v395 = vor.u32 %v391, %v394
        %v396 = vrot.slane %v395, 4
        %v398 = vshll.u32 %v296, 16
        %v400 = vrot.slane %v398, 5
        %v401 = vsel %vm339, %v396, %v400
        %v402 = vshrl.u32 %v296, 16
        %v404 = vrot.slane %v402, 4
        %v405 = vor.u32 %v404, %v400
        %v406 = vrot.slane %v405, 4
        %v408 = vshll.u32 %v297, 16
        %v410 = vrot.slane %v408, 5
        %v411 = vsel %vm339, %v406, %v410
        %v413 = vshrl.u32 %v298, 16
        %v415 = vrot.slane %v413, 4
        %v416 = vshll.u32 %v298, 16
        %v418 = vrot.slane %v416, 5
        %v419 = vor.u32 %v415, %v418
        %v420 = vrot.slane %v419, 4
        %v422 = vshll.u32 %v299, 16
        %v424 = vrot.slane %v422, 5
        %v425 = vsel %vm339, %v420, %v424
        %v426 = vshrl.u32 %v299, 16
        %v428 = vrot.slane %v426, 4
        %v429 = vor.u32 %v428, %v424
        %v430 = vrot.slane %v429, 4
        %v432 = vshll.u32 %v300, 16
        %v434 = vrot.slane %v432, 5
        %v435 = vsel %vm339, %v430, %v434
        %v437 = vshrl.u32 %v301, 16
        %v439 = vrot.slane %v437, 4
        %v440 = vshll.u32 %v301, 16
        %v442 = vrot.slane %v440, 5
        %v443 = vor.u32 %v439, %v442
        %v444 = vrot.slane %v443, 4
        %v446 = vshll.u32 %v302, 16
        %v448 = vrot.slane %v446, 5
        %v449 = vsel %vm339, %v444, %v448
        %v450 = vshrl.u32 %v302, 16
        %v452 = vrot.slane %v450, 4
        %v453 = vor.u32 %v452, %v448
        %v454 = vrot.slane %v453, 4
        %v456 = vshll.u32 %v303, 16
        %v458 = vrot.slane %v456, 5
        %v459 = vsel %vm339, %v454, %v458
        %v461 = vshrl.u32 %v304, 16
        %v463 = vrot.slane %v461, 4
        %v464 = vshll.u32 %v304, 16
        %v466 = vrot.slane %v464, 5
        %v467 = vor.u32 %v463, %v466
        %v468 = vrot.slane %v467, 4
        %v470 = vshll.u32 %v305, 16
        %v472 = vrot.slane %v470, 5
        %v473 = vsel %vm339, %v468, %v472
        %v474 = vshrl.u32 %v305, 16
        %v476 = vrot.slane %v474, 4
        %v477 = vor.u32 %v476, %v472
        %v478 = vrot.slane %v477, 4
        %v480 = vshll.u32 %v306, 16
        %v482 = vrot.slane %v480, 5
        %v483 = vsel %vm339, %v478, %v482
        %v485 = vshrl.u32 %v307, 16
        %v487 = vrot.slane %v485, 4
        %v488 = vshll.u32 %v307, 16
        %v490 = vrot.slane %v488, 5
        %v491 = vor.u32 %v487, %v490
        %v492 = vrot.slane %v491, 4
        %v494 = vshll.u32 %v308, 16
        %v496 = vrot.slane %v494, 5
        %v497 = vsel %vm339, %v492, %v496
        %v498 = vshrl.u32 %v308, 16
        %v500 = vrot.slane %v498, 4
        %v501 = vor.u32 %v500, %v496
        %v502 = vrot.slane %v501, 4
        %v504 = vshll.u32 %v309, 16
        %v506 = vrot.slane %v504, 5
        %v507 = vsel %vm339, %v502, %v506
        %v509 = vshrl.u32 %v310, 16
        %v511 = vrot.slane %v509, 4
        %v512 = vshll.u32 %v310, 16
        %v514 = vrot.slane %v512, 5
        %v515 = vor.u32 %v511, %v514
        %v516 = vrot.slane %v515, 4
        %v518 = vshll.u32 %v311, 16
        %v520 = vrot.slane %v518, 5
        %v521 = vsel %vm339, %v516, %v520
        %v522 = vshrl.u32 %v311, 16
        %v524 = vrot.slane %v522, 4
        %v525 = vor.u32 %v524, %v520
        %v526 = vrot.slane %v525, 4
        %v528 = vshll.u32 %v312, 16
        %v530 = vrot.slane %v528, 5
        %v531 = vsel %vm339, %v526, %v530
        %v533 = vshrl.u32 %v313, 16
        %v535 = vrot.slane %v533, 4
        %v536 = vshll.u32 %v313, 16
        %v538 = vrot.slane %v536, 5
        %v539 = vor.u32 %v535, %v538
        %v540 = vrot.slane %v539, 4
        %v542 = vshll.u32 %v314, 16
        %v544 = vrot.slane %v542, 5
        %v545 = vsel %vm339, %v540, %v544
        %v546 = vshrl.u32 %v314, 16
        %v548 = vrot.slane %v546, 4
        %v549 = vor.u32 %v548, %v544
        %v550 = vrot.slane %v549, 4
        %v552 = vshll.u32 %v315, 16
        %v554 = vrot.slane %v552, 5
        %v555 = vsel %vm339, %v550, %v554
        %v557 = vshrl.u32 %v316, 16
        %v559 = vrot.slane %v557, 4
        %v560 = vshll.u32 %v316, 16
        %v562 = vrot.slane %v560, 5
        %v563 = vor.u32 %v559, %v562
        %v564 = vrot.slane %v563, 4
        %v566 = vshll.u32 %v317, 16
        %v568 = vrot.slane %v566, 5
        %v569 = vsel %vm339, %v564, %v568
        %v570 = vshrl.u32 %v317, 16
        %v572 = vrot.slane %v570, 4
        %v573 = vor.u32 %v572, %v568
        %v574 = vrot.slane %v573, 4
        %v576 = vshll.u32 %v318, 16
        %v578 = vrot.slane %v576, 5
        %v579 = vsel %vm339, %v574, %v578
        %v581 = vshrl.u32 %v319, 16
        %v583 = vrot.slane %v581, 4
        %v584 = vshll.u32 %v319, 16
        %v586 = vrot.slane %v584, 5
        %v587 = vor.u32 %v583, %v586
        %v588 = vrot.slane %v587, 4
        %v590 = vshll.u32 %v320, 16
        %v592 = vrot.slane %v590, 5
        %v593 = vsel %vm339, %v588, %v592
        %v594 = vshrl.u32 %v320, 16
        %v596 = vrot.slane %v594, 4
        %v597 = vor.u32 %v596, %v592
        %v598 = vrot.slane %v597, 4
        %v600 = vshll.u32 %v321, 16
        %v602 = vrot.slane %v600, 5
        %v603 = vsel %vm339, %v598, %v602
        %v605 = vshrl.u32 %v322, 16
        %v607 = vrot.slane %v605, 4
        %v608 = vshll.u32 %v322, 16
        %v610 = vrot.slane %v608, 5
        %v611 = vor.u32 %v607, %v610
        %v612 = vrot.slane %v611, 4
        %v614 = vshll.u32 %v323, 16
        %v616 = vrot.slane %v614, 5
        %v617 = vsel %vm339, %v612, %v616
        %v618 = vshrl.u32 %v323, 16
        %v620 = vrot.slane %v618, 4
        %v621 = vor.u32 %v620, %v616
        %v622 = vrot.slane %v621, 4
        %v624 = vshll.u32 %v324, 16
        %v626 = vrot.slane %v624, 5
        %v627 = vsel %vm339, %v622, %v626
        %v629 = vshrl.u32 %v325, 16
        %v631 = vrot.slane %v629, 4
        %v632 = vshll.u32 %v325, 16
        %v634 = vrot.slane %v632, 5
        %v635 = vor.u32 %v631, %v634
        %v636 = vrot.slane %v635, 4
        %v638 = vshll.u32 %v326, 16
        %v640 = vrot.slane %v638, 5
        %v641 = vsel %vm339, %v636, %v640
        %v642 = vshrl.u32 %v326, 16
        %v644 = vrot.slane %v642, 4
        %v645 = vor.u32 %v644, %v640
        %v646 = vrot.slane %v645, 4
        %v648 = vshll.u32 %v327, 16
        %v650 = vrot.slane %v648, 5
        %v651 = vsel %vm339, %v646, %v650
        %v653 = vshrl.u32 %v328, 16
        %v655 = vrot.slane %v653, 4
        %v656 = vshll.u32 %v328, 16
        %v658 = vrot.slane %v656, 5
        %v659 = vor.u32 %v655, %v658
        %v660 = vrot.slane %v659, 4
        %v662 = vshll.u32 %v329, 16
        %v664 = vrot.slane %v662, 5
        %v665 = vsel %vm339, %v660, %v664
        %v666 = vshrl.u32 %v329, 16
        %v668 = vrot.slane %v666, 4
        %v669 = vor.u32 %v668, %v664
        %v670 = vrot.slane %v669, 4
        %v672 = vshll.u32 %v330, 16
        %v674 = vrot.slane %v672, 5
        %v675 = vsel %vm339, %v670, %v674
        %v677 = vshrl.u32 %v331, 16
        %v679 = vrot.slane %v677, 4
        %v680 = vshll.u32 %v331, 16
        %v682 = vrot.slane %v680, 5
        %v683 = vor.u32 %v679, %v682
        %v684 = vrot.slane %v683, 4
        %v686 = vshll.u32 %v332, 16
        %v688 = vrot.slane %v686, 5
        %v689 = vsel %vm339, %v684, %v688
        %v690 = vshrl.u32 %v332, 16
        %v692 = vrot.slane %v690, 4
        %v693 = vor.u32 %v692, %v688
        %v694 = vrot.slane %v693, 4
        %v696 = vshll.u32 %v333, 16
        %v698 = vrot.slane %v696, 5
        %v699 = vsel %vm339, %v694, %v698
        %v701 = vshrl.u32 %v334, 16
        %v703 = vrot.slane %v701, 4
        %v704 = vshll.u32 %v334, 16
        %v706 = vrot.slane %v704, 5
        %v707 = vor.u32 %v703, %v706
        %v708 = vrot.slane %v707, 4
        %v710 = vshll.u32 %v335, 16
        %v712 = vrot.slane %v710, 5
        %v713 = vsel %vm339, %v708, %v712
        %v714 = vshrl.u32 %v335, 16
        %v716 = vrot.slane %v714, 4
        %v717 = vor.u32 %v716, %v712
        %v718 = vrot.slane %v717, 4
        %v720 = vshll.u32 %v336, 16
        %v722 = vrot.slane %v720, 5
        %v723 = vsel %vm339, %v718, %v722
        %724 = vrot.lane.b32.xlu0 %v353, 64
        %v725 = vpop.permute.xlu0 %724
        %726 = vrot.lane.b32.xlu0 %v363, 64
        %v727 = vpop.permute.xlu0 %726
        %728 = vrot.lane.b32.xlu0 %v377, 64
        %v729 = vpop.permute.xlu0 %728
        %730 = vrot.lane.b32.xlu0 %v387, 64
        %v731 = vpop.permute.xlu0 %730
        %732 = vrot.lane.b32.xlu0 %v401, 64
        %v733 = vpop.permute.xlu0 %732
        %734 = vrot.lane.b32.xlu0 %v411, 64
        %v735 = vpop.permute.xlu0 %734
        %736 = vrot.lane.b32.xlu0 %v425, 64
        %v737 = vpop.permute.xlu0 %736
        %738 = vrot.lane.b32.xlu0 %v435, 64
        %v739 = vpop.permute.xlu0 %738
        %740 = vrot.lane.b32.xlu0 %v449, 64
        %v741 = vpop.permute.xlu0 %740
        %742 = vrot.lane.b32.xlu0 %v459, 64
        %v743 = vpop.permute.xlu0 %742
        %744 = vrot.lane.b32.xlu0 %v473, 64
        %v745 = vpop.permute.xlu0 %744
        %746 = vrot.lane.b32.xlu0 %v483, 64
        %v747 = vpop.permute.xlu0 %746
        %748 = vrot.lane.b32.xlu0 %v497, 64
        %v749 = vpop.permute.xlu0 %748
        %750 = vrot.lane.b32.xlu0 %v507, 64
        %v751 = vpop.permute.xlu0 %750
        %752 = vrot.lane.b32.xlu0 %v521, 64
        %v753 = vpop.permute.xlu0 %752
        %754 = vrot.lane.b32.xlu0 %v531, 64
        %v755 = vpop.permute.xlu0 %754
        %756 = vrot.lane.b32.xlu0 %v545, 64
        %v757 = vpop.permute.xlu0 %756
        %758 = vrot.lane.b32.xlu0 %v555, 64
        %v759 = vpop.permute.xlu0 %758
        %760 = vrot.lane.b32.xlu0 %v569, 64
        %v761 = vpop.permute.xlu0 %760
        %762 = vrot.lane.b32.xlu0 %v579, 64
        %v763 = vpop.permute.xlu0 %762
        %764 = vrot.lane.b32.xlu0 %v593, 64
        %v765 = vpop.permute.xlu0 %764
        %766 = vrot.lane.b32.xlu0 %v603, 64
        %v767 = vpop.permute.xlu0 %766
        %768 = vrot.lane.b32.xlu0 %v617, 64
        %v769 = vpop.permute.xlu0 %768
        %770 = vrot.lane.b32.xlu0 %v627, 64
        %v771 = vpop.permute.xlu0 %770
        %772 = vrot.lane.b32.xlu0 %v641, 64
        %v773 = vpop.permute.xlu0 %772
        %774 = vrot.lane.b32.xlu0 %v651, 64
        %v775 = vpop.permute.xlu0 %774
        %776 = vrot.lane.b32.xlu0 %v665, 64
        %v777 = vpop.permute.xlu0 %776
        %778 = vrot.lane.b32.xlu0 %v675, 64
        %v779 = vpop.permute.xlu0 %778
        %780 = vrot.lane.b32.xlu0 %v689, 64
        %v781 = vpop.permute.xlu0 %780
        %782 = vrot.lane.b32.xlu0 %v699, 64
        %v783 = vpop.permute.xlu0 %782
        %784 = vrot.lane.b32.xlu0 %v713, 64
        %v785 = vpop.permute.xlu0 %784
        %786 = vrot.lane.b32.xlu0 %v723, 64
        %v787 = vpop.permute.xlu0 %786
        %vm820 = vcmask 1043968
        %821 = vst.msk [vmem:[#allocation2] sm:$0xf] %vm820, %v725
        %822 = vst.msk [vmem:[#allocation2 + $0x14] sm:$0xf] %vm820, %v727
        %823 = vst.msk [vmem:[#allocation2 + $0x28] sm:$0xf] %vm820, %v729
        %824 = vst.msk [vmem:[#allocation2 + $0x3c] sm:$0xf] %vm820, %v731
        %825 = vst.msk [vmem:[#allocation2 + $0x50] sm:$0xf] %vm820, %v733
        %826 = vst.msk [vmem:[#allocation2 + $0x64] sm:$0xf] %vm820, %v735
        %827 = vst.msk [vmem:[#allocation2 + $0x78] sm:$0xf] %vm820, %v737
        %828 = vst.msk [vmem:[#allocation2 + $0x8c] sm:$0xf] %vm820, %v739
        %829 = vst.msk [vmem:[#allocation2 + $0xa0] sm:$0xf] %vm820, %v741
        %830 = vst.msk [vmem:[#allocation2 + $0xb4] sm:$0xf] %vm820, %v743
        %831 = vst.msk [vmem:[#allocation2 + $0xc8] sm:$0xf] %vm820, %v745
        %832 = vst.msk [vmem:[#allocation2 + $0xdc] sm:$0xf] %vm820, %v747
        %833 = vst.msk [vmem:[#allocation2 + $0xf0] sm:$0xf] %vm820, %v749
        %834 = vst.msk [vmem:[#allocation2 + $0x104] sm:$0xf] %vm820, %v751
        %835 = vst.msk [vmem:[#allocation2 + $0x118] sm:$0xf] %vm820, %v753
        %836 = vst.msk [vmem:[#allocation2 + $0x12c] sm:$0xf] %vm820, %v755
        %837 = vst.msk [vmem:[#allocation2 + $0x140] sm:$0xf] %vm820, %v757
        %838 = vst.msk [vmem:[#allocation2 + $0x154] sm:$0xf] %vm820, %v759
        %839 = vst.msk [vmem:[#allocation2 + $0x168] sm:$0xf] %vm820, %v761
        %840 = vst.msk [vmem:[#allocation2 + $0x17c] sm:$0xf] %vm820, %v763
        %841 = vst.msk [vmem:[#allocation2 + $0x190] sm:$0xf] %vm820, %v765
        %842 = vst.msk [vmem:[#allocation2 + $0x1a4] sm:$0xf] %vm820, %v767
        %843 = vst.msk [vmem:[#allocation2 + $0x1b8] sm:$0xf] %vm820, %v769
        %844 = vst.msk [vmem:[#allocation2 + $0x1cc] sm:$0xf] %vm820, %v771
        %845 = vst.msk [vmem:[#allocation2 + $0x1e0] sm:$0xf] %vm820, %v773
        %846 = vst.msk [vmem:[#allocation2 + $0x1f4] sm:$0xf] %vm820, %v775
        %847 = vst.msk [vmem:[#allocation2 + $0x208] sm:$0xf] %vm820, %v777
        %848 = vst.msk [vmem:[#allocation2 + $0x21c] sm:$0xf] %vm820, %v779
        %849 = vst.msk [vmem:[#allocation2 + $0x230] sm:$0xf] %vm820, %v781
        %850 = vst.msk [vmem:[#allocation2 + $0x244] sm:$0xf] %vm820, %v783
        %851 = vst.msk [vmem:[#allocation2 + $0x258] sm:$0xf] %vm820, %v785
        %852 = vst.msk [vmem:[#allocation2 + $0x26c] sm:$0xf] %vm820, %v787
        %v853 = vld [vmem:[%s222] sm:$0xe]
        %v854 = vld [vmem:[%s222 + $0x4] sm:$0xf]
        %v855 = vld [vmem:[%s222 + $0x8] sm:$0x1]
        %v856 = vld [vmem:[%s222 + $0xc] sm:$0xe]
        %v857 = vld [vmem:[%s222 + $0x10] sm:$0xf]
        %v858 = vld [vmem:[%s222 + $0x14] sm:$0x1]
        %v859 = vld [vmem:[%s222 + $0x18] sm:$0xe]
        %v860 = vld [vmem:[%s222 + $0x1c] sm:$0xf]
        %v861 = vld [vmem:[%s222 + $0x20] sm:$0x1]
        %v862 = vld [vmem:[%s222 + $0x24] sm:$0xe]
        %v863 = vld [vmem:[%s222 + $0x28] sm:$0xf]
        %v864 = vld [vmem:[%s222 + $0x2c] sm:$0x1]
        %v865 = vld [vmem:[%s222 + $0x30] sm:$0xe]
        %v866 = vld [vmem:[%s222 + $0x34] sm:$0xf]
        %v867 = vld [vmem:[%s222 + $0x38] sm:$0x1]
        %v868 = vld [vmem:[%s222 + $0x3c] sm:$0xe]
        %v869 = vld [vmem:[%s222 + $0x40] sm:$0xf]
        %v870 = vld [vmem:[%s222 + $0x44] sm:$0x1]
        %v871 = vld [vmem:[%s222 + $0x48] sm:$0xe]
        %v872 = vld [vmem:[%s222 + $0x4c] sm:$0xf]
        %v873 = vld [vmem:[%s222 + $0x50] sm:$0x1]
        %v874 = vld [vmem:[%s222 + $0x54] sm:$0xe]
        %v875 = vld [vmem:[%s222 + $0x58] sm:$0xf]
        %v876 = vld [vmem:[%s222 + $0x5c] sm:$0x1]
        %v877 = vld [vmem:[%s222 + $0x60] sm:$0xe]
        %v878 = vld [vmem:[%s222 + $0x64] sm:$0xf]
        %v879 = vld [vmem:[%s222 + $0x68] sm:$0x1]
        %v880 = vld [vmem:[%s222 + $0x6c] sm:$0xe]
        %v881 = vld [vmem:[%s222 + $0x70] sm:$0xf]
        %v882 = vld [vmem:[%s222 + $0x74] sm:$0x1]
        %v883 = vld [vmem:[%s222 + $0x78] sm:$0xe]
        %v884 = vld [vmem:[%s222 + $0x7c] sm:$0xf]
        %v885 = vld [vmem:[%s222 + $0x80] sm:$0x1]
        %v886 = vld [vmem:[%s222 + $0x84] sm:$0xe]
        %v887 = vld [vmem:[%s222 + $0x88] sm:$0xf]
        %v888 = vld [vmem:[%s222 + $0x8c] sm:$0x1]
        %v889 = vld [vmem:[%s222 + $0x90] sm:$0xe]
        %v890 = vld [vmem:[%s222 + $0x94] sm:$0xf]
        %v891 = vld [vmem:[%s222 + $0x98] sm:$0x1]
        %v892 = vld [vmem:[%s222 + $0x9c] sm:$0xe]
        %v893 = vld [vmem:[%s222 + $0xa0] sm:$0xf]
        %v894 = vld [vmem:[%s222 + $0xa4] sm:$0x1]
        %v895 = vld [vmem:[%s222 + $0xa8] sm:$0xe]
        %v896 = vld [vmem:[%s222 + $0xac] sm:$0xf]
        %v897 = vld [vmem:[%s222 + $0xb0] sm:$0x1]
        %v898 = vld [vmem:[%s222 + $0xb4] sm:$0xe]
        %v899 = vld [vmem:[%s222 + $0xb8] sm:$0xf]
        %v900 = vld [vmem:[%s222 + $0xbc] sm:$0x1]
        %vm949 = vcmask 1042432
        %vm950 = vcmask 1046532
        %vm951 = vmor %vm949, %vm950
        %v952 = vrot.slane %v853, 5
        %v953 = vrot.slane %v952, 4
        %v954 = vrot.slane %v854, 5
        %v955 = vsel %vm951, %v953, %v954
        %v956 = vrot.slane %v954, 4
        %v957 = vrot.slane %v855, 5
        %v958 = vsel %vm951, %v956, %v957
        %v959 = vrot.slane %v856, 5
        %v960 = vrot.slane %v959, 4
        %v961 = vrot.slane %v857, 5
        %v962 = vsel %vm951, %v960, %v961
        %v963 = vrot.slane %v961, 4
        %v964 = vrot.slane %v858, 5
        %v965 = vsel %vm951, %v963, %v964
        %v966 = vrot.slane %v859, 5
        %v967 = vrot.slane %v966, 4
        %v968 = vrot.slane %v860, 5
        %v969 = vsel %vm951, %v967, %v968
        %v970 = vrot.slane %v968, 4
        %v971 = vrot.slane %v861, 5
        %v972 = vsel %vm951, %v970, %v971
        %v973 = vrot.slane %v862, 5
        %v974 = vrot.slane %v973, 4
        %v975 = vrot.slane %v863, 5
        %v976 = vsel %vm951, %v974, %v975
        %v977 = vrot.slane %v975, 4
        %v978 = vrot.slane %v864, 5
        %v979 = vsel %vm951, %v977, %v978
        %v980 = vrot.slane %v865, 5
        %v981 = vrot.slane %v980, 4
        %v982 = vrot.slane %v866, 5
        %v983 = vsel %vm951, %v981, %v982
        %v984 = vrot.slane %v982, 4
        %v985 = vrot.slane %v867, 5
        %v986 = vsel %vm951, %v984, %v985
        %v987 = vrot.slane %v868, 5
        %v988 = vrot.slane %v987, 4
        %v989 = vrot.slane %v869, 5
        %v990 = vsel %vm951, %v988, %v989
        %v991 = vrot.slane %v989, 4
        %v992 = vrot.slane %v870, 5
        %v993 = vsel %vm951, %v991, %v992
        %v994 = vrot.slane %v871, 5
        %v995 = vrot.slane %v994, 4
        %v996 = vrot.slane %v872, 5
        %v997 = vsel %vm951, %v995, %v996
        %v998 = vrot.slane %v996, 4
        %v999 = vrot.slane %v873, 5
        %v1000 = vsel %vm951, %v998, %v999
        %v1001 = vrot.slane %v874, 5
        %v1002 = vrot.slane %v1001, 4
        %v1003 = vrot.slane %v875, 5
        %v1004 = vsel %vm951, %v1002, %v1003
        %v1005 = vrot.slane %v1003, 4
        %v1006 = vrot.slane %v876, 5
        %v1007 = vsel %vm951, %v1005, %v1006
        %v1008 = vrot.slane %v877, 5
        %v1009 = vrot.slane %v1008, 4
        %v1010 = vrot.slane %v878, 5
        %v1011 = vsel %vm951, %v1009, %v1010
        %v1012 = vrot.slane %v1010, 4
        %v1013 = vrot.slane %v879, 5
        %v1014 = vsel %vm951, %v1012, %v1013
        %v1015 = vrot.slane %v880, 5
        %v1016 = vrot.slane %v1015, 4
        %v1017 = vrot.slane %v881, 5
        %v1018 = vsel %vm951, %v1016, %v1017
        %v1019 = vrot.slane %v1017, 4
        %v1020 = vrot.slane %v882, 5
        %v1021 = vsel %vm951, %v1019, %v1020
        %v1022 = vrot.slane %v883, 5
        %v1023 = vrot.slane %v1022, 4
        %v1024 = vrot.slane %v884, 5
        %v1025 = vsel %vm951, %v1023, %v1024
        %v1026 = vrot.slane %v1024, 4
        %v1027 = vrot.slane %v885, 5
        %v1028 = vsel %vm951, %v1026, %v1027
        %v1029 = vrot.slane %v886, 5
        %v1030 = vrot.slane %v1029, 4
        %v1031 = vrot.slane %v887, 5
        %v1032 = vsel %vm951, %v1030, %v1031
        %v1033 = vrot.slane %v1031, 4
        %v1034 = vrot.slane %v888, 5
        %v1035 = vsel %vm951, %v1033, %v1034
        %v1036 = vrot.slane %v889, 5
        %v1037 = vrot.slane %v1036, 4
        %v1038 = vrot.slane %v890, 5
        %v1039 = vsel %vm951, %v1037, %v1038
        %v1040 = vrot.slane %v1038, 4
        %v1041 = vrot.slane %v891, 5
        %v1042 = vsel %vm951, %v1040, %v1041
        %v1043 = vrot.slane %v892, 5
        %v1044 = vrot.slane %v1043, 4
        %v1045 = vrot.slane %v893, 5
        %v1046 = vsel %vm951, %v1044, %v1045
        %v1047 = vrot.slane %v1045, 4
        %v1048 = vrot.slane %v894, 5
        %v1049 = vsel %vm951, %v1047, %v1048
        %v1050 = vrot.slane %v895, 5
        %v1051 = vrot.slane %v1050, 4
        %v1052 = vrot.slane %v896, 5
        %v1053 = vsel %vm951, %v1051, %v1052
        %v1054 = vrot.slane %v1052, 4
        %v1055 = vrot.slane %v897, 5
        %v1056 = vsel %vm951, %v1054, %v1055
        %v1057 = vrot.slane %v898, 5
        %v1058 = vrot.slane %v1057, 4
        %v1059 = vrot.slane %v899, 5
        %v1060 = vsel %vm951, %v1058, %v1059
        %v1061 = vrot.slane %v1059, 4
        %v1062 = vrot.slane %v900, 5
        %v1063 = vsel %vm951, %v1061, %v1062
        %1096 = vst.msk [vmem:[#allocation2 + $0x4] sm:$0xf] %vm256, %v955
        %1097 = vst.msk [vmem:[#allocation2 + $0x18] sm:$0xf] %vm256, %v958
        %1098 = vst.msk [vmem:[#allocation2 + $0x2c] sm:$0xf] %vm256, %v962
        %1099 = vst.msk [vmem:[#allocation2 + $0x40] sm:$0xf] %vm256, %v965
        %1100 = vst.msk [vmem:[#allocation2 + $0x54] sm:$0xf] %vm256, %v969
        %1101 = vst.msk [vmem:[#allocation2 + $0x68] sm:$0xf] %vm256, %v972
        %1102 = vst.msk [vmem:[#allocation2 + $0x7c] sm:$0xf] %vm256, %v976
        %1103 = vst.msk [vmem:[#allocation2 + $0x90] sm:$0xf] %vm256, %v979
        %1104 = vst.msk [vmem:[#allocation2 + $0xa4] sm:$0xf] %vm256, %v983
        %1105 = vst.msk [vmem:[#allocation2 + $0xb8] sm:$0xf] %vm256, %v986
        %1106 = vst.msk [vmem:[#allocation2 + $0xcc] sm:$0xf] %vm256, %v990
        %1107 = vst.msk [vmem:[#allocation2 + $0xe0] sm:$0xf] %vm256, %v993
        %1108 = vst.msk [vmem:[#allocation2 + $0xf4] sm:$0xf] %vm256, %v997
        %1109 = vst.msk [vmem:[#allocation2 + $0x108] sm:$0xf] %vm256, %v1000
        %1110 = vst.msk [vmem:[#allocation2 + $0x11c] sm:$0xf] %vm256, %v1004
        %1111 = vst.msk [vmem:[#allocation2 + $0x130] sm:$0xf] %vm256, %v1007
        %1112 = vst.msk [vmem:[#allocation2 + $0x144] sm:$0xf] %vm256, %v1011
        %1113 = vst.msk [vmem:[#allocation2 + $0x158] sm:$0xf] %vm256, %v1014
        %1114 = vst.msk [vmem:[#allocation2 + $0x16c] sm:$0xf] %vm256, %v1018
        %1115 = vst.msk [vmem:[#allocation2 + $0x180] sm:$0xf] %vm256, %v1021
        %1116 = vst.msk [vmem:[#allocation2 + $0x194] sm:$0xf] %vm256, %v1025
        %1117 = vst.msk [vmem:[#allocation2 + $0x1a8] sm:$0xf] %vm256, %v1028
        %1118 = vst.msk [vmem:[#allocation2 + $0x1bc] sm:$0xf] %vm256, %v1032
        %1119 = vst.msk [vmem:[#allocation2 + $0x1d0] sm:$0xf] %vm256, %v1035
        %1120 = vst.msk [vmem:[#allocation2 + $0x1e4] sm:$0xf] %vm256, %v1039
        %1121 = vst.msk [vmem:[#allocation2 + $0x1f8] sm:$0xf] %vm256, %v1042
        %1122 = vst.msk [vmem:[#allocation2 + $0x20c] sm:$0xf] %vm256, %v1046
        %1123 = vst.msk [vmem:[#allocation2 + $0x220] sm:$0xf] %vm256, %v1049
        %1124 = vst.msk [vmem:[#allocation2 + $0x234] sm:$0xf] %vm256, %v1053
        %1125 = vst.msk [vmem:[#allocation2 + $0x248] sm:$0xf] %vm256, %v1056
        %1126 = vst.msk [vmem:[#allocation2 + $0x25c] sm:$0xf] %vm256, %v1060
        %1127 = vst.msk [vmem:[#allocation2 + $0x270] sm:$0xf] %vm256, %v1063
        %s1128 = scalar_lea.vmem %s222, 12
        %v1129 = vld [vmem:[%s1128] sm:$0xf]
        %v1130 = vld [vmem:[%s1128 + $0x4] sm:$0xf]
        %v1131 = vld [vmem:[%s1128 + $0xc] sm:$0xf]
        %v1132 = vld [vmem:[%s1128 + $0x10] sm:$0xf]
        %v1133 = vld [vmem:[%s1128 + $0x18] sm:$0xf]
        %v1134 = vld [vmem:[%s1128 + $0x1c] sm:$0xf]
        %v1135 = vld [vmem:[%s1128 + $0x24] sm:$0xf]
        %v1136 = vld [vmem:[%s1128 + $0x28] sm:$0xf]
        %v1137 = vld [vmem:[%s1128 + $0x30] sm:$0xf]
        %v1138 = vld [vmem:[%s1128 + $0x34] sm:$0xf]
        %v1139 = vld [vmem:[%s1128 + $0x3c] sm:$0xf]
        %v1140 = vld [vmem:[%s1128 + $0x40] sm:$0xf]
        %v1141 = vld [vmem:[%s1128 + $0x48] sm:$0xf]
        %v1142 = vld [vmem:[%s1128 + $0x4c] sm:$0xf]
        %v1143 = vld [vmem:[%s1128 + $0x54] sm:$0xf]
        %v1144 = vld [vmem:[%s1128 + $0x58] sm:$0xf]
        %v1145 = vld [vmem:[%s1128 + $0x60] sm:$0xf]
        %v1146 = vld [vmem:[%s1128 + $0x64] sm:$0xf]
        %v1147 = vld [vmem:[%s1128 + $0x6c] sm:$0xf]
        %v1148 = vld [vmem:[%s1128 + $0x70] sm:$0xf]
        %v1149 = vld [vmem:[%s1128 + $0x78] sm:$0xf]
        %v1150 = vld [vmem:[%s1128 + $0x7c] sm:$0xf]
        %v1151 = vld [vmem:[%s1128 + $0x84] sm:$0xf]
        %v1152 = vld [vmem:[%s1128 + $0x88] sm:$0xf]
        %v1153 = vld [vmem:[%s1128 + $0x90] sm:$0xf]
        %v1154 = vld [vmem:[%s1128 + $0x94] sm:$0xf]
        %v1155 = vld [vmem:[%s1128 + $0x9c] sm:$0xf]
        %v1156 = vld [vmem:[%s1128 + $0xa0] sm:$0xf]
        %v1157 = vld [vmem:[%s1128 + $0xa8] sm:$0xf]
        %v1158 = vld [vmem:[%s1128 + $0xac] sm:$0xf]
        %v1159 = vld [vmem:[%s1128 + $0xb4] sm:$0xf]
        %v1160 = vld [vmem:[%s1128 + $0xb8] sm:$0xf]
        %1193 = vrot.lane.b32.xlu0 %v1129, 64
        %v1194 = vpop.permute.xlu0 %1193
        %1195 = vrot.lane.b32.xlu0 %v1130, 64
        %v1196 = vpop.permute.xlu0 %1195
        %1197 = vrot.lane.b32.xlu0 %v1131, 64
        %v1198 = vpop.permute.xlu0 %1197
        %1199 = vrot.lane.b32.xlu0 %v1132, 64
        %v1200 = vpop.permute.xlu0 %1199
        %1201 = vrot.lane.b32.xlu0 %v1133, 64
        %v1202 = vpop.permute.xlu0 %1201
        %1203 = vrot.lane.b32.xlu0 %v1134, 64
        %v1204 = vpop.permute.xlu0 %1203
        %1205 = vrot.lane.b32.xlu0 %v1135, 64
        %v1206 = vpop.permute.xlu0 %1205
        %1207 = vrot.lane.b32.xlu0 %v1136, 64
        %v1208 = vpop.permute.xlu0 %1207
        %1209 = vrot.lane.b32.xlu0 %v1137, 64
        %v1210 = vpop.permute.xlu0 %1209
        %1211 = vrot.lane.b32.xlu0 %v1138, 64
        %v1212 = vpop.permute.xlu0 %1211
        %1213 = vrot.lane.b32.xlu0 %v1139, 64
        %v1214 = vpop.permute.xlu0 %1213
        %1215 = vrot.lane.b32.xlu0 %v1140, 64
        %v1216 = vpop.permute.xlu0 %1215
        %1217 = vrot.lane.b32.xlu0 %v1141, 64
        %v1218 = vpop.permute.xlu0 %1217
        %1219 = vrot.lane.b32.xlu0 %v1142, 64
        %v1220 = vpop.permute.xlu0 %1219
        %1221 = vrot.lane.b32.xlu0 %v1143, 64
        %v1222 = vpop.permute.xlu0 %1221
        %1223 = vrot.lane.b32.xlu0 %v1144, 64
        %v1224 = vpop.permute.xlu0 %1223
        %1225 = vrot.lane.b32.xlu0 %v1145, 64
        %v1226 = vpop.permute.xlu0 %1225
        %1227 = vrot.lane.b32.xlu0 %v1146, 64
        %v1228 = vpop.permute.xlu0 %1227
        %1229 = vrot.lane.b32.xlu0 %v1147, 64
        %v1230 = vpop.permute.xlu0 %1229
        %1231 = vrot.lane.b32.xlu0 %v1148, 64
        %v1232 = vpop.permute.xlu0 %1231
        %1233 = vrot.lane.b32.xlu0 %v1149, 64
        %v1234 = vpop.permute.xlu0 %1233
        %1235 = vrot.lane.b32.xlu0 %v1150, 64
        %v1236 = vpop.permute.xlu0 %1235
        %1237 = vrot.lane.b32.xlu0 %v1151, 64
        %v1238 = vpop.permute.xlu0 %1237
        %1239 = vrot.lane.b32.xlu0 %v1152, 64
        %v1240 = vpop.permute.xlu0 %1239
        %1241 = vrot.lane.b32.xlu0 %v1153, 64
        %v1242 = vpop.permute.xlu0 %1241
        %1243 = vrot.lane.b32.xlu0 %v1154, 64
        %v1244 = vpop.permute.xlu0 %1243
        %1245 = vrot.lane.b32.xlu0 %v1155, 64
        %v1246 = vpop.permute.xlu0 %1245
        %1247 = vrot.lane.b32.xlu0 %v1156, 64
        %v1248 = vpop.permute.xlu0 %1247
        %1249 = vrot.lane.b32.xlu0 %v1157, 64
        %v1250 = vpop.permute.xlu0 %1249
        %1251 = vrot.lane.b32.xlu0 %v1158, 64
        %v1252 = vpop.permute.xlu0 %1251
        %1253 = vrot.lane.b32.xlu0 %v1159, 64
        %v1254 = vpop.permute.xlu0 %1253
        %1255 = vrot.lane.b32.xlu0 %v1160, 64
        %v1256 = vpop.permute.xlu0 %1255
        %1289 = vst.msk [vmem:[#allocation2 + $0x4] sm:$0xf] %vm820, %v1194
        %1290 = vst.msk [vmem:[#allocation2 + $0x18] sm:$0xf] %vm820, %v1196
        %1291 = vst.msk [vmem:[#allocation2 + $0x2c] sm:$0xf] %vm820, %v1198
        %1292 = vst.msk [vmem:[#allocation2 + $0x40] sm:$0xf] %vm820, %v1200
        %1293 = vst.msk [vmem:[#allocation2 + $0x54] sm:$0xf] %vm820, %v1202
        %1294 = vst.msk [vmem:[#allocation2 + $0x68] sm:$0xf] %vm820, %v1204
        %1295 = vst.msk [vmem:[#allocation2 + $0x7c] sm:$0xf] %vm820, %v1206
        %1296 = vst.msk [vmem:[#allocation2 + $0x90] sm:$0xf] %vm820, %v1208
        %1297 = vst.msk [vmem:[#allocation2 + $0xa4] sm:$0xf] %vm820, %v1210
        %1298 = vst.msk [vmem:[#allocation2 + $0xb8] sm:$0xf] %vm820, %v1212
        %1299 = vst.msk [vmem:[#allocation2 + $0xcc] sm:$0xf] %vm820, %v1214
        %1300 = vst.msk [vmem:[#allocation2 + $0xe0] sm:$0xf] %vm820, %v1216
        %1301 = vst.msk [vmem:[#allocation2 + $0xf4] sm:$0xf] %vm820, %v1218
        %1302 = vst.msk [vmem:[#allocation2 + $0x108] sm:$0xf] %vm820, %v1220
        %1303 = vst.msk [vmem:[#allocation2 + $0x11c] sm:$0xf] %vm820, %v1222
        %1304 = vst.msk [vmem:[#allocation2 + $0x130] sm:$0xf] %vm820, %v1224
        %1305 = vst.msk [vmem:[#allocation2 + $0x144] sm:$0xf] %vm820, %v1226
        %1306 = vst.msk [vmem:[#allocation2 + $0x158] sm:$0xf] %vm820, %v1228
        %1307 = vst.msk [vmem:[#allocation2 + $0x16c] sm:$0xf] %vm820, %v1230
        %1308 = vst.msk [vmem:[#allocation2 + $0x180] sm:$0xf] %vm820, %v1232
        %1309 = vst.msk [vmem:[#allocation2 + $0x194] sm:$0xf] %vm820, %v1234
        %1310 = vst.msk [vmem:[#allocation2 + $0x1a8] sm:$0xf] %vm820, %v1236
        %1311 = vst.msk [vmem:[#allocation2 + $0x1bc] sm:$0xf] %vm820, %v1238
        %1312 = vst.msk [vmem:[#allocation2 + $0x1d0] sm:$0xf] %vm820, %v1240
        %1313 = vst.msk [vmem:[#allocation2 + $0x1e4] sm:$0xf] %vm820, %v1242
        %1314 = vst.msk [vmem:[#allocation2 + $0x1f8] sm:$0xf] %vm820, %v1244
        %1315 = vst.msk [vmem:[#allocation2 + $0x20c] sm:$0xf] %vm820, %v1246
        %1316 = vst.msk [vmem:[#allocation2 + $0x220] sm:$0xf] %vm820, %v1248
        %1317 = vst.msk [vmem:[#allocation2 + $0x234] sm:$0xf] %vm820, %v1250
        %1318 = vst.msk [vmem:[#allocation2 + $0x248] sm:$0xf] %vm820, %v1252
        %1319 = vst.msk [vmem:[#allocation2 + $0x25c] sm:$0xf] %vm820, %v1254
        %1320 = vst.msk [vmem:[#allocation2 + $0x270] sm:$0xf] %vm820, %v1256
        %v1321 = vld [vmem:[%s1128] sm:$0xf]
        %v1322 = vld [vmem:[%s1128 + $0x4] sm:$0xf]
        %v1323 = vld [vmem:[%s1128 + $0x8] sm:$0x1]
        %v1324 = vld [vmem:[%s1128 + $0xc] sm:$0xf]
        %v1325 = vld [vmem:[%s1128 + $0x10] sm:$0xf]
        %v1326 = vld [vmem:[%s1128 + $0x14] sm:$0x1]
        %v1327 = vld [vmem:[%s1128 + $0x18] sm:$0xf]
        %v1328 = vld [vmem:[%s1128 + $0x1c] sm:$0xf]
        %v1329 = vld [vmem:[%s1128 + $0x20] sm:$0x1]
        %v1330 = vld [vmem:[%s1128 + $0x24] sm:$0xf]
        %v1331 = vld [vmem:[%s1128 + $0x28] sm:$0xf]
        %v1332 = vld [vmem:[%s1128 + $0x2c] sm:$0x1]
        %v1333 = vld [vmem:[%s1128 + $0x30] sm:$0xf]
        %v1334 = vld [vmem:[%s1128 + $0x34] sm:$0xf]
        %v1335 = vld [vmem:[%s1128 + $0x38] sm:$0x1]
        %v1336 = vld [vmem:[%s1128 + $0x3c] sm:$0xf]
        %v1337 = vld [vmem:[%s1128 + $0x40] sm:$0xf]
        %v1338 = vld [vmem:[%s1128 + $0x44] sm:$0x1]
        %v1339 = vld [vmem:[%s1128 + $0x48] sm:$0xf]
        %v1340 = vld [vmem:[%s1128 + $0x4c] sm:$0xf]
        %v1341 = vld [vmem:[%s1128 + $0x50] sm:$0x1]
        %v1342 = vld [vmem:[%s1128 + $0x54] sm:$0xf]
        %v1343 = vld [vmem:[%s1128 + $0x58] sm:$0xf]
        %v1344 = vld [vmem:[%s1128 + $0x5c] sm:$0x1]
        %v1345 = vld [vmem:[%s1128 + $0x60] sm:$0xf]
        %v1346 = vld [vmem:[%s1128 + $0x64] sm:$0xf]
        %v1347 = vld [vmem:[%s1128 + $0x68] sm:$0x1]
        %v1348 = vld [vmem:[%s1128 + $0x6c] sm:$0xf]
        %v1349 = vld [vmem:[%s1128 + $0x70] sm:$0xf]
        %v1350 = vld [vmem:[%s1128 + $0x74] sm:$0x1]
        %v1351 = vld [vmem:[%s1128 + $0x78] sm:$0xf]
        %v1352 = vld [vmem:[%s1128 + $0x7c] sm:$0xf]
        %v1353 = vld [vmem:[%s1128 + $0x80] sm:$0x1]
        %v1354 = vld [vmem:[%s1128 + $0x84] sm:$0xf]
        %v1355 = vld [vmem:[%s1128 + $0x88] sm:$0xf]
        %v1356 = vld [vmem:[%s1128 + $0x8c] sm:$0x1]
        %v1357 = vld [vmem:[%s1128 + $0x90] sm:$0xf]
        %v1358 = vld [vmem:[%s1128 + $0x94] sm:$0xf]
        %v1359 = vld [vmem:[%s1128 + $0x98] sm:$0x1]
        %v1360 = vld [vmem:[%s1128 + $0x9c] sm:$0xf]
        %v1361 = vld [vmem:[%s1128 + $0xa0] sm:$0xf]
        %v1362 = vld [vmem:[%s1128 + $0xa4] sm:$0x1]
        %v1363 = vld [vmem:[%s1128 + $0xa8] sm:$0xf]
        %v1364 = vld [vmem:[%s1128 + $0xac] sm:$0xf]
        %v1365 = vld [vmem:[%s1128 + $0xb0] sm:$0x1]
        %v1366 = vld [vmem:[%s1128 + $0xb4] sm:$0xf]
        %v1367 = vld [vmem:[%s1128 + $0xb8] sm:$0xf]
        %v1368 = vld [vmem:[%s1128 + $0xbc] sm:$0x1]
        %v1370 = vshrl.u32 %v1321, 16
        %v1372 = vrot.slane %v1370, 4
        %v1373 = vshll.u32 %v1321, 16
        %v1375 = vrot.slane %v1373, 5
        %v1376 = vor.u32 %v1372, %v1375
        %v1377 = vrot.slane %v1376, 4
        %v1379 = vshll.u32 %v1322, 16
        %v1381 = vrot.slane %v1379, 5
        %v1382 = vsel %vm339, %v1377, %v1381
        %v1383 = vshrl.u32 %v1322, 16
        %v1385 = vrot.slane %v1383, 4
        %v1386 = vor.u32 %v1385, %v1381
        %v1387 = vrot.slane %v1386, 4
        %v1389 = vshll.u32 %v1323, 16
        %v1391 = vrot.slane %v1389, 5
        %v1392 = vsel %vm339, %v1387, %v1391
        %v1394 = vshrl.u32 %v1324, 16
        %v1396 = vrot.slane %v1394, 4
        %v1397 = vshll.u32 %v1324, 16
        %v1399 = vrot.slane %v1397, 5
        %v1400 = vor.u32 %v1396, %v1399
        %v1401 = vrot.slane %v1400, 4
        %v1403 = vshll.u32 %v1325, 16
        %v1405 = vrot.slane %v1403, 5
        %v1406 = vsel %vm339, %v1401, %v1405
        %v1407 = vshrl.u32 %v1325, 16
        %v1409 = vrot.slane %v1407, 4
        %v1410 = vor.u32 %v1409, %v1405
        %v1411 = vrot.slane %v1410, 4
        %v1413 = vshll.u32 %v1326, 16
        %v1415 = vrot.slane %v1413, 5
        %v1416 = vsel %vm339, %v1411, %v1415
        %v1418 = vshrl.u32 %v1327, 16
        %v1420 = vrot.slane %v1418, 4
        %v1421 = vshll.u32 %v1327, 16
        %v1423 = vrot.slane %v1421, 5
        %v1424 = vor.u32 %v1420, %v1423
        %v1425 = vrot.slane %v1424, 4
        %v1427 = vshll.u32 %v1328, 16
        %v1429 = vrot.slane %v1427, 5
        %v1430 = vsel %vm339, %v1425, %v1429
        %v1431 = vshrl.u32 %v1328, 16
        %v1433 = vrot.slane %v1431, 4
        %v1434 = vor.u32 %v1433, %v1429
        %v1435 = vrot.slane %v1434, 4
        %v1437 = vshll.u32 %v1329, 16
        %v1439 = vrot.slane %v1437, 5
        %v1440 = vsel %vm339, %v1435, %v1439
        %v1442 = vshrl.u32 %v1330, 16
        %v1444 = vrot.slane %v1442, 4
        %v1445 = vshll.u32 %v1330, 16
        %v1447 = vrot.slane %v1445, 5
        %v1448 = vor.u32 %v1444, %v1447
        %v1449 = vrot.slane %v1448, 4
        %v1451 = vshll.u32 %v1331, 16
        %v1453 = vrot.slane %v1451, 5
        %v1454 = vsel %vm339, %v1449, %v1453
        %v1455 = vshrl.u32 %v1331, 16
        %v1457 = vrot.slane %v1455, 4
        %v1458 = vor.u32 %v1457, %v1453
        %v1459 = vrot.slane %v1458, 4
        %v1461 = vshll.u32 %v1332, 16
        %v1463 = vrot.slane %v1461, 5
        %v1464 = vsel %vm339, %v1459, %v1463
        %v1466 = vshrl.u32 %v1333, 16
        %v1468 = vrot.slane %v1466, 4
        %v1469 = vshll.u32 %v1333, 16
        %v1471 = vrot.slane %v1469, 5
        %v1472 = vor.u32 %v1468, %v1471
        %v1473 = vrot.slane %v1472, 4
        %v1475 = vshll.u32 %v1334, 16
        %v1477 = vrot.slane %v1475, 5
        %v1478 = vsel %vm339, %v1473, %v1477
        %v1479 = vshrl.u32 %v1334, 16
        %v1481 = vrot.slane %v1479, 4
        %v1482 = vor.u32 %v1481, %v1477
        %v1483 = vrot.slane %v1482, 4
        %v1485 = vshll.u32 %v1335, 16
        %v1487 = vrot.slane %v1485, 5
        %v1488 = vsel %vm339, %v1483, %v1487
        %v1490 = vshrl.u32 %v1336, 16
        %v1492 = vrot.slane %v1490, 4
        %v1493 = vshll.u32 %v1336, 16
        %v1495 = vrot.slane %v1493, 5
        %v1496 = vor.u32 %v1492, %v1495
        %v1497 = vrot.slane %v1496, 4
        %v1499 = vshll.u32 %v1337, 16
        %v1501 = vrot.slane %v1499, 5
        %v1502 = vsel %vm339, %v1497, %v1501
        %v1503 = vshrl.u32 %v1337, 16
        %v1505 = vrot.slane %v1503, 4
        %v1506 = vor.u32 %v1505, %v1501
        %v1507 = vrot.slane %v1506, 4
        %v1509 = vshll.u32 %v1338, 16
        %v1511 = vrot.slane %v1509, 5
        %v1512 = vsel %vm339, %v1507, %v1511
        %v1514 = vshrl.u32 %v1339, 16
        %v1516 = vrot.slane %v1514, 4
        %v1517 = vshll.u32 %v1339, 16
        %v1519 = vrot.slane %v1517, 5
        %v1520 = vor.u32 %v1516, %v1519
        %v1521 = vrot.slane %v1520, 4
        %v1523 = vshll.u32 %v1340, 16
        %v1525 = vrot.slane %v1523, 5
        %v1526 = vsel %vm339, %v1521, %v1525
        %v1527 = vshrl.u32 %v1340, 16
        %v1529 = vrot.slane %v1527, 4
        %v1530 = vor.u32 %v1529, %v1525
        %v1531 = vrot.slane %v1530, 4
        %v1533 = vshll.u32 %v1341, 16
        %v1535 = vrot.slane %v1533, 5
        %v1536 = vsel %vm339, %v1531, %v1535
        %v1538 = vshrl.u32 %v1342, 16
        %v1540 = vrot.slane %v1538, 4
        %v1541 = vshll.u32 %v1342, 16
        %v1543 = vrot.slane %v1541, 5
        %v1544 = vor.u32 %v1540, %v1543
        %v1545 = vrot.slane %v1544, 4
        %v1547 = vshll.u32 %v1343, 16
        %v1549 = vrot.slane %v1547, 5
        %v1550 = vsel %vm339, %v1545, %v1549
        %v1551 = vshrl.u32 %v1343, 16
        %v1553 = vrot.slane %v1551, 4
        %v1554 = vor.u32 %v1553, %v1549
        %v1555 = vrot.slane %v1554, 4
        %v1557 = vshll.u32 %v1344, 16
        %v1559 = vrot.slane %v1557, 5
        %v1560 = vsel %vm339, %v1555, %v1559
        %v1562 = vshrl.u32 %v1345, 16
        %v1564 = vrot.slane %v1562, 4
        %v1565 = vshll.u32 %v1345, 16
        %v1567 = vrot.slane %v1565, 5
        %v1568 = vor.u32 %v1564, %v1567
        %v1569 = vrot.slane %v1568, 4
        %v1571 = vshll.u32 %v1346, 16
        %v1573 = vrot.slane %v1571, 5
        %v1574 = vsel %vm339, %v1569, %v1573
        %v1575 = vshrl.u32 %v1346, 16
        %v1577 = vrot.slane %v1575, 4
        %v1578 = vor.u32 %v1577, %v1573
        %v1579 = vrot.slane %v1578, 4
        %v1581 = vshll.u32 %v1347, 16
        %v1583 = vrot.slane %v1581, 5
        %v1584 = vsel %vm339, %v1579, %v1583
        %v1586 = vshrl.u32 %v1348, 16
        %v1588 = vrot.slane %v1586, 4
        %v1589 = vshll.u32 %v1348, 16
        %v1591 = vrot.slane %v1589, 5
        %v1592 = vor.u32 %v1588, %v1591
        %v1593 = vrot.slane %v1592, 4
        %v1595 = vshll.u32 %v1349, 16
        %v1597 = vrot.slane %v1595, 5
        %v1598 = vsel %vm339, %v1593, %v1597
        %v1599 = vshrl.u32 %v1349, 16
        %v1601 = vrot.slane %v1599, 4
        %v1602 = vor.u32 %v1601, %v1597
        %v1603 = vrot.slane %v1602, 4
        %v1605 = vshll.u32 %v1350, 16
        %v1607 = vrot.slane %v1605, 5
        %v1608 = vsel %vm339, %v1603, %v1607
        %v1610 = vshrl.u32 %v1351, 16
        %v1612 = vrot.slane %v1610, 4
        %v1613 = vshll.u32 %v1351, 16
        %v1615 = vrot.slane %v1613, 5
        %v1616 = vor.u32 %v1612, %v1615
        %v1617 = vrot.slane %v1616, 4
        %v1619 = vshll.u32 %v1352, 16
        %v1621 = vrot.slane %v1619, 5
        %v1622 = vsel %vm339, %v1617, %v1621
        %v1623 = vshrl.u32 %v1352, 16
        %v1625 = vrot.slane %v1623, 4
        %v1626 = vor.u32 %v1625, %v1621
        %v1627 = vrot.slane %v1626, 4
        %v1629 = vshll.u32 %v1353, 16
        %v1631 = vrot.slane %v1629, 5
        %v1632 = vsel %vm339, %v1627, %v1631
        %v1634 = vshrl.u32 %v1354, 16
        %v1636 = vrot.slane %v1634, 4
        %v1637 = vshll.u32 %v1354, 16
        %v1639 = vrot.slane %v1637, 5
        %v1640 = vor.u32 %v1636, %v1639
        %v1641 = vrot.slane %v1640, 4
        %v1643 = vshll.u32 %v1355, 16
        %v1645 = vrot.slane %v1643, 5
        %v1646 = vsel %vm339, %v1641, %v1645
        %v1647 = vshrl.u32 %v1355, 16
        %v1649 = vrot.slane %v1647, 4
        %v1650 = vor.u32 %v1649, %v1645
        %v1651 = vrot.slane %v1650, 4
        %v1653 = vshll.u32 %v1356, 16
        %v1655 = vrot.slane %v1653, 5
        %v1656 = vsel %vm339, %v1651, %v1655
        %v1658 = vshrl.u32 %v1357, 16
        %v1660 = vrot.slane %v1658, 4
        %v1661 = vshll.u32 %v1357, 16
        %v1663 = vrot.slane %v1661, 5
        %v1664 = vor.u32 %v1660, %v1663
        %v1665 = vrot.slane %v1664, 4
        %v1667 = vshll.u32 %v1358, 16
        %v1669 = vrot.slane %v1667, 5
        %v1670 = vsel %vm339, %v1665, %v1669
        %v1671 = vshrl.u32 %v1358, 16
        %v1673 = vrot.slane %v1671, 4
        %v1674 = vor.u32 %v1673, %v1669
        %v1675 = vrot.slane %v1674, 4
        %v1677 = vshll.u32 %v1359, 16
        %v1679 = vrot.slane %v1677, 5
        %v1680 = vsel %vm339, %v1675, %v1679
        %v1682 = vshrl.u32 %v1360, 16
        %v1684 = vrot.slane %v1682, 4
        %v1685 = vshll.u32 %v1360, 16
        %v1687 = vrot.slane %v1685, 5
        %v1688 = vor.u32 %v1684, %v1687
        %v1689 = vrot.slane %v1688, 4
        %v1691 = vshll.u32 %v1361, 16
        %v1693 = vrot.slane %v1691, 5
        %v1694 = vsel %vm339, %v1689, %v1693
        %v1695 = vshrl.u32 %v1361, 16
        %v1697 = vrot.slane %v1695, 4
        %v1698 = vor.u32 %v1697, %v1693
        %v1699 = vrot.slane %v1698, 4
        %v1701 = vshll.u32 %v1362, 16
        %v1703 = vrot.slane %v1701, 5
        %v1704 = vsel %vm339, %v1699, %v1703
        %v1706 = vshrl.u32 %v1363, 16
        %v1708 = vrot.slane %v1706, 4
        %v1709 = vshll.u32 %v1363, 16
        %v1711 = vrot.slane %v1709, 5
        %v1712 = vor.u32 %v1708, %v1711
        %v1713 = vrot.slane %v1712, 4
        %v1715 = vshll.u32 %v1364, 16
        %v1717 = vrot.slane %v1715, 5
        %v1718 = vsel %vm339, %v1713, %v1717
        %v1719 = vshrl.u32 %v1364, 16
        %v1721 = vrot.slane %v1719, 4
        %v1722 = vor.u32 %v1721, %v1717
        %v1723 = vrot.slane %v1722, 4
        %v1725 = vshll.u32 %v1365, 16
        %v1727 = vrot.slane %v1725, 5
        %v1728 = vsel %vm339, %v1723, %v1727
        %v1730 = vshrl.u32 %v1366, 16
        %v1732 = vrot.slane %v1730, 4
        %v1733 = vshll.u32 %v1366, 16
        %v1735 = vrot.slane %v1733, 5
        %v1736 = vor.u32 %v1732, %v1735
        %v1737 = vrot.slane %v1736, 4
        %v1739 = vshll.u32 %v1367, 16
        %v1741 = vrot.slane %v1739, 5
        %v1742 = vsel %vm339, %v1737, %v1741
        %v1743 = vshrl.u32 %v1367, 16
        %v1745 = vrot.slane %v1743, 4
        %v1746 = vor.u32 %v1745, %v1741
        %v1747 = vrot.slane %v1746, 4
        %v1749 = vshll.u32 %v1368, 16
        %v1751 = vrot.slane %v1749, 5
        %v1752 = vsel %vm339, %v1747, %v1751
        %1785 = vst.msk [vmem:[#allocation2 + $0x8] sm:$0xf] %vm256, %v1382
        %1786 = vst.msk [vmem:[#allocation2 + $0x1c] sm:$0xf] %vm256, %v1392
        %1787 = vst.msk [vmem:[#allocation2 + $0x30] sm:$0xf] %vm256, %v1406
        %1788 = vst.msk [vmem:[#allocation2 + $0x44] sm:$0xf] %vm256, %v1416
        %1789 = vst.msk [vmem:[#allocation2 + $0x58] sm:$0xf] %vm256, %v1430
        %1790 = vst.msk [vmem:[#allocation2 + $0x6c] sm:$0xf] %vm256, %v1440
        %1791 = vst.msk [vmem:[#allocation2 + $0x80] sm:$0xf] %vm256, %v1454
        %1792 = vst.msk [vmem:[#allocation2 + $0x94] sm:$0xf] %vm256, %v1464
        %1793 = vst.msk [vmem:[#allocation2 + $0xa8] sm:$0xf] %vm256, %v1478
        %1794 = vst.msk [vmem:[#allocation2 + $0xbc] sm:$0xf] %vm256, %v1488
        %1795 = vst.msk [vmem:[#allocation2 + $0xd0] sm:$0xf] %vm256, %v1502
        %1796 = vst.msk [vmem:[#allocation2 + $0xe4] sm:$0xf] %vm256, %v1512
        %1797 = vst.msk [vmem:[#allocation2 + $0xf8] sm:$0xf] %vm256, %v1526
        %1798 = vst.msk [vmem:[#allocation2 + $0x10c] sm:$0xf] %vm256, %v1536
        %1799 = vst.msk [vmem:[#allocation2 + $0x120] sm:$0xf] %vm256, %v1550
        %1800 = vst.msk [vmem:[#allocation2 + $0x134] sm:$0xf] %vm256, %v1560
        %1801 = vst.msk [vmem:[#allocation2 + $0x148] sm:$0xf] %vm256, %v1574
        %1802 = vst.msk [vmem:[#allocation2 + $0x15c] sm:$0xf] %vm256, %v1584
        %1803 = vst.msk [vmem:[#allocation2 + $0x170] sm:$0xf] %vm256, %v1598
        %1804 = vst.msk [vmem:[#allocation2 + $0x184] sm:$0xf] %vm256, %v1608
        %1805 = vst.msk [vmem:[#allocation2 + $0x198] sm:$0xf] %vm256, %v1622
        %1806 = vst.msk [vmem:[#allocation2 + $0x1ac] sm:$0xf] %vm256, %v1632
        %1807 = vst.msk [vmem:[#allocation2 + $0x1c0] sm:$0xf] %vm256, %v1646
        %1808 = vst.msk [vmem:[#allocation2 + $0x1d4] sm:$0xf] %vm256, %v1656
        %1809 = vst.msk [vmem:[#allocation2 + $0x1e8] sm:$0xf] %vm256, %v1670
        %1810 = vst.msk [vmem:[#allocation2 + $0x1fc] sm:$0xf] %vm256, %v1680
        %1811 = vst.msk [vmem:[#allocation2 + $0x210] sm:$0xf] %vm256, %v1694
        %1812 = vst.msk [vmem:[#allocation2 + $0x224] sm:$0xf] %vm256, %v1704
        %1813 = vst.msk [vmem:[#allocation2 + $0x238] sm:$0xf] %vm256, %v1718
        %1814 = vst.msk [vmem:[#allocation2 + $0x24c] sm:$0xf] %vm256, %v1728
        %1815 = vst.msk [vmem:[#allocation2 + $0x260] sm:$0xf] %vm256, %v1742
        %1816 = vst.msk [vmem:[#allocation2 + $0x274] sm:$0xf] %vm256, %v1752
        %v1817 = vld [vmem:[%s1128] sm:$0xe]
        %v1818 = vld [vmem:[%s1128 + $0x4] sm:$0xf]
        %v1819 = vld [vmem:[%s1128 + $0x8] sm:$0x1]
        %v1820 = vld [vmem:[%s1128 + $0xc] sm:$0xe]
        %v1821 = vld [vmem:[%s1128 + $0x10] sm:$0xf]
        %v1822 = vld [vmem:[%s1128 + $0x14] sm:$0x1]
        %v1823 = vld [vmem:[%s1128 + $0x18] sm:$0xe]
        %v1824 = vld [vmem:[%s1128 + $0x1c] sm:$0xf]
        %v1825 = vld [vmem:[%s1128 + $0x20] sm:$0x1]
        %v1826 = vld [vmem:[%s1128 + $0x24] sm:$0xe]
        %v1827 = vld [vmem:[%s1128 + $0x28] sm:$0xf]
        %v1828 = vld [vmem:[%s1128 + $0x2c] sm:$0x1]
        %v1829 = vld [vmem:[%s1128 + $0x30] sm:$0xe]
        %v1830 = vld [vmem:[%s1128 + $0x34] sm:$0xf]
        %v1831 = vld [vmem:[%s1128 + $0x38] sm:$0x1]
        %v1832 = vld [vmem:[%s1128 + $0x3c] sm:$0xe]
        %v1833 = vld [vmem:[%s1128 + $0x40] sm:$0xf]
        %v1834 = vld [vmem:[%s1128 + $0x44] sm:$0x1]
        %v1835 = vld [vmem:[%s1128 + $0x48] sm:$0xe]
        %v1836 = vld [vmem:[%s1128 + $0x4c] sm:$0xf]
        %v1837 = vld [vmem:[%s1128 + $0x50] sm:$0x1]
        %v1838 = vld [vmem:[%s1128 + $0x54] sm:$0xe]
        %v1839 = vld [vmem:[%s1128 + $0x58] sm:$0xf]
        %v1840 = vld [vmem:[%s1128 + $0x5c] sm:$0x1]
        %v1841 = vld [vmem:[%s1128 + $0x60] sm:$0xe]
        %v1842 = vld [vmem:[%s1128 + $0x64] sm:$0xf]
        %v1843 = vld [vmem:[%s1128 + $0x68] sm:$0x1]
        %v1844 = vld [vmem:[%s1128 + $0x6c] sm:$0xe]
        %v1845 = vld [vmem:[%s1128 + $0x70] sm:$0xf]
        %v1846 = vld [vmem:[%s1128 + $0x74] sm:$0x1]
        %v1847 = vld [vmem:[%s1128 + $0x78] sm:$0xe]
        %v1848 = vld [vmem:[%s1128 + $0x7c] sm:$0xf]
        %v1849 = vld [vmem:[%s1128 + $0x80] sm:$0x1]
        %v1850 = vld [vmem:[%s1128 + $0x84] sm:$0xe]
        %v1851 = vld [vmem:[%s1128 + $0x88] sm:$0xf]
        %v1852 = vld [vmem:[%s1128 + $0x8c] sm:$0x1]
        %v1853 = vld [vmem:[%s1128 + $0x90] sm:$0xe]
        %v1854 = vld [vmem:[%s1128 + $0x94] sm:$0xf]
        %v1855 = vld [vmem:[%s1128 + $0x98] sm:$0x1]
        %v1856 = vld [vmem:[%s1128 + $0x9c] sm:$0xe]
        %v1857 = vld [vmem:[%s1128 + $0xa0] sm:$0xf]
        %v1858 = vld [vmem:[%s1128 + $0xa4] sm:$0x1]
        %v1859 = vld [vmem:[%s1128 + $0xa8] sm:$0xe]
        %v1860 = vld [vmem:[%s1128 + $0xac] sm:$0xf]
        %v1861 = vld [vmem:[%s1128 + $0xb0] sm:$0x1]
        %v1862 = vld [vmem:[%s1128 + $0xb4] sm:$0xe]
        %v1863 = vld [vmem:[%s1128 + $0xb8] sm:$0xf]
        %v1864 = vld [vmem:[%s1128 + $0xbc] sm:$0x1]
        %v1913 = vrot.slane %v1817, 5
        %v1914 = vrot.slane %v1913, 4
        %v1915 = vrot.slane %v1818, 5
        %v1916 = vsel %vm951, %v1914, %v1915
        %v1917 = vrot.slane %v1915, 4
        %v1918 = vrot.slane %v1819, 5
        %v1919 = vsel %vm951, %v1917, %v1918
        %v1920 = vrot.slane %v1820, 5
        %v1921 = vrot.slane %v1920, 4
        %v1922 = vrot.slane %v1821, 5
        %v1923 = vsel %vm951, %v1921, %v1922
        %v1924 = vrot.slane %v1922, 4
        %v1925 = vrot.slane %v1822, 5
        %v1926 = vsel %vm951, %v1924, %v1925
        %v1927 = vrot.slane %v1823, 5
        %v1928 = vrot.slane %v1927, 4
        %v1929 = vrot.slane %v1824, 5
        %v1930 = vsel %vm951, %v1928, %v1929
        %v1931 = vrot.slane %v1929, 4
        %v1932 = vrot.slane %v1825, 5
        %v1933 = vsel %vm951, %v1931, %v1932
        %v1934 = vrot.slane %v1826, 5
        %v1935 = vrot.slane %v1934, 4
        %v1936 = vrot.slane %v1827, 5
        %v1937 = vsel %vm951, %v1935, %v1936
        %v1938 = vrot.slane %v1936, 4
        %v1939 = vrot.slane %v1828, 5
        %v1940 = vsel %vm951, %v1938, %v1939
        %v1941 = vrot.slane %v1829, 5
        %v1942 = vrot.slane %v1941, 4
        %v1943 = vrot.slane %v1830, 5
        %v1944 = vsel %vm951, %v1942, %v1943
        %v1945 = vrot.slane %v1943, 4
        %v1946 = vrot.slane %v1831, 5
        %v1947 = vsel %vm951, %v1945, %v1946
        %v1948 = vrot.slane %v1832, 5
        %v1949 = vrot.slane %v1948, 4
        %v1950 = vrot.slane %v1833, 5
        %v1951 = vsel %vm951, %v1949, %v1950
        %v1952 = vrot.slane %v1950, 4
        %v1953 = vrot.slane %v1834, 5
        %v1954 = vsel %vm951, %v1952, %v1953
        %v1955 = vrot.slane %v1835, 5
        %v1956 = vrot.slane %v1955, 4
        %v1957 = vrot.slane %v1836, 5
        %v1958 = vsel %vm951, %v1956, %v1957
        %v1959 = vrot.slane %v1957, 4
        %v1960 = vrot.slane %v1837, 5
        %v1961 = vsel %vm951, %v1959, %v1960
        %v1962 = vrot.slane %v1838, 5
        %v1963 = vrot.slane %v1962, 4
        %v1964 = vrot.slane %v1839, 5
        %v1965 = vsel %vm951, %v1963, %v1964
        %v1966 = vrot.slane %v1964, 4
        %v1967 = vrot.slane %v1840, 5
        %v1968 = vsel %vm951, %v1966, %v1967
        %v1969 = vrot.slane %v1841, 5
        %v1970 = vrot.slane %v1969, 4
        %v1971 = vrot.slane %v1842, 5
        %v1972 = vsel %vm951, %v1970, %v1971
        %v1973 = vrot.slane %v1971, 4
        %v1974 = vrot.slane %v1843, 5
        %v1975 = vsel %vm951, %v1973, %v1974
        %v1976 = vrot.slane %v1844, 5
        %v1977 = vrot.slane %v1976, 4
        %v1978 = vrot.slane %v1845, 5
        %v1979 = vsel %vm951, %v1977, %v1978
        %v1980 = vrot.slane %v1978, 4
        %v1981 = vrot.slane %v1846, 5
        %v1982 = vsel %vm951, %v1980, %v1981
        %v1983 = vrot.slane %v1847, 5
        %v1984 = vrot.slane %v1983, 4
        %v1985 = vrot.slane %v1848, 5
        %v1986 = vsel %vm951, %v1984, %v1985
        %v1987 = vrot.slane %v1985, 4
        %v1988 = vrot.slane %v1849, 5
        %v1989 = vsel %vm951, %v1987, %v1988
        %v1990 = vrot.slane %v1850, 5
        %v1991 = vrot.slane %v1990, 4
        %v1992 = vrot.slane %v1851, 5
        %v1993 = vsel %vm951, %v1991, %v1992
        %v1994 = vrot.slane %v1992, 4
        %v1995 = vrot.slane %v1852, 5
        %v1996 = vsel %vm951, %v1994, %v1995
        %v1997 = vrot.slane %v1853, 5
        %v1998 = vrot.slane %v1997, 4
        %v1999 = vrot.slane %v1854, 5
        %v2000 = vsel %vm951, %v1998, %v1999
        %v2001 = vrot.slane %v1999, 4
        %v2002 = vrot.slane %v1855, 5
        %v2003 = vsel %vm951, %v2001, %v2002
        %v2004 = vrot.slane %v1856, 5
        %v2005 = vrot.slane %v2004, 4
        %v2006 = vrot.slane %v1857, 5
        %v2007 = vsel %vm951, %v2005, %v2006
        %v2008 = vrot.slane %v2006, 4
        %v2009 = vrot.slane %v1858, 5
        %v2010 = vsel %vm951, %v2008, %v2009
        %v2011 = vrot.slane %v1859, 5
        %v2012 = vrot.slane %v2011, 4
        %v2013 = vrot.slane %v1860, 5
        %v2014 = vsel %vm951, %v2012, %v2013
        %v2015 = vrot.slane %v2013, 4
        %v2016 = vrot.slane %v1861, 5
        %v2017 = vsel %vm951, %v2015, %v2016
        %v2018 = vrot.slane %v1862, 5
        %v2019 = vrot.slane %v2018, 4
        %v2020 = vrot.slane %v1863, 5
        %v2021 = vsel %vm951, %v2019, %v2020
        %v2022 = vrot.slane %v2020, 4
        %v2023 = vrot.slane %v1864, 5
        %v2024 = vsel %vm951, %v2022, %v2023
        %2025 = vrot.lane.b32.xlu0 %v1916, 64
        %v2026 = vpop.permute.xlu0 %2025
        %2027 = vrot.lane.b32.xlu0 %v1919, 64
        %v2028 = vpop.permute.xlu0 %2027
        %2029 = vrot.lane.b32.xlu0 %v1923, 64
        %v2030 = vpop.permute.xlu0 %2029
        %2031 = vrot.lane.b32.xlu0 %v1926, 64
        %v2032 = vpop.permute.xlu0 %2031
        %2033 = vrot.lane.b32.xlu0 %v1930, 64
        %v2034 = vpop.permute.xlu0 %2033
        %2035 = vrot.lane.b32.xlu0 %v1933, 64
        %v2036 = vpop.permute.xlu0 %2035
        %2037 = vrot.lane.b32.xlu0 %v1937, 64
        %v2038 = vpop.permute.xlu0 %2037
        %2039 = vrot.lane.b32.xlu0 %v1940, 64
        %v2040 = vpop.permute.xlu0 %2039
        %2041 = vrot.lane.b32.xlu0 %v1944, 64
        %v2042 = vpop.permute.xlu0 %2041
        %2043 = vrot.lane.b32.xlu0 %v1947, 64
        %v2044 = vpop.permute.xlu0 %2043
        %2045 = vrot.lane.b32.xlu0 %v1951, 64
        %v2046 = vpop.permute.xlu0 %2045
        %2047 = vrot.lane.b32.xlu0 %v1954, 64
        %v2048 = vpop.permute.xlu0 %2047
        %2049 = vrot.lane.b32.xlu0 %v1958, 64
        %v2050 = vpop.permute.xlu0 %2049
        %2051 = vrot.lane.b32.xlu0 %v1961, 64
        %v2052 = vpop.permute.xlu0 %2051
        %2053 = vrot.lane.b32.xlu0 %v1965, 64
        %v2054 = vpop.permute.xlu0 %2053
        %2055 = vrot.lane.b32.xlu0 %v1968, 64
        %v2056 = vpop.permute.xlu0 %2055
        %2057 = vrot.lane.b32.xlu0 %v1972, 64
        %v2058 = vpop.permute.xlu0 %2057
        %2059 = vrot.lane.b32.xlu0 %v1975, 64
        %v2060 = vpop.permute.xlu0 %2059
        %2061 = vrot.lane.b32.xlu0 %v1979, 64
        %v2062 = vpop.permute.xlu0 %2061
        %2063 = vrot.lane.b32.xlu0 %v1982, 64
        %v2064 = vpop.permute.xlu0 %2063
        %2065 = vrot.lane.b32.xlu0 %v1986, 64
        %v2066 = vpop.permute.xlu0 %2065
        %2067 = vrot.lane.b32.xlu0 %v1989, 64
        %v2068 = vpop.permute.xlu0 %2067
        %2069 = vrot.lane.b32.xlu0 %v1993, 64
        %v2070 = vpop.permute.xlu0 %2069
        %2071 = vrot.lane.b32.xlu0 %v1996, 64
        %v2072 = vpop.permute.xlu0 %2071
        %2073 = vrot.lane.b32.xlu0 %v2000, 64
        %v2074 = vpop.permute.xlu0 %2073
        %2075 = vrot.lane.b32.xlu0 %v2003, 64
        %v2076 = vpop.permute.xlu0 %2075
        %2077 = vrot.lane.b32.xlu0 %v2007, 64
        %v2078 = vpop.permute.xlu0 %2077
        %2079 = vrot.lane.b32.xlu0 %v2010, 64
        %v2080 = vpop.permute.xlu0 %2079
        %2081 = vrot.lane.b32.xlu0 %v2014, 64
        %v2082 = vpop.permute.xlu0 %2081
        %2083 = vrot.lane.b32.xlu0 %v2017, 64
        %v2084 = vpop.permute.xlu0 %2083
        %2085 = vrot.lane.b32.xlu0 %v2021, 64
        %v2086 = vpop.permute.xlu0 %2085
        %2087 = vrot.lane.b32.xlu0 %v2024, 64
        %v2088 = vpop.permute.xlu0 %2087
        %2121 = vst.msk [vmem:[#allocation2 + $0x8] sm:$0xf] %vm820, %v2026
        %2122 = vst.msk [vmem:[#allocation2 + $0x1c] sm:$0xf] %vm820, %v2028
        %2123 = vst.msk [vmem:[#allocation2 + $0x30] sm:$0xf] %vm820, %v2030
        %2124 = vst.msk [vmem:[#allocation2 + $0x44] sm:$0xf] %vm820, %v2032
        %2125 = vst.msk [vmem:[#allocation2 + $0x58] sm:$0xf] %vm820, %v2034
        %2126 = vst.msk [vmem:[#allocation2 + $0x6c] sm:$0xf] %vm820, %v2036
        %2127 = vst.msk [vmem:[#allocation2 + $0x80] sm:$0xf] %vm820, %v2038
        %2128 = vst.msk [vmem:[#allocation2 + $0x94] sm:$0xf] %vm820, %v2040
        %2129 = vst.msk [vmem:[#allocation2 + $0xa8] sm:$0xf] %vm820, %v2042
        %2130 = vst.msk [vmem:[#allocation2 + $0xbc] sm:$0xf] %vm820, %v2044
        %2131 = vst.msk [vmem:[#allocation2 + $0xd0] sm:$0xf] %vm820, %v2046
        %2132 = vst.msk [vmem:[#allocation2 + $0xe4] sm:$0xf] %vm820, %v2048
        %2133 = vst.msk [vmem:[#allocation2 + $0xf8] sm:$0xf] %vm820, %v2050
        %2134 = vst.msk [vmem:[#allocation2 + $0x10c] sm:$0xf] %vm820, %v2052
        %2135 = vst.msk [vmem:[#allocation2 + $0x120] sm:$0xf] %vm820, %v2054
        %2136 = vst.msk [vmem:[#allocation2 + $0x134] sm:$0xf] %vm820, %v2056
        %2137 = vst.msk [vmem:[#allocation2 + $0x148] sm:$0xf] %vm820, %v2058
        %2138 = vst.msk [vmem:[#allocation2 + $0x15c] sm:$0xf] %vm820, %v2060
        %2139 = vst.msk [vmem:[#allocation2 + $0x170] sm:$0xf] %vm820, %v2062
        %2140 = vst.msk [vmem:[#allocation2 + $0x184] sm:$0xf] %vm820, %v2064
        %2141 = vst.msk [vmem:[#allocation2 + $0x198] sm:$0xf] %vm820, %v2066
        %2142 = vst.msk [vmem:[#allocation2 + $0x1ac] sm:$0xf] %vm820, %v2068
        %2143 = vst.msk [vmem:[#allocation2 + $0x1c0] sm:$0xf] %vm820, %v2070
        %2144 = vst.msk [vmem:[#allocation2 + $0x1d4] sm:$0xf] %vm820, %v2072
        %2145 = vst.msk [vmem:[#allocation2 + $0x1e8] sm:$0xf] %vm820, %v2074
        %2146 = vst.msk [vmem:[#allocation2 + $0x1fc] sm:$0xf] %vm820, %v2076
        %2147 = vst.msk [vmem:[#allocation2 + $0x210] sm:$0xf] %vm820, %v2078
        %2148 = vst.msk [vmem:[#allocation2 + $0x224] sm:$0xf] %vm820, %v2080
        %2149 = vst.msk [vmem:[#allocation2 + $0x238] sm:$0xf] %vm820, %v2082
        %2150 = vst.msk [vmem:[#allocation2 + $0x24c] sm:$0xf] %vm820, %v2084
        %2151 = vst.msk [vmem:[#allocation2 + $0x260] sm:$0xf] %vm820, %v2086
        %2152 = vst.msk [vmem:[#allocation2 + $0x274] sm:$0xf] %vm820, %v2088
        %s2153 = scalar_lea.vmem %s222, 24
        %v2154 = vld [vmem:[%s2153] sm:$0xf]
        %v2155 = vld [vmem:[%s2153 + $0x4] sm:$0xf]
        %v2156 = vld [vmem:[%s2153 + $0xc] sm:$0xf]
        %v2157 = vld [vmem:[%s2153 + $0x10] sm:$0xf]
        %v2158 = vld [vmem:[%s2153 + $0x18] sm:$0xf]
        %v2159 = vld [vmem:[%s2153 + $0x1c] sm:$0xf]
        %v2160 = vld [vmem:[%s2153 + $0x24] sm:$0xf]
        %v2161 = vld [vmem:[%s2153 + $0x28] sm:$0xf]
        %v2162 = vld [vmem:[%s2153 + $0x30] sm:$0xf]
        %v2163 = vld [vmem:[%s2153 + $0x34] sm:$0xf]
        %v2164 = vld [vmem:[%s2153 + $0x3c] sm:$0xf]
        %v2165 = vld [vmem:[%s2153 + $0x40] sm:$0xf]
        %v2166 = vld [vmem:[%s2153 + $0x48] sm:$0xf]
        %v2167 = vld [vmem:[%s2153 + $0x4c] sm:$0xf]
        %v2168 = vld [vmem:[%s2153 + $0x54] sm:$0xf]
        %v2169 = vld [vmem:[%s2153 + $0x58] sm:$0xf]
        %v2170 = vld [vmem:[%s2153 + $0x60] sm:$0xf]
        %v2171 = vld [vmem:[%s2153 + $0x64] sm:$0xf]
        %v2172 = vld [vmem:[%s2153 + $0x6c] sm:$0xf]
        %v2173 = vld [vmem:[%s2153 + $0x70] sm:$0xf]
        %v2174 = vld [vmem:[%s2153 + $0x78] sm:$0xf]
        %v2175 = vld [vmem:[%s2153 + $0x7c] sm:$0xf]
        %v2176 = vld [vmem:[%s2153 + $0x84] sm:$0xf]
        %v2177 = vld [vmem:[%s2153 + $0x88] sm:$0xf]
        %v2178 = vld [vmem:[%s2153 + $0x90] sm:$0xf]
        %v2179 = vld [vmem:[%s2153 + $0x94] sm:$0xf]
        %v2180 = vld [vmem:[%s2153 + $0x9c] sm:$0xf]
        %v2181 = vld [vmem:[%s2153 + $0xa0] sm:$0xf]
        %v2182 = vld [vmem:[%s2153 + $0xa8] sm:$0xf]
        %v2183 = vld [vmem:[%s2153 + $0xac] sm:$0xf]
        %v2184 = vld [vmem:[%s2153 + $0xb4] sm:$0xf]
        %v2185 = vld [vmem:[%s2153 + $0xb8] sm:$0xf]
        %2186 = vst.msk [vmem:[#allocation2 + $0xc] sm:$0xf] %vm256, %v2154
        %2187 = vst.msk [vmem:[#allocation2 + $0x20] sm:$0xf] %vm256, %v2155
        %2188 = vst.msk [vmem:[#allocation2 + $0x34] sm:$0xf] %vm256, %v2156
        %2189 = vst.msk [vmem:[#allocation2 + $0x48] sm:$0xf] %vm256, %v2157
        %2190 = vst.msk [vmem:[#allocation2 + $0x5c] sm:$0xf] %vm256, %v2158
        %2191 = vst.msk [vmem:[#allocation2 + $0x70] sm:$0xf] %vm256, %v2159
        %2192 = vst.msk [vmem:[#allocation2 + $0x84] sm:$0xf] %vm256, %v2160
        %2193 = vst.msk [vmem:[#allocation2 + $0x98] sm:$0xf] %vm256, %v2161
        %2194 = vst.msk [vmem:[#allocation2 + $0xac] sm:$0xf] %vm256, %v2162
        %2195 = vst.msk [vmem:[#allocation2 + $0xc0] sm:$0xf] %vm256, %v2163
        %2196 = vst.msk [vmem:[#allocation2 + $0xd4] sm:$0xf] %vm256, %v2164
        %2197 = vst.msk [vmem:[#allocation2 + $0xe8] sm:$0xf] %vm256, %v2165
        %2198 = vst.msk [vmem:[#allocation2 + $0xfc] sm:$0xf] %vm256, %v2166
        %2199 = vst.msk [vmem:[#allocation2 + $0x110] sm:$0xf] %vm256, %v2167
        %2200 = vst.msk [vmem:[#allocation2 + $0x124] sm:$0xf] %vm256, %v2168
        %2201 = vst.msk [vmem:[#allocation2 + $0x138] sm:$0xf] %vm256, %v2169
        %2202 = vst.msk [vmem:[#allocation2 + $0x14c] sm:$0xf] %vm256, %v2170
        %2203 = vst.msk [vmem:[#allocation2 + $0x160] sm:$0xf] %vm256, %v2171
        %2204 = vst.msk [vmem:[#allocation2 + $0x174] sm:$0xf] %vm256, %v2172
        %2205 = vst.msk [vmem:[#allocation2 + $0x188] sm:$0xf] %vm256, %v2173
        %2206 = vst.msk [vmem:[#allocation2 + $0x19c] sm:$0xf] %vm256, %v2174
        %2207 = vst.msk [vmem:[#allocation2 + $0x1b0] sm:$0xf] %vm256, %v2175
        %2208 = vst.msk [vmem:[#allocation2 + $0x1c4] sm:$0xf] %vm256, %v2176
        %2209 = vst.msk [vmem:[#allocation2 + $0x1d8] sm:$0xf] %vm256, %v2177
        %2210 = vst.msk [vmem:[#allocation2 + $0x1ec] sm:$0xf] %vm256, %v2178
        %2211 = vst.msk [vmem:[#allocation2 + $0x200] sm:$0xf] %vm256, %v2179
        %2212 = vst.msk [vmem:[#allocation2 + $0x214] sm:$0xf] %vm256, %v2180
        %2213 = vst.msk [vmem:[#allocation2 + $0x228] sm:$0xf] %vm256, %v2181
        %2214 = vst.msk [vmem:[#allocation2 + $0x23c] sm:$0xf] %vm256, %v2182
        %2215 = vst.msk [vmem:[#allocation2 + $0x250] sm:$0xf] %vm256, %v2183
        %2216 = vst.msk [vmem:[#allocation2 + $0x264] sm:$0xf] %vm256, %v2184
        %2217 = vst.msk [vmem:[#allocation2 + $0x278] sm:$0xf] %vm256, %v2185
        %v2218 = vld [vmem:[%s2153] sm:$0xf]
        %v2219 = vld [vmem:[%s2153 + $0x4] sm:$0xf]
        %v2220 = vld [vmem:[%s2153 + $0x8] sm:$0x1]
        %v2221 = vld [vmem:[%s2153 + $0xc] sm:$0xf]
        %v2222 = vld [vmem:[%s2153 + $0x10] sm:$0xf]
        %v2223 = vld [vmem:[%s2153 + $0x14] sm:$0x1]
        %v2224 = vld [vmem:[%s2153 + $0x18] sm:$0xf]
        %v2225 = vld [vmem:[%s2153 + $0x1c] sm:$0xf]
        %v2226 = vld [vmem:[%s2153 + $0x20] sm:$0x1]
        %v2227 = vld [vmem:[%s2153 + $0x24] sm:$0xf]
        %v2228 = vld [vmem:[%s2153 + $0x28] sm:$0xf]
        %v2229 = vld [vmem:[%s2153 + $0x2c] sm:$0x1]
        %v2230 = vld [vmem:[%s2153 + $0x30] sm:$0xf]
        %v2231 = vld [vmem:[%s2153 + $0x34] sm:$0xf]
        %v2232 = vld [vmem:[%s2153 + $0x38] sm:$0x1]
        %v2233 = vld [vmem:[%s2153 + $0x3c] sm:$0xf]
        %v2234 = vld [vmem:[%s2153 + $0x40] sm:$0xf]
        %v2235 = vld [vmem:[%s2153 + $0x44] sm:$0x1]
        %v2236 = vld [vmem:[%s2153 + $0x48] sm:$0xf]
        %v2237 = vld [vmem:[%s2153 + $0x4c] sm:$0xf]
        %v2238 = vld [vmem:[%s2153 + $0x50] sm:$0x1]
        %v2239 = vld [vmem:[%s2153 + $0x54] sm:$0xf]
        %v2240 = vld [vmem:[%s2153 + $0x58] sm:$0xf]
        %v2241 = vld [vmem:[%s2153 + $0x5c] sm:$0x1]
        %v2242 = vld [vmem:[%s2153 + $0x60] sm:$0xf]
        %v2243 = vld [vmem:[%s2153 + $0x64] sm:$0xf]
        %v2244 = vld [vmem:[%s2153 + $0x68] sm:$0x1]
        %v2245 = vld [vmem:[%s2153 + $0x6c] sm:$0xf]
        %v2246 = vld [vmem:[%s2153 + $0x70] sm:$0xf]
        %v2247 = vld [vmem:[%s2153 + $0x74] sm:$0x1]
        %v2248 = vld [vmem:[%s2153 + $0x78] sm:$0xf]
        %v2249 = vld [vmem:[%s2153 + $0x7c] sm:$0xf]
        %v2250 = vld [vmem:[%s2153 + $0x80] sm:$0x1]
        %v2251 = vld [vmem:[%s2153 + $0x84] sm:$0xf]
        %v2252 = vld [vmem:[%s2153 + $0x88] sm:$0xf]
        %v2253 = vld [vmem:[%s2153 + $0x8c] sm:$0x1]
        %v2254 = vld [vmem:[%s2153 + $0x90] sm:$0xf]
        %v2255 = vld [vmem:[%s2153 + $0x94] sm:$0xf]
        %v2256 = vld [vmem:[%s2153 + $0x98] sm:$0x1]
        %v2257 = vld [vmem:[%s2153 + $0x9c] sm:$0xf]
        %v2258 = vld [vmem:[%s2153 + $0xa0] sm:$0xf]
        %v2259 = vld [vmem:[%s2153 + $0xa4] sm:$0x1]
        %v2260 = vld [vmem:[%s2153 + $0xa8] sm:$0xf]
        %v2261 = vld [vmem:[%s2153 + $0xac] sm:$0xf]
        %v2262 = vld [vmem:[%s2153 + $0xb0] sm:$0x1]
        %v2263 = vld [vmem:[%s2153 + $0xb4] sm:$0xf]
        %v2264 = vld [vmem:[%s2153 + $0xb8] sm:$0xf]
        %v2265 = vld [vmem:[%s2153 + $0xbc] sm:$0x1]
        %v2267 = vshrl.u32 %v2218, 16
        %v2269 = vrot.slane %v2267, 4
        %v2270 = vshll.u32 %v2218, 16
        %v2272 = vrot.slane %v2270, 5
        %v2273 = vor.u32 %v2269, %v2272
        %v2274 = vrot.slane %v2273, 4
        %v2276 = vshll.u32 %v2219, 16
        %v2278 = vrot.slane %v2276, 5
        %v2279 = vsel %vm339, %v2274, %v2278
        %v2280 = vshrl.u32 %v2219, 16
        %v2282 = vrot.slane %v2280, 4
        %v2283 = vor.u32 %v2282, %v2278
        %v2284 = vrot.slane %v2283, 4
        %v2286 = vshll.u32 %v2220, 16
        %v2288 = vrot.slane %v2286, 5
        %v2289 = vsel %vm339, %v2284, %v2288
        %v2291 = vshrl.u32 %v2221, 16
        %v2293 = vrot.slane %v2291, 4
        %v2294 = vshll.u32 %v2221, 16
        %v2296 = vrot.slane %v2294, 5
        %v2297 = vor.u32 %v2293, %v2296
        %v2298 = vrot.slane %v2297, 4
        %v2300 = vshll.u32 %v2222, 16
        %v2302 = vrot.slane %v2300, 5
        %v2303 = vsel %vm339, %v2298, %v2302
        %v2304 = vshrl.u32 %v2222, 16
        %v2306 = vrot.slane %v2304, 4
        %v2307 = vor.u32 %v2306, %v2302
        %v2308 = vrot.slane %v2307, 4
        %v2310 = vshll.u32 %v2223, 16
        %v2312 = vrot.slane %v2310, 5
        %v2313 = vsel %vm339, %v2308, %v2312
        %v2315 = vshrl.u32 %v2224, 16
        %v2317 = vrot.slane %v2315, 4
        %v2318 = vshll.u32 %v2224, 16
        %v2320 = vrot.slane %v2318, 5
        %v2321 = vor.u32 %v2317, %v2320
        %v2322 = vrot.slane %v2321, 4
        %v2324 = vshll.u32 %v2225, 16
        %v2326 = vrot.slane %v2324, 5
        %v2327 = vsel %vm339, %v2322, %v2326
        %v2328 = vshrl.u32 %v2225, 16
        %v2330 = vrot.slane %v2328, 4
        %v2331 = vor.u32 %v2330, %v2326
        %v2332 = vrot.slane %v2331, 4
        %v2334 = vshll.u32 %v2226, 16
        %v2336 = vrot.slane %v2334, 5
        %v2337 = vsel %vm339, %v2332, %v2336
        %v2339 = vshrl.u32 %v2227, 16
        %v2341 = vrot.slane %v2339, 4
        %v2342 = vshll.u32 %v2227, 16
        %v2344 = vrot.slane %v2342, 5
        %v2345 = vor.u32 %v2341, %v2344
        %v2346 = vrot.slane %v2345, 4
        %v2348 = vshll.u32 %v2228, 16
        %v2350 = vrot.slane %v2348, 5
        %v2351 = vsel %vm339, %v2346, %v2350
        %v2352 = vshrl.u32 %v2228, 16
        %v2354 = vrot.slane %v2352, 4
        %v2355 = vor.u32 %v2354, %v2350
        %v2356 = vrot.slane %v2355, 4
        %v2358 = vshll.u32 %v2229, 16
        %v2360 = vrot.slane %v2358, 5
        %v2361 = vsel %vm339, %v2356, %v2360
        %v2363 = vshrl.u32 %v2230, 16
        %v2365 = vrot.slane %v2363, 4
        %v2366 = vshll.u32 %v2230, 16
        %v2368 = vrot.slane %v2366, 5
        %v2369 = vor.u32 %v2365, %v2368
        %v2370 = vrot.slane %v2369, 4
        %v2372 = vshll.u32 %v2231, 16
        %v2374 = vrot.slane %v2372, 5
        %v2375 = vsel %vm339, %v2370, %v2374
        %v2376 = vshrl.u32 %v2231, 16
        %v2378 = vrot.slane %v2376, 4
        %v2379 = vor.u32 %v2378, %v2374
        %v2380 = vrot.slane %v2379, 4
        %v2382 = vshll.u32 %v2232, 16
        %v2384 = vrot.slane %v2382, 5
        %v2385 = vsel %vm339, %v2380, %v2384
        %v2387 = vshrl.u32 %v2233, 16
        %v2389 = vrot.slane %v2387, 4
        %v2390 = vshll.u32 %v2233, 16
        %v2392 = vrot.slane %v2390, 5
        %v2393 = vor.u32 %v2389, %v2392
        %v2394 = vrot.slane %v2393, 4
        %v2396 = vshll.u32 %v2234, 16
        %v2398 = vrot.slane %v2396, 5
        %v2399 = vsel %vm339, %v2394, %v2398
        %v2400 = vshrl.u32 %v2234, 16
        %v2402 = vrot.slane %v2400, 4
        %v2403 = vor.u32 %v2402, %v2398
        %v2404 = vrot.slane %v2403, 4
        %v2406 = vshll.u32 %v2235, 16
        %v2408 = vrot.slane %v2406, 5
        %v2409 = vsel %vm339, %v2404, %v2408
        %v2411 = vshrl.u32 %v2236, 16
        %v2413 = vrot.slane %v2411, 4
        %v2414 = vshll.u32 %v2236, 16
        %v2416 = vrot.slane %v2414, 5
        %v2417 = vor.u32 %v2413, %v2416
        %v2418 = vrot.slane %v2417, 4
        %v2420 = vshll.u32 %v2237, 16
        %v2422 = vrot.slane %v2420, 5
        %v2423 = vsel %vm339, %v2418, %v2422
        %v2424 = vshrl.u32 %v2237, 16
        %v2426 = vrot.slane %v2424, 4
        %v2427 = vor.u32 %v2426, %v2422
        %v2428 = vrot.slane %v2427, 4
        %v2430 = vshll.u32 %v2238, 16
        %v2432 = vrot.slane %v2430, 5
        %v2433 = vsel %vm339, %v2428, %v2432
        %v2435 = vshrl.u32 %v2239, 16
        %v2437 = vrot.slane %v2435, 4
        %v2438 = vshll.u32 %v2239, 16
        %v2440 = vrot.slane %v2438, 5
        %v2441 = vor.u32 %v2437, %v2440
        %v2442 = vrot.slane %v2441, 4
        %v2444 = vshll.u32 %v2240, 16
        %v2446 = vrot.slane %v2444, 5
        %v2447 = vsel %vm339, %v2442, %v2446
        %v2448 = vshrl.u32 %v2240, 16
        %v2450 = vrot.slane %v2448, 4
        %v2451 = vor.u32 %v2450, %v2446
        %v2452 = vrot.slane %v2451, 4
        %v2454 = vshll.u32 %v2241, 16
        %v2456 = vrot.slane %v2454, 5
        %v2457 = vsel %vm339, %v2452, %v2456
        %v2459 = vshrl.u32 %v2242, 16
        %v2461 = vrot.slane %v2459, 4
        %v2462 = vshll.u32 %v2242, 16
        %v2464 = vrot.slane %v2462, 5
        %v2465 = vor.u32 %v2461, %v2464
        %v2466 = vrot.slane %v2465, 4
        %v2468 = vshll.u32 %v2243, 16
        %v2470 = vrot.slane %v2468, 5
        %v2471 = vsel %vm339, %v2466, %v2470
        %v2472 = vshrl.u32 %v2243, 16
        %v2474 = vrot.slane %v2472, 4
        %v2475 = vor.u32 %v2474, %v2470
        %v2476 = vrot.slane %v2475, 4
        %v2478 = vshll.u32 %v2244, 16
        %v2480 = vrot.slane %v2478, 5
        %v2481 = vsel %vm339, %v2476, %v2480
        %v2483 = vshrl.u32 %v2245, 16
        %v2485 = vrot.slane %v2483, 4
        %v2486 = vshll.u32 %v2245, 16
        %v2488 = vrot.slane %v2486, 5
        %v2489 = vor.u32 %v2485, %v2488
        %v2490 = vrot.slane %v2489, 4
        %v2492 = vshll.u32 %v2246, 16
        %v2494 = vrot.slane %v2492, 5
        %v2495 = vsel %vm339, %v2490, %v2494
        %v2496 = vshrl.u32 %v2246, 16
        %v2498 = vrot.slane %v2496, 4
        %v2499 = vor.u32 %v2498, %v2494
        %v2500 = vrot.slane %v2499, 4
        %v2502 = vshll.u32 %v2247, 16
        %v2504 = vrot.slane %v2502, 5
        %v2505 = vsel %vm339, %v2500, %v2504
        %v2507 = vshrl.u32 %v2248, 16
        %v2509 = vrot.slane %v2507, 4
        %v2510 = vshll.u32 %v2248, 16
        %v2512 = vrot.slane %v2510, 5
        %v2513 = vor.u32 %v2509, %v2512
        %v2514 = vrot.slane %v2513, 4
        %v2516 = vshll.u32 %v2249, 16
        %v2518 = vrot.slane %v2516, 5
        %v2519 = vsel %vm339, %v2514, %v2518
        %v2520 = vshrl.u32 %v2249, 16
        %v2522 = vrot.slane %v2520, 4
        %v2523 = vor.u32 %v2522, %v2518
        %v2524 = vrot.slane %v2523, 4
        %v2526 = vshll.u32 %v2250, 16
        %v2528 = vrot.slane %v2526, 5
        %v2529 = vsel %vm339, %v2524, %v2528
        %v2531 = vshrl.u32 %v2251, 16
        %v2533 = vrot.slane %v2531, 4
        %v2534 = vshll.u32 %v2251, 16
        %v2536 = vrot.slane %v2534, 5
        %v2537 = vor.u32 %v2533, %v2536
        %v2538 = vrot.slane %v2537, 4
        %v2540 = vshll.u32 %v2252, 16
        %v2542 = vrot.slane %v2540, 5
        %v2543 = vsel %vm339, %v2538, %v2542
        %v2544 = vshrl.u32 %v2252, 16
        %v2546 = vrot.slane %v2544, 4
        %v2547 = vor.u32 %v2546, %v2542
        %v2548 = vrot.slane %v2547, 4
        %v2550 = vshll.u32 %v2253, 16
        %v2552 = vrot.slane %v2550, 5
        %v2553 = vsel %vm339, %v2548, %v2552
        %v2555 = vshrl.u32 %v2254, 16
        %v2557 = vrot.slane %v2555, 4
        %v2558 = vshll.u32 %v2254, 16
        %v2560 = vrot.slane %v2558, 5
        %v2561 = vor.u32 %v2557, %v2560
        %v2562 = vrot.slane %v2561, 4
        %v2564 = vshll.u32 %v2255, 16
        %v2566 = vrot.slane %v2564, 5
        %v2567 = vsel %vm339, %v2562, %v2566
        %v2568 = vshrl.u32 %v2255, 16
        %v2570 = vrot.slane %v2568, 4
        %v2571 = vor.u32 %v2570, %v2566
        %v2572 = vrot.slane %v2571, 4
        %v2574 = vshll.u32 %v2256, 16
        %v2576 = vrot.slane %v2574, 5
        %v2577 = vsel %vm339, %v2572, %v2576
        %v2579 = vshrl.u32 %v2257, 16
        %v2581 = vrot.slane %v2579, 4
        %v2582 = vshll.u32 %v2257, 16
        %v2584 = vrot.slane %v2582, 5
        %v2585 = vor.u32 %v2581, %v2584
        %v2586 = vrot.slane %v2585, 4
        %v2588 = vshll.u32 %v2258, 16
        %v2590 = vrot.slane %v2588, 5
        %v2591 = vsel %vm339, %v2586, %v2590
        %v2592 = vshrl.u32 %v2258, 16
        %v2594 = vrot.slane %v2592, 4
        %v2595 = vor.u32 %v2594, %v2590
        %v2596 = vrot.slane %v2595, 4
        %v2598 = vshll.u32 %v2259, 16
        %v2600 = vrot.slane %v2598, 5
        %v2601 = vsel %vm339, %v2596, %v2600
        %v2603 = vshrl.u32 %v2260, 16
        %v2605 = vrot.slane %v2603, 4
        %v2606 = vshll.u32 %v2260, 16
        %v2608 = vrot.slane %v2606, 5
        %v2609 = vor.u32 %v2605, %v2608
        %v2610 = vrot.slane %v2609, 4
        %v2612 = vshll.u32 %v2261, 16
        %v2614 = vrot.slane %v2612, 5
        %v2615 = vsel %vm339, %v2610, %v2614
        %v2616 = vshrl.u32 %v2261, 16
        %v2618 = vrot.slane %v2616, 4
        %v2619 = vor.u32 %v2618, %v2614
        %v2620 = vrot.slane %v2619, 4
        %v2622 = vshll.u32 %v2262, 16
        %v2624 = vrot.slane %v2622, 5
        %v2625 = vsel %vm339, %v2620, %v2624
        %v2627 = vshrl.u32 %v2263, 16
        %v2629 = vrot.slane %v2627, 4
        %v2630 = vshll.u32 %v2263, 16
        %v2632 = vrot.slane %v2630, 5
        %v2633 = vor.u32 %v2629, %v2632
        %v2634 = vrot.slane %v2633, 4
        %v2636 = vshll.u32 %v2264, 16
        %v2638 = vrot.slane %v2636, 5
        %v2639 = vsel %vm339, %v2634, %v2638
        %v2640 = vshrl.u32 %v2264, 16
        %v2642 = vrot.slane %v2640, 4
        %v2643 = vor.u32 %v2642, %v2638
        %v2644 = vrot.slane %v2643, 4
        %v2646 = vshll.u32 %v2265, 16
        %v2648 = vrot.slane %v2646, 5
        %v2649 = vsel %vm339, %v2644, %v2648
        %2650 = vrot.lane.b32.xlu0 %v2279, 64
        %v2651 = vpop.permute.xlu0 %2650
        %2652 = vrot.lane.b32.xlu0 %v2289, 64
        %v2653 = vpop.permute.xlu0 %2652
        %2654 = vrot.lane.b32.xlu0 %v2303, 64
        %v2655 = vpop.permute.xlu0 %2654
        %2656 = vrot.lane.b32.xlu0 %v2313, 64
        %v2657 = vpop.permute.xlu0 %2656
        %2658 = vrot.lane.b32.xlu0 %v2327, 64
        %v2659 = vpop.permute.xlu0 %2658
        %2660 = vrot.lane.b32.xlu0 %v2337, 64
        %v2661 = vpop.permute.xlu0 %2660
        %2662 = vrot.lane.b32.xlu0 %v2351, 64
        %v2663 = vpop.permute.xlu0 %2662
        %2664 = vrot.lane.b32.xlu0 %v2361, 64
        %v2665 = vpop.permute.xlu0 %2664
        %2666 = vrot.lane.b32.xlu0 %v2375, 64
        %v2667 = vpop.permute.xlu0 %2666
        %2668 = vrot.lane.b32.xlu0 %v2385, 64
        %v2669 = vpop.permute.xlu0 %2668
        %2670 = vrot.lane.b32.xlu0 %v2399, 64
        %v2671 = vpop.permute.xlu0 %2670
        %2672 = vrot.lane.b32.xlu0 %v2409, 64
        %v2673 = vpop.permute.xlu0 %2672
        %2674 = vrot.lane.b32.xlu0 %v2423, 64
        %v2675 = vpop.permute.xlu0 %2674
        %2676 = vrot.lane.b32.xlu0 %v2433, 64
        %v2677 = vpop.permute.xlu0 %2676
        %2678 = vrot.lane.b32.xlu0 %v2447, 64
        %v2679 = vpop.permute.xlu0 %2678
        %2680 = vrot.lane.b32.xlu0 %v2457, 64
        %v2681 = vpop.permute.xlu0 %2680
        %2682 = vrot.lane.b32.xlu0 %v2471, 64
        %v2683 = vpop.permute.xlu0 %2682
        %2684 = vrot.lane.b32.xlu0 %v2481, 64
        %v2685 = vpop.permute.xlu0 %2684
        %2686 = vrot.lane.b32.xlu0 %v2495, 64
        %v2687 = vpop.permute.xlu0 %2686
        %2688 = vrot.lane.b32.xlu0 %v2505, 64
        %v2689 = vpop.permute.xlu0 %2688
        %2690 = vrot.lane.b32.xlu0 %v2519, 64
        %v2691 = vpop.permute.xlu0 %2690
        %2692 = vrot.lane.b32.xlu0 %v2529, 64
        %v2693 = vpop.permute.xlu0 %2692
        %2694 = vrot.lane.b32.xlu0 %v2543, 64
        %v2695 = vpop.permute.xlu0 %2694
        %2696 = vrot.lane.b32.xlu0 %v2553, 64
        %v2697 = vpop.permute.xlu0 %2696
        %2698 = vrot.lane.b32.xlu0 %v2567, 64
        %v2699 = vpop.permute.xlu0 %2698
        %2700 = vrot.lane.b32.xlu0 %v2577, 64
        %v2701 = vpop.permute.xlu0 %2700
        %2702 = vrot.lane.b32.xlu0 %v2591, 64
        %v2703 = vpop.permute.xlu0 %2702
        %2704 = vrot.lane.b32.xlu0 %v2601, 64
        %v2705 = vpop.permute.xlu0 %2704
        %2706 = vrot.lane.b32.xlu0 %v2615, 64
        %v2707 = vpop.permute.xlu0 %2706
        %2708 = vrot.lane.b32.xlu0 %v2625, 64
        %v2709 = vpop.permute.xlu0 %2708
        %2710 = vrot.lane.b32.xlu0 %v2639, 64
        %v2711 = vpop.permute.xlu0 %2710
        %2712 = vrot.lane.b32.xlu0 %v2649, 64
        %v2713 = vpop.permute.xlu0 %2712
        %2746 = vst.msk [vmem:[#allocation2 + $0xc] sm:$0xf] %vm820, %v2651
        %2747 = vst.msk [vmem:[#allocation2 + $0x20] sm:$0xf] %vm820, %v2653
        %2748 = vst.msk [vmem:[#allocation2 + $0x34] sm:$0xf] %vm820, %v2655
        %2749 = vst.msk [vmem:[#allocation2 + $0x48] sm:$0xf] %vm820, %v2657
        %2750 = vst.msk [vmem:[#allocation2 + $0x5c] sm:$0xf] %vm820, %v2659
        %2751 = vst.msk [vmem:[#allocation2 + $0x70] sm:$0xf] %vm820, %v2661
        %2752 = vst.msk [vmem:[#allocation2 + $0x84] sm:$0xf] %vm820, %v2663
        %2753 = vst.msk [vmem:[#allocation2 + $0x98] sm:$0xf] %vm820, %v2665
        %2754 = vst.msk [vmem:[#allocation2 + $0xac] sm:$0xf] %vm820, %v2667
        %2755 = vst.msk [vmem:[#allocation2 + $0xc0] sm:$0xf] %vm820, %v2669
        %2756 = vst.msk [vmem:[#allocation2 + $0xd4] sm:$0xf] %vm820, %v2671
        %2757 = vst.msk [vmem:[#allocation2 + $0xe8] sm:$0xf] %vm820, %v2673
        %2758 = vst.msk [vmem:[#allocation2 + $0xfc] sm:$0xf] %vm820, %v2675
        %2759 = vst.msk [vmem:[#allocation2 + $0x110] sm:$0xf] %vm820, %v2677
        %2760 = vst.msk [vmem:[#allocation2 + $0x124] sm:$0xf] %vm820, %v2679
        %2761 = vst.msk [vmem:[#allocation2 + $0x138] sm:$0xf] %vm820, %v2681
        %2762 = vst.msk [vmem:[#allocation2 + $0x14c] sm:$0xf] %vm820, %v2683
        %2763 = vst.msk [vmem:[#allocation2 + $0x160] sm:$0xf] %vm820, %v2685
        %2764 = vst.msk [vmem:[#allocation2 + $0x174] sm:$0xf] %vm820, %v2687
        %2765 = vst.msk [vmem:[#allocation2 + $0x188] sm:$0xf] %vm820, %v2689
        %2766 = vst.msk [vmem:[#allocation2 + $0x19c] sm:$0xf] %vm820, %v2691
        %2767 = vst.msk [vmem:[#allocation2 + $0x1b0] sm:$0xf] %vm820, %v2693
        %2768 = vst.msk [vmem:[#allocation2 + $0x1c4] sm:$0xf] %vm820, %v2695
        %2769 = vst.msk [vmem:[#allocation2 + $0x1d8] sm:$0xf] %vm820, %v2697
        %2770 = vst.msk [vmem:[#allocation2 + $0x1ec] sm:$0xf] %vm820, %v2699
        %2771 = vst.msk [vmem:[#allocation2 + $0x200] sm:$0xf] %vm820, %v2701
        %2772 = vst.msk [vmem:[#allocation2 + $0x214] sm:$0xf] %vm820, %v2703
        %2773 = vst.msk [vmem:[#allocation2 + $0x228] sm:$0xf] %vm820, %v2705
        %2774 = vst.msk [vmem:[#allocation2 + $0x23c] sm:$0xf] %vm820, %v2707
        %2775 = vst.msk [vmem:[#allocation2 + $0x250] sm:$0xf] %vm820, %v2709
        %2776 = vst.msk [vmem:[#allocation2 + $0x264] sm:$0xf] %vm820, %v2711
        %2777 = vst.msk [vmem:[#allocation2 + $0x278] sm:$0xf] %vm820, %v2713
        %v2778 = vld [vmem:[%s2153] sm:$0xe]
        %v2779 = vld [vmem:[%s2153 + $0x4] sm:$0xf]
        %v2780 = vld [vmem:[%s2153 + $0x8] sm:$0x1]
        %v2781 = vld [vmem:[%s2153 + $0xc] sm:$0xe]
        %v2782 = vld [vmem:[%s2153 + $0x10] sm:$0xf]
        %v2783 = vld [vmem:[%s2153 + $0x14] sm:$0x1]
        %v2784 = vld [vmem:[%s2153 + $0x18] sm:$0xe]
        %v2785 = vld [vmem:[%s2153 + $0x1c] sm:$0xf]
        %v2786 = vld [vmem:[%s2153 + $0x20] sm:$0x1]
        %v2787 = vld [vmem:[%s2153 + $0x24] sm:$0xe]
        %v2788 = vld [vmem:[%s2153 + $0x28] sm:$0xf]
        %v2789 = vld [vmem:[%s2153 + $0x2c] sm:$0x1]
        %v2790 = vld [vmem:[%s2153 + $0x30] sm:$0xe]
        %v2791 = vld [vmem:[%s2153 + $0x34] sm:$0xf]
        %v2792 = vld [vmem:[%s2153 + $0x38] sm:$0x1]
        %v2793 = vld [vmem:[%s2153 + $0x3c] sm:$0xe]
        %v2794 = vld [vmem:[%s2153 + $0x40] sm:$0xf]
        %v2795 = vld [vmem:[%s2153 + $0x44] sm:$0x1]
        %v2796 = vld [vmem:[%s2153 + $0x48] sm:$0xe]
        %v2797 = vld [vmem:[%s2153 + $0x4c] sm:$0xf]
        %v2798 = vld [vmem:[%s2153 + $0x50] sm:$0x1]
        %v2799 = vld [vmem:[%s2153 + $0x54] sm:$0xe]
        %v2800 = vld [vmem:[%s2153 + $0x58] sm:$0xf]
        %v2801 = vld [vmem:[%s2153 + $0x5c] sm:$0x1]
        %v2802 = vld [vmem:[%s2153 + $0x60] sm:$0xe]
        %v2803 = vld [vmem:[%s2153 + $0x64] sm:$0xf]
        %v2804 = vld [vmem:[%s2153 + $0x68] sm:$0x1]
        %v2805 = vld [vmem:[%s2153 + $0x6c] sm:$0xe]
        %v2806 = vld [vmem:[%s2153 + $0x70] sm:$0xf]
        %v2807 = vld [vmem:[%s2153 + $0x74] sm:$0x1]
        %v2808 = vld [vmem:[%s2153 + $0x78] sm:$0xe]
        %v2809 = vld [vmem:[%s2153 + $0x7c] sm:$0xf]
        %v2810 = vld [vmem:[%s2153 + $0x80] sm:$0x1]
        %v2811 = vld [vmem:[%s2153 + $0x84] sm:$0xe]
        %v2812 = vld [vmem:[%s2153 + $0x88] sm:$0xf]
        %v2813 = vld [vmem:[%s2153 + $0x8c] sm:$0x1]
        %v2814 = vld [vmem:[%s2153 + $0x90] sm:$0xe]
        %v2815 = vld [vmem:[%s2153 + $0x94] sm:$0xf]
        %v2816 = vld [vmem:[%s2153 + $0x98] sm:$0x1]
        %v2817 = vld [vmem:[%s2153 + $0x9c] sm:$0xe]
        %v2818 = vld [vmem:[%s2153 + $0xa0] sm:$0xf]
        %v2819 = vld [vmem:[%s2153 + $0xa4] sm:$0x1]
        %v2820 = vld [vmem:[%s2153 + $0xa8] sm:$0xe]
        %v2821 = vld [vmem:[%s2153 + $0xac] sm:$0xf]
        %v2822 = vld [vmem:[%s2153 + $0xb0] sm:$0x1]
        %v2823 = vld [vmem:[%s2153 + $0xb4] sm:$0xe]
        %v2824 = vld [vmem:[%s2153 + $0xb8] sm:$0xf]
        %v2825 = vld [vmem:[%s2153 + $0xbc] sm:$0x1]
        %v2874 = vrot.slane %v2778, 5
        %v2875 = vrot.slane %v2874, 4
        %v2876 = vrot.slane %v2779, 5
        %v2877 = vsel %vm951, %v2875, %v2876
        %v2878 = vrot.slane %v2876, 4
        %v2879 = vrot.slane %v2780, 5
        %v2880 = vsel %vm951, %v2878, %v2879
        %v2881 = vrot.slane %v2781, 5
        %v2882 = vrot.slane %v2881, 4
        %v2883 = vrot.slane %v2782, 5
        %v2884 = vsel %vm951, %v2882, %v2883
        %v2885 = vrot.slane %v2883, 4
        %v2886 = vrot.slane %v2783, 5
        %v2887 = vsel %vm951, %v2885, %v2886
        %v2888 = vrot.slane %v2784, 5
        %v2889 = vrot.slane %v2888, 4
        %v2890 = vrot.slane %v2785, 5
        %v2891 = vsel %vm951, %v2889, %v2890
        %v2892 = vrot.slane %v2890, 4
        %v2893 = vrot.slane %v2786, 5
        %v2894 = vsel %vm951, %v2892, %v2893
        %v2895 = vrot.slane %v2787, 5
        %v2896 = vrot.slane %v2895, 4
        %v2897 = vrot.slane %v2788, 5
        %v2898 = vsel %vm951, %v2896, %v2897
        %v2899 = vrot.slane %v2897, 4
        %v2900 = vrot.slane %v2789, 5
        %v2901 = vsel %vm951, %v2899, %v2900
        %v2902 = vrot.slane %v2790, 5
        %v2903 = vrot.slane %v2902, 4
        %v2904 = vrot.slane %v2791, 5
        %v2905 = vsel %vm951, %v2903, %v2904
        %v2906 = vrot.slane %v2904, 4
        %v2907 = vrot.slane %v2792, 5
        %v2908 = vsel %vm951, %v2906, %v2907
        %v2909 = vrot.slane %v2793, 5
        %v2910 = vrot.slane %v2909, 4
        %v2911 = vrot.slane %v2794, 5
        %v2912 = vsel %vm951, %v2910, %v2911
        %v2913 = vrot.slane %v2911, 4
        %v2914 = vrot.slane %v2795, 5
        %v2915 = vsel %vm951, %v2913, %v2914
        %v2916 = vrot.slane %v2796, 5
        %v2917 = vrot.slane %v2916, 4
        %v2918 = vrot.slane %v2797, 5
        %v2919 = vsel %vm951, %v2917, %v2918
        %v2920 = vrot.slane %v2918, 4
        %v2921 = vrot.slane %v2798, 5
        %v2922 = vsel %vm951, %v2920, %v2921
        %v2923 = vrot.slane %v2799, 5
        %v2924 = vrot.slane %v2923, 4
        %v2925 = vrot.slane %v2800, 5
        %v2926 = vsel %vm951, %v2924, %v2925
        %v2927 = vrot.slane %v2925, 4
        %v2928 = vrot.slane %v2801, 5
        %v2929 = vsel %vm951, %v2927, %v2928
        %v2930 = vrot.slane %v2802, 5
        %v2931 = vrot.slane %v2930, 4
        %v2932 = vrot.slane %v2803, 5
        %v2933 = vsel %vm951, %v2931, %v2932
        %v2934 = vrot.slane %v2932, 4
        %v2935 = vrot.slane %v2804, 5
        %v2936 = vsel %vm951, %v2934, %v2935
        %v2937 = vrot.slane %v2805, 5
        %v2938 = vrot.slane %v2937, 4
        %v2939 = vrot.slane %v2806, 5
        %v2940 = vsel %vm951, %v2938, %v2939
        %v2941 = vrot.slane %v2939, 4
        %v2942 = vrot.slane %v2807, 5
        %v2943 = vsel %vm951, %v2941, %v2942
        %v2944 = vrot.slane %v2808, 5
        %v2945 = vrot.slane %v2944, 4
        %v2946 = vrot.slane %v2809, 5
        %v2947 = vsel %vm951, %v2945, %v2946
        %v2948 = vrot.slane %v2946, 4
        %v2949 = vrot.slane %v2810, 5
        %v2950 = vsel %vm951, %v2948, %v2949
        %v2951 = vrot.slane %v2811, 5
        %v2952 = vrot.slane %v2951, 4
        %v2953 = vrot.slane %v2812, 5
        %v2954 = vsel %vm951, %v2952, %v2953
        %v2955 = vrot.slane %v2953, 4
        %v2956 = vrot.slane %v2813, 5
        %v2957 = vsel %vm951, %v2955, %v2956
        %v2958 = vrot.slane %v2814, 5
        %v2959 = vrot.slane %v2958, 4
        %v2960 = vrot.slane %v2815, 5
        %v2961 = vsel %vm951, %v2959, %v2960
        %v2962 = vrot.slane %v2960, 4
        %v2963 = vrot.slane %v2816, 5
        %v2964 = vsel %vm951, %v2962, %v2963
        %v2965 = vrot.slane %v2817, 5
        %v2966 = vrot.slane %v2965, 4
        %v2967 = vrot.slane %v2818, 5
        %v2968 = vsel %vm951, %v2966, %v2967
        %v2969 = vrot.slane %v2967, 4
        %v2970 = vrot.slane %v2819, 5
        %v2971 = vsel %vm951, %v2969, %v2970
        %v2972 = vrot.slane %v2820, 5
        %v2973 = vrot.slane %v2972, 4
        %v2974 = vrot.slane %v2821, 5
        %v2975 = vsel %vm951, %v2973, %v2974
        %v2976 = vrot.slane %v2974, 4
        %v2977 = vrot.slane %v2822, 5
        %v2978 = vsel %vm951, %v2976, %v2977
        %v2979 = vrot.slane %v2823, 5
        %v2980 = vrot.slane %v2979, 4
        %v2981 = vrot.slane %v2824, 5
        %v2982 = vsel %vm951, %v2980, %v2981
        %v2983 = vrot.slane %v2981, 4
        %v2984 = vrot.slane %v2825, 5
        %v2985 = vsel %vm951, %v2983, %v2984
        %3018 = vst.msk [vmem:[#allocation2 + $0x10] sm:$0xf] %vm256, %v2877
        %3019 = vst.msk [vmem:[#allocation2 + $0x24] sm:$0xf] %vm256, %v2880
        %3020 = vst.msk [vmem:[#allocation2 + $0x38] sm:$0xf] %vm256, %v2884
        %3021 = vst.msk [vmem:[#allocation2 + $0x4c] sm:$0xf] %vm256, %v2887
        %3022 = vst.msk [vmem:[#allocation2 + $0x60] sm:$0xf] %vm256, %v2891
        %3023 = vst.msk [vmem:[#allocation2 + $0x74] sm:$0xf] %vm256, %v2894
        %3024 = vst.msk [vmem:[#allocation2 + $0x88] sm:$0xf] %vm256, %v2898
        %3025 = vst.msk [vmem:[#allocation2 + $0x9c] sm:$0xf] %vm256, %v2901
        %3026 = vst.msk [vmem:[#allocation2 + $0xb0] sm:$0xf] %vm256, %v2905
        %3027 = vst.msk [vmem:[#allocation2 + $0xc4] sm:$0xf] %vm256, %v2908
        %3028 = vst.msk [vmem:[#allocation2 + $0xd8] sm:$0xf] %vm256, %v2912
        %3029 = vst.msk [vmem:[#allocation2 + $0xec] sm:$0xf] %vm256, %v2915
        %3030 = vst.msk [vmem:[#allocation2 + $0x100] sm:$0xf] %vm256, %v2919
        %3031 = vst.msk [vmem:[#allocation2 + $0x114] sm:$0xf] %vm256, %v2922
        %3032 = vst.msk [vmem:[#allocation2 + $0x128] sm:$0xf] %vm256, %v2926
        %3033 = vst.msk [vmem:[#allocation2 + $0x13c] sm:$0xf] %vm256, %v2929
        %3034 = vst.msk [vmem:[#allocation2 + $0x150] sm:$0xf] %vm256, %v2933
        %3035 = vst.msk [vmem:[#allocation2 + $0x164] sm:$0xf] %vm256, %v2936
        %3036 = vst.msk [vmem:[#allocation2 + $0x178] sm:$0xf] %vm256, %v2940
        %3037 = vst.msk [vmem:[#allocation2 + $0x18c] sm:$0xf] %vm256, %v2943
        %3038 = vst.msk [vmem:[#allocation2 + $0x1a0] sm:$0xf] %vm256, %v2947
        %3039 = vst.msk [vmem:[#allocation2 + $0x1b4] sm:$0xf] %vm256, %v2950
        %3040 = vst.msk [vmem:[#allocation2 + $0x1c8] sm:$0xf] %vm256, %v2954
        %3041 = vst.msk [vmem:[#allocation2 + $0x1dc] sm:$0xf] %vm256, %v2957
        %3042 = vst.msk [vmem:[#allocation2 + $0x1f0] sm:$0xf] %vm256, %v2961
        %3043 = vst.msk [vmem:[#allocation2 + $0x204] sm:$0xf] %vm256, %v2964
        %3044 = vst.msk [vmem:[#allocation2 + $0x218] sm:$0xf] %vm256, %v2968
        %3045 = vst.msk [vmem:[#allocation2 + $0x22c] sm:$0xf] %vm256, %v2971
        %3046 = vst.msk [vmem:[#allocation2 + $0x240] sm:$0xf] %vm256, %v2975
        %3047 = vst.msk [vmem:[#allocation2 + $0x254] sm:$0xf] %vm256, %v2978
        %3048 = vst.msk [vmem:[#allocation2 + $0x268] sm:$0xf] %vm256, %v2982
        %3049 = vst.msk [vmem:[#allocation2 + $0x27c] sm:$0xf] %vm256, %v2985
        %v3050 = vld [vmem:[#allocation2] sm:$0xff]
        %v3051 = vld [vmem:[#allocation2 + $0x8] sm:$0xff]
        %v3052 = vld [vmem:[#allocation2 + $0x10] sm:$0xf]
        %v3053 = vld [vmem:[#allocation2 + $0x14] sm:$0xff]
        %v3054 = vld [vmem:[#allocation2 + $0x1c] sm:$0xff]
        %v3055 = vld [vmem:[#allocation2 + $0x24] sm:$0xf]
        %v3056 = vld [vmem:[#allocation2 + $0x28] sm:$0xff]
        %v3057 = vld [vmem:[#allocation2 + $0x30] sm:$0xff]
        %v3058 = vld [vmem:[#allocation2 + $0x38] sm:$0xf]
        %v3059 = vld [vmem:[#allocation2 + $0x3c] sm:$0xff]
        %v3060 = vld [vmem:[#allocation2 + $0x44] sm:$0xff]
        %v3061 = vld [vmem:[#allocation2 + $0x4c] sm:$0xf]
        %v3062 = vld [vmem:[#allocation2 + $0x50] sm:$0xff]
        %v3063 = vld [vmem:[#allocation2 + $0x58] sm:$0xff]
        %v3064 = vld [vmem:[#allocation2 + $0x60] sm:$0xf]
        %v3065 = vld [vmem:[#allocation2 + $0x64] sm:$0xff]
        %v3066 = vld [vmem:[#allocation2 + $0x6c] sm:$0xff]
        %v3067 = vld [vmem:[#allocation2 + $0x74] sm:$0xf]
        %v3068 = vld [vmem:[#allocation2 + $0x78] sm:$0xff]
        %v3069 = vld [vmem:[#allocation2 + $0x80] sm:$0xff]
        %v3070 = vld [vmem:[#allocation2 + $0x88] sm:$0xf]
        %v3071 = vld [vmem:[#allocation2 + $0x8c] sm:$0xff]
        %v3072 = vld [vmem:[#allocation2 + $0x94] sm:$0xff]
        %v3073 = vld [vmem:[#allocation2 + $0x9c] sm:$0xf]
        %v3074 = vld [vmem:[#allocation2 + $0xa0] sm:$0xff]
        %v3075 = vld [vmem:[#allocation2 + $0xa8] sm:$0xff]
        %v3076 = vld [vmem:[#allocation2 + $0xb0] sm:$0xf]
        %v3077 = vld [vmem:[#allocation2 + $0xb4] sm:$0xff]
        %v3078 = vld [vmem:[#allocation2 + $0xbc] sm:$0xff]
        %v3079 = vld [vmem:[#allocation2 + $0xc4] sm:$0xf]
        %v3080 = vld [vmem:[#allocation2 + $0xc8] sm:$0xff]
        %v3081 = vld [vmem:[#allocation2 + $0xd0] sm:$0xff]
        %v3082 = vld [vmem:[#allocation2 + $0xd8] sm:$0xf]
        %v3083 = vld [vmem:[#allocation2 + $0xdc] sm:$0xff]
        %v3084 = vld [vmem:[#allocation2 + $0xe4] sm:$0xff]
        %v3085 = vld [vmem:[#allocation2 + $0xec] sm:$0xf]
        %v3086 = vld [vmem:[#allocation2 + $0xf0] sm:$0xff]
        %v3087 = vld [vmem:[#allocation2 + $0xf8] sm:$0xff]
        %v3088 = vld [vmem:[#allocation2 + $0x100] sm:$0xf]
        %v3089 = vld [vmem:[#allocation2 + $0x104] sm:$0xff]
        %v3090 = vld [vmem:[#allocation2 + $0x10c] sm:$0xff]
        %v3091 = vld [vmem:[#allocation2 + $0x114] sm:$0xf]
        %v3092 = vld [vmem:[#allocation2 + $0x118] sm:$0xff]
        %v3093 = vld [vmem:[#allocation2 + $0x120] sm:$0xff]
        %v3094 = vld [vmem:[#allocation2 + $0x128] sm:$0xf]
        %v3095 = vld [vmem:[#allocation2 + $0x12c] sm:$0xff]
        %v3096 = vld [vmem:[#allocation2 + $0x134] sm:$0xff]
        %v3097 = vld [vmem:[#allocation2 + $0x13c] sm:$0xf]
        %v3098 = vld [vmem:[#allocation2 + $0x140] sm:$0xff]
        %v3099 = vld [vmem:[#allocation2 + $0x148] sm:$0xff]
        %v3100 = vld [vmem:[#allocation2 + $0x150] sm:$0xf]
        %v3101 = vld [vmem:[#allocation2 + $0x154] sm:$0xff]
        %v3102 = vld [vmem:[#allocation2 + $0x15c] sm:$0xff]
        %v3103 = vld [vmem:[#allocation2 + $0x164] sm:$0xf]
        %v3104 = vld [vmem:[#allocation2 + $0x168] sm:$0xff]
        %v3105 = vld [vmem:[#allocation2 + $0x170] sm:$0xff]
        %v3106 = vld [vmem:[#allocation2 + $0x178] sm:$0xf]
        %v3107 = vld [vmem:[#allocation2 + $0x17c] sm:$0xff]
        %v3108 = vld [vmem:[#allocation2 + $0x184] sm:$0xff]
        %v3109 = vld [vmem:[#allocation2 + $0x18c] sm:$0xf]
        %v3110 = vld [vmem:[#allocation2 + $0x190] sm:$0xff]
        %v3111 = vld [vmem:[#allocation2 + $0x198] sm:$0xff]
        %v3112 = vld [vmem:[#allocation2 + $0x1a0] sm:$0xf]
        %v3113 = vld [vmem:[#allocation2 + $0x1a4] sm:$0xff]
        %v3114 = vld [vmem:[#allocation2 + $0x1ac] sm:$0xff]
        %v3115 = vld [vmem:[#allocation2 + $0x1b4] sm:$0xf]
        %v3116 = vld [vmem:[#allocation2 + $0x1b8] sm:$0xff]
        %v3117 = vld [vmem:[#allocation2 + $0x1c0] sm:$0xff]
        %v3118 = vld [vmem:[#allocation2 + $0x1c8] sm:$0xf]
        %v3119 = vld [vmem:[#allocation2 + $0x1cc] sm:$0xff]
        %v3120 = vld [vmem:[#allocation2 + $0x1d4] sm:$0xff]
        %v3121 = vld [vmem:[#allocation2 + $0x1dc] sm:$0xf]
        %v3122 = vld [vmem:[#allocation2 + $0x1e0] sm:$0xff]
        %v3123 = vld [vmem:[#allocation2 + $0x1e8] sm:$0xff]
        %v3124 = vld [vmem:[#allocation2 + $0x1f0] sm:$0xf]
        %v3125 = vld [vmem:[#allocation2 + $0x1f4] sm:$0xff]
        %v3126 = vld [vmem:[#allocation2 + $0x1fc] sm:$0xff]
        %v3127 = vld [vmem:[#allocation2 + $0x204] sm:$0xf]
        %v3128 = vld [vmem:[#allocation2 + $0x208] sm:$0xff]
        %v3129 = vld [vmem:[#allocation2 + $0x210] sm:$0xff]
        %v3130 = vld [vmem:[#allocation2 + $0x218] sm:$0xf]
        %v3131 = vld [vmem:[#allocation2 + $0x21c] sm:$0xff]
        %v3132 = vld [vmem:[#allocation2 + $0x224] sm:$0xff]
        %v3133 = vld [vmem:[#allocation2 + $0x22c] sm:$0xf]
        %v3134 = vld [vmem:[#allocation2 + $0x230] sm:$0xff]
        %v3135 = vld [vmem:[#allocation2 + $0x238] sm:$0xff]
        %v3136 = vld [vmem:[#allocation2 + $0x240] sm:$0xf]
        %v3137 = vld [vmem:[#allocation2 + $0x244] sm:$0xff]
        %v3138 = vld [vmem:[#allocation2 + $0x24c] sm:$0xff]
        %v3139 = vld [vmem:[#allocation2 + $0x254] sm:$0xf]
        %v3140 = vld [vmem:[#allocation2 + $0x258] sm:$0xff]
        %v3141 = vld [vmem:[#allocation2 + $0x260] sm:$0xff]
        %v3142 = vld [vmem:[#allocation2 + $0x268] sm:$0xf]
        %v3143 = vld [vmem:[#allocation2 + $0x26c] sm:$0xff]
        %v3144 = vld [vmem:[#allocation2 + $0x274] sm:$0xff]
        %v3145 = vld [vmem:[#allocation2 + $0x27c] sm:$0xf]
        %v3146 = vld [vmem:[%s1] sm:$0xf]
        %v3147 = vld [vmem:[%s1 + $0x4] sm:$0xf]
        %v3148 = vld [vmem:[%s1 + $0x8] sm:$0xf]
        %v3149 = vld [vmem:[%s1 + $0xc] sm:$0xf]
        %v3150 = vld [vmem:[%s1 + $0x10] sm:$0xf]
        %v3151 = vld [vmem:[%s1 + $0x14] sm:$0xf]
        %v3152 = vld [vmem:[%s1 + $0x18] sm:$0xf]
        %v3153 = vld [vmem:[%s1 + $0x1c] sm:$0xf]
        %v3154 = vld [vmem:[%s1 + $0x20] sm:$0xf]
        %v3155 = vld [vmem:[%s1 + $0x24] sm:$0xf]
        %v3156 = vld [vmem:[%s1 + $0x28] sm:$0xf]
        %v3157 = vld [vmem:[%s1 + $0x2c] sm:$0xf]
        %v3158 = vld [vmem:[%s1 + $0x30] sm:$0xf]
        %v3159 = vld [vmem:[%s1 + $0x34] sm:$0xf]
        %v3160 = vld [vmem:[%s1 + $0x38] sm:$0xf]
        %v3161 = vld [vmem:[%s1 + $0x3c] sm:$0xf]
        %v3162 = vld [vmem:[%s1 + $0x40] sm:$0xf]
        %v3163 = vld [vmem:[%s1 + $0x44] sm:$0xf]
        %v3164 = vld [vmem:[%s1 + $0x48] sm:$0xf]
        %v3165 = vld [vmem:[%s1 + $0x4c] sm:$0xf]
        %v3166 = vld [vmem:[%s1 + $0x50] sm:$0xf]
        %v3167 = vld [vmem:[%s1 + $0x54] sm:$0xf]
        %v3168 = vld [vmem:[%s1 + $0x58] sm:$0xf]
        %v3169 = vld [vmem:[%s1 + $0x5c] sm:$0xf]
        %v3170 = vld [vmem:[%s1 + $0x60] sm:$0xf]
        %v3171 = vld [vmem:[%s1 + $0x64] sm:$0xf]
        %v3172 = vld [vmem:[%s1 + $0x68] sm:$0xf]
        %v3173 = vld [vmem:[%s1 + $0x6c] sm:$0xf]
        %v3174 = vld [vmem:[%s1 + $0x70] sm:$0xf]
        %v3175 = vld [vmem:[%s1 + $0x74] sm:$0xf]
        %v3176 = vld [vmem:[%s1 + $0x78] sm:$0xf]
        %v3177 = vld [vmem:[%s1 + $0x7c] sm:$0xf]
        %v3178 = vld [vmem:[%s1 + $0x80] sm:$0xf]
        %v3179 = vld [vmem:[%s1 + $0x84] sm:$0xf]
        %v3180 = vld [vmem:[%s1 + $0x88] sm:$0xf]
        %v3181 = vld [vmem:[%s1 + $0x8c] sm:$0xf]
        %v3182 = vld [vmem:[%s1 + $0x90] sm:$0xf]
        %v3183 = vld [vmem:[%s1 + $0x94] sm:$0xf]
        %v3184 = vld [vmem:[%s1 + $0x98] sm:$0xf]
        %v3185 = vld [vmem:[%s1 + $0x9c] sm:$0xf]
        %v3186 = vld [vmem:[%s1 + $0xa0] sm:$0xf]
        %v3187 = vld [vmem:[%s1 + $0xa4] sm:$0xf]
        %v3188 = vld [vmem:[%s1 + $0xa8] sm:$0xf]
        %v3189 = vld [vmem:[%s1 + $0xac] sm:$0xf]
        %v3190 = vld [vmem:[%s1 + $0xb0] sm:$0xf]
        %v3191 = vld [vmem:[%s1 + $0xb4] sm:$0xf]
        %v3192 = vld [vmem:[%s1 + $0xb8] sm:$0xf]
        %v3193 = vld [vmem:[%s1 + $0xbc] sm:$0xf]
        %v3194 = vld [vmem:[%s1 + $0xc0] sm:$0xf]
        %v3195 = vld [vmem:[%s1 + $0xc4] sm:$0xf]
        %v3196 = vld [vmem:[%s1 + $0xc8] sm:$0xf]
        %v3197 = vld [vmem:[%s1 + $0xcc] sm:$0xf]
        %v3198 = vld [vmem:[%s1 + $0xd0] sm:$0xf]
        %v3199 = vld [vmem:[%s1 + $0xd4] sm:$0xf]
        %v3200 = vld [vmem:[%s1 + $0xd8] sm:$0xf]
        %v3201 = vld [vmem:[%s1 + $0xdc] sm:$0xf]
        %v3202 = vld [vmem:[%s1 + $0xe0] sm:$0xf]
        %v3203 = vld [vmem:[%s1 + $0xe4] sm:$0xf]
        %v3204 = vld [vmem:[%s1 + $0xe8] sm:$0xf]
        %v3205 = vld [vmem:[%s1 + $0xec] sm:$0xf]
        %v3206 = vld [vmem:[%s1 + $0xf0] sm:$0xf]
        %v3207 = vld [vmem:[%s1 + $0xf4] sm:$0xf]
        %v3208 = vld [vmem:[%s1 + $0xf8] sm:$0xf]
        %v3209 = vld [vmem:[%s1 + $0xfc] sm:$0xf]
        %v3210 = vld [vmem:[%s1 + $0x100] sm:$0xf]
        %v3211 = vld [vmem:[%s1 + $0x104] sm:$0xf]
        %v3212 = vld [vmem:[%s1 + $0x108] sm:$0xf]
        %v3213 = vld [vmem:[%s1 + $0x10c] sm:$0xf]
        %v3214 = vld [vmem:[%s1 + $0x110] sm:$0xf]
        %v3215 = vld [vmem:[%s1 + $0x114] sm:$0xf]
        %v3216 = vld [vmem:[%s1 + $0x118] sm:$0xf]
        %v3217 = vld [vmem:[%s1 + $0x11c] sm:$0xf]
        %v3218 = vld [vmem:[%s4] sm:$0x1]
        %v3219 = vlaneseq
        %v3220 = vshrl.u32 %v3219, 7
        %v3221 = vsub.s32 0, %v3220
        %v3222 = vrot.slane %v3218, %v3221
        %v3319 = vunpack.c.l.b16 %v3050
        %v3320 = vunpack.c.h.b16 %v3050
        %v3321 = vunpack.c.l.b16 %v3051
        %v3322 = vunpack.c.h.b16 %v3051
        %v3323 = vunpack.c.l.b16 %v3052
        %v3324 = vunpack.c.l.b16 %v3053
        %v3325 = vunpack.c.h.b16 %v3053
        %v3326 = vunpack.c.l.b16 %v3054
        %v3327 = vunpack.c.h.b16 %v3054
        %v3328 = vunpack.c.l.b16 %v3055
        %v3329 = vunpack.c.l.b16 %v3056
        %v3330 = vunpack.c.h.b16 %v3056
        %v3331 = vunpack.c.l.b16 %v3057
        %v3332 = vunpack.c.h.b16 %v3057
        %v3333 = vunpack.c.l.b16 %v3058
        %v3334 = vunpack.c.l.b16 %v3059
        %v3335 = vunpack.c.h.b16 %v3059
        %v3336 = vunpack.c.l.b16 %v3060
        %v3337 = vunpack.c.h.b16 %v3060
        %v3338 = vunpack.c.l.b16 %v3061
        %v3339 = vunpack.c.l.b16 %v3062
        %v3340 = vunpack.c.h.b16 %v3062
        %v3341 = vunpack.c.l.b16 %v3063
        %v3342 = vunpack.c.h.b16 %v3063
        %v3343 = vunpack.c.l.b16 %v3064
        %v3344 = vunpack.c.l.b16 %v3065
        %v3345 = vunpack.c.h.b16 %v3065
        %v3346 = vunpack.c.l.b16 %v3066
        %v3347 = vunpack.c.h.b16 %v3066
        %v3348 = vunpack.c.l.b16 %v3067
        %v3349 = vunpack.c.l.b16 %v3068
        %v3350 = vunpack.c.h.b16 %v3068
        %v3351 = vunpack.c.l.b16 %v3069
        %v3352 = vunpack.c.h.b16 %v3069
        %v3353 = vunpack.c.l.b16 %v3070
        %v3354 = vunpack.c.l.b16 %v3071
        %v3355 = vunpack.c.h.b16 %v3071
        %v3356 = vunpack.c.l.b16 %v3072
        %v3357 = vunpack.c.h.b16 %v3072
        %v3358 = vunpack.c.l.b16 %v3073
        %v3359 = vunpack.c.l.b16 %v3074
        %v3360 = vunpack.c.h.b16 %v3074
        %v3361 = vunpack.c.l.b16 %v3075
        %v3362 = vunpack.c.h.b16 %v3075
        %v3363 = vunpack.c.l.b16 %v3076
        %v3364 = vunpack.c.l.b16 %v3077
        %v3365 = vunpack.c.h.b16 %v3077
        %v3366 = vunpack.c.l.b16 %v3078
        %v3367 = vunpack.c.h.b16 %v3078
        %v3368 = vunpack.c.l.b16 %v3079
        %v3369 = vunpack.c.l.b16 %v3080
        %v3370 = vunpack.c.h.b16 %v3080
        %v3371 = vunpack.c.l.b16 %v3081
        %v3372 = vunpack.c.h.b16 %v3081
        %v3373 = vunpack.c.l.b16 %v3082
        %v3374 = vunpack.c.l.b16 %v3083
        %v3375 = vunpack.c.h.b16 %v3083
        %v3376 = vunpack.c.l.b16 %v3084
        %v3377 = vunpack.c.h.b16 %v3084
        %v3378 = vunpack.c.l.b16 %v3085
        %v3379 = vunpack.c.l.b16 %v3086
        %v3380 = vunpack.c.h.b16 %v3086
        %v3381 = vunpack.c.l.b16 %v3087
        %v3382 = vunpack.c.h.b16 %v3087
        %v3383 = vunpack.c.l.b16 %v3088
        %v3384 = vunpack.c.l.b16 %v3089
        %v3385 = vunpack.c.h.b16 %v3089
        %v3386 = vunpack.c.l.b16 %v3090
        %v3387 = vunpack.c.h.b16 %v3090
        %v3388 = vunpack.c.l.b16 %v3091
        %v3389 = vunpack.c.l.b16 %v3092
        %v3390 = vunpack.c.h.b16 %v3092
        %v3391 = vunpack.c.l.b16 %v3093
        %v3392 = vunpack.c.h.b16 %v3093
        %v3393 = vunpack.c.l.b16 %v3094
        %v3394 = vunpack.c.l.b16 %v3095
        %v3395 = vunpack.c.h.b16 %v3095
        %v3396 = vunpack.c.l.b16 %v3096
        %v3397 = vunpack.c.h.b16 %v3096
        %v3398 = vunpack.c.l.b16 %v3097
        %v3399 = vunpack.c.l.b16 %v3098
        %v3400 = vunpack.c.h.b16 %v3098
        %v3401 = vunpack.c.l.b16 %v3099
        %v3402 = vunpack.c.h.b16 %v3099
        %v3403 = vunpack.c.l.b16 %v3100
        %v3404 = vunpack.c.l.b16 %v3101
        %v3405 = vunpack.c.h.b16 %v3101
        %v3406 = vunpack.c.l.b16 %v3102
        %v3407 = vunpack.c.h.b16 %v3102
        %v3408 = vunpack.c.l.b16 %v3103
        %v3409 = vunpack.c.l.b16 %v3104
        %v3410 = vunpack.c.h.b16 %v3104
        %v3411 = vunpack.c.l.b16 %v3105
        %v3412 = vunpack.c.h.b16 %v3105
        %v3413 = vunpack.c.l.b16 %v3106
        %v3414 = vunpack.c.l.b16 %v3107
        %v3415 = vunpack.c.h.b16 %v3107
        %v3416 = vunpack.c.l.b16 %v3108
        %v3417 = vunpack.c.h.b16 %v3108
        %v3418 = vunpack.c.l.b16 %v3109
        %v3419 = vunpack.c.l.b16 %v3110
        %v3420 = vunpack.c.h.b16 %v3110
        %v3421 = vunpack.c.l.b16 %v3111
        %v3422 = vunpack.c.h.b16 %v3111
        %v3423 = vunpack.c.l.b16 %v3112
        %v3424 = vunpack.c.l.b16 %v3113
        %v3425 = vunpack.c.h.b16 %v3113
        %v3426 = vunpack.c.l.b16 %v3114
        %v3427 = vunpack.c.h.b16 %v3114
        %v3428 = vunpack.c.l.b16 %v3115
        %v3429 = vunpack.c.l.b16 %v3116
        %v3430 = vunpack.c.h.b16 %v3116
        %v3431 = vunpack.c.l.b16 %v3117
        %v3432 = vunpack.c.h.b16 %v3117
        %v3433 = vunpack.c.l.b16 %v3118
        %v3434 = vunpack.c.l.b16 %v3119
        %v3435 = vunpack.c.h.b16 %v3119
        %v3436 = vunpack.c.l.b16 %v3120
        %v3437 = vunpack.c.h.b16 %v3120
        %v3438 = vunpack.c.l.b16 %v3121
        %v3439 = vunpack.c.l.b16 %v3122
        %v3440 = vunpack.c.h.b16 %v3122
        %v3441 = vunpack.c.l.b16 %v3123
        %v3442 = vunpack.c.h.b16 %v3123
        %v3443 = vunpack.c.l.b16 %v3124
        %v3444 = vunpack.c.l.b16 %v3125
        %v3445 = vunpack.c.h.b16 %v3125
        %v3446 = vunpack.c.l.b16 %v3126
        %v3447 = vunpack.c.h.b16 %v3126
        %v3448 = vunpack.c.l.b16 %v3127
        %v3449 = vunpack.c.l.b16 %v3128
        %v3450 = vunpack.c.h.b16 %v3128
        %v3451 = vunpack.c.l.b16 %v3129
        %v3452 = vunpack.c.h.b16 %v3129
        %v3453 = vunpack.c.l.b16 %v3130
        %v3454 = vunpack.c.l.b16 %v3131
        %v3455 = vunpack.c.h.b16 %v3131
        %v3456 = vunpack.c.l.b16 %v3132
        %v3457 = vunpack.c.h.b16 %v3132
        %v3458 = vunpack.c.l.b16 %v3133
        %v3459 = vunpack.c.l.b16 %v3134
        %v3460 = vunpack.c.h.b16 %v3134
        %v3461 = vunpack.c.l.b16 %v3135
        %v3462 = vunpack.c.h.b16 %v3135
        %v3463 = vunpack.c.l.b16 %v3136
        %v3464 = vunpack.c.l.b16 %v3137
        %v3465 = vunpack.c.h.b16 %v3137
        %v3466 = vunpack.c.l.b16 %v3138
        %v3467 = vunpack.c.h.b16 %v3138
        %v3468 = vunpack.c.l.b16 %v3139
        %v3469 = vunpack.c.l.b16 %v3140
        %v3470 = vunpack.c.h.b16 %v3140
        %v3471 = vunpack.c.l.b16 %v3141
        %v3472 = vunpack.c.h.b16 %v3141
        %v3473 = vunpack.c.l.b16 %v3142
        %v3474 = vunpack.c.l.b16 %v3143
        %v3475 = vunpack.c.h.b16 %v3143
        %v3476 = vunpack.c.l.b16 %v3144
        %v3477 = vunpack.c.h.b16 %v3144
        %v3478 = vunpack.c.l.b16 %v3145
        %v3479 = vpack.c.b16 %v3324, %v3319
        %v3480 = vpack.c.b16 %v3325, %v3320
        %v3481 = vpack.c.b16 %v3326, %v3321
        %v3482 = vpack.c.b16 %v3327, %v3322
        %v3483 = vpack.c.b16 %v3328, %v3323
        %v3484 = vpack.c.b16 %v3334, %v3329
        %v3485 = vpack.c.b16 %v3335, %v3330
        %v3486 = vpack.c.b16 %v3336, %v3331
        %v3487 = vpack.c.b16 %v3337, %v3332
        %v3488 = vpack.c.b16 %v3338, %v3333
        %v3489 = vpack.c.b16 %v3344, %v3339
        %v3490 = vpack.c.b16 %v3345, %v3340
        %v3491 = vpack.c.b16 %v3346, %v3341
        %v3492 = vpack.c.b16 %v3347, %v3342
        %v3493 = vpack.c.b16 %v3348, %v3343
        %v3494 = vpack.c.b16 %v3354, %v3349
        %v3495 = vpack.c.b16 %v3355, %v3350
        %v3496 = vpack.c.b16 %v3356, %v3351
        %v3497 = vpack.c.b16 %v3357, %v3352
        %v3498 = vpack.c.b16 %v3358, %v3353
        %v3499 = vpack.c.b16 %v3364, %v3359
        %v3500 = vpack.c.b16 %v3365, %v3360
        %v3501 = vpack.c.b16 %v3366, %v3361
        %v3502 = vpack.c.b16 %v3367, %v3362
        %v3503 = vpack.c.b16 %v3368, %v3363
        %v3504 = vpack.c.b16 %v3374, %v3369
        %v3505 = vpack.c.b16 %v3375, %v3370
        %v3506 = vpack.c.b16 %v3376, %v3371
        %v3507 = vpack.c.b16 %v3377, %v3372
        %v3508 = vpack.c.b16 %v3378, %v3373
        %v3509 = vpack.c.b16 %v3384, %v3379
        %v3510 = vpack.c.b16 %v3385, %v3380
        %v3511 = vpack.c.b16 %v3386, %v3381
        %v3512 = vpack.c.b16 %v3387, %v3382
        %v3513 = vpack.c.b16 %v3388, %v3383
        %v3514 = vpack.c.b16 %v3394, %v3389
        %v3515 = vpack.c.b16 %v3395, %v3390
        %v3516 = vpack.c.b16 %v3396, %v3391
        %v3517 = vpack.c.b16 %v3397, %v3392
        %v3518 = vpack.c.b16 %v3398, %v3393
        %v3519 = vpack.c.b16 %v3404, %v3399
        %v3520 = vpack.c.b16 %v3405, %v3400
        %v3521 = vpack.c.b16 %v3406, %v3401
        %v3522 = vpack.c.b16 %v3407, %v3402
        %v3523 = vpack.c.b16 %v3408, %v3403
        %v3524 = vpack.c.b16 %v3414, %v3409
        %v3525 = vpack.c.b16 %v3415, %v3410
        %v3526 = vpack.c.b16 %v3416, %v3411
        %v3527 = vpack.c.b16 %v3417, %v3412
        %v3528 = vpack.c.b16 %v3418, %v3413
        %v3529 = vpack.c.b16 %v3424, %v3419
        %v3530 = vpack.c.b16 %v3425, %v3420
        %v3531 = vpack.c.b16 %v3426, %v3421
        %v3532 = vpack.c.b16 %v3427, %v3422
        %v3533 = vpack.c.b16 %v3428, %v3423
        %v3534 = vpack.c.b16 %v3434, %v3429
        %v3535 = vpack.c.b16 %v3435, %v3430
        %v3536 = vpack.c.b16 %v3436, %v3431
        %v3537 = vpack.c.b16 %v3437, %v3432
        %v3538 = vpack.c.b16 %v3438, %v3433
        %v3539 = vpack.c.b16 %v3444, %v3439
        %v3540 = vpack.c.b16 %v3445, %v3440
        %v3541 = vpack.c.b16 %v3446, %v3441
        %v3542 = vpack.c.b16 %v3447, %v3442
        %v3543 = vpack.c.b16 %v3448, %v3443
        %v3544 = vpack.c.b16 %v3454, %v3449
        %v3545 = vpack.c.b16 %v3455, %v3450
        %v3546 = vpack.c.b16 %v3456, %v3451
        %v3547 = vpack.c.b16 %v3457, %v3452
        %v3548 = vpack.c.b16 %v3458, %v3453
        %v3549 = vpack.c.b16 %v3464, %v3459
        %v3550 = vpack.c.b16 %v3465, %v3460
        %v3551 = vpack.c.b16 %v3466, %v3461
        %v3552 = vpack.c.b16 %v3467, %v3462
        %v3553 = vpack.c.b16 %v3468, %v3463
        %v3554 = vpack.c.b16 %v3474, %v3469
        %v3555 = vpack.c.b16 %v3475, %v3470
        %v3556 = vpack.c.b16 %v3476, %v3471
        %v3557 = vpack.c.b16 %v3477, %v3472
        %v3558 = vpack.c.b16 %v3478, %v3473
        %v3695 = vunpack.c.l.b16 %v3146
        %v3696 = vunpack.c.l.b16 %v3147
        %v3697 = vunpack.c.l.b16 %v3148
        %v3698 = vunpack.c.l.b16 %v3149
        %v3699 = vunpack.c.l.b16 %v3150
        %v3700 = vunpack.c.l.b16 %v3151
        %v3701 = vunpack.c.l.b16 %v3152
        %v3702 = vunpack.c.l.b16 %v3153
        %v3703 = vunpack.c.l.b16 %v3154
        %v3704 = vunpack.c.l.b16 %v3155
        %v3705 = vunpack.c.l.b16 %v3156
        %v3706 = vunpack.c.l.b16 %v3157
        %v3707 = vunpack.c.l.b16 %v3158
        %v3708 = vunpack.c.l.b16 %v3159
        %v3709 = vunpack.c.l.b16 %v3160
        %v3710 = vunpack.c.l.b16 %v3161
        %v3711 = vunpack.c.l.b16 %v3162
        %v3712 = vunpack.c.l.b16 %v3163
        %v3713 = vunpack.c.l.b16 %v3164
        %v3714 = vunpack.c.l.b16 %v3165
        %v3715 = vunpack.c.l.b16 %v3166
        %v3716 = vunpack.c.l.b16 %v3167
        %v3717 = vunpack.c.l.b16 %v3168
        %v3718 = vunpack.c.l.b16 %v3169
        %v3719 = vunpack.c.l.b16 %v3170
        %v3720 = vunpack.c.l.b16 %v3171
        %v3721 = vunpack.c.l.b16 %v3172
        %v3722 = vunpack.c.l.b16 %v3173
        %v3723 = vunpack.c.l.b16 %v3174
        %v3724 = vunpack.c.l.b16 %v3175
        %v3725 = vunpack.c.l.b16 %v3176
        %v3726 = vunpack.c.l.b16 %v3177
        %v3727 = vunpack.c.l.b16 %v3178
        %v3728 = vunpack.c.l.b16 %v3179
        %v3729 = vunpack.c.l.b16 %v3180
        %v3730 = vunpack.c.l.b16 %v3181
        %v3731 = vunpack.c.l.b16 %v3182
        %v3732 = vunpack.c.l.b16 %v3183
        %v3733 = vunpack.c.l.b16 %v3184
        %v3734 = vunpack.c.l.b16 %v3185
        %v3735 = vunpack.c.l.b16 %v3186
        %v3736 = vunpack.c.l.b16 %v3187
        %v3737 = vunpack.c.l.b16 %v3188
        %v3738 = vunpack.c.l.b16 %v3189
        %v3739 = vunpack.c.l.b16 %v3190
        %v3740 = vunpack.c.l.b16 %v3191
        %v3741 = vunpack.c.l.b16 %v3192
        %v3742 = vunpack.c.l.b16 %v3193
        %v3743 = vunpack.c.l.b16 %v3194
        %v3744 = vunpack.c.l.b16 %v3195
        %v3745 = vunpack.c.l.b16 %v3196
        %v3746 = vunpack.c.l.b16 %v3197
        %v3747 = vunpack.c.l.b16 %v3198
        %v3748 = vunpack.c.l.b16 %v3199
        %v3749 = vunpack.c.l.b16 %v3200
        %v3750 = vunpack.c.l.b16 %v3201
        %v3751 = vunpack.c.l.b16 %v3202
        %v3752 = vunpack.c.l.b16 %v3203
        %v3753 = vunpack.c.l.b16 %v3204
        %v3754 = vunpack.c.l.b16 %v3205
        %v3755 = vunpack.c.l.b16 %v3206
        %v3756 = vunpack.c.l.b16 %v3207
        %v3757 = vunpack.c.l.b16 %v3208
        %v3758 = vunpack.c.l.b16 %v3209
        %v3759 = vunpack.c.l.b16 %v3210
        %v3760 = vunpack.c.l.b16 %v3211
        %v3761 = vunpack.c.l.b16 %v3212
        %v3762 = vunpack.c.l.b16 %v3213
        %v3763 = vunpack.c.l.b16 %v3214
        %v3764 = vunpack.c.l.b16 %v3215
        %v3765 = vunpack.c.l.b16 %v3216
        %v3766 = vunpack.c.l.b16 %v3217
        %v3767 = vpack.c.b16 %v3696, %v3695
        %v3768 = vpack.c.b16 %v3698, %v3697
        %v3769 = vpack.c.b16 %v3700, %v3699
        %v3770 = vpack.c.b16 %v3702, %v3701
        %v3771 = vpack.c.b16 %v3704, %v3703
        %v3772 = vpack.c.b16 %v3706, %v3705
        %v3773 = vpack.c.b16 %v3708, %v3707
        %v3774 = vpack.c.b16 %v3710, %v3709
        %v3775 = vpack.c.b16 %v3712, %v3711
        %v3776 = vpack.c.b16 %v3714, %v3713
        %v3777 = vpack.c.b16 %v3716, %v3715
        %v3778 = vpack.c.b16 %v3718, %v3717
        %v3779 = vpack.c.b16 %v3720, %v3719
        %v3780 = vpack.c.b16 %v3722, %v3721
        %v3781 = vpack.c.b16 %v3724, %v3723
        %v3782 = vpack.c.b16 %v3726, %v3725
        %v3783 = vpack.c.b16 %v3728, %v3727
        %v3784 = vpack.c.b16 %v3730, %v3729
        %v3785 = vpack.c.b16 %v3732, %v3731
        %v3786 = vpack.c.b16 %v3734, %v3733
        %v3787 = vpack.c.b16 %v3736, %v3735
        %v3788 = vpack.c.b16 %v3738, %v3737
        %v3789 = vpack.c.b16 %v3740, %v3739
        %v3790 = vpack.c.b16 %v3742, %v3741
        %v3791 = vpack.c.b16 %v3744, %v3743
        %v3792 = vpack.c.b16 %v3746, %v3745
        %v3793 = vpack.c.b16 %v3748, %v3747
        %v3794 = vpack.c.b16 %v3750, %v3749
        %v3795 = vpack.c.b16 %v3752, %v3751
        %v3796 = vpack.c.b16 %v3754, %v3753
        %v3797 = vpack.c.b16 %v3756, %v3755
        %v3798 = vpack.c.b16 %v3758, %v3757
        %v3799 = vpack.c.b16 %v3760, %v3759
        %v3800 = vpack.c.b16 %v3762, %v3761
        %v3801 = vpack.c.b16 %v3764, %v3763
        %v3802 = vpack.c.b16 %v3766, %v3765
        %vm3839 = vcmask 523264
        %v3841 = vsel %vm3839, %v3483, 0
        %v3844 = vsel %vm3839, %v3488, 0
        %v3847 = vsel %vm3839, %v3493, 0
        %v3850 = vsel %vm3839, %v3498, 0
        %v3853 = vsel %vm3839, %v3503, 0
        %v3856 = vsel %vm3839, %v3508, 0
        %v3859 = vsel %vm3839, %v3513, 0
        %v3862 = vsel %vm3839, %v3518, 0
        %v3865 = vsel %vm3839, %v3523, 0
        %v3868 = vsel %vm3839, %v3528, 0
        %v3871 = vsel %vm3839, %v3533, 0
        %v3874 = vsel %vm3839, %v3538, 0
        %v3877 = vsel %vm3839, %v3543, 0
        %v3880 = vsel %vm3839, %v3548, 0
        %v3883 = vsel %vm3839, %v3553, 0
        %v3886 = vsel %vm3839, %v3558, 0
        %3888 = vmatprep.subr.bf16.mxu0 0
        %3889 = vmatpush1.bf16.msra.mxu0 %v3774
        %3890 = vmatprep.subr.bf16.mxu0 0
        %3891 = vmatpush1.bf16.msra.mxu0 %v3773
        %3892 = vmatprep.subr.bf16.mxu0 0
        %3893 = vmatpush1.bf16.msra.mxu0 %v3772
        %3894 = vmatprep.subr.bf16.mxu0 0
        %3895 = vmatpush1.bf16.msra.mxu0 %v3771
        %3896 = vmatprep.subr.bf16.mxu0 0
        %3897 = vmatpush1.bf16.msra.mxu0 %v3770
        %3898 = vmatprep.subr.bf16.mxu0 0
        %3899 = vmatpush1.bf16.msra.mxu0 %v3769
        %3900 = vmatprep.subr.bf16.mxu0 0
        %3901 = vmatpush1.bf16.msra.mxu0 %v3768
        %3902 = vmatprep.subr.bf16.mxu0 0
        %3903 = vmatpush1.bf16.msra.mxu0 %v3767
        %3904 = vmatprep.subr.bf16.mxu0 0
        %3905 = vmatpush2.bf16.msra.mxu0 %v3782
        %3906 = vmatprep.subr.bf16.mxu0 0
        %3907 = vmatpush2.bf16.msra.mxu0 %v3781
        %3908 = vmatprep.subr.bf16.mxu0 0
        %3909 = vmatpush2.bf16.msra.mxu0 %v3780
        %3910 = vmatprep.subr.bf16.mxu0 0
        %3911 = vmatpush2.bf16.msra.mxu0 %v3779
        %3912 = vmatprep.subr.bf16.mxu0 0
        %3913 = vmatpush2.bf16.msra.mxu0 %v3778
        %3914 = vmatprep.subr.bf16.mxu0 0
        %3915 = vmatpush2.bf16.msra.mxu0 %v3777
        %3916 = vmatprep.subr.bf16.mxu0 0
        %3917 = vmatpush2.bf16.msra.mxu0 %v3776
        %3918 = vmatprep.subr.bf16.mxu0 0
        %3919 = vmatpush2.bf16.msra.mxu0 %v3775
        %3920 = vmatprep.mubr.bf16.mxu0 %v3480
        %3921 = vmatmul.mubr.bf16.gmra.mxu0 %v3479
        %v3922 = vpop.f32.mrf.mxu0
        %v3923 = vadd.f32 %v3222, %v3922
        %v3924 = vpop.f32.mrf.mxu0
        %v3925 = vpop.f32.mrf.mxu0
        %v3926 = vadd.f32 %v3222, %v3925
        %v3927 = vpop.f32.mrf.mxu0
        %3928 = vmatprep.mubr.bf16.mxu0 %v3485
        %3929 = vmatmul.mubr.bf16.gmra.mxu0 %v3484
        %v3930 = vpop.f32.mrf.mxu0
        %v3931 = vadd.f32 %v3222, %v3930
        %v3932 = vpop.f32.mrf.mxu0
        %v3933 = vpop.f32.mrf.mxu0
        %v3934 = vadd.f32 %v3222, %v3933
        %v3935 = vpop.f32.mrf.mxu0
        %3936 = vmatprep.mubr.bf16.mxu0 %v3490
        %3937 = vmatmul.mubr.bf16.gmra.mxu0 %v3489
        %v3938 = vpop.f32.mrf.mxu0
        %v3939 = vadd.f32 %v3222, %v3938
        %v3940 = vpop.f32.mrf.mxu0
        %v3941 = vpop.f32.mrf.mxu0
        %v3942 = vadd.f32 %v3222, %v3941
        %v3943 = vpop.f32.mrf.mxu0
        %3944 = vmatprep.mubr.bf16.mxu0 %v3495
        %3945 = vmatmul.mubr.bf16.gmra.mxu0 %v3494
        %v3946 = vpop.f32.mrf.mxu0
        %v3947 = vadd.f32 %v3222, %v3946
        %v3948 = vpop.f32.mrf.mxu0
        %v3949 = vpop.f32.mrf.mxu0
        %v3950 = vadd.f32 %v3222, %v3949
        %v3951 = vpop.f32.mrf.mxu0
        %3952 = vmatprep.mubr.bf16.mxu0 %v3500
        %3953 = vmatmul.mubr.bf16.gmra.mxu0 %v3499
        %v3954 = vpop.f32.mrf.mxu0
        %v3955 = vadd.f32 %v3222, %v3954
        %v3956 = vpop.f32.mrf.mxu0
        %v3957 = vpop.f32.mrf.mxu0
        %v3958 = vadd.f32 %v3222, %v3957
        %v3959 = vpop.f32.mrf.mxu0
        %3960 = vmatprep.mubr.bf16.mxu0 %v3505
        %3961 = vmatmul.mubr.bf16.gmra.mxu0 %v3504
        %v3962 = vpop.f32.mrf.mxu0
        %v3963 = vadd.f32 %v3222, %v3962
        %v3964 = vpop.f32.mrf.mxu0
        %v3965 = vpop.f32.mrf.mxu0
        %v3966 = vadd.f32 %v3222, %v3965
        %v3967 = vpop.f32.mrf.mxu0
        %3968 = vmatprep.mubr.bf16.mxu0 %v3510
        %3969 = vmatmul.mubr.bf16.gmra.mxu0 %v3509
        %v3970 = vpop.f32.mrf.mxu0
        %v3971 = vadd.f32 %v3222, %v3970
        %v3972 = vpop.f32.mrf.mxu0
        %v3973 = vpop.f32.mrf.mxu0
        %v3974 = vadd.f32 %v3222, %v3973
        %v3975 = vpop.f32.mrf.mxu0
        %3976 = vmatprep.mubr.bf16.mxu0 %v3515
        %3977 = vmatmul.mubr.bf16.gmra.mxu0 %v3514
        %v3978 = vpop.f32.mrf.mxu0
        %v3979 = vadd.f32 %v3222, %v3978
        %v3980 = vpop.f32.mrf.mxu0
        %v3981 = vpop.f32.mrf.mxu0
        %v3982 = vadd.f32 %v3222, %v3981
        %v3983 = vpop.f32.mrf.mxu0
        %3984 = vmatprep.mubr.bf16.mxu0 %v3520
        %3985 = vmatmul.mubr.bf16.gmra.mxu0 %v3519
        %v3986 = vpop.f32.mrf.mxu0
        %v3987 = vadd.f32 %v3222, %v3986
        %v3988 = vpop.f32.mrf.mxu0
        %v3989 = vpop.f32.mrf.mxu0
        %v3990 = vadd.f32 %v3222, %v3989
        %v3991 = vpop.f32.mrf.mxu0
        %3992 = vmatprep.mubr.bf16.mxu0 %v3525
        %3993 = vmatmul.mubr.bf16.gmra.mxu0 %v3524
        %v3994 = vpop.f32.mrf.mxu0
        %v3995 = vadd.f32 %v3222, %v3994
        %v3996 = vpop.f32.mrf.mxu0
        %v3997 = vpop.f32.mrf.mxu0
        %v3998 = vadd.f32 %v3222, %v3997
        %v3999 = vpop.f32.mrf.mxu0
        %4000 = vmatprep.mubr.bf16.mxu0 %v3530
        %4001 = vmatmul.mubr.bf16.gmra.mxu0 %v3529
        %v4002 = vpop.f32.mrf.mxu0
        %v4003 = vadd.f32 %v3222, %v4002
        %v4004 = vpop.f32.mrf.mxu0
        %v4005 = vpop.f32.mrf.mxu0
        %v4006 = vadd.f32 %v3222, %v4005
        %v4007 = vpop.f32.mrf.mxu0
        %4008 = vmatprep.mubr.bf16.mxu0 %v3535
        %4009 = vmatmul.mubr.bf16.gmra.mxu0 %v3534
        %v4010 = vpop.f32.mrf.mxu0
        %v4011 = vadd.f32 %v3222, %v4010
        %v4012 = vpop.f32.mrf.mxu0
        %v4013 = vpop.f32.mrf.mxu0
        %v4014 = vadd.f32 %v3222, %v4013
        %v4015 = vpop.f32.mrf.mxu0
        %4016 = vmatprep.mubr.bf16.mxu0 %v3540
        %4017 = vmatmul.mubr.bf16.gmra.mxu0 %v3539
        %v4018 = vpop.f32.mrf.mxu0
        %v4019 = vadd.f32 %v3222, %v4018
        %v4020 = vpop.f32.mrf.mxu0
        %v4021 = vpop.f32.mrf.mxu0
        %v4022 = vadd.f32 %v3222, %v4021
        %v4023 = vpop.f32.mrf.mxu0
        %4024 = vmatprep.mubr.bf16.mxu0 %v3545
        %4025 = vmatmul.mubr.bf16.gmra.mxu0 %v3544
        %v4026 = vpop.f32.mrf.mxu0
        %v4027 = vadd.f32 %v3222, %v4026
        %v4028 = vpop.f32.mrf.mxu0
        %v4029 = vpop.f32.mrf.mxu0
        %v4030 = vadd.f32 %v3222, %v4029
        %v4031 = vpop.f32.mrf.mxu0
        %4032 = vmatprep.mubr.bf16.mxu0 %v3550
        %4033 = vmatmul.mubr.bf16.gmra.mxu0 %v3549
        %v4034 = vpop.f32.mrf.mxu0
        %v4035 = vadd.f32 %v3222, %v4034
        %v4036 = vpop.f32.mrf.mxu0
        %v4037 = vpop.f32.mrf.mxu0
        %v4038 = vadd.f32 %v3222, %v4037
        %v4039 = vpop.f32.mrf.mxu0
        %4040 = vmatprep.mubr.bf16.mxu0 %v3555
        %4041 = vmatmul.mubr.bf16.gmra.mxu0 %v3554
        %v4042 = vpop.f32.mrf.mxu0
        %v4043 = vadd.f32 %v3222, %v4042
        %v4044 = vpop.f32.mrf.mxu0
        %v4045 = vpop.f32.mrf.mxu0
        %v4046 = vadd.f32 %v3222, %v4045
        %v4047 = vpop.f32.mrf.mxu0
        %4048 = vdwg.mxu0
        %4049 = vmatprep.subr.bf16.mxu0 0
        %4050 = vmatpush1.bf16.msra.mxu0 %v3790
        %4051 = vmatprep.subr.bf16.mxu0 0
        %4052 = vmatpush1.bf16.msra.mxu0 %v3789
        %4053 = vmatprep.subr.bf16.mxu0 0
        %4054 = vmatpush1.bf16.msra.mxu0 %v3788
        %4055 = vmatprep.subr.bf16.mxu0 0
        %4056 = vmatpush1.bf16.msra.mxu0 %v3787
        %4057 = vmatprep.subr.bf16.mxu0 0
        %4058 = vmatpush1.bf16.msra.mxu0 %v3786
        %4059 = vmatprep.subr.bf16.mxu0 0
        %4060 = vmatpush1.bf16.msra.mxu0 %v3785
        %4061 = vmatprep.subr.bf16.mxu0 0
        %4062 = vmatpush1.bf16.msra.mxu0 %v3784
        %4063 = vmatprep.subr.bf16.mxu0 0
        %4064 = vmatpush1.bf16.msra.mxu0 %v3783
        %4065 = vmatprep.subr.bf16.mxu0 0
        %4066 = vmatpush2.bf16.msra.mxu0 %v3798
        %4067 = vmatprep.subr.bf16.mxu0 0
        %4068 = vmatpush2.bf16.msra.mxu0 %v3797
        %4069 = vmatprep.subr.bf16.mxu0 0
        %4070 = vmatpush2.bf16.msra.mxu0 %v3796
        %4071 = vmatprep.subr.bf16.mxu0 0
        %4072 = vmatpush2.bf16.msra.mxu0 %v3795
        %4073 = vmatprep.subr.bf16.mxu0 0
        %4074 = vmatpush2.bf16.msra.mxu0 %v3794
        %4075 = vmatprep.subr.bf16.mxu0 0
        %4076 = vmatpush2.bf16.msra.mxu0 %v3793
        %4077 = vmatprep.subr.bf16.mxu0 0
        %4078 = vmatpush2.bf16.msra.mxu0 %v3792
        %4079 = vmatprep.subr.bf16.mxu0 0
        %4080 = vmatpush2.bf16.msra.mxu0 %v3791
        %4081 = vmatprep.mubr.bf16.mxu0 %v3482
        %4082 = vmatmul.mubr.bf16.gmra.mxu0 %v3481
        %v4083 = vpop.f32.mrf.mxu0
        %v4084 = vadd.f32 %v3923, %v4083
        %v4085 = vpop.f32.mrf.mxu0
        %v4086 = vpop.f32.mrf.mxu0
        %v4087 = vadd.f32 %v3926, %v4086
        %v4088 = vpop.f32.mrf.mxu0
        %4089 = vmatprep.mubr.bf16.mxu0 %v3487
        %4090 = vmatmul.mubr.bf16.gmra.mxu0 %v3486
        %v4091 = vpop.f32.mrf.mxu0
        %v4092 = vadd.f32 %v3931, %v4091
        %v4093 = vpop.f32.mrf.mxu0
        %v4094 = vpop.f32.mrf.mxu0
        %v4095 = vadd.f32 %v3934, %v4094
        %v4096 = vpop.f32.mrf.mxu0
        %4097 = vmatprep.mubr.bf16.mxu0 %v3492
        %4098 = vmatmul.mubr.bf16.gmra.mxu0 %v3491
        %v4099 = vpop.f32.mrf.mxu0
        %v4100 = vadd.f32 %v3939, %v4099
        %v4101 = vpop.f32.mrf.mxu0
        %v4102 = vpop.f32.mrf.mxu0
        %v4103 = vadd.f32 %v3942, %v4102
        %v4104 = vpop.f32.mrf.mxu0
        %4105 = vmatprep.mubr.bf16.mxu0 %v3497
        %4106 = vmatmul.mubr.bf16.gmra.mxu0 %v3496
        %v4107 = vpop.f32.mrf.mxu0
        %v4108 = vadd.f32 %v3947, %v4107
        %v4109 = vpop.f32.mrf.mxu0
        %v4110 = vpop.f32.mrf.mxu0
        %v4111 = vadd.f32 %v3950, %v4110
        %v4112 = vpop.f32.mrf.mxu0
        %4113 = vmatprep.mubr.bf16.mxu0 %v3502
        %4114 = vmatmul.mubr.bf16.gmra.mxu0 %v3501
        %v4115 = vpop.f32.mrf.mxu0
        %v4116 = vadd.f32 %v3955, %v4115
        %v4117 = vpop.f32.mrf.mxu0
        %v4118 = vpop.f32.mrf.mxu0
        %v4119 = vadd.f32 %v3958, %v4118
        %v4120 = vpop.f32.mrf.mxu0
        %4121 = vmatprep.mubr.bf16.mxu0 %v3507
        %4122 = vmatmul.mubr.bf16.gmra.mxu0 %v3506
        %v4123 = vpop.f32.mrf.mxu0
        %v4124 = vadd.f32 %v3963, %v4123
        %v4125 = vpop.f32.mrf.mxu0
        %v4126 = vpop.f32.mrf.mxu0
        %v4127 = vadd.f32 %v3966, %v4126
        %v4128 = vpop.f32.mrf.mxu0
        %4129 = vmatprep.mubr.bf16.mxu0 %v3512
        %4130 = vmatmul.mubr.bf16.gmra.mxu0 %v3511
        %v4131 = vpop.f32.mrf.mxu0
        %v4132 = vadd.f32 %v3971, %v4131
        %v4133 = vpop.f32.mrf.mxu0
        %v4134 = vpop.f32.mrf.mxu0
        %v4135 = vadd.f32 %v3974, %v4134
        %v4136 = vpop.f32.mrf.mxu0
        %4137 = vmatprep.mubr.bf16.mxu0 %v3517
        %4138 = vmatmul.mubr.bf16.gmra.mxu0 %v3516
        %v4139 = vpop.f32.mrf.mxu0
        %v4140 = vadd.f32 %v3979, %v4139
        %v4141 = vpop.f32.mrf.mxu0
        %v4142 = vpop.f32.mrf.mxu0
        %v4143 = vadd.f32 %v3982, %v4142
        %v4144 = vpop.f32.mrf.mxu0
        %4145 = vmatprep.mubr.bf16.mxu0 %v3522
        %4146 = vmatmul.mubr.bf16.gmra.mxu0 %v3521
        %v4147 = vpop.f32.mrf.mxu0
        %v4148 = vadd.f32 %v3987, %v4147
        %v4149 = vpop.f32.mrf.mxu0
        %v4150 = vpop.f32.mrf.mxu0
        %v4151 = vadd.f32 %v3990, %v4150
        %v4152 = vpop.f32.mrf.mxu0
        %4153 = vmatprep.mubr.bf16.mxu0 %v3527
        %4154 = vmatmul.mubr.bf16.gmra.mxu0 %v3526
        %v4155 = vpop.f32.mrf.mxu0
        %v4156 = vadd.f32 %v3995, %v4155
        %v4157 = vpop.f32.mrf.mxu0
        %v4158 = vpop.f32.mrf.mxu0
        %v4159 = vadd.f32 %v3998, %v4158
        %v4160 = vpop.f32.mrf.mxu0
        %4161 = vmatprep.mubr.bf16.mxu0 %v3532
        %4162 = vmatmul.mubr.bf16.gmra.mxu0 %v3531
        %v4163 = vpop.f32.mrf.mxu0
        %v4164 = vadd.f32 %v4003, %v4163
        %v4165 = vpop.f32.mrf.mxu0
        %v4166 = vpop.f32.mrf.mxu0
        %v4167 = vadd.f32 %v4006, %v4166
        %v4168 = vpop.f32.mrf.mxu0
        %4169 = vmatprep.mubr.bf16.mxu0 %v3537
        %4170 = vmatmul.mubr.bf16.gmra.mxu0 %v3536
        %v4171 = vpop.f32.mrf.mxu0
        %v4172 = vadd.f32 %v4011, %v4171
        %v4173 = vpop.f32.mrf.mxu0
        %v4174 = vpop.f32.mrf.mxu0
        %v4175 = vadd.f32 %v4014, %v4174
        %v4176 = vpop.f32.mrf.mxu0
        %4177 = vmatprep.mubr.bf16.mxu0 %v3542
        %4178 = vmatmul.mubr.bf16.gmra.mxu0 %v3541
        %v4179 = vpop.f32.mrf.mxu0
        %v4180 = vadd.f32 %v4019, %v4179
        %v4181 = vpop.f32.mrf.mxu0
        %v4182 = vpop.f32.mrf.mxu0
        %v4183 = vadd.f32 %v4022, %v4182
        %v4184 = vpop.f32.mrf.mxu0
        %4185 = vmatprep.mubr.bf16.mxu0 %v3547
        %4186 = vmatmul.mubr.bf16.gmra.mxu0 %v3546
        %v4187 = vpop.f32.mrf.mxu0
        %v4188 = vadd.f32 %v4027, %v4187
        %v4189 = vpop.f32.mrf.mxu0
        %v4190 = vpop.f32.mrf.mxu0
        %v4191 = vadd.f32 %v4030, %v4190
        %v4192 = vpop.f32.mrf.mxu0
        %4193 = vmatprep.mubr.bf16.mxu0 %v3552
        %4194 = vmatmul.mubr.bf16.gmra.mxu0 %v3551
        %v4195 = vpop.f32.mrf.mxu0
        %v4196 = vadd.f32 %v4035, %v4195
        %v4197 = vpop.f32.mrf.mxu0
        %v4198 = vpop.f32.mrf.mxu0
        %v4199 = vadd.f32 %v4038, %v4198
        %v4200 = vpop.f32.mrf.mxu0
        %4201 = vmatprep.mubr.bf16.mxu0 %v3557
        %4202 = vmatmul.mubr.bf16.gmra.mxu0 %v3556
        %v4203 = vpop.f32.mrf.mxu0
        %v4204 = vadd.f32 %v4043, %v4203
        %v4205 = vpop.f32.mrf.mxu0
        %v4206 = vpop.f32.mrf.mxu0
        %v4207 = vadd.f32 %v4046, %v4206
        %v4208 = vpop.f32.mrf.mxu0
        %4209 = vdwg.mxu0
        %4210 = vmatprep.subr.bf16.mxu0 0
        %4211 = vmatpush1.bf16.msra.mxu0 0
        %4212 = vmatprep.subr.bf16.mxu0 0
        %4213 = vmatpush1.bf16.msra.mxu0 0
        %4214 = vmatprep.subr.bf16.mxu0 0
        %4215 = vmatpush1.bf16.msra.mxu0 0
        %4216 = vmatprep.subr.bf16.mxu0 0
        %4217 = vmatpush1.bf16.msra.mxu0 0
        %4218 = vmatprep.subr.bf16.mxu0 0
        %4219 = vmatpush1.bf16.msra.mxu0 %v3802
        %4220 = vmatprep.subr.bf16.mxu0 0
        %4221 = vmatpush1.bf16.msra.mxu0 %v3801
        %4222 = vmatprep.subr.bf16.mxu0 0
        %4223 = vmatpush1.bf16.msra.mxu0 %v3800
        %4224 = vmatprep.subr.bf16.mxu0 0
        %4225 = vmatpush1.bf16.msra.mxu0 %v3799
        %4226 = vmatprep.subr.bf16.mxu0 0
        %4227 = vmatpush2.bf16.msra.mxu0 0
        %4228 = vmatprep.subr.bf16.mxu0 0
        %4229 = vmatpush2.bf16.msra.mxu0 0
        %4230 = vmatprep.subr.bf16.mxu0 0
        %4231 = vmatpush2.bf16.msra.mxu0 0
        %4232 = vmatprep.subr.bf16.mxu0 0
        %4233 = vmatpush2.bf16.msra.mxu0 0
        %4234 = vmatprep.subr.bf16.mxu0 0
        %4235 = vmatpush2.bf16.msra.mxu0 0
        %4236 = vmatprep.subr.bf16.mxu0 0
        %4237 = vmatpush2.bf16.msra.mxu0 0
        %4238 = vmatprep.subr.bf16.mxu0 0
        %4239 = vmatpush2.bf16.msra.mxu0 0
        %4240 = vmatprep.subr.bf16.mxu0 0
        %4241 = vmatpush2.bf16.msra.mxu0 0
        %4242 = vmatprep.mubr.bf16.mxu0 0
        %4243 = vmatmul.mubr.bf16.gmra.mxu0 %v3841
        %v4244 = vpop.f32.mrf.mxu0
        %v4245 = vadd.f32 %v4084, %v4244
        %v4246 = vpop.f32.mrf.mxu0
        %v4247 = vpop.f32.mrf.mxu0
        %v4248 = vadd.f32 %v4087, %v4247
        %v4249 = vpop.f32.mrf.mxu0
        %4250 = vmatprep.mubr.bf16.mxu0 0
        %4251 = vmatmul.mubr.bf16.gmra.mxu0 %v3844
        %v4252 = vpop.f32.mrf.mxu0
        %v4253 = vadd.f32 %v4092, %v4252
        %v4254 = vpop.f32.mrf.mxu0
        %v4255 = vpop.f32.mrf.mxu0
        %v4256 = vadd.f32 %v4095, %v4255
        %v4257 = vpop.f32.mrf.mxu0
        %4258 = vmatprep.mubr.bf16.mxu0 0
        %4259 = vmatmul.mubr.bf16.gmra.mxu0 %v3847
        %v4260 = vpop.f32.mrf.mxu0
        %v4261 = vadd.f32 %v4100, %v4260
        %v4262 = vpop.f32.mrf.mxu0
        %v4263 = vpop.f32.mrf.mxu0
        %v4264 = vadd.f32 %v4103, %v4263
        %v4265 = vpop.f32.mrf.mxu0
        %4266 = vmatprep.mubr.bf16.mxu0 0
        %4267 = vmatmul.mubr.bf16.gmra.mxu0 %v3850
        %v4268 = vpop.f32.mrf.mxu0
        %v4269 = vadd.f32 %v4108, %v4268
        %v4270 = vpop.f32.mrf.mxu0
        %v4271 = vpop.f32.mrf.mxu0
        %v4272 = vadd.f32 %v4111, %v4271
        %v4273 = vpop.f32.mrf.mxu0
        %4274 = vmatprep.mubr.bf16.mxu0 0
        %4275 = vmatmul.mubr.bf16.gmra.mxu0 %v3853
        %v4276 = vpop.f32.mrf.mxu0
        %v4277 = vadd.f32 %v4116, %v4276
        %v4278 = vpop.f32.mrf.mxu0
        %v4279 = vpop.f32.mrf.mxu0
        %v4280 = vadd.f32 %v4119, %v4279
        %v4281 = vpop.f32.mrf.mxu0
        %4282 = vmatprep.mubr.bf16.mxu0 0
        %4283 = vmatmul.mubr.bf16.gmra.mxu0 %v3856
        %v4284 = vpop.f32.mrf.mxu0
        %v4285 = vadd.f32 %v4124, %v4284
        %v4286 = vpop.f32.mrf.mxu0
        %v4287 = vpop.f32.mrf.mxu0
        %v4288 = vadd.f32 %v4127, %v4287
        %v4289 = vpop.f32.mrf.mxu0
        %4290 = vmatprep.mubr.bf16.mxu0 0
        %4291 = vmatmul.mubr.bf16.gmra.mxu0 %v3859
        %v4292 = vpop.f32.mrf.mxu0
        %v4293 = vadd.f32 %v4132, %v4292
        %v4294 = vpop.f32.mrf.mxu0
        %v4295 = vpop.f32.mrf.mxu0
        %v4296 = vadd.f32 %v4135, %v4295
        %v4297 = vpop.f32.mrf.mxu0
        %4298 = vmatprep.mubr.bf16.mxu0 0
        %4299 = vmatmul.mubr.bf16.gmra.mxu0 %v3862
        %v4300 = vpop.f32.mrf.mxu0
        %v4301 = vadd.f32 %v4140, %v4300
        %v4302 = vpop.f32.mrf.mxu0
        %v4303 = vpop.f32.mrf.mxu0
        %v4304 = vadd.f32 %v4143, %v4303
        %v4305 = vpop.f32.mrf.mxu0
        %4306 = vmatprep.mubr.bf16.mxu0 0
        %4307 = vmatmul.mubr.bf16.gmra.mxu0 %v3865
        %v4308 = vpop.f32.mrf.mxu0
        %v4309 = vadd.f32 %v4148, %v4308
        %v4310 = vpop.f32.mrf.mxu0
        %v4311 = vpop.f32.mrf.mxu0
        %v4312 = vadd.f32 %v4151, %v4311
        %v4313 = vpop.f32.mrf.mxu0
        %4314 = vmatprep.mubr.bf16.mxu0 0
        %4315 = vmatmul.mubr.bf16.gmra.mxu0 %v3868
        %v4316 = vpop.f32.mrf.mxu0
        %v4317 = vadd.f32 %v4156, %v4316
        %v4318 = vpop.f32.mrf.mxu0
        %v4319 = vpop.f32.mrf.mxu0
        %v4320 = vadd.f32 %v4159, %v4319
        %v4321 = vpop.f32.mrf.mxu0
        %4322 = vmatprep.mubr.bf16.mxu0 0
        %4323 = vmatmul.mubr.bf16.gmra.mxu0 %v3871
        %v4324 = vpop.f32.mrf.mxu0
        %v4325 = vadd.f32 %v4164, %v4324
        %v4326 = vpop.f32.mrf.mxu0
        %v4327 = vpop.f32.mrf.mxu0
        %v4328 = vadd.f32 %v4167, %v4327
        %v4329 = vpop.f32.mrf.mxu0
        %4330 = vmatprep.mubr.bf16.mxu0 0
        %4331 = vmatmul.mubr.bf16.gmra.mxu0 %v3874
        %v4332 = vpop.f32.mrf.mxu0
        %v4333 = vadd.f32 %v4172, %v4332
        %v4334 = vpop.f32.mrf.mxu0
        %v4335 = vpop.f32.mrf.mxu0
        %v4336 = vadd.f32 %v4175, %v4335
        %v4337 = vpop.f32.mrf.mxu0
        %4338 = vmatprep.mubr.bf16.mxu0 0
        %4339 = vmatmul.mubr.bf16.gmra.mxu0 %v3877
        %v4340 = vpop.f32.mrf.mxu0
        %v4341 = vadd.f32 %v4180, %v4340
        %v4342 = vpop.f32.mrf.mxu0
        %v4343 = vpop.f32.mrf.mxu0
        %v4344 = vadd.f32 %v4183, %v4343
        %v4345 = vpop.f32.mrf.mxu0
        %4346 = vmatprep.mubr.bf16.mxu0 0
        %4347 = vmatmul.mubr.bf16.gmra.mxu0 %v3880
        %v4348 = vpop.f32.mrf.mxu0
        %v4349 = vadd.f32 %v4188, %v4348
        %v4350 = vpop.f32.mrf.mxu0
        %v4351 = vpop.f32.mrf.mxu0
        %v4352 = vadd.f32 %v4191, %v4351
        %v4353 = vpop.f32.mrf.mxu0
        %4354 = vmatprep.mubr.bf16.mxu0 0
        %4355 = vmatmul.mubr.bf16.gmra.mxu0 %v3883
        %v4356 = vpop.f32.mrf.mxu0
        %v4357 = vadd.f32 %v4196, %v4356
        %v4358 = vpop.f32.mrf.mxu0
        %v4359 = vpop.f32.mrf.mxu0
        %v4360 = vadd.f32 %v4199, %v4359
        %v4361 = vpop.f32.mrf.mxu0
        %4362 = vmatprep.mubr.bf16.mxu0 0
        %4363 = vmatmul.mubr.bf16.gmra.mxu0 %v3886
        %v4364 = vpop.f32.mrf.mxu0
        %v4365 = vadd.f32 %v4204, %v4364
        %v4366 = vpop.f32.mrf.mxu0
        %v4367 = vpop.f32.mrf.mxu0
        %v4368 = vadd.f32 %v4207, %v4367
        %v4369 = vpop.f32.mrf.mxu0
        %4370 = vdwg.mxu0
        %v4371 = vmax.f32 %v4245, 0.0
        %v4372 = vmax.f32 %v4248, 0.0
        %v4373 = vmax.f32 %v4253, 0.0
        %v4374 = vmax.f32 %v4256, 0.0
        %v4375 = vmax.f32 %v4261, 0.0
        %v4376 = vmax.f32 %v4264, 0.0
        %v4377 = vmax.f32 %v4269, 0.0
        %v4378 = vmax.f32 %v4272, 0.0
        %v4379 = vmax.f32 %v4277, 0.0
        %v4380 = vmax.f32 %v4280, 0.0
        %v4381 = vmax.f32 %v4285, 0.0
        %v4382 = vmax.f32 %v4288, 0.0
        %v4383 = vmax.f32 %v4293, 0.0
        %v4384 = vmax.f32 %v4296, 0.0
        %v4385 = vmax.f32 %v4301, 0.0
        %v4386 = vmax.f32 %v4304, 0.0
        %v4387 = vmax.f32 %v4309, 0.0
        %v4388 = vmax.f32 %v4312, 0.0
        %v4389 = vmax.f32 %v4317, 0.0
        %v4390 = vmax.f32 %v4320, 0.0
        %v4391 = vmax.f32 %v4325, 0.0
        %v4392 = vmax.f32 %v4328, 0.0
        %v4393 = vmax.f32 %v4333, 0.0
        %v4394 = vmax.f32 %v4336, 0.0
        %v4395 = vmax.f32 %v4341, 0.0
        %v4396 = vmax.f32 %v4344, 0.0
        %v4397 = vmax.f32 %v4349, 0.0
        %v4398 = vmax.f32 %v4352, 0.0
        %v4399 = vmax.f32 %v4357, 0.0
        %v4400 = vmax.f32 %v4360, 0.0
        %v4401 = vmax.f32 %v4365, 0.0
        %v4402 = vmax.f32 %v4368, 0.0
        %4403 = vst [vmem:[#allocation3] sm:$0xff] 0.0
        %4404 = vst [vmem:[#allocation3 + $0x8] sm:$0xff] 0.0
        %4405 = vst [vmem:[#allocation3 + $0x10] sm:$0x3] 0.0
        %s4406 = scalar_lea.vmem [#allocation3], 408
        %4407 = vst [vmem:[%s4406] sm:$0xff] 0.0
        %4408 = vst [vmem:[%s4406 + $0x8] sm:$0xff] 0.0
        %4409 = vst [vmem:[%s4406 + $0x10] sm:$0x3] 0.0
        %s4410 = scalar_lea.vmem [#allocation3], 24
        %4411 = vst [vmem:[%s4410] sm:$0x1] 0.0
        %4412 = vst [vmem:[%s4410 + $0x18] sm:$0x1] 0.0
        %4413 = vst [vmem:[%s4410 + $0x30] sm:$0x1] 0.0
        %4414 = vst [vmem:[%s4410 + $0x48] sm:$0x1] 0.0
        %4415 = vst [vmem:[%s4410 + $0x60] sm:$0x1] 0.0
        %4416 = vst [vmem:[%s4410 + $0x78] sm:$0x1] 0.0
        %4417 = vst [vmem:[%s4410 + $0x90] sm:$0x1] 0.0
        %4418 = vst [vmem:[%s4410 + $0xa8] sm:$0x1] 0.0
        %4419 = vst [vmem:[%s4410 + $0xc0] sm:$0x1] 0.0
        %4420 = vst [vmem:[%s4410 + $0xd8] sm:$0x1] 0.0
        %4421 = vst [vmem:[%s4410 + $0xf0] sm:$0x1] 0.0
        %4422 = vst [vmem:[%s4410 + $0x108] sm:$0x1] 0.0
        %4423 = vst [vmem:[%s4410 + $0x120] sm:$0x1] 0.0
        %4424 = vst [vmem:[%s4410 + $0x138] sm:$0x1] 0.0
        %4425 = vst [vmem:[%s4410 + $0x150] sm:$0x1] 0.0
        %4426 = vst [vmem:[%s4410 + $0x168] sm:$0x1] 0.0
        %4427 = vst [vmem:[%s4410 + $0x11] sm:$0x1] 0.0
        %4428 = vst [vmem:[%s4410 + $0x29] sm:$0x1] 0.0
        %4429 = vst [vmem:[%s4410 + $0x41] sm:$0x1] 0.0
        %4430 = vst [vmem:[%s4410 + $0x59] sm:$0x1] 0.0
        %4431 = vst [vmem:[%s4410 + $0x71] sm:$0x1] 0.0
        %4432 = vst [vmem:[%s4410 + $0x89] sm:$0x1] 0.0
        %4433 = vst [vmem:[%s4410 + $0xa1] sm:$0x1] 0.0
        %4434 = vst [vmem:[%s4410 + $0xb9] sm:$0x1] 0.0
        %4435 = vst [vmem:[%s4410 + $0xd1] sm:$0x1] 0.0
        %4436 = vst [vmem:[%s4410 + $0xe9] sm:$0x1] 0.0
        %4437 = vst [vmem:[%s4410 + $0x101] sm:$0x1] 0.0
        %4438 = vst [vmem:[%s4410 + $0x119] sm:$0x1] 0.0
        %4439 = vst [vmem:[%s4410 + $0x131] sm:$0x1] 0.0
        %4440 = vst [vmem:[%s4410 + $0x149] sm:$0x1] 0.0
        %4441 = vst [vmem:[%s4410 + $0x161] sm:$0x1] 0.0
        %4442 = vst [vmem:[%s4410 + $0x179] sm:$0x1] 0.0
        %4443 = vst [vmem:[%s4410 + $0x1] sm:$0xff] %v4371
        %4444 = vst [vmem:[%s4410 + $0x9] sm:$0xff] %v4372
        %4445 = vst [vmem:[%s4410 + $0x19] sm:$0xff] %v4373
        %4446 = vst [vmem:[%s4410 + $0x21] sm:$0xff] %v4374
        %4447 = vst [vmem:[%s4410 + $0x31] sm:$0xff] %v4375
        %4448 = vst [vmem:[%s4410 + $0x39] sm:$0xff] %v4376
        %4449 = vst [vmem:[%s4410 + $0x49] sm:$0xff] %v4377
        %4450 = vst [vmem:[%s4410 + $0x51] sm:$0xff] %v4378
        %4451 = vst [vmem:[%s4410 + $0x61] sm:$0xff] %v4379
        %4452 = vst [vmem:[%s4410 + $0x69] sm:$0xff] %v4380
        %4453 = vst [vmem:[%s4410 + $0x79] sm:$0xff] %v4381
        %4454 = vst [vmem:[%s4410 + $0x81] sm:$0xff] %v4382
        %4455 = vst [vmem:[%s4410 + $0x91] sm:$0xff] %v4383
        %4456 = vst [vmem:[%s4410 + $0x99] sm:$0xff] %v4384
        %4457 = vst [vmem:[%s4410 + $0xa9] sm:$0xff] %v4385
        %4458 = vst [vmem:[%s4410 + $0xb1] sm:$0xff] %v4386
        %4459 = vst [vmem:[%s4410 + $0xc1] sm:$0xff] %v4387
        %4460 = vst [vmem:[%s4410 + $0xc9] sm:$0xff] %v4388
        %4461 = vst [vmem:[%s4410 + $0xd9] sm:$0xff] %v4389
        %4462 = vst [vmem:[%s4410 + $0xe1] sm:$0xff] %v4390
        %4463 = vst [vmem:[%s4410 + $0xf1] sm:$0xff] %v4391
        %4464 = vst [vmem:[%s4410 + $0xf9] sm:$0xff] %v4392
        %4465 = vst [vmem:[%s4410 + $0x109] sm:$0xff] %v4393
        %4466 = vst [vmem:[%s4410 + $0x111] sm:$0xff] %v4394
        %4467 = vst [vmem:[%s4410 + $0x121] sm:$0xff] %v4395
        %4468 = vst [vmem:[%s4410 + $0x129] sm:$0xff] %v4396
        %4469 = vst [vmem:[%s4410 + $0x139] sm:$0xff] %v4397
        %4470 = vst [vmem:[%s4410 + $0x141] sm:$0xff] %v4398
        %4471 = vst [vmem:[%s4410 + $0x151] sm:$0xff] %v4399
        %4472 = vst [vmem:[%s4410 + $0x159] sm:$0xff] %v4400
        %4473 = vst [vmem:[%s4410 + $0x169] sm:$0xff] %v4401
        %4474 = vst [vmem:[%s4410 + $0x171] sm:$0xff] %v4402
        %v4475 = vld [vmem:[#allocation3] sm:$0xff]
        %v4476 = vld [vmem:[#allocation3 + $0x8] sm:$0xff]
        %v4477 = vld [vmem:[#allocation3 + $0x18] sm:$0xff]
        %v4478 = vld [vmem:[#allocation3 + $0x20] sm:$0xff]
        %v4479 = vld [vmem:[#allocation3 + $0x30] sm:$0xff]
        %v4480 = vld [vmem:[#allocation3 + $0x38] sm:$0xff]
        %v4481 = vld [vmem:[#allocation3 + $0x48] sm:$0xff]
        %v4482 = vld [vmem:[#allocation3 + $0x50] sm:$0xff]
        %v4483 = vld [vmem:[#allocation3 + $0x60] sm:$0xff]
        %v4484 = vld [vmem:[#allocation3 + $0x68] sm:$0xff]
        %v4485 = vld [vmem:[#allocation3 + $0x78] sm:$0xff]
        %v4486 = vld [vmem:[#allocation3 + $0x80] sm:$0xff]
        %v4487 = vld [vmem:[#allocation3 + $0x90] sm:$0xff]
        %v4488 = vld [vmem:[#allocation3 + $0x98] sm:$0xff]
        %v4489 = vld [vmem:[#allocation3 + $0xa8] sm:$0xff]
        %v4490 = vld [vmem:[#allocation3 + $0xb0] sm:$0xff]
        %v4491 = vld [vmem:[#allocation3 + $0xc0] sm:$0xff]
        %v4492 = vld [vmem:[#allocation3 + $0xc8] sm:$0xff]
        %v4493 = vld [vmem:[#allocation3 + $0xd8] sm:$0xff]
        %v4494 = vld [vmem:[#allocation3 + $0xe0] sm:$0xff]
        %v4495 = vld [vmem:[#allocation3 + $0xf0] sm:$0xff]
        %v4496 = vld [vmem:[#allocation3 + $0xf8] sm:$0xff]
        %v4497 = vld [vmem:[#allocation3 + $0x108] sm:$0xff]
        %v4498 = vld [vmem:[#allocation3 + $0x110] sm:$0xff]
        %v4499 = vld [vmem:[#allocation3 + $0x120] sm:$0xff]
        %v4500 = vld [vmem:[#allocation3 + $0x128] sm:$0xff]
        %v4501 = vld [vmem:[#allocation3 + $0x138] sm:$0xff]
        %v4502 = vld [vmem:[#allocation3 + $0x140] sm:$0xff]
        %v4503 = vld [vmem:[#allocation3 + $0x150] sm:$0xff]
        %v4504 = vld [vmem:[#allocation3 + $0x158] sm:$0xff]
        %v4505 = vld [vmem:[#allocation3 + $0x168] sm:$0xff]
        %v4506 = vld [vmem:[#allocation3 + $0x170] sm:$0xff]
        %v4507 = vpack.c.bf16 %v4476, %v4475
        %v4508 = vpack.c.bf16 %v4478, %v4477
        %v4509 = vpack.c.bf16 %v4480, %v4479
        %v4510 = vpack.c.bf16 %v4482, %v4481
        %v4511 = vpack.c.bf16 %v4484, %v4483
        %v4512 = vpack.c.bf16 %v4486, %v4485
        %v4513 = vpack.c.bf16 %v4488, %v4487
        %v4514 = vpack.c.bf16 %v4490, %v4489
        %v4515 = vpack.c.bf16 %v4492, %v4491
        %v4516 = vpack.c.bf16 %v4494, %v4493
        %v4517 = vpack.c.bf16 %v4496, %v4495
        %v4518 = vpack.c.bf16 %v4498, %v4497
        %v4519 = vpack.c.bf16 %v4500, %v4499
        %v4520 = vpack.c.bf16 %v4502, %v4501
        %v4521 = vpack.c.bf16 %v4504, %v4503
        %v4522 = vpack.c.bf16 %v4506, %v4505
        %v4539 = vunpack.c.l.b16 %v4507
        %v4540 = vunpack.c.h.b16 %v4507
        %v4541 = vunpack.c.l.b16 %v4508
        %v4542 = vunpack.c.h.b16 %v4508
        %v4543 = vunpack.c.l.b16 %v4509
        %v4544 = vunpack.c.h.b16 %v4509
        %v4545 = vunpack.c.l.b16 %v4510
        %v4546 = vunpack.c.h.b16 %v4510
        %v4547 = vunpack.c.l.b16 %v4511
        %v4548 = vunpack.c.h.b16 %v4511
        %v4549 = vunpack.c.l.b16 %v4512
        %v4550 = vunpack.c.h.b16 %v4512
        %v4551 = vunpack.c.l.b16 %v4513
        %v4552 = vunpack.c.h.b16 %v4513
        %v4553 = vunpack.c.l.b16 %v4514
        %v4554 = vunpack.c.h.b16 %v4514
        %v4555 = vunpack.c.l.b16 %v4515
        %v4556 = vunpack.c.h.b16 %v4515
        %v4557 = vunpack.c.l.b16 %v4516
        %v4558 = vunpack.c.h.b16 %v4516
        %v4559 = vunpack.c.l.b16 %v4517
        %v4560 = vunpack.c.h.b16 %v4517
        %v4561 = vunpack.c.l.b16 %v4518
        %v4562 = vunpack.c.h.b16 %v4518
        %v4563 = vunpack.c.l.b16 %v4519
        %v4564 = vunpack.c.h.b16 %v4519
        %v4565 = vunpack.c.l.b16 %v4520
        %v4566 = vunpack.c.h.b16 %v4520
        %v4567 = vunpack.c.l.b16 %v4521
        %v4568 = vunpack.c.h.b16 %v4521
        %v4569 = vunpack.c.l.b16 %v4522
        %v4570 = vunpack.c.h.b16 %v4522
        %v4571 = vpack.c.b16 %v4539, %v4539
        %v4572 = vpack.c.b16 %v4540, %v4540
        %v4573 = vpack.c.b16 %v4541, %v4541
        %v4574 = vpack.c.b16 %v4542, %v4542
        %v4575 = vpack.c.b16 %v4543, %v4543
        %v4576 = vpack.c.b16 %v4544, %v4544
        %v4577 = vpack.c.b16 %v4545, %v4545
        %v4578 = vpack.c.b16 %v4546, %v4546
        %v4579 = vpack.c.b16 %v4547, %v4547
        %v4580 = vpack.c.b16 %v4548, %v4548
        %v4581 = vpack.c.b16 %v4549, %v4549
        %v4582 = vpack.c.b16 %v4550, %v4550
        %v4583 = vpack.c.b16 %v4551, %v4551
        %v4584 = vpack.c.b16 %v4552, %v4552
        %v4585 = vpack.c.b16 %v4553, %v4553
        %v4586 = vpack.c.b16 %v4554, %v4554
        %v4587 = vpack.c.b16 %v4555, %v4555
        %v4588 = vpack.c.b16 %v4556, %v4556
        %v4589 = vpack.c.b16 %v4557, %v4557
        %v4590 = vpack.c.b16 %v4558, %v4558
        %v4591 = vpack.c.b16 %v4559, %v4559
        %v4592 = vpack.c.b16 %v4560, %v4560
        %v4593 = vpack.c.b16 %v4561, %v4561
        %v4594 = vpack.c.b16 %v4562, %v4562
        %v4595 = vpack.c.b16 %v4563, %v4563
        %v4596 = vpack.c.b16 %v4564, %v4564
        %v4597 = vpack.c.b16 %v4565, %v4565
        %v4598 = vpack.c.b16 %v4566, %v4566
        %v4599 = vpack.c.b16 %v4567, %v4567
        %v4600 = vpack.c.b16 %v4568, %v4568
        %v4601 = vpack.c.b16 %v4569, %v4569
        %v4602 = vpack.c.b16 %v4570, %v4570
        %4635 = vst [vmem:[#allocation4] sm:$0xf] %v4571
        %4636 = vst [vmem:[#allocation4 + $0x24] sm:$0xf] %v4572
        %4637 = vst [vmem:[#allocation4 + $0x48] sm:$0xf] %v4573
        %4638 = vst [vmem:[#allocation4 + $0x6c] sm:$0xf] %v4574
        %4639 = vst [vmem:[#allocation4 + $0x90] sm:$0xf] %v4575
        %4640 = vst [vmem:[#allocation4 + $0xb4] sm:$0xf] %v4576
        %4641 = vst [vmem:[#allocation4 + $0xd8] sm:$0xf] %v4577
        %4642 = vst [vmem:[#allocation4 + $0xfc] sm:$0xf] %v4578
        %4643 = vst [vmem:[#allocation4 + $0x120] sm:$0xf] %v4579
        %4644 = vst [vmem:[#allocation4 + $0x144] sm:$0xf] %v4580
        %4645 = vst [vmem:[#allocation4 + $0x168] sm:$0xf] %v4581
        %4646 = vst [vmem:[#allocation4 + $0x18c] sm:$0xf] %v4582
        %4647 = vst [vmem:[#allocation4 + $0x1b0] sm:$0xf] %v4583
        %4648 = vst [vmem:[#allocation4 + $0x1d4] sm:$0xf] %v4584
        %4649 = vst [vmem:[#allocation4 + $0x1f8] sm:$0xf] %v4585
        %4650 = vst [vmem:[#allocation4 + $0x21c] sm:$0xf] %v4586
        %4651 = vst [vmem:[#allocation4 + $0x240] sm:$0xf] %v4587
        %4652 = vst [vmem:[#allocation4 + $0x264] sm:$0xf] %v4588
        %4653 = vst [vmem:[#allocation4 + $0x288] sm:$0xf] %v4589
        %4654 = vst [vmem:[#allocation4 + $0x2ac] sm:$0xf] %v4590
        %4655 = vst [vmem:[#allocation4 + $0x2d0] sm:$0xf] %v4591
        %4656 = vst [vmem:[#allocation4 + $0x2f4] sm:$0xf] %v4592
        %4657 = vst [vmem:[#allocation4 + $0x318] sm:$0xf] %v4593
        %4658 = vst [vmem:[#allocation4 + $0x33c] sm:$0xf] %v4594
        %4659 = vst [vmem:[#allocation4 + $0x360] sm:$0xf] %v4595
        %4660 = vst [vmem:[#allocation4 + $0x384] sm:$0xf] %v4596
        %4661 = vst [vmem:[#allocation4 + $0x3a8] sm:$0xf] %v4597
        %4662 = vst [vmem:[#allocation4 + $0x3cc] sm:$0xf] %v4598
        %4663 = vst [vmem:[#allocation4 + $0x3f0] sm:$0xf] %v4599
        %4664 = vst [vmem:[#allocation4 + $0x414] sm:$0xf] %v4600
        %4665 = vst [vmem:[#allocation4 + $0x438] sm:$0xf] %v4601
        %4666 = vst [vmem:[#allocation4 + $0x45c] sm:$0xf] %v4602
        %v4667 = vld [vmem:[#allocation3 + $0x1] sm:$0xff]
        %v4668 = vld [vmem:[#allocation3 + $0x9] sm:$0xff]
        %v4669 = vld [vmem:[#allocation3 + $0x19] sm:$0xff]
        %v4670 = vld [vmem:[#allocation3 + $0x21] sm:$0xff]
        %v4671 = vld [vmem:[#allocation3 + $0x31] sm:$0xff]
        %v4672 = vld [vmem:[#allocation3 + $0x39] sm:$0xff]
        %v4673 = vld [vmem:[#allocation3 + $0x49] sm:$0xff]
        %v4674 = vld [vmem:[#allocation3 + $0x51] sm:$0xff]
        %v4675 = vld [vmem:[#allocation3 + $0x61] sm:$0xff]
        %v4676 = vld [vmem:[#allocation3 + $0x69] sm:$0xff]
        %v4677 = vld [vmem:[#allocation3 + $0x79] sm:$0xff]
        %v4678 = vld [vmem:[#allocation3 + $0x81] sm:$0xff]
        %v4679 = vld [vmem:[#allocation3 + $0x91] sm:$0xff]
        %v4680 = vld [vmem:[#allocation3 + $0x99] sm:$0xff]
        %v4681 = vld [vmem:[#allocation3 + $0xa9] sm:$0xff]
        %v4682 = vld [vmem:[#allocation3 + $0xb1] sm:$0xff]
        %v4683 = vld [vmem:[#allocation3 + $0xc1] sm:$0xff]
        %v4684 = vld [vmem:[#allocation3 + $0xc9] sm:$0xff]
        %v4685 = vld [vmem:[#allocation3 + $0xd9] sm:$0xff]
        %v4686 = vld [vmem:[#allocation3 + $0xe1] sm:$0xff]
        %v4687 = vld [vmem:[#allocation3 + $0xf1] sm:$0xff]
        %v4688 = vld [vmem:[#allocation3 + $0xf9] sm:$0xff]
        %v4689 = vld [vmem:[#allocation3 + $0x109] sm:$0xff]
        %v4690 = vld [vmem:[#allocation3 + $0x111] sm:$0xff]
        %v4691 = vld [vmem:[#allocation3 + $0x121] sm:$0xff]
        %v4692 = vld [vmem:[#allocation3 + $0x129] sm:$0xff]
        %v4693 = vld [vmem:[#allocation3 + $0x139] sm:$0xff]
        %v4694 = vld [vmem:[#allocation3 + $0x141] sm:$0xff]
        %v4695 = vld [vmem:[#allocation3 + $0x151] sm:$0xff]
        %v4696 = vld [vmem:[#allocation3 + $0x159] sm:$0xff]
        %v4697 = vld [vmem:[#allocation3 + $0x169] sm:$0xff]
        %v4698 = vld [vmem:[#allocation3 + $0x171] sm:$0xff]
        %v4699 = vpack.c.bf16 %v4668, %v4667
        %v4700 = vpack.c.bf16 %v4670, %v4669
        %v4701 = vpack.c.bf16 %v4672, %v4671
        %v4702 = vpack.c.bf16 %v4674, %v4673
        %v4703 = vpack.c.bf16 %v4676, %v4675
        %v4704 = vpack.c.bf16 %v4678, %v4677
        %v4705 = vpack.c.bf16 %v4680, %v4679
        %v4706 = vpack.c.bf16 %v4682, %v4681
        %v4707 = vpack.c.bf16 %v4684, %v4683
        %v4708 = vpack.c.bf16 %v4686, %v4685
        %v4709 = vpack.c.bf16 %v4688, %v4687
        %v4710 = vpack.c.bf16 %v4690, %v4689
        %v4711 = vpack.c.bf16 %v4692, %v4691
        %v4712 = vpack.c.bf16 %v4694, %v4693
        %v4713 = vpack.c.bf16 %v4696, %v4695
        %v4714 = vpack.c.bf16 %v4698, %v4697
        %v4731 = vunpack.c.l.b16 %v4699
        %v4732 = vunpack.c.h.b16 %v4699
        %v4733 = vunpack.c.l.b16 %v4700
        %v4734 = vunpack.c.h.b16 %v4700
        %v4735 = vunpack.c.l.b16 %v4701
        %v4736 = vunpack.c.h.b16 %v4701
        %v4737 = vunpack.c.l.b16 %v4702
        %v4738 = vunpack.c.h.b16 %v4702
        %v4739 = vunpack.c.l.b16 %v4703
        %v4740 = vunpack.c.h.b16 %v4703
        %v4741 = vunpack.c.l.b16 %v4704
        %v4742 = vunpack.c.h.b16 %v4704
        %v4743 = vunpack.c.l.b16 %v4705
        %v4744 = vunpack.c.h.b16 %v4705
        %v4745 = vunpack.c.l.b16 %v4706
        %v4746 = vunpack.c.h.b16 %v4706
        %v4747 = vunpack.c.l.b16 %v4707
        %v4748 = vunpack.c.h.b16 %v4707
        %v4749 = vunpack.c.l.b16 %v4708
        %v4750 = vunpack.c.h.b16 %v4708
        %v4751 = vunpack.c.l.b16 %v4709
        %v4752 = vunpack.c.h.b16 %v4709
        %v4753 = vunpack.c.l.b16 %v4710
        %v4754 = vunpack.c.h.b16 %v4710
        %v4755 = vunpack.c.l.b16 %v4711
        %v4756 = vunpack.c.h.b16 %v4711
        %v4757 = vunpack.c.l.b16 %v4712
        %v4758 = vunpack.c.h.b16 %v4712
        %v4759 = vunpack.c.l.b16 %v4713
        %v4760 = vunpack.c.h.b16 %v4713
        %v4761 = vunpack.c.l.b16 %v4714
        %v4762 = vunpack.c.h.b16 %v4714
        %v4763 = vpack.c.b16 %v4731, %v4731
        %v4764 = vpack.c.b16 %v4732, %v4732
        %v4765 = vpack.c.b16 %v4733, %v4733
        %v4766 = vpack.c.b16 %v4734, %v4734
        %v4767 = vpack.c.b16 %v4735, %v4735
        %v4768 = vpack.c.b16 %v4736, %v4736
        %v4769 = vpack.c.b16 %v4737, %v4737
        %v4770 = vpack.c.b16 %v4738, %v4738
        %v4771 = vpack.c.b16 %v4739, %v4739
        %v4772 = vpack.c.b16 %v4740, %v4740
        %v4773 = vpack.c.b16 %v4741, %v4741
        %v4774 = vpack.c.b16 %v4742, %v4742
        %v4775 = vpack.c.b16 %v4743, %v4743
        %v4776 = vpack.c.b16 %v4744, %v4744
        %v4777 = vpack.c.b16 %v4745, %v4745
        %v4778 = vpack.c.b16 %v4746, %v4746
        %v4779 = vpack.c.b16 %v4747, %v4747
        %v4780 = vpack.c.b16 %v4748, %v4748
        %v4781 = vpack.c.b16 %v4749, %v4749
        %v4782 = vpack.c.b16 %v4750, %v4750
        %v4783 = vpack.c.b16 %v4751, %v4751
        %v4784 = vpack.c.b16 %v4752, %v4752
        %v4785 = vpack.c.b16 %v4753, %v4753
        %v4786 = vpack.c.b16 %v4754, %v4754
        %v4787 = vpack.c.b16 %v4755, %v4755
        %v4788 = vpack.c.b16 %v4756, %v4756
        %v4789 = vpack.c.b16 %v4757, %v4757
        %v4790 = vpack.c.b16 %v4758, %v4758
        %v4791 = vpack.c.b16 %v4759, %v4759
        %v4792 = vpack.c.b16 %v4760, %v4760
        %v4793 = vpack.c.b16 %v4761, %v4761
        %v4794 = vpack.c.b16 %v4762, %v4762
        %4827 = vst [vmem:[#allocation4 + $0x4] sm:$0xf] %v4763
        %4828 = vst [vmem:[#allocation4 + $0x28] sm:$0xf] %v4764
        %4829 = vst [vmem:[#allocation4 + $0x4c] sm:$0xf] %v4765
        %4830 = vst [vmem:[#allocation4 + $0x70] sm:$0xf] %v4766
        %4831 = vst [vmem:[#allocation4 + $0x94] sm:$0xf] %v4767
        %4832 = vst [vmem:[#allocation4 + $0xb8] sm:$0xf] %v4768
        %4833 = vst [vmem:[#allocation4 + $0xdc] sm:$0xf] %v4769
        %4834 = vst [vmem:[#allocation4 + $0x100] sm:$0xf] %v4770
        %4835 = vst [vmem:[#allocation4 + $0x124] sm:$0xf] %v4771
        %4836 = vst [vmem:[#allocation4 + $0x148] sm:$0xf] %v4772
        %4837 = vst [vmem:[#allocation4 + $0x16c] sm:$0xf] %v4773
        %4838 = vst [vmem:[#allocation4 + $0x190] sm:$0xf] %v4774
        %4839 = vst [vmem:[#allocation4 + $0x1b4] sm:$0xf] %v4775
        %4840 = vst [vmem:[#allocation4 + $0x1d8] sm:$0xf] %v4776
        %4841 = vst [vmem:[#allocation4 + $0x1fc] sm:$0xf] %v4777
        %4842 = vst [vmem:[#allocation4 + $0x220] sm:$0xf] %v4778
        %4843 = vst [vmem:[#allocation4 + $0x244] sm:$0xf] %v4779
        %4844 = vst [vmem:[#allocation4 + $0x268] sm:$0xf] %v4780
        %4845 = vst [vmem:[#allocation4 + $0x28c] sm:$0xf] %v4781
        %4846 = vst [vmem:[#allocation4 + $0x2b0] sm:$0xf] %v4782
        %4847 = vst [vmem:[#allocation4 + $0x2d4] sm:$0xf] %v4783
        %4848 = vst [vmem:[#allocation4 + $0x2f8] sm:$0xf] %v4784
        %4849 = vst [vmem:[#allocation4 + $0x31c] sm:$0xf] %v4785
        %4850 = vst [vmem:[#allocation4 + $0x340] sm:$0xf] %v4786
        %4851 = vst [vmem:[#allocation4 + $0x364] sm:$0xf] %v4787
        %4852 = vst [vmem:[#allocation4 + $0x388] sm:$0xf] %v4788
        %4853 = vst [vmem:[#allocation4 + $0x3ac] sm:$0xf] %v4789
        %4854 = vst [vmem:[#allocation4 + $0x3d0] sm:$0xf] %v4790
        %4855 = vst [vmem:[#allocation4 + $0x3f4] sm:$0xf] %v4791
        %4856 = vst [vmem:[#allocation4 + $0x418] sm:$0xf] %v4792
        %4857 = vst [vmem:[#allocation4 + $0x43c] sm:$0xf] %v4793
        %4858 = vst [vmem:[#allocation4 + $0x460] sm:$0xf] %v4794
        %v4859 = vld [vmem:[#allocation3 + $0x2] sm:$0xff]
        %v4860 = vld [vmem:[#allocation3 + $0xa] sm:$0xff]
        %v4861 = vld [vmem:[#allocation3 + $0x1a] sm:$0xff]
        %v4862 = vld [vmem:[#allocation3 + $0x22] sm:$0xff]
        %v4863 = vld [vmem:[#allocation3 + $0x32] sm:$0xff]
        %v4864 = vld [vmem:[#allocation3 + $0x3a] sm:$0xff]
        %v4865 = vld [vmem:[#allocation3 + $0x4a] sm:$0xff]
        %v4866 = vld [vmem:[#allocation3 + $0x52] sm:$0xff]
        %v4867 = vld [vmem:[#allocation3 + $0x62] sm:$0xff]
        %v4868 = vld [vmem:[#allocation3 + $0x6a] sm:$0xff]
        %v4869 = vld [vmem:[#allocation3 + $0x7a] sm:$0xff]
        %v4870 = vld [vmem:[#allocation3 + $0x82] sm:$0xff]
        %v4871 = vld [vmem:[#allocation3 + $0x92] sm:$0xff]
        %v4872 = vld [vmem:[#allocation3 + $0x9a] sm:$0xff]
        %v4873 = vld [vmem:[#allocation3 + $0xaa] sm:$0xff]
        %v4874 = vld [vmem:[#allocation3 + $0xb2] sm:$0xff]
        %v4875 = vld [vmem:[#allocation3 + $0xc2] sm:$0xff]
        %v4876 = vld [vmem:[#allocation3 + $0xca] sm:$0xff]
        %v4877 = vld [vmem:[#allocation3 + $0xda] sm:$0xff]
        %v4878 = vld [vmem:[#allocation3 + $0xe2] sm:$0xff]
        %v4879 = vld [vmem:[#allocation3 + $0xf2] sm:$0xff]
        %v4880 = vld [vmem:[#allocation3 + $0xfa] sm:$0xff]
        %v4881 = vld [vmem:[#allocation3 + $0x10a] sm:$0xff]
        %v4882 = vld [vmem:[#allocation3 + $0x112] sm:$0xff]
        %v4883 = vld [vmem:[#allocation3 + $0x122] sm:$0xff]
        %v4884 = vld [vmem:[#allocation3 + $0x12a] sm:$0xff]
        %v4885 = vld [vmem:[#allocation3 + $0x13a] sm:$0xff]
        %v4886 = vld [vmem:[#allocation3 + $0x142] sm:$0xff]
        %v4887 = vld [vmem:[#allocation3 + $0x152] sm:$0xff]
        %v4888 = vld [vmem:[#allocation3 + $0x15a] sm:$0xff]
        %v4889 = vld [vmem:[#allocation3 + $0x16a] sm:$0xff]
        %v4890 = vld [vmem:[#allocation3 + $0x172] sm:$0xff]
        %v4891 = vpack.c.bf16 %v4860, %v4859
        %v4892 = vpack.c.bf16 %v4862, %v4861
        %v4893 = vpack.c.bf16 %v4864, %v4863
        %v4894 = vpack.c.bf16 %v4866, %v4865
        %v4895 = vpack.c.bf16 %v4868, %v4867
        %v4896 = vpack.c.bf16 %v4870, %v4869
        %v4897 = vpack.c.bf16 %v4872, %v4871
        %v4898 = vpack.c.bf16 %v4874, %v4873
        %v4899 = vpack.c.bf16 %v4876, %v4875
        %v4900 = vpack.c.bf16 %v4878, %v4877
        %v4901 = vpack.c.bf16 %v4880, %v4879
        %v4902 = vpack.c.bf16 %v4882, %v4881
        %v4903 = vpack.c.bf16 %v4884, %v4883
        %v4904 = vpack.c.bf16 %v4886, %v4885
        %v4905 = vpack.c.bf16 %v4888, %v4887
        %v4906 = vpack.c.bf16 %v4890, %v4889
        %v4923 = vunpack.c.l.b16 %v4891
        %v4924 = vunpack.c.h.b16 %v4891
        %v4925 = vunpack.c.l.b16 %v4892
        %v4926 = vunpack.c.h.b16 %v4892
        %v4927 = vunpack.c.l.b16 %v4893
        %v4928 = vunpack.c.h.b16 %v4893
        %v4929 = vunpack.c.l.b16 %v4894
        %v4930 = vunpack.c.h.b16 %v4894
        %v4931 = vunpack.c.l.b16 %v4895
        %v4932 = vunpack.c.h.b16 %v4895
        %v4933 = vunpack.c.l.b16 %v4896
        %v4934 = vunpack.c.h.b16 %v4896
        %v4935 = vunpack.c.l.b16 %v4897
        %v4936 = vunpack.c.h.b16 %v4897
        %v4937 = vunpack.c.l.b16 %v4898
        %v4938 = vunpack.c.h.b16 %v4898
        %v4939 = vunpack.c.l.b16 %v4899
        %v4940 = vunpack.c.h.b16 %v4899
        %v4941 = vunpack.c.l.b16 %v4900
        %v4942 = vunpack.c.h.b16 %v4900
        %v4943 = vunpack.c.l.b16 %v4901
        %v4944 = vunpack.c.h.b16 %v4901
        %v4945 = vunpack.c.l.b16 %v4902
        %v4946 = vunpack.c.h.b16 %v4902
        %v4947 = vunpack.c.l.b16 %v4903
        %v4948 = vunpack.c.h.b16 %v4903
        %v4949 = vunpack.c.l.b16 %v4904
        %v4950 = vunpack.c.h.b16 %v4904
        %v4951 = vunpack.c.l.b16 %v4905
        %v4952 = vunpack.c.h.b16 %v4905
        %v4953 = vunpack.c.l.b16 %v4906
        %v4954 = vunpack.c.h.b16 %v4906
        %v4955 = vpack.c.b16 %v4923, %v4923
        %v4956 = vpack.c.b16 %v4924, %v4924
        %v4957 = vpack.c.b16 %v4925, %v4925
        %v4958 = vpack.c.b16 %v4926, %v4926
        %v4959 = vpack.c.b16 %v4927, %v4927
        %v4960 = vpack.c.b16 %v4928, %v4928
        %v4961 = vpack.c.b16 %v4929, %v4929
        %v4962 = vpack.c.b16 %v4930, %v4930
        %v4963 = vpack.c.b16 %v4931, %v4931
        %v4964 = vpack.c.b16 %v4932, %v4932
        %v4965 = vpack.c.b16 %v4933, %v4933
        %v4966 = vpack.c.b16 %v4934, %v4934
        %v4967 = vpack.c.b16 %v4935, %v4935
        %v4968 = vpack.c.b16 %v4936, %v4936
        %v4969 = vpack.c.b16 %v4937, %v4937
        %v4970 = vpack.c.b16 %v4938, %v4938
        %v4971 = vpack.c.b16 %v4939, %v4939
        %v4972 = vpack.c.b16 %v4940, %v4940
        %v4973 = vpack.c.b16 %v4941, %v4941
        %v4974 = vpack.c.b16 %v4942, %v4942
        %v4975 = vpack.c.b16 %v4943, %v4943
        %v4976 = vpack.c.b16 %v4944, %v4944
        %v4977 = vpack.c.b16 %v4945, %v4945
        %v4978 = vpack.c.b16 %v4946, %v4946
        %v4979 = vpack.c.b16 %v4947, %v4947
        %v4980 = vpack.c.b16 %v4948, %v4948
        %v4981 = vpack.c.b16 %v4949, %v4949
        %v4982 = vpack.c.b16 %v4950, %v4950
        %v4983 = vpack.c.b16 %v4951, %v4951
        %v4984 = vpack.c.b16 %v4952, %v4952
        %v4985 = vpack.c.b16 %v4953, %v4953
        %v4986 = vpack.c.b16 %v4954, %v4954
        %5019 = vst [vmem:[#allocation4 + $0x8] sm:$0xf] %v4955
        %5020 = vst [vmem:[#allocation4 + $0x2c] sm:$0xf] %v4956
        %5021 = vst [vmem:[#allocation4 + $0x50] sm:$0xf] %v4957
        %5022 = vst [vmem:[#allocation4 + $0x74] sm:$0xf] %v4958
        %5023 = vst [vmem:[#allocation4 + $0x98] sm:$0xf] %v4959
        %5024 = vst [vmem:[#allocation4 + $0xbc] sm:$0xf] %v4960
        %5025 = vst [vmem:[#allocation4 + $0xe0] sm:$0xf] %v4961
        %5026 = vst [vmem:[#allocation4 + $0x104] sm:$0xf] %v4962
        %5027 = vst [vmem:[#allocation4 + $0x128] sm:$0xf] %v4963
        %5028 = vst [vmem:[#allocation4 + $0x14c] sm:$0xf] %v4964
        %5029 = vst [vmem:[#allocation4 + $0x170] sm:$0xf] %v4965
        %5030 = vst [vmem:[#allocation4 + $0x194] sm:$0xf] %v4966
        %5031 = vst [vmem:[#allocation4 + $0x1b8] sm:$0xf] %v4967
        %5032 = vst [vmem:[#allocation4 + $0x1dc] sm:$0xf] %v4968
        %5033 = vst [vmem:[#allocation4 + $0x200] sm:$0xf] %v4969
        %5034 = vst [vmem:[#allocation4 + $0x224] sm:$0xf] %v4970
        %5035 = vst [vmem:[#allocation4 + $0x248] sm:$0xf] %v4971
        %5036 = vst [vmem:[#allocation4 + $0x26c] sm:$0xf] %v4972
        %5037 = vst [vmem:[#allocation4 + $0x290] sm:$0xf] %v4973
        %5038 = vst [vmem:[#allocation4 + $0x2b4] sm:$0xf] %v4974
        %5039 = vst [vmem:[#allocation4 + $0x2d8] sm:$0xf] %v4975
        %5040 = vst [vmem:[#allocation4 + $0x2fc] sm:$0xf] %v4976
        %5041 = vst [vmem:[#allocation4 + $0x320] sm:$0xf] %v4977
        %5042 = vst [vmem:[#allocation4 + $0x344] sm:$0xf] %v4978
        %5043 = vst [vmem:[#allocation4 + $0x368] sm:$0xf] %v4979
        %5044 = vst [vmem:[#allocation4 + $0x38c] sm:$0xf] %v4980
        %5045 = vst [vmem:[#allocation4 + $0x3b0] sm:$0xf] %v4981
        %5046 = vst [vmem:[#allocation4 + $0x3d4] sm:$0xf] %v4982
        %5047 = vst [vmem:[#allocation4 + $0x3f8] sm:$0xf] %v4983
        %5048 = vst [vmem:[#allocation4 + $0x41c] sm:$0xf] %v4984
        %5049 = vst [vmem:[#allocation4 + $0x440] sm:$0xf] %v4985
        %5050 = vst [vmem:[#allocation4 + $0x464] sm:$0xf] %v4986
        %v5051 = vld [vmem:[%s4410] sm:$0xff]
        %v5052 = vld [vmem:[%s4410 + $0x8] sm:$0xff]
        %v5053 = vld [vmem:[%s4410 + $0x18] sm:$0xff]
        %v5054 = vld [vmem:[%s4410 + $0x20] sm:$0xff]
        %v5055 = vld [vmem:[%s4410 + $0x30] sm:$0xff]
        %v5056 = vld [vmem:[%s4410 + $0x38] sm:$0xff]
        %v5057 = vld [vmem:[%s4410 + $0x48] sm:$0xff]
        %v5058 = vld [vmem:[%s4410 + $0x50] sm:$0xff]
        %v5059 = vld [vmem:[%s4410 + $0x60] sm:$0xff]
        %v5060 = vld [vmem:[%s4410 + $0x68] sm:$0xff]
        %v5061 = vld [vmem:[%s4410 + $0x78] sm:$0xff]
        %v5062 = vld [vmem:[%s4410 + $0x80] sm:$0xff]
        %v5063 = vld [vmem:[%s4410 + $0x90] sm:$0xff]
        %v5064 = vld [vmem:[%s4410 + $0x98] sm:$0xff]
        %v5065 = vld [vmem:[%s4410 + $0xa8] sm:$0xff]
        %v5066 = vld [vmem:[%s4410 + $0xb0] sm:$0xff]
        %v5067 = vld [vmem:[%s4410 + $0xc0] sm:$0xff]
        %v5068 = vld [vmem:[%s4410 + $0xc8] sm:$0xff]
        %v5069 = vld [vmem:[%s4410 + $0xd8] sm:$0xff]
        %v5070 = vld [vmem:[%s4410 + $0xe0] sm:$0xff]
        %v5071 = vld [vmem:[%s4410 + $0xf0] sm:$0xff]
        %v5072 = vld [vmem:[%s4410 + $0xf8] sm:$0xff]
        %v5073 = vld [vmem:[%s4410 + $0x108] sm:$0xff]
        %v5074 = vld [vmem:[%s4410 + $0x110] sm:$0xff]
        %v5075 = vld [vmem:[%s4410 + $0x120] sm:$0xff]
        %v5076 = vld [vmem:[%s4410 + $0x128] sm:$0xff]
        %v5077 = vld [vmem:[%s4410 + $0x138] sm:$0xff]
        %v5078 = vld [vmem:[%s4410 + $0x140] sm:$0xff]
        %v5079 = vld [vmem:[%s4410 + $0x150] sm:$0xff]
        %v5080 = vld [vmem:[%s4410 + $0x158] sm:$0xff]
        %v5081 = vld [vmem:[%s4410 + $0x168] sm:$0xff]
        %v5082 = vld [vmem:[%s4410 + $0x170] sm:$0xff]
        %v5083 = vpack.c.bf16 %v5052, %v5051
        %v5084 = vpack.c.bf16 %v5054, %v5053
        %v5085 = vpack.c.bf16 %v5056, %v5055
        %v5086 = vpack.c.bf16 %v5058, %v5057
        %v5087 = vpack.c.bf16 %v5060, %v5059
        %v5088 = vpack.c.bf16 %v5062, %v5061
        %v5089 = vpack.c.bf16 %v5064, %v5063
        %v5090 = vpack.c.bf16 %v5066, %v5065
        %v5091 = vpack.c.bf16 %v5068, %v5067
        %v5092 = vpack.c.bf16 %v5070, %v5069
        %v5093 = vpack.c.bf16 %v5072, %v5071
        %v5094 = vpack.c.bf16 %v5074, %v5073
        %v5095 = vpack.c.bf16 %v5076, %v5075
        %v5096 = vpack.c.bf16 %v5078, %v5077
        %v5097 = vpack.c.bf16 %v5080, %v5079
        %v5098 = vpack.c.bf16 %v5082, %v5081
        %v5115 = vunpack.c.l.b16 %v5083
        %v5116 = vunpack.c.h.b16 %v5083
        %v5117 = vunpack.c.l.b16 %v5084
        %v5118 = vunpack.c.h.b16 %v5084
        %v5119 = vunpack.c.l.b16 %v5085
        %v5120 = vunpack.c.h.b16 %v5085
        %v5121 = vunpack.c.l.b16 %v5086
        %v5122 = vunpack.c.h.b16 %v5086
        %v5123 = vunpack.c.l.b16 %v5087
        %v5124 = vunpack.c.h.b16 %v5087
        %v5125 = vunpack.c.l.b16 %v5088
        %v5126 = vunpack.c.h.b16 %v5088
        %v5127 = vunpack.c.l.b16 %v5089
        %v5128 = vunpack.c.h.b16 %v5089
        %v5129 = vunpack.c.l.b16 %v5090
        %v5130 = vunpack.c.h.b16 %v5090
        %v5131 = vunpack.c.l.b16 %v5091
        %v5132 = vunpack.c.h.b16 %v5091
        %v5133 = vunpack.c.l.b16 %v5092
        %v5134 = vunpack.c.h.b16 %v5092
        %v5135 = vunpack.c.l.b16 %v5093
        %v5136 = vunpack.c.h.b16 %v5093
        %v5137 = vunpack.c.l.b16 %v5094
        %v5138 = vunpack.c.h.b16 %v5094
        %v5139 = vunpack.c.l.b16 %v5095
        %v5140 = vunpack.c.h.b16 %v5095
        %v5141 = vunpack.c.l.b16 %v5096
        %v5142 = vunpack.c.h.b16 %v5096
        %v5143 = vunpack.c.l.b16 %v5097
        %v5144 = vunpack.c.h.b16 %v5097
        %v5145 = vunpack.c.l.b16 %v5098
        %v5146 = vunpack.c.h.b16 %v5098
        %v5147 = vpack.c.b16 %v5115, %v5115
        %v5148 = vpack.c.b16 %v5116, %v5116
        %v5149 = vpack.c.b16 %v5117, %v5117
        %v5150 = vpack.c.b16 %v5118, %v5118
        %v5151 = vpack.c.b16 %v5119, %v5119
        %v5152 = vpack.c.b16 %v5120, %v5120
        %v5153 = vpack.c.b16 %v5121, %v5121
        %v5154 = vpack.c.b16 %v5122, %v5122
        %v5155 = vpack.c.b16 %v5123, %v5123
        %v5156 = vpack.c.b16 %v5124, %v5124
        %v5157 = vpack.c.b16 %v5125, %v5125
        %v5158 = vpack.c.b16 %v5126, %v5126
        %v5159 = vpack.c.b16 %v5127, %v5127
        %v5160 = vpack.c.b16 %v5128, %v5128
        %v5161 = vpack.c.b16 %v5129, %v5129
        %v5162 = vpack.c.b16 %v5130, %v5130
        %v5163 = vpack.c.b16 %v5131, %v5131
        %v5164 = vpack.c.b16 %v5132, %v5132
        %v5165 = vpack.c.b16 %v5133, %v5133
        %v5166 = vpack.c.b16 %v5134, %v5134
        %v5167 = vpack.c.b16 %v5135, %v5135
        %v5168 = vpack.c.b16 %v5136, %v5136
        %v5169 = vpack.c.b16 %v5137, %v5137
        %v5170 = vpack.c.b16 %v5138, %v5138
        %v5171 = vpack.c.b16 %v5139, %v5139
        %v5172 = vpack.c.b16 %v5140, %v5140
        %v5173 = vpack.c.b16 %v5141, %v5141
        %v5174 = vpack.c.b16 %v5142, %v5142
        %v5175 = vpack.c.b16 %v5143, %v5143
        %v5176 = vpack.c.b16 %v5144, %v5144
        %v5177 = vpack.c.b16 %v5145, %v5145
        %v5178 = vpack.c.b16 %v5146, %v5146
        %5211 = vst [vmem:[#allocation4 + $0xc] sm:$0xf] %v5147
        %5212 = vst [vmem:[#allocation4 + $0x30] sm:$0xf] %v5148
        %5213 = vst [vmem:[#allocation4 + $0x54] sm:$0xf] %v5149
        %5214 = vst [vmem:[#allocation4 + $0x78] sm:$0xf] %v5150
        %5215 = vst [vmem:[#allocation4 + $0x9c] sm:$0xf] %v5151
        %5216 = vst [vmem:[#allocation4 + $0xc0] sm:$0xf] %v5152
        %5217 = vst [vmem:[#allocation4 + $0xe4] sm:$0xf] %v5153
        %5218 = vst [vmem:[#allocation4 + $0x108] sm:$0xf] %v5154
        %5219 = vst [vmem:[#allocation4 + $0x12c] sm:$0xf] %v5155
        %5220 = vst [vmem:[#allocation4 + $0x150] sm:$0xf] %v5156
        %5221 = vst [vmem:[#allocation4 + $0x174] sm:$0xf] %v5157
        %5222 = vst [vmem:[#allocation4 + $0x198] sm:$0xf] %v5158
        %5223 = vst [vmem:[#allocation4 + $0x1bc] sm:$0xf] %v5159
        %5224 = vst [vmem:[#allocation4 + $0x1e0] sm:$0xf] %v5160
        %5225 = vst [vmem:[#allocation4 + $0x204] sm:$0xf] %v5161
        %5226 = vst [vmem:[#allocation4 + $0x228] sm:$0xf] %v5162
        %5227 = vst [vmem:[#allocation4 + $0x24c] sm:$0xf] %v5163
        %5228 = vst [vmem:[#allocation4 + $0x270] sm:$0xf] %v5164
        %5229 = vst [vmem:[#allocation4 + $0x294] sm:$0xf] %v5165
        %5230 = vst [vmem:[#allocation4 + $0x2b8] sm:$0xf] %v5166
        %5231 = vst [vmem:[#allocation4 + $0x2dc] sm:$0xf] %v5167
        %5232 = vst [vmem:[#allocation4 + $0x300] sm:$0xf] %v5168
        %5233 = vst [vmem:[#allocation4 + $0x324] sm:$0xf] %v5169
        %5234 = vst [vmem:[#allocation4 + $0x348] sm:$0xf] %v5170
        %5235 = vst [vmem:[#allocation4 + $0x36c] sm:$0xf] %v5171
        %5236 = vst [vmem:[#allocation4 + $0x390] sm:$0xf] %v5172
        %5237 = vst [vmem:[#allocation4 + $0x3b4] sm:$0xf] %v5173
        %5238 = vst [vmem:[#allocation4 + $0x3d8] sm:$0xf] %v5174
        %5239 = vst [vmem:[#allocation4 + $0x3fc] sm:$0xf] %v5175
        %5240 = vst [vmem:[#allocation4 + $0x420] sm:$0xf] %v5176
        %5241 = vst [vmem:[#allocation4 + $0x444] sm:$0xf] %v5177
        %5242 = vst [vmem:[#allocation4 + $0x468] sm:$0xf] %v5178
        %v5243 = vld [vmem:[%s4410 + $0x1] sm:$0xff]
        %v5244 = vld [vmem:[%s4410 + $0x9] sm:$0xff]
        %v5245 = vld [vmem:[%s4410 + $0x19] sm:$0xff]
        %v5246 = vld [vmem:[%s4410 + $0x21] sm:$0xff]
        %v5247 = vld [vmem:[%s4410 + $0x31] sm:$0xff]
        %v5248 = vld [vmem:[%s4410 + $0x39] sm:$0xff]
        %v5249 = vld [vmem:[%s4410 + $0x49] sm:$0xff]
        %v5250 = vld [vmem:[%s4410 + $0x51] sm:$0xff]
        %v5251 = vld [vmem:[%s4410 + $0x61] sm:$0xff]
        %v5252 = vld [vmem:[%s4410 + $0x69] sm:$0xff]
        %v5253 = vld [vmem:[%s4410 + $0x79] sm:$0xff]
        %v5254 = vld [vmem:[%s4410 + $0x81] sm:$0xff]
        %v5255 = vld [vmem:[%s4410 + $0x91] sm:$0xff]
        %v5256 = vld [vmem:[%s4410 + $0x99] sm:$0xff]
        %v5257 = vld [vmem:[%s4410 + $0xa9] sm:$0xff]
        %v5258 = vld [vmem:[%s4410 + $0xb1] sm:$0xff]
        %v5259 = vld [vmem:[%s4410 + $0xc1] sm:$0xff]
        %v5260 = vld [vmem:[%s4410 + $0xc9] sm:$0xff]
        %v5261 = vld [vmem:[%s4410 + $0xd9] sm:$0xff]
        %v5262 = vld [vmem:[%s4410 + $0xe1] sm:$0xff]
        %v5263 = vld [vmem:[%s4410 + $0xf1] sm:$0xff]
        %v5264 = vld [vmem:[%s4410 + $0xf9] sm:$0xff]
        %v5265 = vld [vmem:[%s4410 + $0x109] sm:$0xff]
        %v5266 = vld [vmem:[%s4410 + $0x111] sm:$0xff]
        %v5267 = vld [vmem:[%s4410 + $0x121] sm:$0xff]
        %v5268 = vld [vmem:[%s4410 + $0x129] sm:$0xff]
        %v5269 = vld [vmem:[%s4410 + $0x139] sm:$0xff]
        %v5270 = vld [vmem:[%s4410 + $0x141] sm:$0xff]
        %v5271 = vld [vmem:[%s4410 + $0x151] sm:$0xff]
        %v5272 = vld [vmem:[%s4410 + $0x159] sm:$0xff]
        %v5273 = vld [vmem:[%s4410 + $0x169] sm:$0xff]
        %v5274 = vld [vmem:[%s4410 + $0x171] sm:$0xff]
        %v5275 = vpack.c.bf16 %v5244, %v5243
        %v5276 = vpack.c.bf16 %v5246, %v5245
        %v5277 = vpack.c.bf16 %v5248, %v5247
        %v5278 = vpack.c.bf16 %v5250, %v5249
        %v5279 = vpack.c.bf16 %v5252, %v5251
        %v5280 = vpack.c.bf16 %v5254, %v5253
        %v5281 = vpack.c.bf16 %v5256, %v5255
        %v5282 = vpack.c.bf16 %v5258, %v5257
        %v5283 = vpack.c.bf16 %v5260, %v5259
        %v5284 = vpack.c.bf16 %v5262, %v5261
        %v5285 = vpack.c.bf16 %v5264, %v5263
        %v5286 = vpack.c.bf16 %v5266, %v5265
        %v5287 = vpack.c.bf16 %v5268, %v5267
        %v5288 = vpack.c.bf16 %v5270, %v5269
        %v5289 = vpack.c.bf16 %v5272, %v5271
        %v5290 = vpack.c.bf16 %v5274, %v5273
        %v5307 = vunpack.c.l.b16 %v5275
        %v5308 = vunpack.c.h.b16 %v5275
        %v5309 = vunpack.c.l.b16 %v5276
        %v5310 = vunpack.c.h.b16 %v5276
        %v5311 = vunpack.c.l.b16 %v5277
        %v5312 = vunpack.c.h.b16 %v5277
        %v5313 = vunpack.c.l.b16 %v5278
        %v5314 = vunpack.c.h.b16 %v5278
        %v5315 = vunpack.c.l.b16 %v5279
        %v5316 = vunpack.c.h.b16 %v5279
        %v5317 = vunpack.c.l.b16 %v5280
        %v5318 = vunpack.c.h.b16 %v5280
        %v5319 = vunpack.c.l.b16 %v5281
        %v5320 = vunpack.c.h.b16 %v5281
        %v5321 = vunpack.c.l.b16 %v5282
        %v5322 = vunpack.c.h.b16 %v5282
        %v5323 = vunpack.c.l.b16 %v5283
        %v5324 = vunpack.c.h.b16 %v5283
        %v5325 = vunpack.c.l.b16 %v5284
        %v5326 = vunpack.c.h.b16 %v5284
        %v5327 = vunpack.c.l.b16 %v5285
        %v5328 = vunpack.c.h.b16 %v5285
        %v5329 = vunpack.c.l.b16 %v5286
        %v5330 = vunpack.c.h.b16 %v5286
        %v5331 = vunpack.c.l.b16 %v5287
        %v5332 = vunpack.c.h.b16 %v5287
        %v5333 = vunpack.c.l.b16 %v5288
        %v5334 = vunpack.c.h.b16 %v5288
        %v5335 = vunpack.c.l.b16 %v5289
        %v5336 = vunpack.c.h.b16 %v5289
        %v5337 = vunpack.c.l.b16 %v5290
        %v5338 = vunpack.c.h.b16 %v5290
        %v5339 = vpack.c.b16 %v5307, %v5307
        %v5340 = vpack.c.b16 %v5308, %v5308
        %v5341 = vpack.c.b16 %v5309, %v5309
        %v5342 = vpack.c.b16 %v5310, %v5310
        %v5343 = vpack.c.b16 %v5311, %v5311
        %v5344 = vpack.c.b16 %v5312, %v5312
        %v5345 = vpack.c.b16 %v5313, %v5313
        %v5346 = vpack.c.b16 %v5314, %v5314
        %v5347 = vpack.c.b16 %v5315, %v5315
        %v5348 = vpack.c.b16 %v5316, %v5316
        %v5349 = vpack.c.b16 %v5317, %v5317
        %v5350 = vpack.c.b16 %v5318, %v5318
        %v5351 = vpack.c.b16 %v5319, %v5319
        %v5352 = vpack.c.b16 %v5320, %v5320
        %v5353 = vpack.c.b16 %v5321, %v5321
        %v5354 = vpack.c.b16 %v5322, %v5322
        %v5355 = vpack.c.b16 %v5323, %v5323
        %v5356 = vpack.c.b16 %v5324, %v5324
        %v5357 = vpack.c.b16 %v5325, %v5325
        %v5358 = vpack.c.b16 %v5326, %v5326
        %v5359 = vpack.c.b16 %v5327, %v5327
        %v5360 = vpack.c.b16 %v5328, %v5328
        %v5361 = vpack.c.b16 %v5329, %v5329
        %v5362 = vpack.c.b16 %v5330, %v5330
        %v5363 = vpack.c.b16 %v5331, %v5331
        %v5364 = vpack.c.b16 %v5332, %v5332
        %v5365 = vpack.c.b16 %v5333, %v5333
        %v5366 = vpack.c.b16 %v5334, %v5334
        %v5367 = vpack.c.b16 %v5335, %v5335
        %v5368 = vpack.c.b16 %v5336, %v5336
        %v5369 = vpack.c.b16 %v5337, %v5337
        %v5370 = vpack.c.b16 %v5338, %v5338
        %5403 = vst [vmem:[#allocation4 + $0x10] sm:$0xf] %v5339
        %5404 = vst [vmem:[#allocation4 + $0x34] sm:$0xf] %v5340
        %5405 = vst [vmem:[#allocation4 + $0x58] sm:$0xf] %v5341
        %5406 = vst [vmem:[#allocation4 + $0x7c] sm:$0xf] %v5342
        %5407 = vst [vmem:[#allocation4 + $0xa0] sm:$0xf] %v5343
        %5408 = vst [vmem:[#allocation4 + $0xc4] sm:$0xf] %v5344
        %5409 = vst [vmem:[#allocation4 + $0xe8] sm:$0xf] %v5345
        %5410 = vst [vmem:[#allocation4 + $0x10c] sm:$0xf] %v5346
        %5411 = vst [vmem:[#allocation4 + $0x130] sm:$0xf] %v5347
        %5412 = vst [vmem:[#allocation4 + $0x154] sm:$0xf] %v5348
        %5413 = vst [vmem:[#allocation4 + $0x178] sm:$0xf] %v5349
        %5414 = vst [vmem:[#allocation4 + $0x19c] sm:$0xf] %v5350
        %5415 = vst [vmem:[#allocation4 + $0x1c0] sm:$0xf] %v5351
        %5416 = vst [vmem:[#allocation4 + $0x1e4] sm:$0xf] %v5352
        %5417 = vst [vmem:[#allocation4 + $0x208] sm:$0xf] %v5353
        %5418 = vst [vmem:[#allocation4 + $0x22c] sm:$0xf] %v5354
        %5419 = vst [vmem:[#allocation4 + $0x250] sm:$0xf] %v5355
        %5420 = vst [vmem:[#allocation4 + $0x274] sm:$0xf] %v5356
        %5421 = vst [vmem:[#allocation4 + $0x298] sm:$0xf] %v5357
        %5422 = vst [vmem:[#allocation4 + $0x2bc] sm:$0xf] %v5358
        %5423 = vst [vmem:[#allocation4 + $0x2e0] sm:$0xf] %v5359
        %5424 = vst [vmem:[#allocation4 + $0x304] sm:$0xf] %v5360
        %5425 = vst [vmem:[#allocation4 + $0x328] sm:$0xf] %v5361
        %5426 = vst [vmem:[#allocation4 + $0x34c] sm:$0xf] %v5362
        %5427 = vst [vmem:[#allocation4 + $0x370] sm:$0xf] %v5363
        %5428 = vst [vmem:[#allocation4 + $0x394] sm:$0xf] %v5364
        %5429 = vst [vmem:[#allocation4 + $0x3b8] sm:$0xf] %v5365
        %5430 = vst [vmem:[#allocation4 + $0x3dc] sm:$0xf] %v5366
        %5431 = vst [vmem:[#allocation4 + $0x400] sm:$0xf] %v5367
        %5432 = vst [vmem:[#allocation4 + $0x424] sm:$0xf] %v5368
        %5433 = vst [vmem:[#allocation4 + $0x448] sm:$0xf] %v5369
        %5434 = vst [vmem:[#allocation4 + $0x46c] sm:$0xf] %v5370
        %v5435 = vld [vmem:[%s4410 + $0x2] sm:$0xff]
        %v5436 = vld [vmem:[%s4410 + $0xa] sm:$0xff]
        %v5437 = vld [vmem:[%s4410 + $0x1a] sm:$0xff]
        %v5438 = vld [vmem:[%s4410 + $0x22] sm:$0xff]
        %v5439 = vld [vmem:[%s4410 + $0x32] sm:$0xff]
        %v5440 = vld [vmem:[%s4410 + $0x3a] sm:$0xff]
        %v5441 = vld [vmem:[%s4410 + $0x4a] sm:$0xff]
        %v5442 = vld [vmem:[%s4410 + $0x52] sm:$0xff]
        %v5443 = vld [vmem:[%s4410 + $0x62] sm:$0xff]
        %v5444 = vld [vmem:[%s4410 + $0x6a] sm:$0xff]
        %v5445 = vld [vmem:[%s4410 + $0x7a] sm:$0xff]
        %v5446 = vld [vmem:[%s4410 + $0x82] sm:$0xff]
        %v5447 = vld [vmem:[%s4410 + $0x92] sm:$0xff]
        %v5448 = vld [vmem:[%s4410 + $0x9a] sm:$0xff]
        %v5449 = vld [vmem:[%s4410 + $0xaa] sm:$0xff]
        %v5450 = vld [vmem:[%s4410 + $0xb2] sm:$0xff]
        %v5451 = vld [vmem:[%s4410 + $0xc2] sm:$0xff]
        %v5452 = vld [vmem:[%s4410 + $0xca] sm:$0xff]
        %v5453 = vld [vmem:[%s4410 + $0xda] sm:$0xff]
        %v5454 = vld [vmem:[%s4410 + $0xe2] sm:$0xff]
        %v5455 = vld [vmem:[%s4410 + $0xf2] sm:$0xff]
        %v5456 = vld [vmem:[%s4410 + $0xfa] sm:$0xff]
        %v5457 = vld [vmem:[%s4410 + $0x10a] sm:$0xff]
        %v5458 = vld [vmem:[%s4410 + $0x112] sm:$0xff]
        %v5459 = vld [vmem:[%s4410 + $0x122] sm:$0xff]
        %v5460 = vld [vmem:[%s4410 + $0x12a] sm:$0xff]
        %v5461 = vld [vmem:[%s4410 + $0x13a] sm:$0xff]
        %v5462 = vld [vmem:[%s4410 + $0x142] sm:$0xff]
        %v5463 = vld [vmem:[%s4410 + $0x152] sm:$0xff]
        %v5464 = vld [vmem:[%s4410 + $0x15a] sm:$0xff]
        %v5465 = vld [vmem:[%s4410 + $0x16a] sm:$0xff]
        %v5466 = vld [vmem:[%s4410 + $0x172] sm:$0xff]
        %v5467 = vpack.c.bf16 %v5436, %v5435
        %v5468 = vpack.c.bf16 %v5438, %v5437
        %v5469 = vpack.c.bf16 %v5440, %v5439
        %v5470 = vpack.c.bf16 %v5442, %v5441
        %v5471 = vpack.c.bf16 %v5444, %v5443
        %v5472 = vpack.c.bf16 %v5446, %v5445
        %v5473 = vpack.c.bf16 %v5448, %v5447
        %v5474 = vpack.c.bf16 %v5450, %v5449
        %v5475 = vpack.c.bf16 %v5452, %v5451
        %v5476 = vpack.c.bf16 %v5454, %v5453
        %v5477 = vpack.c.bf16 %v5456, %v5455
        %v5478 = vpack.c.bf16 %v5458, %v5457
        %v5479 = vpack.c.bf16 %v5460, %v5459
        %v5480 = vpack.c.bf16 %v5462, %v5461
        %v5481 = vpack.c.bf16 %v5464, %v5463
        %v5482 = vpack.c.bf16 %v5466, %v5465
        %v5499 = vunpack.c.l.b16 %v5467
        %v5500 = vunpack.c.h.b16 %v5467
        %v5501 = vunpack.c.l.b16 %v5468
        %v5502 = vunpack.c.h.b16 %v5468
        %v5503 = vunpack.c.l.b16 %v5469
        %v5504 = vunpack.c.h.b16 %v5469
        %v5505 = vunpack.c.l.b16 %v5470
        %v5506 = vunpack.c.h.b16 %v5470
        %v5507 = vunpack.c.l.b16 %v5471
        %v5508 = vunpack.c.h.b16 %v5471
        %v5509 = vunpack.c.l.b16 %v5472
        %v5510 = vunpack.c.h.b16 %v5472
        %v5511 = vunpack.c.l.b16 %v5473
        %v5512 = vunpack.c.h.b16 %v5473
        %v5513 = vunpack.c.l.b16 %v5474
        %v5514 = vunpack.c.h.b16 %v5474
        %v5515 = vunpack.c.l.b16 %v5475
        %v5516 = vunpack.c.h.b16 %v5475
        %v5517 = vunpack.c.l.b16 %v5476
        %v5518 = vunpack.c.h.b16 %v5476
        %v5519 = vunpack.c.l.b16 %v5477
        %v5520 = vunpack.c.h.b16 %v5477
        %v5521 = vunpack.c.l.b16 %v5478
        %v5522 = vunpack.c.h.b16 %v5478
        %v5523 = vunpack.c.l.b16 %v5479
        %v5524 = vunpack.c.h.b16 %v5479
        %v5525 = vunpack.c.l.b16 %v5480
        %v5526 = vunpack.c.h.b16 %v5480
        %v5527 = vunpack.c.l.b16 %v5481
        %v5528 = vunpack.c.h.b16 %v5481
        %v5529 = vunpack.c.l.b16 %v5482
        %v5530 = vunpack.c.h.b16 %v5482
        %v5531 = vpack.c.b16 %v5499, %v5499
        %v5532 = vpack.c.b16 %v5500, %v5500
        %v5533 = vpack.c.b16 %v5501, %v5501
        %v5534 = vpack.c.b16 %v5502, %v5502
        %v5535 = vpack.c.b16 %v5503, %v5503
        %v5536 = vpack.c.b16 %v5504, %v5504
        %v5537 = vpack.c.b16 %v5505, %v5505
        %v5538 = vpack.c.b16 %v5506, %v5506
        %v5539 = vpack.c.b16 %v5507, %v5507
        %v5540 = vpack.c.b16 %v5508, %v5508
        %v5541 = vpack.c.b16 %v5509, %v5509
        %v5542 = vpack.c.b16 %v5510, %v5510
        %v5543 = vpack.c.b16 %v5511, %v5511
        %v5544 = vpack.c.b16 %v5512, %v5512
        %v5545 = vpack.c.b16 %v5513, %v5513
        %v5546 = vpack.c.b16 %v5514, %v5514
        %v5547 = vpack.c.b16 %v5515, %v5515
        %v5548 = vpack.c.b16 %v5516, %v5516
        %v5549 = vpack.c.b16 %v5517, %v5517
        %v5550 = vpack.c.b16 %v5518, %v5518
        %v5551 = vpack.c.b16 %v5519, %v5519
        %v5552 = vpack.c.b16 %v5520, %v5520
        %v5553 = vpack.c.b16 %v5521, %v5521
        %v5554 = vpack.c.b16 %v5522, %v5522
        %v5555 = vpack.c.b16 %v5523, %v5523
        %v5556 = vpack.c.b16 %v5524, %v5524
        %v5557 = vpack.c.b16 %v5525, %v5525
        %v5558 = vpack.c.b16 %v5526, %v5526
        %v5559 = vpack.c.b16 %v5527, %v5527
        %v5560 = vpack.c.b16 %v5528, %v5528
        %v5561 = vpack.c.b16 %v5529, %v5529
        %v5562 = vpack.c.b16 %v5530, %v5530
        %5595 = vst [vmem:[#allocation4 + $0x14] sm:$0xf] %v5531
        %5596 = vst [vmem:[#allocation4 + $0x38] sm:$0xf] %v5532
        %5597 = vst [vmem:[#allocation4 + $0x5c] sm:$0xf] %v5533
        %5598 = vst [vmem:[#allocation4 + $0x80] sm:$0xf] %v5534
        %5599 = vst [vmem:[#allocation4 + $0xa4] sm:$0xf] %v5535
        %5600 = vst [vmem:[#allocation4 + $0xc8] sm:$0xf] %v5536
        %5601 = vst [vmem:[#allocation4 + $0xec] sm:$0xf] %v5537
        %5602 = vst [vmem:[#allocation4 + $0x110] sm:$0xf] %v5538
        %5603 = vst [vmem:[#allocation4 + $0x134] sm:$0xf] %v5539
        %5604 = vst [vmem:[#allocation4 + $0x158] sm:$0xf] %v5540
        %5605 = vst [vmem:[#allocation4 + $0x17c] sm:$0xf] %v5541
        %5606 = vst [vmem:[#allocation4 + $0x1a0] sm:$0xf] %v5542
        %5607 = vst [vmem:[#allocation4 + $0x1c4] sm:$0xf] %v5543
        %5608 = vst [vmem:[#allocation4 + $0x1e8] sm:$0xf] %v5544
        %5609 = vst [vmem:[#allocation4 + $0x20c] sm:$0xf] %v5545
        %5610 = vst [vmem:[#allocation4 + $0x230] sm:$0xf] %v5546
        %5611 = vst [vmem:[#allocation4 + $0x254] sm:$0xf] %v5547
        %5612 = vst [vmem:[#allocation4 + $0x278] sm:$0xf] %v5548
        %5613 = vst [vmem:[#allocation4 + $0x29c] sm:$0xf] %v5549
        %5614 = vst [vmem:[#allocation4 + $0x2c0] sm:$0xf] %v5550
        %5615 = vst [vmem:[#allocation4 + $0x2e4] sm:$0xf] %v5551
        %5616 = vst [vmem:[#allocation4 + $0x308] sm:$0xf] %v5552
        %5617 = vst [vmem:[#allocation4 + $0x32c] sm:$0xf] %v5553
        %5618 = vst [vmem:[#allocation4 + $0x350] sm:$0xf] %v5554
        %5619 = vst [vmem:[#allocation4 + $0x374] sm:$0xf] %v5555
        %5620 = vst [vmem:[#allocation4 + $0x398] sm:$0xf] %v5556
        %5621 = vst [vmem:[#allocation4 + $0x3bc] sm:$0xf] %v5557
        %5622 = vst [vmem:[#allocation4 + $0x3e0] sm:$0xf] %v5558
        %5623 = vst [vmem:[#allocation4 + $0x404] sm:$0xf] %v5559
        %5624 = vst [vmem:[#allocation4 + $0x428] sm:$0xf] %v5560
        %5625 = vst [vmem:[#allocation4 + $0x44c] sm:$0xf] %v5561
        %5626 = vst [vmem:[#allocation4 + $0x470] sm:$0xf] %v5562
        %s5627 = scalar_lea.vmem [#allocation3], 48
        %v5628 = vld [vmem:[%s5627] sm:$0xff]
        %v5629 = vld [vmem:[%s5627 + $0x8] sm:$0xff]
        %v5630 = vld [vmem:[%s5627 + $0x18] sm:$0xff]
        %v5631 = vld [vmem:[%s5627 + $0x20] sm:$0xff]
        %v5632 = vld [vmem:[%s5627 + $0x30] sm:$0xff]
        %v5633 = vld [vmem:[%s5627 + $0x38] sm:$0xff]
        %v5634 = vld [vmem:[%s5627 + $0x48] sm:$0xff]
        %v5635 = vld [vmem:[%s5627 + $0x50] sm:$0xff]
        %v5636 = vld [vmem:[%s5627 + $0x60] sm:$0xff]
        %v5637 = vld [vmem:[%s5627 + $0x68] sm:$0xff]
        %v5638 = vld [vmem:[%s5627 + $0x78] sm:$0xff]
        %v5639 = vld [vmem:[%s5627 + $0x80] sm:$0xff]
        %v5640 = vld [vmem:[%s5627 + $0x90] sm:$0xff]
        %v5641 = vld [vmem:[%s5627 + $0x98] sm:$0xff]
        %v5642 = vld [vmem:[%s5627 + $0xa8] sm:$0xff]
        %v5643 = vld [vmem:[%s5627 + $0xb0] sm:$0xff]
        %v5644 = vld [vmem:[%s5627 + $0xc0] sm:$0xff]
        %v5645 = vld [vmem:[%s5627 + $0xc8] sm:$0xff]
        %v5646 = vld [vmem:[%s5627 + $0xd8] sm:$0xff]
        %v5647 = vld [vmem:[%s5627 + $0xe0] sm:$0xff]
        %v5648 = vld [vmem:[%s5627 + $0xf0] sm:$0xff]
        %v5649 = vld [vmem:[%s5627 + $0xf8] sm:$0xff]
        %v5650 = vld [vmem:[%s5627 + $0x108] sm:$0xff]
        %v5651 = vld [vmem:[%s5627 + $0x110] sm:$0xff]
        %v5652 = vld [vmem:[%s5627 + $0x120] sm:$0xff]
        %v5653 = vld [vmem:[%s5627 + $0x128] sm:$0xff]
        %v5654 = vld [vmem:[%s5627 + $0x138] sm:$0xff]
        %v5655 = vld [vmem:[%s5627 + $0x140] sm:$0xff]
        %v5656 = vld [vmem:[%s5627 + $0x150] sm:$0xff]
        %v5657 = vld [vmem:[%s5627 + $0x158] sm:$0xff]
        %v5658 = vld [vmem:[%s5627 + $0x168] sm:$0xff]
        %v5659 = vld [vmem:[%s5627 + $0x170] sm:$0xff]
        %v5660 = vpack.c.bf16 %v5629, %v5628
        %v5661 = vpack.c.bf16 %v5631, %v5630
        %v5662 = vpack.c.bf16 %v5633, %v5632
        %v5663 = vpack.c.bf16 %v5635, %v5634
        %v5664 = vpack.c.bf16 %v5637, %v5636
        %v5665 = vpack.c.bf16 %v5639, %v5638
        %v5666 = vpack.c.bf16 %v5641, %v5640
        %v5667 = vpack.c.bf16 %v5643, %v5642
        %v5668 = vpack.c.bf16 %v5645, %v5644
        %v5669 = vpack.c.bf16 %v5647, %v5646
        %v5670 = vpack.c.bf16 %v5649, %v5648
        %v5671 = vpack.c.bf16 %v5651, %v5650
        %v5672 = vpack.c.bf16 %v5653, %v5652
        %v5673 = vpack.c.bf16 %v5655, %v5654
        %v5674 = vpack.c.bf16 %v5657, %v5656
        %v5675 = vpack.c.bf16 %v5659, %v5658
        %v5692 = vunpack.c.l.b16 %v5660
        %v5693 = vunpack.c.h.b16 %v5660
        %v5694 = vunpack.c.l.b16 %v5661
        %v5695 = vunpack.c.h.b16 %v5661
        %v5696 = vunpack.c.l.b16 %v5662
        %v5697 = vunpack.c.h.b16 %v5662
        %v5698 = vunpack.c.l.b16 %v5663
        %v5699 = vunpack.c.h.b16 %v5663
        %v5700 = vunpack.c.l.b16 %v5664
        %v5701 = vunpack.c.h.b16 %v5664
        %v5702 = vunpack.c.l.b16 %v5665
        %v5703 = vunpack.c.h.b16 %v5665
        %v5704 = vunpack.c.l.b16 %v5666
        %v5705 = vunpack.c.h.b16 %v5666
        %v5706 = vunpack.c.l.b16 %v5667
        %v5707 = vunpack.c.h.b16 %v5667
        %v5708 = vunpack.c.l.b16 %v5668
        %v5709 = vunpack.c.h.b16 %v5668
        %v5710 = vunpack.c.l.b16 %v5669
        %v5711 = vunpack.c.h.b16 %v5669
        %v5712 = vunpack.c.l.b16 %v5670
        %v5713 = vunpack.c.h.b16 %v5670
        %v5714 = vunpack.c.l.b16 %v5671
        %v5715 = vunpack.c.h.b16 %v5671
        %v5716 = vunpack.c.l.b16 %v5672
        %v5717 = vunpack.c.h.b16 %v5672
        %v5718 = vunpack.c.l.b16 %v5673
        %v5719 = vunpack.c.h.b16 %v5673
        %v5720 = vunpack.c.l.b16 %v5674
        %v5721 = vunpack.c.h.b16 %v5674
        %v5722 = vunpack.c.l.b16 %v5675
        %v5723 = vunpack.c.h.b16 %v5675
        %v5724 = vpack.c.b16 %v5692, %v5692
        %v5725 = vpack.c.b16 %v5693, %v5693
        %v5726 = vpack.c.b16 %v5694, %v5694
        %v5727 = vpack.c.b16 %v5695, %v5695
        %v5728 = vpack.c.b16 %v5696, %v5696
        %v5729 = vpack.c.b16 %v5697, %v5697
        %v5730 = vpack.c.b16 %v5698, %v5698
        %v5731 = vpack.c.b16 %v5699, %v5699
        %v5732 = vpack.c.b16 %v5700, %v5700
        %v5733 = vpack.c.b16 %v5701, %v5701
        %v5734 = vpack.c.b16 %v5702, %v5702
        %v5735 = vpack.c.b16 %v5703, %v5703
        %v5736 = vpack.c.b16 %v5704, %v5704
        %v5737 = vpack.c.b16 %v5705, %v5705
        %v5738 = vpack.c.b16 %v5706, %v5706
        %v5739 = vpack.c.b16 %v5707, %v5707
        %v5740 = vpack.c.b16 %v5708, %v5708
        %v5741 = vpack.c.b16 %v5709, %v5709
        %v5742 = vpack.c.b16 %v5710, %v5710
        %v5743 = vpack.c.b16 %v5711, %v5711
        %v5744 = vpack.c.b16 %v5712, %v5712
        %v5745 = vpack.c.b16 %v5713, %v5713
        %v5746 = vpack.c.b16 %v5714, %v5714
        %v5747 = vpack.c.b16 %v5715, %v5715
        %v5748 = vpack.c.b16 %v5716, %v5716
        %v5749 = vpack.c.b16 %v5717, %v5717
        %v5750 = vpack.c.b16 %v5718, %v5718
        %v5751 = vpack.c.b16 %v5719, %v5719
        %v5752 = vpack.c.b16 %v5720, %v5720
        %v5753 = vpack.c.b16 %v5721, %v5721
        %v5754 = vpack.c.b16 %v5722, %v5722
        %v5755 = vpack.c.b16 %v5723, %v5723
        %5788 = vst [vmem:[#allocation4 + $0x18] sm:$0xf] %v5724
        %5789 = vst [vmem:[#allocation4 + $0x3c] sm:$0xf] %v5725
        %5790 = vst [vmem:[#allocation4 + $0x60] sm:$0xf] %v5726
        %5791 = vst [vmem:[#allocation4 + $0x84] sm:$0xf] %v5727
        %5792 = vst [vmem:[#allocation4 + $0xa8] sm:$0xf] %v5728
        %5793 = vst [vmem:[#allocation4 + $0xcc] sm:$0xf] %v5729
        %5794 = vst [vmem:[#allocation4 + $0xf0] sm:$0xf] %v5730
        %5795 = vst [vmem:[#allocation4 + $0x114] sm:$0xf] %v5731
        %5796 = vst [vmem:[#allocation4 + $0x138] sm:$0xf] %v5732
        %5797 = vst [vmem:[#allocation4 + $0x15c] sm:$0xf] %v5733
        %5798 = vst [vmem:[#allocation4 + $0x180] sm:$0xf] %v5734
        %5799 = vst [vmem:[#allocation4 + $0x1a4] sm:$0xf] %v5735
        %5800 = vst [vmem:[#allocation4 + $0x1c8] sm:$0xf] %v5736
        %5801 = vst [vmem:[#allocation4 + $0x1ec] sm:$0xf] %v5737
        %5802 = vst [vmem:[#allocation4 + $0x210] sm:$0xf] %v5738
        %5803 = vst [vmem:[#allocation4 + $0x234] sm:$0xf] %v5739
        %5804 = vst [vmem:[#allocation4 + $0x258] sm:$0xf] %v5740
        %5805 = vst [vmem:[#allocation4 + $0x27c] sm:$0xf] %v5741
        %5806 = vst [vmem:[#allocation4 + $0x2a0] sm:$0xf] %v5742
        %5807 = vst [vmem:[#allocation4 + $0x2c4] sm:$0xf] %v5743
        %5808 = vst [vmem:[#allocation4 + $0x2e8] sm:$0xf] %v5744
        %5809 = vst [vmem:[#allocation4 + $0x30c] sm:$0xf] %v5745
        %5810 = vst [vmem:[#allocation4 + $0x330] sm:$0xf] %v5746
        %5811 = vst [vmem:[#allocation4 + $0x354] sm:$0xf] %v5747
        %5812 = vst [vmem:[#allocation4 + $0x378] sm:$0xf] %v5748
        %5813 = vst [vmem:[#allocation4 + $0x39c] sm:$0xf] %v5749
        %5814 = vst [vmem:[#allocation4 + $0x3c0] sm:$0xf] %v5750
        %5815 = vst [vmem:[#allocation4 + $0x3e4] sm:$0xf] %v5751
        %5816 = vst [vmem:[#allocation4 + $0x408] sm:$0xf] %v5752
        %5817 = vst [vmem:[#allocation4 + $0x42c] sm:$0xf] %v5753
        %5818 = vst [vmem:[#allocation4 + $0x450] sm:$0xf] %v5754
        %5819 = vst [vmem:[#allocation4 + $0x474] sm:$0xf] %v5755
        %v5820 = vld [vmem:[%s5627 + $0x1] sm:$0xff]
        %v5821 = vld [vmem:[%s5627 + $0x9] sm:$0xff]
        %v5822 = vld [vmem:[%s5627 + $0x19] sm:$0xff]
        %v5823 = vld [vmem:[%s5627 + $0x21] sm:$0xff]
        %v5824 = vld [vmem:[%s5627 + $0x31] sm:$0xff]
        %v5825 = vld [vmem:[%s5627 + $0x39] sm:$0xff]
        %v5826 = vld [vmem:[%s5627 + $0x49] sm:$0xff]
        %v5827 = vld [vmem:[%s5627 + $0x51] sm:$0xff]
        %v5828 = vld [vmem:[%s5627 + $0x61] sm:$0xff]
        %v5829 = vld [vmem:[%s5627 + $0x69] sm:$0xff]
        %v5830 = vld [vmem:[%s5627 + $0x79] sm:$0xff]
        %v5831 = vld [vmem:[%s5627 + $0x81] sm:$0xff]
        %v5832 = vld [vmem:[%s5627 + $0x91] sm:$0xff]
        %v5833 = vld [vmem:[%s5627 + $0x99] sm:$0xff]
        %v5834 = vld [vmem:[%s5627 + $0xa9] sm:$0xff]
        %v5835 = vld [vmem:[%s5627 + $0xb1] sm:$0xff]
        %v5836 = vld [vmem:[%s5627 + $0xc1] sm:$0xff]
        %v5837 = vld [vmem:[%s5627 + $0xc9] sm:$0xff]
        %v5838 = vld [vmem:[%s5627 + $0xd9] sm:$0xff]
        %v5839 = vld [vmem:[%s5627 + $0xe1] sm:$0xff]
        %v5840 = vld [vmem:[%s5627 + $0xf1] sm:$0xff]
        %v5841 = vld [vmem:[%s5627 + $0xf9] sm:$0xff]
        %v5842 = vld [vmem:[%s5627 + $0x109] sm:$0xff]
        %v5843 = vld [vmem:[%s5627 + $0x111] sm:$0xff]
        %v5844 = vld [vmem:[%s5627 + $0x121] sm:$0xff]
        %v5845 = vld [vmem:[%s5627 + $0x129] sm:$0xff]
        %v5846 = vld [vmem:[%s5627 + $0x139] sm:$0xff]
        %v5847 = vld [vmem:[%s5627 + $0x141] sm:$0xff]
        %v5848 = vld [vmem:[%s5627 + $0x151] sm:$0xff]
        %v5849 = vld [vmem:[%s5627 + $0x159] sm:$0xff]
        %v5850 = vld [vmem:[%s5627 + $0x169] sm:$0xff]
        %v5851 = vld [vmem:[%s5627 + $0x171] sm:$0xff]
        %v5852 = vpack.c.bf16 %v5821, %v5820
        %v5853 = vpack.c.bf16 %v5823, %v5822
        %v5854 = vpack.c.bf16 %v5825, %v5824
        %v5855 = vpack.c.bf16 %v5827, %v5826
        %v5856 = vpack.c.bf16 %v5829, %v5828
        %v5857 = vpack.c.bf16 %v5831, %v5830
        %v5858 = vpack.c.bf16 %v5833, %v5832
        %v5859 = vpack.c.bf16 %v5835, %v5834
        %v5860 = vpack.c.bf16 %v5837, %v5836
        %v5861 = vpack.c.bf16 %v5839, %v5838
        %v5862 = vpack.c.bf16 %v5841, %v5840
        %v5863 = vpack.c.bf16 %v5843, %v5842
        %v5864 = vpack.c.bf16 %v5845, %v5844
        %v5865 = vpack.c.bf16 %v5847, %v5846
        %v5866 = vpack.c.bf16 %v5849, %v5848
        %v5867 = vpack.c.bf16 %v5851, %v5850
        %v5884 = vunpack.c.l.b16 %v5852
        %v5885 = vunpack.c.h.b16 %v5852
        %v5886 = vunpack.c.l.b16 %v5853
        %v5887 = vunpack.c.h.b16 %v5853
        %v5888 = vunpack.c.l.b16 %v5854
        %v5889 = vunpack.c.h.b16 %v5854
        %v5890 = vunpack.c.l.b16 %v5855
        %v5891 = vunpack.c.h.b16 %v5855
        %v5892 = vunpack.c.l.b16 %v5856
        %v5893 = vunpack.c.h.b16 %v5856
        %v5894 = vunpack.c.l.b16 %v5857
        %v5895 = vunpack.c.h.b16 %v5857
        %v5896 = vunpack.c.l.b16 %v5858
        %v5897 = vunpack.c.h.b16 %v5858
        %v5898 = vunpack.c.l.b16 %v5859
        %v5899 = vunpack.c.h.b16 %v5859
        %v5900 = vunpack.c.l.b16 %v5860
        %v5901 = vunpack.c.h.b16 %v5860
        %v5902 = vunpack.c.l.b16 %v5861
        %v5903 = vunpack.c.h.b16 %v5861
        %v5904 = vunpack.c.l.b16 %v5862
        %v5905 = vunpack.c.h.b16 %v5862
        %v5906 = vunpack.c.l.b16 %v5863
        %v5907 = vunpack.c.h.b16 %v5863
        %v5908 = vunpack.c.l.b16 %v5864
        %v5909 = vunpack.c.h.b16 %v5864
        %v5910 = vunpack.c.l.b16 %v5865
        %v5911 = vunpack.c.h.b16 %v5865
        %v5912 = vunpack.c.l.b16 %v5866
        %v5913 = vunpack.c.h.b16 %v5866
        %v5914 = vunpack.c.l.b16 %v5867
        %v5915 = vunpack.c.h.b16 %v5867
        %v5916 = vpack.c.b16 %v5884, %v5884
        %v5917 = vpack.c.b16 %v5885, %v5885
        %v5918 = vpack.c.b16 %v5886, %v5886
        %v5919 = vpack.c.b16 %v5887, %v5887
        %v5920 = vpack.c.b16 %v5888, %v5888
        %v5921 = vpack.c.b16 %v5889, %v5889
        %v5922 = vpack.c.b16 %v5890, %v5890
        %v5923 = vpack.c.b16 %v5891, %v5891
        %v5924 = vpack.c.b16 %v5892, %v5892
        %v5925 = vpack.c.b16 %v5893, %v5893
        %v5926 = vpack.c.b16 %v5894, %v5894
        %v5927 = vpack.c.b16 %v5895, %v5895
        %v5928 = vpack.c.b16 %v5896, %v5896
        %v5929 = vpack.c.b16 %v5897, %v5897
        %v5930 = vpack.c.b16 %v5898, %v5898
        %v5931 = vpack.c.b16 %v5899, %v5899
        %v5932 = vpack.c.b16 %v5900, %v5900
        %v5933 = vpack.c.b16 %v5901, %v5901
        %v5934 = vpack.c.b16 %v5902, %v5902
        %v5935 = vpack.c.b16 %v5903, %v5903
        %v5936 = vpack.c.b16 %v5904, %v5904
        %v5937 = vpack.c.b16 %v5905, %v5905
        %v5938 = vpack.c.b16 %v5906, %v5906
        %v5939 = vpack.c.b16 %v5907, %v5907
        %v5940 = vpack.c.b16 %v5908, %v5908
        %v5941 = vpack.c.b16 %v5909, %v5909
        %v5942 = vpack.c.b16 %v5910, %v5910
        %v5943 = vpack.c.b16 %v5911, %v5911
        %v5944 = vpack.c.b16 %v5912, %v5912
        %v5945 = vpack.c.b16 %v5913, %v5913
        %v5946 = vpack.c.b16 %v5914, %v5914
        %v5947 = vpack.c.b16 %v5915, %v5915
        %5980 = vst [vmem:[#allocation4 + $0x1c] sm:$0xf] %v5916
        %5981 = vst [vmem:[#allocation4 + $0x40] sm:$0xf] %v5917
        %5982 = vst [vmem:[#allocation4 + $0x64] sm:$0xf] %v5918
        %5983 = vst [vmem:[#allocation4 + $0x88] sm:$0xf] %v5919
        %5984 = vst [vmem:[#allocation4 + $0xac] sm:$0xf] %v5920
        %5985 = vst [vmem:[#allocation4 + $0xd0] sm:$0xf] %v5921
        %5986 = vst [vmem:[#allocation4 + $0xf4] sm:$0xf] %v5922
        %5987 = vst [vmem:[#allocation4 + $0x118] sm:$0xf] %v5923
        %5988 = vst [vmem:[#allocation4 + $0x13c] sm:$0xf] %v5924
        %5989 = vst [vmem:[#allocation4 + $0x160] sm:$0xf] %v5925
        %5990 = vst [vmem:[#allocation4 + $0x184] sm:$0xf] %v5926
        %5991 = vst [vmem:[#allocation4 + $0x1a8] sm:$0xf] %v5927
        %5992 = vst [vmem:[#allocation4 + $0x1cc] sm:$0xf] %v5928
        %5993 = vst [vmem:[#allocation4 + $0x1f0] sm:$0xf] %v5929
        %5994 = vst [vmem:[#allocation4 + $0x214] sm:$0xf] %v5930
        %5995 = vst [vmem:[#allocation4 + $0x238] sm:$0xf] %v5931
        %5996 = vst [vmem:[#allocation4 + $0x25c] sm:$0xf] %v5932
        %5997 = vst [vmem:[#allocation4 + $0x280] sm:$0xf] %v5933
        %5998 = vst [vmem:[#allocation4 + $0x2a4] sm:$0xf] %v5934
        %5999 = vst [vmem:[#allocation4 + $0x2c8] sm:$0xf] %v5935
        %6000 = vst [vmem:[#allocation4 + $0x2ec] sm:$0xf] %v5936
        %6001 = vst [vmem:[#allocation4 + $0x310] sm:$0xf] %v5937
        %6002 = vst [vmem:[#allocation4 + $0x334] sm:$0xf] %v5938
        %6003 = vst [vmem:[#allocation4 + $0x358] sm:$0xf] %v5939
        %6004 = vst [vmem:[#allocation4 + $0x37c] sm:$0xf] %v5940
        %6005 = vst [vmem:[#allocation4 + $0x3a0] sm:$0xf] %v5941
        %6006 = vst [vmem:[#allocation4 + $0x3c4] sm:$0xf] %v5942
        %6007 = vst [vmem:[#allocation4 + $0x3e8] sm:$0xf] %v5943
        %6008 = vst [vmem:[#allocation4 + $0x40c] sm:$0xf] %v5944
        %6009 = vst [vmem:[#allocation4 + $0x430] sm:$0xf] %v5945
        %6010 = vst [vmem:[#allocation4 + $0x454] sm:$0xf] %v5946
        %6011 = vst [vmem:[#allocation4 + $0x478] sm:$0xf] %v5947
        %v6012 = vld [vmem:[%s5627 + $0x2] sm:$0xff]
        %v6013 = vld [vmem:[%s5627 + $0xa] sm:$0xff]
        %v6014 = vld [vmem:[%s5627 + $0x1a] sm:$0xff]
        %v6015 = vld [vmem:[%s5627 + $0x22] sm:$0xff]
        %v6016 = vld [vmem:[%s5627 + $0x32] sm:$0xff]
        %v6017 = vld [vmem:[%s5627 + $0x3a] sm:$0xff]
        %v6018 = vld [vmem:[%s5627 + $0x4a] sm:$0xff]
        %v6019 = vld [vmem:[%s5627 + $0x52] sm:$0xff]
        %v6020 = vld [vmem:[%s5627 + $0x62] sm:$0xff]
        %v6021 = vld [vmem:[%s5627 + $0x6a] sm:$0xff]
        %v6022 = vld [vmem:[%s5627 + $0x7a] sm:$0xff]
        %v6023 = vld [vmem:[%s5627 + $0x82] sm:$0xff]
        %v6024 = vld [vmem:[%s5627 + $0x92] sm:$0xff]
        %v6025 = vld [vmem:[%s5627 + $0x9a] sm:$0xff]
        %v6026 = vld [vmem:[%s5627 + $0xaa] sm:$0xff]
        %v6027 = vld [vmem:[%s5627 + $0xb2] sm:$0xff]
        %v6028 = vld [vmem:[%s5627 + $0xc2] sm:$0xff]
        %v6029 = vld [vmem:[%s5627 + $0xca] sm:$0xff]
        %v6030 = vld [vmem:[%s5627 + $0xda] sm:$0xff]
        %v6031 = vld [vmem:[%s5627 + $0xe2] sm:$0xff]
        %v6032 = vld [vmem:[%s5627 + $0xf2] sm:$0xff]
        %v6033 = vld [vmem:[%s5627 + $0xfa] sm:$0xff]
        %v6034 = vld [vmem:[%s5627 + $0x10a] sm:$0xff]
        %v6035 = vld [vmem:[%s5627 + $0x112] sm:$0xff]
        %v6036 = vld [vmem:[%s5627 + $0x122] sm:$0xff]
        %v6037 = vld [vmem:[%s5627 + $0x12a] sm:$0xff]
        %v6038 = vld [vmem:[%s5627 + $0x13a] sm:$0xff]
        %v6039 = vld [vmem:[%s5627 + $0x142] sm:$0xff]
        %v6040 = vld [vmem:[%s5627 + $0x152] sm:$0xff]
        %v6041 = vld [vmem:[%s5627 + $0x15a] sm:$0xff]
        %v6042 = vld [vmem:[%s5627 + $0x16a] sm:$0xff]
        %v6043 = vld [vmem:[%s5627 + $0x172] sm:$0xff]
        %v6044 = vpack.c.bf16 %v6013, %v6012
        %v6045 = vpack.c.bf16 %v6015, %v6014
        %v6046 = vpack.c.bf16 %v6017, %v6016
        %v6047 = vpack.c.bf16 %v6019, %v6018
        %v6048 = vpack.c.bf16 %v6021, %v6020
        %v6049 = vpack.c.bf16 %v6023, %v6022
        %v6050 = vpack.c.bf16 %v6025, %v6024
        %v6051 = vpack.c.bf16 %v6027, %v6026
        %v6052 = vpack.c.bf16 %v6029, %v6028
        %v6053 = vpack.c.bf16 %v6031, %v6030
        %v6054 = vpack.c.bf16 %v6033, %v6032
        %v6055 = vpack.c.bf16 %v6035, %v6034
        %v6056 = vpack.c.bf16 %v6037, %v6036
        %v6057 = vpack.c.bf16 %v6039, %v6038
        %v6058 = vpack.c.bf16 %v6041, %v6040
        %v6059 = vpack.c.bf16 %v6043, %v6042
        %v6076 = vunpack.c.l.b16 %v6044
        %v6077 = vunpack.c.h.b16 %v6044
        %v6078 = vunpack.c.l.b16 %v6045
        %v6079 = vunpack.c.h.b16 %v6045
        %v6080 = vunpack.c.l.b16 %v6046
        %v6081 = vunpack.c.h.b16 %v6046
        %v6082 = vunpack.c.l.b16 %v6047
        %v6083 = vunpack.c.h.b16 %v6047
        %v6084 = vunpack.c.l.b16 %v6048
        %v6085 = vunpack.c.h.b16 %v6048
        %v6086 = vunpack.c.l.b16 %v6049
        %v6087 = vunpack.c.h.b16 %v6049
        %v6088 = vunpack.c.l.b16 %v6050
        %v6089 = vunpack.c.h.b16 %v6050
        %v6090 = vunpack.c.l.b16 %v6051
        %v6091 = vunpack.c.h.b16 %v6051
        %v6092 = vunpack.c.l.b16 %v6052
        %v6093 = vunpack.c.h.b16 %v6052
        %v6094 = vunpack.c.l.b16 %v6053
        %v6095 = vunpack.c.h.b16 %v6053
        %v6096 = vunpack.c.l.b16 %v6054
        %v6097 = vunpack.c.h.b16 %v6054
        %v6098 = vunpack.c.l.b16 %v6055
        %v6099 = vunpack.c.h.b16 %v6055
        %v6100 = vunpack.c.l.b16 %v6056
        %v6101 = vunpack.c.h.b16 %v6056
        %v6102 = vunpack.c.l.b16 %v6057
        %v6103 = vunpack.c.h.b16 %v6057
        %v6104 = vunpack.c.l.b16 %v6058
        %v6105 = vunpack.c.h.b16 %v6058
        %v6106 = vunpack.c.l.b16 %v6059
        %v6107 = vunpack.c.h.b16 %v6059
        %v6108 = vpack.c.b16 %v6076, %v6076
        %v6109 = vpack.c.b16 %v6077, %v6077
        %v6110 = vpack.c.b16 %v6078, %v6078
        %v6111 = vpack.c.b16 %v6079, %v6079
        %v6112 = vpack.c.b16 %v6080, %v6080
        %v6113 = vpack.c.b16 %v6081, %v6081
        %v6114 = vpack.c.b16 %v6082, %v6082
        %v6115 = vpack.c.b16 %v6083, %v6083
        %v6116 = vpack.c.b16 %v6084, %v6084
        %v6117 = vpack.c.b16 %v6085, %v6085
        %v6118 = vpack.c.b16 %v6086, %v6086
        %v6119 = vpack.c.b16 %v6087, %v6087
        %v6120 = vpack.c.b16 %v6088, %v6088
        %v6121 = vpack.c.b16 %v6089, %v6089
        %v6122 = vpack.c.b16 %v6090, %v6090
        %v6123 = vpack.c.b16 %v6091, %v6091
        %v6124 = vpack.c.b16 %v6092, %v6092
        %v6125 = vpack.c.b16 %v6093, %v6093
        %v6126 = vpack.c.b16 %v6094, %v6094
        %v6127 = vpack.c.b16 %v6095, %v6095
        %v6128 = vpack.c.b16 %v6096, %v6096
        %v6129 = vpack.c.b16 %v6097, %v6097
        %v6130 = vpack.c.b16 %v6098, %v6098
        %v6131 = vpack.c.b16 %v6099, %v6099
        %v6132 = vpack.c.b16 %v6100, %v6100
        %v6133 = vpack.c.b16 %v6101, %v6101
        %v6134 = vpack.c.b16 %v6102, %v6102
        %v6135 = vpack.c.b16 %v6103, %v6103
        %v6136 = vpack.c.b16 %v6104, %v6104
        %v6137 = vpack.c.b16 %v6105, %v6105
        %v6138 = vpack.c.b16 %v6106, %v6106
        %v6139 = vpack.c.b16 %v6107, %v6107
        %6172 = vst [vmem:[#allocation4 + $0x20] sm:$0xf] %v6108
        %6173 = vst [vmem:[#allocation4 + $0x44] sm:$0xf] %v6109
        %6174 = vst [vmem:[#allocation4 + $0x68] sm:$0xf] %v6110
        %6175 = vst [vmem:[#allocation4 + $0x8c] sm:$0xf] %v6111
        %6176 = vst [vmem:[#allocation4 + $0xb0] sm:$0xf] %v6112
        %6177 = vst [vmem:[#allocation4 + $0xd4] sm:$0xf] %v6113
        %6178 = vst [vmem:[#allocation4 + $0xf8] sm:$0xf] %v6114
        %6179 = vst [vmem:[#allocation4 + $0x11c] sm:$0xf] %v6115
        %6180 = vst [vmem:[#allocation4 + $0x140] sm:$0xf] %v6116
        %6181 = vst [vmem:[#allocation4 + $0x164] sm:$0xf] %v6117
        %6182 = vst [vmem:[#allocation4 + $0x188] sm:$0xf] %v6118
        %6183 = vst [vmem:[#allocation4 + $0x1ac] sm:$0xf] %v6119
        %6184 = vst [vmem:[#allocation4 + $0x1d0] sm:$0xf] %v6120
        %6185 = vst [vmem:[#allocation4 + $0x1f4] sm:$0xf] %v6121
        %6186 = vst [vmem:[#allocation4 + $0x218] sm:$0xf] %v6122
        %6187 = vst [vmem:[#allocation4 + $0x23c] sm:$0xf] %v6123
        %6188 = vst [vmem:[#allocation4 + $0x260] sm:$0xf] %v6124
        %6189 = vst [vmem:[#allocation4 + $0x284] sm:$0xf] %v6125
        %6190 = vst [vmem:[#allocation4 + $0x2a8] sm:$0xf] %v6126
        %6191 = vst [vmem:[#allocation4 + $0x2cc] sm:$0xf] %v6127
        %6192 = vst [vmem:[#allocation4 + $0x2f0] sm:$0xf] %v6128
        %6193 = vst [vmem:[#allocation4 + $0x314] sm:$0xf] %v6129
        %6194 = vst [vmem:[#allocation4 + $0x338] sm:$0xf] %v6130
        %6195 = vst [vmem:[#allocation4 + $0x35c] sm:$0xf] %v6131
        %6196 = vst [vmem:[#allocation4 + $0x380] sm:$0xf] %v6132
        %6197 = vst [vmem:[#allocation4 + $0x3a4] sm:$0xf] %v6133
        %6198 = vst [vmem:[#allocation4 + $0x3c8] sm:$0xf] %v6134
        %6199 = vst [vmem:[#allocation4 + $0x3ec] sm:$0xf] %v6135
        %6200 = vst [vmem:[#allocation4 + $0x410] sm:$0xf] %v6136
        %6201 = vst [vmem:[#allocation4 + $0x434] sm:$0xf] %v6137
        %6202 = vst [vmem:[#allocation4 + $0x458] sm:$0xf] %v6138
        %6203 = vst [vmem:[#allocation4 + $0x47c] sm:$0xf] %v6139
        %v6204 = vld [vmem:[#allocation2 + $0x8] sm:$0xf]
        %v6205 = vld [vmem:[#allocation2 + $0x1c] sm:$0xf]
        %v6206 = vld [vmem:[#allocation2 + $0x30] sm:$0xf]
        %v6207 = vld [vmem:[#allocation2 + $0x44] sm:$0xf]
        %v6208 = vld [vmem:[#allocation2 + $0x58] sm:$0xf]
        %v6209 = vld [vmem:[#allocation2 + $0x6c] sm:$0xf]
        %v6210 = vld [vmem:[#allocation2 + $0x80] sm:$0xf]
        %v6211 = vld [vmem:[#allocation2 + $0x94] sm:$0xf]
        %v6212 = vld [vmem:[#allocation2 + $0xa8] sm:$0xf]
        %v6213 = vld [vmem:[#allocation2 + $0xbc] sm:$0xf]
        %v6214 = vld [vmem:[#allocation2 + $0xd0] sm:$0xf]
        %v6215 = vld [vmem:[#allocation2 + $0xe4] sm:$0xf]
        %v6216 = vld [vmem:[#allocation2 + $0xf8] sm:$0xf]
        %v6217 = vld [vmem:[#allocation2 + $0x10c] sm:$0xf]
        %v6218 = vld [vmem:[#allocation2 + $0x120] sm:$0xf]
        %v6219 = vld [vmem:[#allocation2 + $0x134] sm:$0xf]
        %v6220 = vld [vmem:[#allocation2 + $0x148] sm:$0xf]
        %v6221 = vld [vmem:[#allocation2 + $0x15c] sm:$0xf]
        %v6222 = vld [vmem:[#allocation2 + $0x170] sm:$0xf]
        %v6223 = vld [vmem:[#allocation2 + $0x184] sm:$0xf]
        %v6224 = vld [vmem:[#allocation2 + $0x198] sm:$0xf]
        %v6225 = vld [vmem:[#allocation2 + $0x1ac] sm:$0xf]
        %v6226 = vld [vmem:[#allocation2 + $0x1c0] sm:$0xf]
        %v6227 = vld [vmem:[#allocation2 + $0x1d4] sm:$0xf]
        %v6228 = vld [vmem:[#allocation2 + $0x1e8] sm:$0xf]
        %v6229 = vld [vmem:[#allocation2 + $0x1fc] sm:$0xf]
        %v6230 = vld [vmem:[#allocation2 + $0x210] sm:$0xf]
        %v6231 = vld [vmem:[#allocation2 + $0x224] sm:$0xf]
        %v6232 = vld [vmem:[#allocation2 + $0x238] sm:$0xf]
        %v6233 = vld [vmem:[#allocation2 + $0x24c] sm:$0xf]
        %v6234 = vld [vmem:[#allocation2 + $0x260] sm:$0xf]
        %v6235 = vld [vmem:[#allocation2 + $0x274] sm:$0xf]
        %v6236 = vld [vmem:[%s3] sm:$0xf]
        %v6237 = vld [vmem:[%s3 + $0x4] sm:$0xf]
        %v6238 = vld [vmem:[%s3 + $0x8] sm:$0xf]
        %v6239 = vld [vmem:[%s3 + $0xc] sm:$0xf]
        %v6240 = vld [vmem:[%s3 + $0x10] sm:$0xf]
        %v6241 = vld [vmem:[%s3 + $0x14] sm:$0xf]
        %v6242 = vld [vmem:[%s3 + $0x18] sm:$0xf]
        %v6243 = vld [vmem:[%s3 + $0x1c] sm:$0xf]
        %v6244 = vld [vmem:[#allocation4] sm:$0xff]
        %v6245 = vld [vmem:[#allocation4 + $0x8] sm:$0xff]
        %v6246 = vld [vmem:[#allocation4 + $0x10] sm:$0xff]
        %v6247 = vld [vmem:[#allocation4 + $0x18] sm:$0xff]
        %v6248 = vld [vmem:[#allocation4 + $0x20] sm:$0xf]
        %v6249 = vld [vmem:[#allocation4 + $0x24] sm:$0xff]
        %v6250 = vld [vmem:[#allocation4 + $0x2c] sm:$0xff]
        %v6251 = vld [vmem:[#allocation4 + $0x34] sm:$0xff]
        %v6252 = vld [vmem:[#allocation4 + $0x3c] sm:$0xff]
        %v6253 = vld [vmem:[#allocation4 + $0x44] sm:$0xf]
        %v6254 = vld [vmem:[#allocation4 + $0x48] sm:$0xff]
        %v6255 = vld [vmem:[#allocation4 + $0x50] sm:$0xff]
        %v6256 = vld [vmem:[#allocation4 + $0x58] sm:$0xff]
        %v6257 = vld [vmem:[#allocation4 + $0x60] sm:$0xff]
        %v6258 = vld [vmem:[#allocation4 + $0x68] sm:$0xf]
        %v6259 = vld [vmem:[#allocation4 + $0x6c] sm:$0xff]
        %v6260 = vld [vmem:[#allocation4 + $0x74] sm:$0xff]
        %v6261 = vld [vmem:[#allocation4 + $0x7c] sm:$0xff]
        %v6262 = vld [vmem:[#allocation4 + $0x84] sm:$0xff]
        %v6263 = vld [vmem:[#allocation4 + $0x8c] sm:$0xf]
        %v6264 = vld [vmem:[#allocation4 + $0x90] sm:$0xff]
        %v6265 = vld [vmem:[#allocation4 + $0x98] sm:$0xff]
        %v6266 = vld [vmem:[#allocation4 + $0xa0] sm:$0xff]
        %v6267 = vld [vmem:[#allocation4 + $0xa8] sm:$0xff]
        %v6268 = vld [vmem:[#allocation4 + $0xb0] sm:$0xf]
        %v6269 = vld [vmem:[#allocation4 + $0xb4] sm:$0xff]
        %v6270 = vld [vmem:[#allocation4 + $0xbc] sm:$0xff]
        %v6271 = vld [vmem:[#allocation4 + $0xc4] sm:$0xff]
        %v6272 = vld [vmem:[#allocation4 + $0xcc] sm:$0xff]
        %v6273 = vld [vmem:[#allocation4 + $0xd4] sm:$0xf]
        %v6274 = vld [vmem:[#allocation4 + $0xd8] sm:$0xff]
        %v6275 = vld [vmem:[#allocation4 + $0xe0] sm:$0xff]
        %v6276 = vld [vmem:[#allocation4 + $0xe8] sm:$0xff]
        %v6277 = vld [vmem:[#allocation4 + $0xf0] sm:$0xff]
        %v6278 = vld [vmem:[#allocation4 + $0xf8] sm:$0xf]
        %v6279 = vld [vmem:[#allocation4 + $0xfc] sm:$0xff]
        %v6280 = vld [vmem:[#allocation4 + $0x104] sm:$0xff]
        %v6281 = vld [vmem:[#allocation4 + $0x10c] sm:$0xff]
        %v6282 = vld [vmem:[#allocation4 + $0x114] sm:$0xff]
        %v6283 = vld [vmem:[#allocation4 + $0x11c] sm:$0xf]
        %v6284 = vld [vmem:[#allocation4 + $0x120] sm:$0xff]
        %v6285 = vld [vmem:[#allocation4 + $0x128] sm:$0xff]
        %v6286 = vld [vmem:[#allocation4 + $0x130] sm:$0xff]
        %v6287 = vld [vmem:[#allocation4 + $0x138] sm:$0xff]
        %v6288 = vld [vmem:[#allocation4 + $0x140] sm:$0xf]
        %v6289 = vld [vmem:[#allocation4 + $0x144] sm:$0xff]
        %v6290 = vld [vmem:[#allocation4 + $0x14c] sm:$0xff]
        %v6291 = vld [vmem:[#allocation4 + $0x154] sm:$0xff]
        %v6292 = vld [vmem:[#allocation4 + $0x15c] sm:$0xff]
        %v6293 = vld [vmem:[#allocation4 + $0x164] sm:$0xf]
        %v6294 = vld [vmem:[#allocation4 + $0x168] sm:$0xff]
        %v6295 = vld [vmem:[#allocation4 + $0x170] sm:$0xff]
        %v6296 = vld [vmem:[#allocation4 + $0x178] sm:$0xff]
        %v6297 = vld [vmem:[#allocation4 + $0x180] sm:$0xff]
        %v6298 = vld [vmem:[#allocation4 + $0x188] sm:$0xf]
        %v6299 = vld [vmem:[#allocation4 + $0x18c] sm:$0xff]
        %v6300 = vld [vmem:[#allocation4 + $0x194] sm:$0xff]
        %v6301 = vld [vmem:[#allocation4 + $0x19c] sm:$0xff]
        %v6302 = vld [vmem:[#allocation4 + $0x1a4] sm:$0xff]
        %v6303 = vld [vmem:[#allocation4 + $0x1ac] sm:$0xf]
        %v6304 = vld [vmem:[#allocation4 + $0x1b0] sm:$0xff]
        %v6305 = vld [vmem:[#allocation4 + $0x1b8] sm:$0xff]
        %v6306 = vld [vmem:[#allocation4 + $0x1c0] sm:$0xff]
        %v6307 = vld [vmem:[#allocation4 + $0x1c8] sm:$0xff]
        %v6308 = vld [vmem:[#allocation4 + $0x1d0] sm:$0xf]
        %v6309 = vld [vmem:[#allocation4 + $0x1d4] sm:$0xff]
        %v6310 = vld [vmem:[#allocation4 + $0x1dc] sm:$0xff]
        %v6311 = vld [vmem:[#allocation4 + $0x1e4] sm:$0xff]
        %v6312 = vld [vmem:[#allocation4 + $0x1ec] sm:$0xff]
        %v6313 = vld [vmem:[#allocation4 + $0x1f4] sm:$0xf]
        %v6314 = vld [vmem:[#allocation4 + $0x1f8] sm:$0xff]
        %v6315 = vld [vmem:[#allocation4 + $0x200] sm:$0xff]
        %v6316 = vld [vmem:[#allocation4 + $0x208] sm:$0xff]
        %v6317 = vld [vmem:[#allocation4 + $0x210] sm:$0xff]
        %v6318 = vld [vmem:[#allocation4 + $0x218] sm:$0xf]
        %v6319 = vld [vmem:[#allocation4 + $0x21c] sm:$0xff]
        %v6320 = vld [vmem:[#allocation4 + $0x224] sm:$0xff]
        %v6321 = vld [vmem:[#allocation4 + $0x22c] sm:$0xff]
        %v6322 = vld [vmem:[#allocation4 + $0x234] sm:$0xff]
        %v6323 = vld [vmem:[#allocation4 + $0x23c] sm:$0xf]
        %v6324 = vld [vmem:[#allocation4 + $0x240] sm:$0xff]
        %v6325 = vld [vmem:[#allocation4 + $0x248] sm:$0xff]
        %v6326 = vld [vmem:[#allocation4 + $0x250] sm:$0xff]
        %v6327 = vld [vmem:[#allocation4 + $0x258] sm:$0xff]
        %v6328 = vld [vmem:[#allocation4 + $0x260] sm:$0xf]
        %v6329 = vld [vmem:[#allocation4 + $0x264] sm:$0xff]
        %v6330 = vld [vmem:[#allocation4 + $0x26c] sm:$0xff]
        %v6331 = vld [vmem:[#allocation4 + $0x274] sm:$0xff]
        %v6332 = vld [vmem:[#allocation4 + $0x27c] sm:$0xff]
        %v6333 = vld [vmem:[#allocation4 + $0x284] sm:$0xf]
        %v6334 = vld [vmem:[#allocation4 + $0x288] sm:$0xff]
        %v6335 = vld [vmem:[#allocation4 + $0x290] sm:$0xff]
        %v6336 = vld [vmem:[#allocation4 + $0x298] sm:$0xff]
        %v6337 = vld [vmem:[#allocation4 + $0x2a0] sm:$0xff]
        %v6338 = vld [vmem:[#allocation4 + $0x2a8] sm:$0xf]
        %v6339 = vld [vmem:[#allocation4 + $0x2ac] sm:$0xff]
        %v6340 = vld [vmem:[#allocation4 + $0x2b4] sm:$0xff]
        %v6341 = vld [vmem:[#allocation4 + $0x2bc] sm:$0xff]
        %v6342 = vld [vmem:[#allocation4 + $0x2c4] sm:$0xff]
        %v6343 = vld [vmem:[#allocation4 + $0x2cc] sm:$0xf]
        %v6344 = vld [vmem:[#allocation4 + $0x2d0] sm:$0xff]
        %v6345 = vld [vmem:[#allocation4 + $0x2d8] sm:$0xff]
        %v6346 = vld [vmem:[#allocation4 + $0x2e0] sm:$0xff]
        %v6347 = vld [vmem:[#allocation4 + $0x2e8] sm:$0xff]
        %v6348 = vld [vmem:[#allocation4 + $0x2f0] sm:$0xf]
        %v6349 = vld [vmem:[#allocation4 + $0x2f4] sm:$0xff]
        %v6350 = vld [vmem:[#allocation4 + $0x2fc] sm:$0xff]
        %v6351 = vld [vmem:[#allocation4 + $0x304] sm:$0xff]
        %v6352 = vld [vmem:[#allocation4 + $0x30c] sm:$0xff]
        %v6353 = vld [vmem:[#allocation4 + $0x314] sm:$0xf]
        %v6354 = vld [vmem:[#allocation4 + $0x318] sm:$0xff]
        %v6355 = vld [vmem:[#allocation4 + $0x320] sm:$0xff]
        %v6356 = vld [vmem:[#allocation4 + $0x328] sm:$0xff]
        %v6357 = vld [vmem:[#allocation4 + $0x330] sm:$0xff]
        %v6358 = vld [vmem:[#allocation4 + $0x338] sm:$0xf]
        %v6359 = vld [vmem:[#allocation4 + $0x33c] sm:$0xff]
        %v6360 = vld [vmem:[#allocation4 + $0x344] sm:$0xff]
        %v6361 = vld [vmem:[#allocation4 + $0x34c] sm:$0xff]
        %v6362 = vld [vmem:[#allocation4 + $0x354] sm:$0xff]
        %v6363 = vld [vmem:[#allocation4 + $0x35c] sm:$0xf]
        %v6364 = vld [vmem:[#allocation4 + $0x360] sm:$0xff]
        %v6365 = vld [vmem:[#allocation4 + $0x368] sm:$0xff]
        %v6366 = vld [vmem:[#allocation4 + $0x370] sm:$0xff]
        %v6367 = vld [vmem:[#allocation4 + $0x378] sm:$0xff]
        %v6368 = vld [vmem:[#allocation4 + $0x380] sm:$0xf]
        %v6369 = vld [vmem:[#allocation4 + $0x384] sm:$0xff]
        %v6370 = vld [vmem:[#allocation4 + $0x38c] sm:$0xff]
        %v6371 = vld [vmem:[#allocation4 + $0x394] sm:$0xff]
        %v6372 = vld [vmem:[#allocation4 + $0x39c] sm:$0xff]
        %v6373 = vld [vmem:[#allocation4 + $0x3a4] sm:$0xf]
        %v6374 = vld [vmem:[#allocation4 + $0x3a8] sm:$0xff]
        %v6375 = vld [vmem:[#allocation4 + $0x3b0] sm:$0xff]
        %v6376 = vld [vmem:[#allocation4 + $0x3b8] sm:$0xff]
        %v6377 = vld [vmem:[#allocation4 + $0x3c0] sm:$0xff]
        %v6378 = vld [vmem:[#allocation4 + $0x3c8] sm:$0xf]
        %v6379 = vld [vmem:[#allocation4 + $0x3cc] sm:$0xff]
        %v6380 = vld [vmem:[#allocation4 + $0x3d4] sm:$0xff]
        %v6381 = vld [vmem:[#allocation4 + $0x3dc] sm:$0xff]
        %v6382 = vld [vmem:[#allocation4 + $0x3e4] sm:$0xff]
        %v6383 = vld [vmem:[#allocation4 + $0x3ec] sm:$0xf]
        %v6384 = vld [vmem:[#allocation4 + $0x3f0] sm:$0xff]
        %v6385 = vld [vmem:[#allocation4 + $0x3f8] sm:$0xff]
        %v6386 = vld [vmem:[#allocation4 + $0x400] sm:$0xff]
        %v6387 = vld [vmem:[#allocation4 + $0x408] sm:$0xff]
        %v6388 = vld [vmem:[#allocation4 + $0x410] sm:$0xf]
        %v6389 = vld [vmem:[#allocation4 + $0x414] sm:$0xff]
        %v6390 = vld [vmem:[#allocation4 + $0x41c] sm:$0xff]
        %v6391 = vld [vmem:[#allocation4 + $0x424] sm:$0xff]
        %v6392 = vld [vmem:[#allocation4 + $0x42c] sm:$0xff]
        %v6393 = vld [vmem:[#allocation4 + $0x434] sm:$0xf]
        %v6394 = vld [vmem:[#allocation4 + $0x438] sm:$0xff]
        %v6395 = vld [vmem:[#allocation4 + $0x440] sm:$0xff]
        %v6396 = vld [vmem:[#allocation4 + $0x448] sm:$0xff]
        %v6397 = vld [vmem:[#allocation4 + $0x450] sm:$0xff]
        %v6398 = vld [vmem:[#allocation4 + $0x458] sm:$0xf]
        %v6399 = vld [vmem:[#allocation4 + $0x45c] sm:$0xff]
        %v6400 = vld [vmem:[#allocation4 + $0x464] sm:$0xff]
        %v6401 = vld [vmem:[#allocation4 + $0x46c] sm:$0xff]
        %v6402 = vld [vmem:[#allocation4 + $0x474] sm:$0xff]
        %v6403 = vld [vmem:[#allocation4 + $0x47c] sm:$0xf]
        %v6404 = vld [vmem:[%s2] sm:$0xf]
        %v6405 = vld [vmem:[%s2 + $0x4] sm:$0xf]
        %v6406 = vld [vmem:[%s2 + $0x8] sm:$0xf]
        %v6407 = vld [vmem:[%s2 + $0xc] sm:$0xf]
        %v6408 = vld [vmem:[%s2 + $0x10] sm:$0xf]
        %v6409 = vld [vmem:[%s2 + $0x14] sm:$0xf]
        %v6410 = vld [vmem:[%s2 + $0x18] sm:$0xf]
        %v6411 = vld [vmem:[%s2 + $0x1c] sm:$0xf]
        %v6412 = vld [vmem:[%s2 + $0x20] sm:$0xf]
        %v6413 = vld [vmem:[%s2 + $0x24] sm:$0xf]
        %v6414 = vld [vmem:[%s2 + $0x28] sm:$0xf]
        %v6415 = vld [vmem:[%s2 + $0x2c] sm:$0xf]
        %v6416 = vld [vmem:[%s2 + $0x30] sm:$0xf]
        %v6417 = vld [vmem:[%s2 + $0x34] sm:$0xf]
        %v6418 = vld [vmem:[%s2 + $0x38] sm:$0xf]
        %v6419 = vld [vmem:[%s2 + $0x3c] sm:$0xf]
        %v6420 = vld [vmem:[%s2 + $0x40] sm:$0xf]
        %v6421 = vld [vmem:[%s2 + $0x44] sm:$0xf]
        %v6422 = vld [vmem:[%s2 + $0x48] sm:$0xf]
        %v6423 = vld [vmem:[%s2 + $0x4c] sm:$0xf]
        %v6424 = vld [vmem:[%s2 + $0x50] sm:$0xf]
        %v6425 = vld [vmem:[%s2 + $0x54] sm:$0xf]
        %v6426 = vld [vmem:[%s2 + $0x58] sm:$0xf]
        %v6427 = vld [vmem:[%s2 + $0x5c] sm:$0xf]
        %v6428 = vld [vmem:[%s2 + $0x60] sm:$0xf]
        %v6429 = vld [vmem:[%s2 + $0x64] sm:$0xf]
        %v6430 = vld [vmem:[%s2 + $0x68] sm:$0xf]
        %v6431 = vld [vmem:[%s2 + $0x6c] sm:$0xf]
        %v6432 = vld [vmem:[%s2 + $0x70] sm:$0xf]
        %v6433 = vld [vmem:[%s2 + $0x74] sm:$0xf]
        %v6434 = vld [vmem:[%s2 + $0x78] sm:$0xf]
        %v6435 = vld [vmem:[%s2 + $0x7c] sm:$0xf]
        %v6436 = vld [vmem:[%s2 + $0x80] sm:$0xf]
        %v6437 = vld [vmem:[%s2 + $0x84] sm:$0xf]
        %v6438 = vld [vmem:[%s2 + $0x88] sm:$0xf]
        %v6439 = vld [vmem:[%s2 + $0x8c] sm:$0xf]
        %v6440 = vld [vmem:[%s2 + $0x90] sm:$0xf]
        %v6441 = vld [vmem:[%s2 + $0x94] sm:$0xf]
        %v6442 = vld [vmem:[%s2 + $0x98] sm:$0xf]
        %v6443 = vld [vmem:[%s2 + $0x9c] sm:$0xf]
        %v6444 = vld [vmem:[%s2 + $0xa0] sm:$0xf]
        %v6445 = vld [vmem:[%s2 + $0xa4] sm:$0xf]
        %v6446 = vld [vmem:[%s2 + $0xa8] sm:$0xf]
        %v6447 = vld [vmem:[%s2 + $0xac] sm:$0xf]
        %v6448 = vld [vmem:[%s2 + $0xb0] sm:$0xf]
        %v6449 = vld [vmem:[%s2 + $0xb4] sm:$0xf]
        %v6450 = vld [vmem:[%s2 + $0xb8] sm:$0xf]
        %v6451 = vld [vmem:[%s2 + $0xbc] sm:$0xf]
        %v6452 = vld [vmem:[%s2 + $0xc0] sm:$0xf]
        %v6453 = vld [vmem:[%s2 + $0xc4] sm:$0xf]
        %v6454 = vld [vmem:[%s2 + $0xc8] sm:$0xf]
        %v6455 = vld [vmem:[%s2 + $0xcc] sm:$0xf]
        %v6456 = vld [vmem:[%s2 + $0xd0] sm:$0xf]
        %v6457 = vld [vmem:[%s2 + $0xd4] sm:$0xf]
        %v6458 = vld [vmem:[%s2 + $0xd8] sm:$0xf]
        %v6459 = vld [vmem:[%s2 + $0xdc] sm:$0xf]
        %v6460 = vld [vmem:[%s2 + $0xe0] sm:$0xf]
        %v6461 = vld [vmem:[%s2 + $0xe4] sm:$0xf]
        %v6462 = vld [vmem:[%s2 + $0xe8] sm:$0xf]
        %v6463 = vld [vmem:[%s2 + $0xec] sm:$0xf]
        %v6464 = vld [vmem:[%s2 + $0xf0] sm:$0xf]
        %v6465 = vld [vmem:[%s2 + $0xf4] sm:$0xf]
        %v6466 = vld [vmem:[%s2 + $0xf8] sm:$0xf]
        %v6467 = vld [vmem:[%s2 + $0xfc] sm:$0xf]
        %v6468 = vld [vmem:[%s2 + $0x100] sm:$0xf]
        %v6469 = vld [vmem:[%s2 + $0x104] sm:$0xf]
        %v6470 = vld [vmem:[%s2 + $0x108] sm:$0xf]
        %v6471 = vld [vmem:[%s2 + $0x10c] sm:$0xf]
        %v6472 = vld [vmem:[%s2 + $0x110] sm:$0xf]
        %v6473 = vld [vmem:[%s2 + $0x114] sm:$0xf]
        %v6474 = vld [vmem:[%s2 + $0x118] sm:$0xf]
        %v6475 = vld [vmem:[%s2 + $0x11c] sm:$0xf]
        %v6476 = vld [vmem:[%s2 + $0x120] sm:$0xf]
        %v6477 = vld [vmem:[%s2 + $0x124] sm:$0xf]
        %v6478 = vld [vmem:[%s2 + $0x128] sm:$0xf]
        %v6479 = vld [vmem:[%s2 + $0x12c] sm:$0xf]
        %v6480 = vld [vmem:[%s2 + $0x130] sm:$0xf]
        %v6481 = vld [vmem:[%s2 + $0x134] sm:$0xf]
        %v6482 = vld [vmem:[%s2 + $0x138] sm:$0xf]
        %v6483 = vld [vmem:[%s2 + $0x13c] sm:$0xf]
        %v6484 = vld [vmem:[%s2 + $0x140] sm:$0xf]
        %v6485 = vld [vmem:[%s2 + $0x144] sm:$0xf]
        %v6486 = vld [vmem:[%s2 + $0x148] sm:$0xf]
        %v6487 = vld [vmem:[%s2 + $0x14c] sm:$0xf]
        %v6488 = vld [vmem:[%s2 + $0x150] sm:$0xf]
        %v6489 = vld [vmem:[%s2 + $0x154] sm:$0xf]
        %v6490 = vld [vmem:[%s2 + $0x158] sm:$0xf]
        %v6491 = vld [vmem:[%s2 + $0x15c] sm:$0xf]
        %v6492 = vld [vmem:[%s2 + $0x160] sm:$0xf]
        %v6493 = vld [vmem:[%s2 + $0x164] sm:$0xf]
        %v6494 = vld [vmem:[%s2 + $0x168] sm:$0xf]
        %v6495 = vld [vmem:[%s2 + $0x16c] sm:$0xf]
        %v6496 = vld [vmem:[%s2 + $0x170] sm:$0xf]
        %v6497 = vld [vmem:[%s2 + $0x174] sm:$0xf]
        %v6498 = vld [vmem:[%s2 + $0x178] sm:$0xf]
        %v6499 = vld [vmem:[%s2 + $0x17c] sm:$0xf]
        %v6500 = vld [vmem:[%s2 + $0x180] sm:$0xf]
        %v6501 = vld [vmem:[%s2 + $0x184] sm:$0xf]
        %v6502 = vld [vmem:[%s2 + $0x188] sm:$0xf]
        %v6503 = vld [vmem:[%s2 + $0x18c] sm:$0xf]
        %v6504 = vld [vmem:[%s2 + $0x190] sm:$0xf]
        %v6505 = vld [vmem:[%s2 + $0x194] sm:$0xf]
        %v6506 = vld [vmem:[%s2 + $0x198] sm:$0xf]
        %v6507 = vld [vmem:[%s2 + $0x19c] sm:$0xf]
        %v6508 = vld [vmem:[%s2 + $0x1a0] sm:$0xf]
        %v6509 = vld [vmem:[%s2 + $0x1a4] sm:$0xf]
        %v6510 = vld [vmem:[%s2 + $0x1a8] sm:$0xf]
        %v6511 = vld [vmem:[%s2 + $0x1ac] sm:$0xf]
        %v6512 = vld [vmem:[%s2 + $0x1b0] sm:$0xf]
        %v6513 = vld [vmem:[%s2 + $0x1b4] sm:$0xf]
        %v6514 = vld [vmem:[%s2 + $0x1b8] sm:$0xf]
        %v6515 = vld [vmem:[%s2 + $0x1bc] sm:$0xf]
        %v6516 = vld [vmem:[%s2 + $0x1c0] sm:$0xf]
        %v6517 = vld [vmem:[%s2 + $0x1c4] sm:$0xf]
        %v6518 = vld [vmem:[%s2 + $0x1c8] sm:$0xf]
        %v6519 = vld [vmem:[%s2 + $0x1cc] sm:$0xf]
        %v6520 = vld [vmem:[%s2 + $0x1d0] sm:$0xf]
        %v6521 = vld [vmem:[%s2 + $0x1d4] sm:$0xf]
        %v6522 = vld [vmem:[%s2 + $0x1d8] sm:$0xf]
        %v6523 = vld [vmem:[%s2 + $0x1dc] sm:$0xf]
        %v6524 = vld [vmem:[%s2 + $0x1e0] sm:$0xf]
        %v6525 = vld [vmem:[%s2 + $0x1e4] sm:$0xf]
        %v6526 = vld [vmem:[%s2 + $0x1e8] sm:$0xf]
        %v6527 = vld [vmem:[%s2 + $0x1ec] sm:$0xf]
        %v6528 = vld [vmem:[%s2 + $0x1f0] sm:$0xf]
        %v6529 = vld [vmem:[%s2 + $0x1f4] sm:$0xf]
        %v6530 = vld [vmem:[%s2 + $0x1f8] sm:$0xf]
        %v6531 = vld [vmem:[%s2 + $0x1fc] sm:$0xf]
        %v6532 = vld [vmem:[%s2 + $0x200] sm:$0xf]
        %v6533 = vld [vmem:[%s2 + $0x204] sm:$0xf]
        %v6534 = vld [vmem:[%s2 + $0x208] sm:$0xf]
        %v6535 = vld [vmem:[%s2 + $0x20c] sm:$0xf]
        %v6536 = vld [vmem:[%s2 + $0x210] sm:$0xf]
        %v6537 = vld [vmem:[%s2 + $0x214] sm:$0xf]
        %v6538 = vld [vmem:[%s2 + $0x218] sm:$0xf]
        %v6539 = vld [vmem:[%s2 + $0x21c] sm:$0xf]
        %v6540 = vld [vmem:[%s2 + $0x220] sm:$0xf]
        %v6541 = vld [vmem:[%s2 + $0x224] sm:$0xf]
        %v6542 = vld [vmem:[%s2 + $0x228] sm:$0xf]
        %v6543 = vld [vmem:[%s2 + $0x22c] sm:$0xf]
        %v6544 = vld [vmem:[%s2 + $0x230] sm:$0xf]
        %v6545 = vld [vmem:[%s2 + $0x234] sm:$0xf]
        %v6546 = vld [vmem:[%s2 + $0x238] sm:$0xf]
        %v6547 = vld [vmem:[%s2 + $0x23c] sm:$0xf]
        %v6708 = vunpack.c.l.b16 %v6244
        %v6709 = vunpack.c.h.b16 %v6244
        %v6710 = vunpack.c.l.b16 %v6245
        %v6711 = vunpack.c.h.b16 %v6245
        %v6712 = vunpack.c.l.b16 %v6246
        %v6713 = vunpack.c.h.b16 %v6246
        %v6714 = vunpack.c.l.b16 %v6247
        %v6715 = vunpack.c.h.b16 %v6247
        %v6716 = vunpack.c.l.b16 %v6248
        %v6717 = vunpack.c.l.b16 %v6249
        %v6718 = vunpack.c.h.b16 %v6249
        %v6719 = vunpack.c.l.b16 %v6250
        %v6720 = vunpack.c.h.b16 %v6250
        %v6721 = vunpack.c.l.b16 %v6251
        %v6722 = vunpack.c.h.b16 %v6251
        %v6723 = vunpack.c.l.b16 %v6252
        %v6724 = vunpack.c.h.b16 %v6252
        %v6725 = vunpack.c.l.b16 %v6253
        %v6726 = vunpack.c.l.b16 %v6254
        %v6727 = vunpack.c.h.b16 %v6254
        %v6728 = vunpack.c.l.b16 %v6255
        %v6729 = vunpack.c.h.b16 %v6255
        %v6730 = vunpack.c.l.b16 %v6256
        %v6731 = vunpack.c.h.b16 %v6256
        %v6732 = vunpack.c.l.b16 %v6257
        %v6733 = vunpack.c.h.b16 %v6257
        %v6734 = vunpack.c.l.b16 %v6258
        %v6735 = vunpack.c.l.b16 %v6259
        %v6736 = vunpack.c.h.b16 %v6259
        %v6737 = vunpack.c.l.b16 %v6260
        %v6738 = vunpack.c.h.b16 %v6260
        %v6739 = vunpack.c.l.b16 %v6261
        %v6740 = vunpack.c.h.b16 %v6261
        %v6741 = vunpack.c.l.b16 %v6262
        %v6742 = vunpack.c.h.b16 %v6262
        %v6743 = vunpack.c.l.b16 %v6263
        %v6744 = vunpack.c.l.b16 %v6264
        %v6745 = vunpack.c.h.b16 %v6264
        %v6746 = vunpack.c.l.b16 %v6265
        %v6747 = vunpack.c.h.b16 %v6265
        %v6748 = vunpack.c.l.b16 %v6266
        %v6749 = vunpack.c.h.b16 %v6266
        %v6750 = vunpack.c.l.b16 %v6267
        %v6751 = vunpack.c.h.b16 %v6267
        %v6752 = vunpack.c.l.b16 %v6268
        %v6753 = vunpack.c.l.b16 %v6269
        %v6754 = vunpack.c.h.b16 %v6269
        %v6755 = vunpack.c.l.b16 %v6270
        %v6756 = vunpack.c.h.b16 %v6270
        %v6757 = vunpack.c.l.b16 %v6271
        %v6758 = vunpack.c.h.b16 %v6271
        %v6759 = vunpack.c.l.b16 %v6272
        %v6760 = vunpack.c.h.b16 %v6272
        %v6761 = vunpack.c.l.b16 %v6273
        %v6762 = vunpack.c.l.b16 %v6274
        %v6763 = vunpack.c.h.b16 %v6274
        %v6764 = vunpack.c.l.b16 %v6275
        %v6765 = vunpack.c.h.b16 %v6275
        %v6766 = vunpack.c.l.b16 %v6276
        %v6767 = vunpack.c.h.b16 %v6276
        %v6768 = vunpack.c.l.b16 %v6277
        %v6769 = vunpack.c.h.b16 %v6277
        %v6770 = vunpack.c.l.b16 %v6278
        %v6771 = vunpack.c.l.b16 %v6279
        %v6772 = vunpack.c.h.b16 %v6279
        %v6773 = vunpack.c.l.b16 %v6280
        %v6774 = vunpack.c.h.b16 %v6280
        %v6775 = vunpack.c.l.b16 %v6281
        %v6776 = vunpack.c.h.b16 %v6281
        %v6777 = vunpack.c.l.b16 %v6282
        %v6778 = vunpack.c.h.b16 %v6282
        %v6779 = vunpack.c.l.b16 %v6283
        %v6780 = vunpack.c.l.b16 %v6284
        %v6781 = vunpack.c.h.b16 %v6284
        %v6782 = vunpack.c.l.b16 %v6285
        %v6783 = vunpack.c.h.b16 %v6285
        %v6784 = vunpack.c.l.b16 %v6286
        %v6785 = vunpack.c.h.b16 %v6286
        %v6786 = vunpack.c.l.b16 %v6287
        %v6787 = vunpack.c.h.b16 %v6287
        %v6788 = vunpack.c.l.b16 %v6288
        %v6789 = vunpack.c.l.b16 %v6289
        %v6790 = vunpack.c.h.b16 %v6289
        %v6791 = vunpack.c.l.b16 %v6290
        %v6792 = vunpack.c.h.b16 %v6290
        %v6793 = vunpack.c.l.b16 %v6291
        %v6794 = vunpack.c.h.b16 %v6291
        %v6795 = vunpack.c.l.b16 %v6292
        %v6796 = vunpack.c.h.b16 %v6292
        %v6797 = vunpack.c.l.b16 %v6293
        %v6798 = vunpack.c.l.b16 %v6294
        %v6799 = vunpack.c.h.b16 %v6294
        %v6800 = vunpack.c.l.b16 %v6295
        %v6801 = vunpack.c.h.b16 %v6295
        %v6802 = vunpack.c.l.b16 %v6296
        %v6803 = vunpack.c.h.b16 %v6296
        %v6804 = vunpack.c.l.b16 %v6297
        %v6805 = vunpack.c.h.b16 %v6297
        %v6806 = vunpack.c.l.b16 %v6298
        %v6807 = vunpack.c.l.b16 %v6299
        %v6808 = vunpack.c.h.b16 %v6299
        %v6809 = vunpack.c.l.b16 %v6300
        %v6810 = vunpack.c.h.b16 %v6300
        %v6811 = vunpack.c.l.b16 %v6301
        %v6812 = vunpack.c.h.b16 %v6301
        %v6813 = vunpack.c.l.b16 %v6302
        %v6814 = vunpack.c.h.b16 %v6302
        %v6815 = vunpack.c.l.b16 %v6303
        %v6816 = vunpack.c.l.b16 %v6304
        %v6817 = vunpack.c.h.b16 %v6304
        %v6818 = vunpack.c.l.b16 %v6305
        %v6819 = vunpack.c.h.b16 %v6305
        %v6820 = vunpack.c.l.b16 %v6306
        %v6821 = vunpack.c.h.b16 %v6306
        %v6822 = vunpack.c.l.b16 %v6307
        %v6823 = vunpack.c.h.b16 %v6307
        %v6824 = vunpack.c.l.b16 %v6308
        %v6825 = vunpack.c.l.b16 %v6309
        %v6826 = vunpack.c.h.b16 %v6309
        %v6827 = vunpack.c.l.b16 %v6310
        %v6828 = vunpack.c.h.b16 %v6310
        %v6829 = vunpack.c.l.b16 %v6311
        %v6830 = vunpack.c.h.b16 %v6311
        %v6831 = vunpack.c.l.b16 %v6312
        %v6832 = vunpack.c.h.b16 %v6312
        %v6833 = vunpack.c.l.b16 %v6313
        %v6834 = vunpack.c.l.b16 %v6314
        %v6835 = vunpack.c.h.b16 %v6314
        %v6836 = vunpack.c.l.b16 %v6315
        %v6837 = vunpack.c.h.b16 %v6315
        %v6838 = vunpack.c.l.b16 %v6316
        %v6839 = vunpack.c.h.b16 %v6316
        %v6840 = vunpack.c.l.b16 %v6317
        %v6841 = vunpack.c.h.b16 %v6317
        %v6842 = vunpack.c.l.b16 %v6318
        %v6843 = vunpack.c.l.b16 %v6319
        %v6844 = vunpack.c.h.b16 %v6319
        %v6845 = vunpack.c.l.b16 %v6320
        %v6846 = vunpack.c.h.b16 %v6320
        %v6847 = vunpack.c.l.b16 %v6321
        %v6848 = vunpack.c.h.b16 %v6321
        %v6849 = vunpack.c.l.b16 %v6322
        %v6850 = vunpack.c.h.b16 %v6322
        %v6851 = vunpack.c.l.b16 %v6323
        %v6852 = vunpack.c.l.b16 %v6324
        %v6853 = vunpack.c.h.b16 %v6324
        %v6854 = vunpack.c.l.b16 %v6325
        %v6855 = vunpack.c.h.b16 %v6325
        %v6856 = vunpack.c.l.b16 %v6326
        %v6857 = vunpack.c.h.b16 %v6326
        %v6858 = vunpack.c.l.b16 %v6327
        %v6859 = vunpack.c.h.b16 %v6327
        %v6860 = vunpack.c.l.b16 %v6328
        %v6861 = vunpack.c.l.b16 %v6329
        %v6862 = vunpack.c.h.b16 %v6329
        %v6863 = vunpack.c.l.b16 %v6330
        %v6864 = vunpack.c.h.b16 %v6330
        %v6865 = vunpack.c.l.b16 %v6331
        %v6866 = vunpack.c.h.b16 %v6331
        %v6867 = vunpack.c.l.b16 %v6332
        %v6868 = vunpack.c.h.b16 %v6332
        %v6869 = vunpack.c.l.b16 %v6333
        %v6870 = vunpack.c.l.b16 %v6334
        %v6871 = vunpack.c.h.b16 %v6334
        %v6872 = vunpack.c.l.b16 %v6335
        %v6873 = vunpack.c.h.b16 %v6335
        %v6874 = vunpack.c.l.b16 %v6336
        %v6875 = vunpack.c.h.b16 %v6336
        %v6876 = vunpack.c.l.b16 %v6337
        %v6877 = vunpack.c.h.b16 %v6337
        %v6878 = vunpack.c.l.b16 %v6338
        %v6879 = vunpack.c.l.b16 %v6339
        %v6880 = vunpack.c.h.b16 %v6339
        %v6881 = vunpack.c.l.b16 %v6340
        %v6882 = vunpack.c.h.b16 %v6340
        %v6883 = vunpack.c.l.b16 %v6341
        %v6884 = vunpack.c.h.b16 %v6341
        %v6885 = vunpack.c.l.b16 %v6342
        %v6886 = vunpack.c.h.b16 %v6342
        %v6887 = vunpack.c.l.b16 %v6343
        %v6888 = vunpack.c.l.b16 %v6344
        %v6889 = vunpack.c.h.b16 %v6344
        %v6890 = vunpack.c.l.b16 %v6345
        %v6891 = vunpack.c.h.b16 %v6345
        %v6892 = vunpack.c.l.b16 %v6346
        %v6893 = vunpack.c.h.b16 %v6346
        %v6894 = vunpack.c.l.b16 %v6347
        %v6895 = vunpack.c.h.b16 %v6347
        %v6896 = vunpack.c.l.b16 %v6348
        %v6897 = vunpack.c.l.b16 %v6349
        %v6898 = vunpack.c.h.b16 %v6349
        %v6899 = vunpack.c.l.b16 %v6350
        %v6900 = vunpack.c.h.b16 %v6350
        %v6901 = vunpack.c.l.b16 %v6351
        %v6902 = vunpack.c.h.b16 %v6351
        %v6903 = vunpack.c.l.b16 %v6352
        %v6904 = vunpack.c.h.b16 %v6352
        %v6905 = vunpack.c.l.b16 %v6353
        %v6906 = vunpack.c.l.b16 %v6354
        %v6907 = vunpack.c.h.b16 %v6354
        %v6908 = vunpack.c.l.b16 %v6355
        %v6909 = vunpack.c.h.b16 %v6355
        %v6910 = vunpack.c.l.b16 %v6356
        %v6911 = vunpack.c.h.b16 %v6356
        %v6912 = vunpack.c.l.b16 %v6357
        %v6913 = vunpack.c.h.b16 %v6357
        %v6914 = vunpack.c.l.b16 %v6358
        %v6915 = vunpack.c.l.b16 %v6359
        %v6916 = vunpack.c.h.b16 %v6359
        %v6917 = vunpack.c.l.b16 %v6360
        %v6918 = vunpack.c.h.b16 %v6360
        %v6919 = vunpack.c.l.b16 %v6361
        %v6920 = vunpack.c.h.b16 %v6361
        %v6921 = vunpack.c.l.b16 %v6362
        %v6922 = vunpack.c.h.b16 %v6362
        %v6923 = vunpack.c.l.b16 %v6363
        %v6924 = vunpack.c.l.b16 %v6364
        %v6925 = vunpack.c.h.b16 %v6364
        %v6926 = vunpack.c.l.b16 %v6365
        %v6927 = vunpack.c.h.b16 %v6365
        %v6928 = vunpack.c.l.b16 %v6366
        %v6929 = vunpack.c.h.b16 %v6366
        %v6930 = vunpack.c.l.b16 %v6367
        %v6931 = vunpack.c.h.b16 %v6367
        %v6932 = vunpack.c.l.b16 %v6368
        %v6933 = vunpack.c.l.b16 %v6369
        %v6934 = vunpack.c.h.b16 %v6369
        %v6935 = vunpack.c.l.b16 %v6370
        %v6936 = vunpack.c.h.b16 %v6370
        %v6937 = vunpack.c.l.b16 %v6371
        %v6938 = vunpack.c.h.b16 %v6371
        %v6939 = vunpack.c.l.b16 %v6372
        %v6940 = vunpack.c.h.b16 %v6372
        %v6941 = vunpack.c.l.b16 %v6373
        %v6942 = vunpack.c.l.b16 %v6374
        %v6943 = vunpack.c.h.b16 %v6374
        %v6944 = vunpack.c.l.b16 %v6375
        %v6945 = vunpack.c.h.b16 %v6375
        %v6946 = vunpack.c.l.b16 %v6376
        %v6947 = vunpack.c.h.b16 %v6376
        %v6948 = vunpack.c.l.b16 %v6377
        %v6949 = vunpack.c.h.b16 %v6377
        %v6950 = vunpack.c.l.b16 %v6378
        %v6951 = vunpack.c.l.b16 %v6379
        %v6952 = vunpack.c.h.b16 %v6379
        %v6953 = vunpack.c.l.b16 %v6380
        %v6954 = vunpack.c.h.b16 %v6380
        %v6955 = vunpack.c.l.b16 %v6381
        %v6956 = vunpack.c.h.b16 %v6381
        %v6957 = vunpack.c.l.b16 %v6382
        %v6958 = vunpack.c.h.b16 %v6382
        %v6959 = vunpack.c.l.b16 %v6383
        %v6960 = vunpack.c.l.b16 %v6384
        %v6961 = vunpack.c.h.b16 %v6384
        %v6962 = vunpack.c.l.b16 %v6385
        %v6963 = vunpack.c.h.b16 %v6385
        %v6964 = vunpack.c.l.b16 %v6386
        %v6965 = vunpack.c.h.b16 %v6386
        %v6966 = vunpack.c.l.b16 %v6387
        %v6967 = vunpack.c.h.b16 %v6387
        %v6968 = vunpack.c.l.b16 %v6388
        %v6969 = vunpack.c.l.b16 %v6389
        %v6970 = vunpack.c.h.b16 %v6389
        %v6971 = vunpack.c.l.b16 %v6390
        %v6972 = vunpack.c.h.b16 %v6390
        %v6973 = vunpack.c.l.b16 %v6391
        %v6974 = vunpack.c.h.b16 %v6391
        %v6975 = vunpack.c.l.b16 %v6392
        %v6976 = vunpack.c.h.b16 %v6392
        %v6977 = vunpack.c.l.b16 %v6393
        %v6978 = vunpack.c.l.b16 %v6394
        %v6979 = vunpack.c.h.b16 %v6394
        %v6980 = vunpack.c.l.b16 %v6395
        %v6981 = vunpack.c.h.b16 %v6395
        %v6982 = vunpack.c.l.b16 %v6396
        %v6983 = vunpack.c.h.b16 %v6396
        %v6984 = vunpack.c.l.b16 %v6397
        %v6985 = vunpack.c.h.b16 %v6397
        %v6986 = vunpack.c.l.b16 %v6398
        %v6987 = vunpack.c.l.b16 %v6399
        %v6988 = vunpack.c.h.b16 %v6399
        %v6989 = vunpack.c.l.b16 %v6400
        %v6990 = vunpack.c.h.b16 %v6400
        %v6991 = vunpack.c.l.b16 %v6401
        %v6992 = vunpack.c.h.b16 %v6401
        %v6993 = vunpack.c.l.b16 %v6402
        %v6994 = vunpack.c.h.b16 %v6402
        %v6995 = vunpack.c.l.b16 %v6403
        %v6996 = vpack.c.b16 %v6717, %v6708
        %v6997 = vpack.c.b16 %v6718, %v6709
        %v6998 = vpack.c.b16 %v6719, %v6710
        %v6999 = vpack.c.b16 %v6720, %v6711
        %v7000 = vpack.c.b16 %v6721, %v6712
        %v7001 = vpack.c.b16 %v6722, %v6713
        %v7002 = vpack.c.b16 %v6723, %v6714
        %v7003 = vpack.c.b16 %v6724, %v6715
        %v7004 = vpack.c.b16 %v6725, %v6716
        %v7005 = vpack.c.b16 %v6735, %v6726
        %v7006 = vpack.c.b16 %v6736, %v6727
        %v7007 = vpack.c.b16 %v6737, %v6728
        %v7008 = vpack.c.b16 %v6738, %v6729
        %v7009 = vpack.c.b16 %v6739, %v6730
        %v7010 = vpack.c.b16 %v6740, %v6731
        %v7011 = vpack.c.b16 %v6741, %v6732
        %v7012 = vpack.c.b16 %v6742, %v6733
        %v7013 = vpack.c.b16 %v6743, %v6734
        %v7014 = vpack.c.b16 %v6753, %v6744
        %v7015 = vpack.c.b16 %v6754, %v6745
        %v7016 = vpack.c.b16 %v6755, %v6746
        %v7017 = vpack.c.b16 %v6756, %v6747
        %v7018 = vpack.c.b16 %v6757, %v6748
        %v7019 = vpack.c.b16 %v6758, %v6749
        %v7020 = vpack.c.b16 %v6759, %v6750
        %v7021 = vpack.c.b16 %v6760, %v6751
        %v7022 = vpack.c.b16 %v6761, %v6752
        %v7023 = vpack.c.b16 %v6771, %v6762
        %v7024 = vpack.c.b16 %v6772, %v6763
        %v7025 = vpack.c.b16 %v6773, %v6764
        %v7026 = vpack.c.b16 %v6774, %v6765
        %v7027 = vpack.c.b16 %v6775, %v6766
        %v7028 = vpack.c.b16 %v6776, %v6767
        %v7029 = vpack.c.b16 %v6777, %v6768
        %v7030 = vpack.c.b16 %v6778, %v6769
        %v7031 = vpack.c.b16 %v6779, %v6770
        %v7032 = vpack.c.b16 %v6789, %v6780
        %v7033 = vpack.c.b16 %v6790, %v6781
        %v7034 = vpack.c.b16 %v6791, %v6782
        %v7035 = vpack.c.b16 %v6792, %v6783
        %v7036 = vpack.c.b16 %v6793, %v6784
        %v7037 = vpack.c.b16 %v6794, %v6785
        %v7038 = vpack.c.b16 %v6795, %v6786
        %v7039 = vpack.c.b16 %v6796, %v6787
        %v7040 = vpack.c.b16 %v6797, %v6788
        %v7041 = vpack.c.b16 %v6807, %v6798
        %v7042 = vpack.c.b16 %v6808, %v6799
        %v7043 = vpack.c.b16 %v6809, %v6800
        %v7044 = vpack.c.b16 %v6810, %v6801
        %v7045 = vpack.c.b16 %v6811, %v6802
        %v7046 = vpack.c.b16 %v6812, %v6803
        %v7047 = vpack.c.b16 %v6813, %v6804
        %v7048 = vpack.c.b16 %v6814, %v6805
        %v7049 = vpack.c.b16 %v6815, %v6806
        %v7050 = vpack.c.b16 %v6825, %v6816
        %v7051 = vpack.c.b16 %v6826, %v6817
        %v7052 = vpack.c.b16 %v6827, %v6818
        %v7053 = vpack.c.b16 %v6828, %v6819
        %v7054 = vpack.c.b16 %v6829, %v6820
        %v7055 = vpack.c.b16 %v6830, %v6821
        %v7056 = vpack.c.b16 %v6831, %v6822
        %v7057 = vpack.c.b16 %v6832, %v6823
        %v7058 = vpack.c.b16 %v6833, %v6824
        %v7059 = vpack.c.b16 %v6843, %v6834
        %v7060 = vpack.c.b16 %v6844, %v6835
        %v7061 = vpack.c.b16 %v6845, %v6836
        %v7062 = vpack.c.b16 %v6846, %v6837
        %v7063 = vpack.c.b16 %v6847, %v6838
        %v7064 = vpack.c.b16 %v6848, %v6839
        %v7065 = vpack.c.b16 %v6849, %v6840
        %v7066 = vpack.c.b16 %v6850, %v6841
        %v7067 = vpack.c.b16 %v6851, %v6842
        %v7068 = vpack.c.b16 %v6861, %v6852
        %v7069 = vpack.c.b16 %v6862, %v6853
        %v7070 = vpack.c.b16 %v6863, %v6854
        %v7071 = vpack.c.b16 %v6864, %v6855
        %v7072 = vpack.c.b16 %v6865, %v6856
        %v7073 = vpack.c.b16 %v6866, %v6857
        %v7074 = vpack.c.b16 %v6867, %v6858
        %v7075 = vpack.c.b16 %v6868, %v6859
        %v7076 = vpack.c.b16 %v6869, %v6860
        %v7077 = vpack.c.b16 %v6879, %v6870
        %v7078 = vpack.c.b16 %v6880, %v6871
        %v7079 = vpack.c.b16 %v6881, %v6872
        %v7080 = vpack.c.b16 %v6882, %v6873
        %v7081 = vpack.c.b16 %v6883, %v6874
        %v7082 = vpack.c.b16 %v6884, %v6875
        %v7083 = vpack.c.b16 %v6885, %v6876
        %v7084 = vpack.c.b16 %v6886, %v6877
        %v7085 = vpack.c.b16 %v6887, %v6878
        %v7086 = vpack.c.b16 %v6897, %v6888
        %v7087 = vpack.c.b16 %v6898, %v6889
        %v7088 = vpack.c.b16 %v6899, %v6890
        %v7089 = vpack.c.b16 %v6900, %v6891
        %v7090 = vpack.c.b16 %v6901, %v6892
        %v7091 = vpack.c.b16 %v6902, %v6893
        %v7092 = vpack.c.b16 %v6903, %v6894
        %v7093 = vpack.c.b16 %v6904, %v6895
        %v7094 = vpack.c.b16 %v6905, %v6896
        %v7095 = vpack.c.b16 %v6915, %v6906
        %v7096 = vpack.c.b16 %v6916, %v6907
        %v7097 = vpack.c.b16 %v6917, %v6908
        %v7098 = vpack.c.b16 %v6918, %v6909
        %v7099 = vpack.c.b16 %v6919, %v6910
        %v7100 = vpack.c.b16 %v6920, %v6911
        %v7101 = vpack.c.b16 %v6921, %v6912
        %v7102 = vpack.c.b16 %v6922, %v6913
        %v7103 = vpack.c.b16 %v6923, %v6914
        %v7104 = vpack.c.b16 %v6933, %v6924
        %v7105 = vpack.c.b16 %v6934, %v6925
        %v7106 = vpack.c.b16 %v6935, %v6926
        %v7107 = vpack.c.b16 %v6936, %v6927
        %v7108 = vpack.c.b16 %v6937, %v6928
        %v7109 = vpack.c.b16 %v6938, %v6929
        %v7110 = vpack.c.b16 %v6939, %v6930
        %v7111 = vpack.c.b16 %v6940, %v6931
        %v7112 = vpack.c.b16 %v6941, %v6932
        %v7113 = vpack.c.b16 %v6951, %v6942
        %v7114 = vpack.c.b16 %v6952, %v6943
        %v7115 = vpack.c.b16 %v6953, %v6944
        %v7116 = vpack.c.b16 %v6954, %v6945
        %v7117 = vpack.c.b16 %v6955, %v6946
        %v7118 = vpack.c.b16 %v6956, %v6947
        %v7119 = vpack.c.b16 %v6957, %v6948
        %v7120 = vpack.c.b16 %v6958, %v6949
        %v7121 = vpack.c.b16 %v6959, %v6950
        %v7122 = vpack.c.b16 %v6969, %v6960
        %v7123 = vpack.c.b16 %v6970, %v6961
        %v7124 = vpack.c.b16 %v6971, %v6962
        %v7125 = vpack.c.b16 %v6972, %v6963
        %v7126 = vpack.c.b16 %v6973, %v6964
        %v7127 = vpack.c.b16 %v6974, %v6965
        %v7128 = vpack.c.b16 %v6975, %v6966
        %v7129 = vpack.c.b16 %v6976, %v6967
        %v7130 = vpack.c.b16 %v6977, %v6968
        %v7131 = vpack.c.b16 %v6987, %v6978
        %v7132 = vpack.c.b16 %v6988, %v6979
        %v7133 = vpack.c.b16 %v6989, %v6980
        %v7134 = vpack.c.b16 %v6990, %v6981
        %v7135 = vpack.c.b16 %v6991, %v6982
        %v7136 = vpack.c.b16 %v6992, %v6983
        %v7137 = vpack.c.b16 %v6993, %v6984
        %v7138 = vpack.c.b16 %v6994, %v6985
        %v7139 = vpack.c.b16 %v6995, %v6986
        %v7428 = vunpack.c.l.b16 %v6404
        %v7429 = vunpack.c.l.b16 %v6405
        %v7430 = vunpack.c.l.b16 %v6406
        %v7431 = vunpack.c.l.b16 %v6407
        %v7432 = vunpack.c.l.b16 %v6408
        %v7433 = vunpack.c.l.b16 %v6409
        %v7434 = vunpack.c.l.b16 %v6410
        %v7435 = vunpack.c.l.b16 %v6411
        %v7436 = vunpack.c.l.b16 %v6412
        %v7437 = vunpack.c.l.b16 %v6413
        %v7438 = vunpack.c.l.b16 %v6414
        %v7439 = vunpack.c.l.b16 %v6415
        %v7440 = vunpack.c.l.b16 %v6416
        %v7441 = vunpack.c.l.b16 %v6417
        %v7442 = vunpack.c.l.b16 %v6418
        %v7443 = vunpack.c.l.b16 %v6419
        %v7444 = vunpack.c.l.b16 %v6420
        %v7445 = vunpack.c.l.b16 %v6421
        %v7446 = vunpack.c.l.b16 %v6422
        %v7447 = vunpack.c.l.b16 %v6423
        %v7448 = vunpack.c.l.b16 %v6424
        %v7449 = vunpack.c.l.b16 %v6425
        %v7450 = vunpack.c.l.b16 %v6426
        %v7451 = vunpack.c.l.b16 %v6427
        %v7452 = vunpack.c.l.b16 %v6428
        %v7453 = vunpack.c.l.b16 %v6429
        %v7454 = vunpack.c.l.b16 %v6430
        %v7455 = vunpack.c.l.b16 %v6431
        %v7456 = vunpack.c.l.b16 %v6432
        %v7457 = vunpack.c.l.b16 %v6433
        %v7458 = vunpack.c.l.b16 %v6434
        %v7459 = vunpack.c.l.b16 %v6435
        %v7460 = vunpack.c.l.b16 %v6436
        %v7461 = vunpack.c.l.b16 %v6437
        %v7462 = vunpack.c.l.b16 %v6438
        %v7463 = vunpack.c.l.b16 %v6439
        %v7464 = vunpack.c.l.b16 %v6440
        %v7465 = vunpack.c.l.b16 %v6441
        %v7466 = vunpack.c.l.b16 %v6442
        %v7467 = vunpack.c.l.b16 %v6443
        %v7468 = vunpack.c.l.b16 %v6444
        %v7469 = vunpack.c.l.b16 %v6445
        %v7470 = vunpack.c.l.b16 %v6446
        %v7471 = vunpack.c.l.b16 %v6447
        %v7472 = vunpack.c.l.b16 %v6448
        %v7473 = vunpack.c.l.b16 %v6449
        %v7474 = vunpack.c.l.b16 %v6450
        %v7475 = vunpack.c.l.b16 %v6451
        %v7476 = vunpack.c.l.b16 %v6452
        %v7477 = vunpack.c.l.b16 %v6453
        %v7478 = vunpack.c.l.b16 %v6454
        %v7479 = vunpack.c.l.b16 %v6455
        %v7480 = vunpack.c.l.b16 %v6456
        %v7481 = vunpack.c.l.b16 %v6457
        %v7482 = vunpack.c.l.b16 %v6458
        %v7483 = vunpack.c.l.b16 %v6459
        %v7484 = vunpack.c.l.b16 %v6460
        %v7485 = vunpack.c.l.b16 %v6461
        %v7486 = vunpack.c.l.b16 %v6462
        %v7487 = vunpack.c.l.b16 %v6463
        %v7488 = vunpack.c.l.b16 %v6464
        %v7489 = vunpack.c.l.b16 %v6465
        %v7490 = vunpack.c.l.b16 %v6466
        %v7491 = vunpack.c.l.b16 %v6467
        %v7492 = vunpack.c.l.b16 %v6468
        %v7493 = vunpack.c.l.b16 %v6469
        %v7494 = vunpack.c.l.b16 %v6470
        %v7495 = vunpack.c.l.b16 %v6471
        %v7496 = vunpack.c.l.b16 %v6472
        %v7497 = vunpack.c.l.b16 %v6473
        %v7498 = vunpack.c.l.b16 %v6474
        %v7499 = vunpack.c.l.b16 %v6475
        %v7500 = vunpack.c.l.b16 %v6476
        %v7501 = vunpack.c.l.b16 %v6477
        %v7502 = vunpack.c.l.b16 %v6478
        %v7503 = vunpack.c.l.b16 %v6479
        %v7504 = vunpack.c.l.b16 %v6480
        %v7505 = vunpack.c.l.b16 %v6481
        %v7506 = vunpack.c.l.b16 %v6482
        %v7507 = vunpack.c.l.b16 %v6483
        %v7508 = vunpack.c.l.b16 %v6484
        %v7509 = vunpack.c.l.b16 %v6485
        %v7510 = vunpack.c.l.b16 %v6486
        %v7511 = vunpack.c.l.b16 %v6487
        %v7512 = vunpack.c.l.b16 %v6488
        %v7513 = vunpack.c.l.b16 %v6489
        %v7514 = vunpack.c.l.b16 %v6490
        %v7515 = vunpack.c.l.b16 %v6491
        %v7516 = vunpack.c.l.b16 %v6492
        %v7517 = vunpack.c.l.b16 %v6493
        %v7518 = vunpack.c.l.b16 %v6494
        %v7519 = vunpack.c.l.b16 %v6495
        %v7520 = vunpack.c.l.b16 %v6496
        %v7521 = vunpack.c.l.b16 %v6497
        %v7522 = vunpack.c.l.b16 %v6498
        %v7523 = vunpack.c.l.b16 %v6499
        %v7524 = vunpack.c.l.b16 %v6500
        %v7525 = vunpack.c.l.b16 %v6501
        %v7526 = vunpack.c.l.b16 %v6502
        %v7527 = vunpack.c.l.b16 %v6503
        %v7528 = vunpack.c.l.b16 %v6504
        %v7529 = vunpack.c.l.b16 %v6505
        %v7530 = vunpack.c.l.b16 %v6506
        %v7531 = vunpack.c.l.b16 %v6507
        %v7532 = vunpack.c.l.b16 %v6508
        %v7533 = vunpack.c.l.b16 %v6509
        %v7534 = vunpack.c.l.b16 %v6510
        %v7535 = vunpack.c.l.b16 %v6511
        %v7536 = vunpack.c.l.b16 %v6512
        %v7537 = vunpack.c.l.b16 %v6513
        %v7538 = vunpack.c.l.b16 %v6514
        %v7539 = vunpack.c.l.b16 %v6515
        %v7540 = vunpack.c.l.b16 %v6516
        %v7541 = vunpack.c.l.b16 %v6517
        %v7542 = vunpack.c.l.b16 %v6518
        %v7543 = vunpack.c.l.b16 %v6519
        %v7544 = vunpack.c.l.b16 %v6520
        %v7545 = vunpack.c.l.b16 %v6521
        %v7546 = vunpack.c.l.b16 %v6522
        %v7547 = vunpack.c.l.b16 %v6523
        %v7548 = vunpack.c.l.b16 %v6524
        %v7549 = vunpack.c.l.b16 %v6525
        %v7550 = vunpack.c.l.b16 %v6526
        %v7551 = vunpack.c.l.b16 %v6527
        %v7552 = vunpack.c.l.b16 %v6528
        %v7553 = vunpack.c.l.b16 %v6529
        %v7554 = vunpack.c.l.b16 %v6530
        %v7555 = vunpack.c.l.b16 %v6531
        %v7556 = vunpack.c.l.b16 %v6532
        %v7557 = vunpack.c.l.b16 %v6533
        %v7558 = vunpack.c.l.b16 %v6534
        %v7559 = vunpack.c.l.b16 %v6535
        %v7560 = vunpack.c.l.b16 %v6536
        %v7561 = vunpack.c.l.b16 %v6537
        %v7562 = vunpack.c.l.b16 %v6538
        %v7563 = vunpack.c.l.b16 %v6539
        %v7564 = vunpack.c.l.b16 %v6540
        %v7565 = vunpack.c.l.b16 %v6541
        %v7566 = vunpack.c.l.b16 %v6542
        %v7567 = vunpack.c.l.b16 %v6543
        %v7568 = vunpack.c.l.b16 %v6544
        %v7569 = vunpack.c.l.b16 %v6545
        %v7570 = vunpack.c.l.b16 %v6546
        %v7571 = vunpack.c.l.b16 %v6547
        %v7572 = vpack.c.b16 %v7429, %v7428
        %v7573 = vpack.c.b16 %v7431, %v7430
        %v7574 = vpack.c.b16 %v7433, %v7432
        %v7575 = vpack.c.b16 %v7435, %v7434
        %v7576 = vpack.c.b16 %v7437, %v7436
        %v7577 = vpack.c.b16 %v7439, %v7438
        %v7578 = vpack.c.b16 %v7441, %v7440
        %v7579 = vpack.c.b16 %v7443, %v7442
        %v7580 = vpack.c.b16 %v7445, %v7444
        %v7581 = vpack.c.b16 %v7447, %v7446
        %v7582 = vpack.c.b16 %v7449, %v7448
        %v7583 = vpack.c.b16 %v7451, %v7450
        %v7584 = vpack.c.b16 %v7453, %v7452
        %v7585 = vpack.c.b16 %v7455, %v7454
        %v7586 = vpack.c.b16 %v7457, %v7456
        %v7587 = vpack.c.b16 %v7459, %v7458
        %v7588 = vpack.c.b16 %v7461, %v7460
        %v7589 = vpack.c.b16 %v7463, %v7462
        %v7590 = vpack.c.b16 %v7465, %v7464
        %v7591 = vpack.c.b16 %v7467, %v7466
        %v7592 = vpack.c.b16 %v7469, %v7468
        %v7593 = vpack.c.b16 %v7471, %v7470
        %v7594 = vpack.c.b16 %v7473, %v7472
        %v7595 = vpack.c.b16 %v7475, %v7474
        %v7596 = vpack.c.b16 %v7477, %v7476
        %v7597 = vpack.c.b16 %v7479, %v7478
        %v7598 = vpack.c.b16 %v7481, %v7480
        %v7599 = vpack.c.b16 %v7483, %v7482
        %v7600 = vpack.c.b16 %v7485, %v7484
        %v7601 = vpack.c.b16 %v7487, %v7486
        %v7602 = vpack.c.b16 %v7489, %v7488
        %v7603 = vpack.c.b16 %v7491, %v7490
        %v7604 = vpack.c.b16 %v7493, %v7492
        %v7605 = vpack.c.b16 %v7495, %v7494
        %v7606 = vpack.c.b16 %v7497, %v7496
        %v7607 = vpack.c.b16 %v7499, %v7498
        %v7608 = vpack.c.b16 %v7501, %v7500
        %v7609 = vpack.c.b16 %v7503, %v7502
        %v7610 = vpack.c.b16 %v7505, %v7504
        %v7611 = vpack.c.b16 %v7507, %v7506
        %v7612 = vpack.c.b16 %v7509, %v7508
        %v7613 = vpack.c.b16 %v7511, %v7510
        %v7614 = vpack.c.b16 %v7513, %v7512
        %v7615 = vpack.c.b16 %v7515, %v7514
        %v7616 = vpack.c.b16 %v7517, %v7516
        %v7617 = vpack.c.b16 %v7519, %v7518
        %v7618 = vpack.c.b16 %v7521, %v7520
        %v7619 = vpack.c.b16 %v7523, %v7522
        %v7620 = vpack.c.b16 %v7525, %v7524
        %v7621 = vpack.c.b16 %v7527, %v7526
        %v7622 = vpack.c.b16 %v7529, %v7528
        %v7623 = vpack.c.b16 %v7531, %v7530
        %v7624 = vpack.c.b16 %v7533, %v7532
        %v7625 = vpack.c.b16 %v7535, %v7534
        %v7626 = vpack.c.b16 %v7537, %v7536
        %v7627 = vpack.c.b16 %v7539, %v7538
        %v7628 = vpack.c.b16 %v7541, %v7540
        %v7629 = vpack.c.b16 %v7543, %v7542
        %v7630 = vpack.c.b16 %v7545, %v7544
        %v7631 = vpack.c.b16 %v7547, %v7546
        %v7632 = vpack.c.b16 %v7549, %v7548
        %v7633 = vpack.c.b16 %v7551, %v7550
        %v7634 = vpack.c.b16 %v7553, %v7552
        %v7635 = vpack.c.b16 %v7555, %v7554
        %v7636 = vpack.c.b16 %v7557, %v7556
        %v7637 = vpack.c.b16 %v7559, %v7558
        %v7638 = vpack.c.b16 %v7561, %v7560
        %v7639 = vpack.c.b16 %v7563, %v7562
        %v7640 = vpack.c.b16 %v7565, %v7564
        %v7641 = vpack.c.b16 %v7567, %v7566
        %v7642 = vpack.c.b16 %v7569, %v7568
        %v7643 = vpack.c.b16 %v7571, %v7570
        %7716 = vmatprep.subr.bf16.mxu0 0
        %7717 = vmatpush1.bf16.msra.mxu0 %v7579
        %7718 = vmatprep.subr.bf16.mxu0 0
        %7719 = vmatpush1.bf16.msra.mxu0 %v7578
        %7720 = vmatprep.subr.bf16.mxu0 0
        %7721 = vmatpush1.bf16.msra.mxu0 %v7577
        %7722 = vmatprep.subr.bf16.mxu0 0
        %7723 = vmatpush1.bf16.msra.mxu0 %v7576
        %7724 = vmatprep.subr.bf16.mxu0 0
        %7725 = vmatpush1.bf16.msra.mxu0 %v7575
        %7726 = vmatprep.subr.bf16.mxu0 0
        %7727 = vmatpush1.bf16.msra.mxu0 %v7574
        %7728 = vmatprep.subr.bf16.mxu0 0
        %7729 = vmatpush1.bf16.msra.mxu0 %v7573
        %7730 = vmatprep.subr.bf16.mxu0 0
        %7731 = vmatpush1.bf16.msra.mxu0 %v7572
        %7732 = vmatprep.subr.bf16.mxu0 0
        %7733 = vmatpush2.bf16.msra.mxu0 %v7587
        %7734 = vmatprep.subr.bf16.mxu0 0
        %7735 = vmatpush2.bf16.msra.mxu0 %v7586
        %7736 = vmatprep.subr.bf16.mxu0 0
        %7737 = vmatpush2.bf16.msra.mxu0 %v7585
        %7738 = vmatprep.subr.bf16.mxu0 0
        %7739 = vmatpush2.bf16.msra.mxu0 %v7584
        %7740 = vmatprep.subr.bf16.mxu0 0
        %7741 = vmatpush2.bf16.msra.mxu0 %v7583
        %7742 = vmatprep.subr.bf16.mxu0 0
        %7743 = vmatpush2.bf16.msra.mxu0 %v7582
        %7744 = vmatprep.subr.bf16.mxu0 0
        %7745 = vmatpush2.bf16.msra.mxu0 %v7581
        %7746 = vmatprep.subr.bf16.mxu0 0
        %7747 = vmatpush2.bf16.msra.mxu0 %v7580
        %7748 = vmatprep.mubr.bf16.mxu0 %v6997
        %7749 = vmatmul.mubr.bf16.gmra.mxu0 %v6996
        %v7750 = vpop.f32.mrf.mxu0
        %v7751 = vadd.f32 0.0, %v7750
        %v7752 = vpop.f32.mrf.mxu0
        %v7753 = vpop.f32.mrf.mxu0
        %v7754 = vadd.f32 0.0, %v7753
        %v7755 = vpop.f32.mrf.mxu0
        %7756 = vmatprep.mubr.bf16.mxu0 %v7006
        %7757 = vmatmul.mubr.bf16.gmra.mxu0 %v7005
        %v7758 = vpop.f32.mrf.mxu0
        %v7759 = vadd.f32 0.0, %v7758
        %v7760 = vpop.f32.mrf.mxu0
        %v7761 = vpop.f32.mrf.mxu0
        %v7762 = vadd.f32 0.0, %v7761
        %v7763 = vpop.f32.mrf.mxu0
        %7764 = vmatprep.mubr.bf16.mxu0 %v7015
        %7765 = vmatmul.mubr.bf16.gmra.mxu0 %v7014
        %v7766 = vpop.f32.mrf.mxu0
        %v7767 = vadd.f32 0.0, %v7766
        %v7768 = vpop.f32.mrf.mxu0
        %v7769 = vpop.f32.mrf.mxu0
        %v7770 = vadd.f32 0.0, %v7769
        %v7771 = vpop.f32.mrf.mxu0
        %7772 = vmatprep.mubr.bf16.mxu0 %v7024
        %7773 = vmatmul.mubr.bf16.gmra.mxu0 %v7023
        %v7774 = vpop.f32.mrf.mxu0
        %v7775 = vadd.f32 0.0, %v7774
        %v7776 = vpop.f32.mrf.mxu0
        %v7777 = vpop.f32.mrf.mxu0
        %v7778 = vadd.f32 0.0, %v7777
        %v7779 = vpop.f32.mrf.mxu0
        %7780 = vmatprep.mubr.bf16.mxu0 %v7033
        %7781 = vmatmul.mubr.bf16.gmra.mxu0 %v7032
        %v7782 = vpop.f32.mrf.mxu0
        %v7783 = vadd.f32 0.0, %v7782
        %v7784 = vpop.f32.mrf.mxu0
        %v7785 = vpop.f32.mrf.mxu0
        %v7786 = vadd.f32 0.0, %v7785
        %v7787 = vpop.f32.mrf.mxu0
        %7788 = vmatprep.mubr.bf16.mxu0 %v7042
        %7789 = vmatmul.mubr.bf16.gmra.mxu0 %v7041
        %v7790 = vpop.f32.mrf.mxu0
        %v7791 = vadd.f32 0.0, %v7790
        %v7792 = vpop.f32.mrf.mxu0
        %v7793 = vpop.f32.mrf.mxu0
        %v7794 = vadd.f32 0.0, %v7793
        %v7795 = vpop.f32.mrf.mxu0
        %7796 = vmatprep.mubr.bf16.mxu0 %v7051
        %7797 = vmatmul.mubr.bf16.gmra.mxu0 %v7050
        %v7798 = vpop.f32.mrf.mxu0
        %v7799 = vadd.f32 0.0, %v7798
        %v7800 = vpop.f32.mrf.mxu0
        %v7801 = vpop.f32.mrf.mxu0
        %v7802 = vadd.f32 0.0, %v7801
        %v7803 = vpop.f32.mrf.mxu0
        %7804 = vmatprep.mubr.bf16.mxu0 %v7060
        %7805 = vmatmul.mubr.bf16.gmra.mxu0 %v7059
        %v7806 = vpop.f32.mrf.mxu0
        %v7807 = vadd.f32 0.0, %v7806
        %v7808 = vpop.f32.mrf.mxu0
        %v7809 = vpop.f32.mrf.mxu0
        %v7810 = vadd.f32 0.0, %v7809
        %v7811 = vpop.f32.mrf.mxu0
        %7812 = vmatprep.mubr.bf16.mxu0 %v7069
        %7813 = vmatmul.mubr.bf16.gmra.mxu0 %v7068
        %v7814 = vpop.f32.mrf.mxu0
        %v7815 = vadd.f32 0.0, %v7814
        %v7816 = vpop.f32.mrf.mxu0
        %v7817 = vpop.f32.mrf.mxu0
        %v7818 = vadd.f32 0.0, %v7817
        %v7819 = vpop.f32.mrf.mxu0
        %7820 = vmatprep.mubr.bf16.mxu0 %v7078
        %7821 = vmatmul.mubr.bf16.gmra.mxu0 %v7077
        %v7822 = vpop.f32.mrf.mxu0
        %v7823 = vadd.f32 0.0, %v7822
        %v7824 = vpop.f32.mrf.mxu0
        %v7825 = vpop.f32.mrf.mxu0
        %v7826 = vadd.f32 0.0, %v7825
        %v7827 = vpop.f32.mrf.mxu0
        %7828 = vmatprep.mubr.bf16.mxu0 %v7087
        %7829 = vmatmul.mubr.bf16.gmra.mxu0 %v7086
        %v7830 = vpop.f32.mrf.mxu0
        %v7831 = vadd.f32 0.0, %v7830
        %v7832 = vpop.f32.mrf.mxu0
        %v7833 = vpop.f32.mrf.mxu0
        %v7834 = vadd.f32 0.0, %v7833
        %v7835 = vpop.f32.mrf.mxu0
        %7836 = vmatprep.mubr.bf16.mxu0 %v7096
        %7837 = vmatmul.mubr.bf16.gmra.mxu0 %v7095
        %v7838 = vpop.f32.mrf.mxu0
        %v7839 = vadd.f32 0.0, %v7838
        %v7840 = vpop.f32.mrf.mxu0
        %v7841 = vpop.f32.mrf.mxu0
        %v7842 = vadd.f32 0.0, %v7841
        %v7843 = vpop.f32.mrf.mxu0
        %7844 = vmatprep.mubr.bf16.mxu0 %v7105
        %7845 = vmatmul.mubr.bf16.gmra.mxu0 %v7104
        %v7846 = vpop.f32.mrf.mxu0
        %v7847 = vadd.f32 0.0, %v7846
        %v7848 = vpop.f32.mrf.mxu0
        %v7849 = vpop.f32.mrf.mxu0
        %v7850 = vadd.f32 0.0, %v7849
        %v7851 = vpop.f32.mrf.mxu0
        %7852 = vmatprep.mubr.bf16.mxu0 %v7114
        %7853 = vmatmul.mubr.bf16.gmra.mxu0 %v7113
        %v7854 = vpop.f32.mrf.mxu0
        %v7855 = vadd.f32 0.0, %v7854
        %v7856 = vpop.f32.mrf.mxu0
        %v7857 = vpop.f32.mrf.mxu0
        %v7858 = vadd.f32 0.0, %v7857
        %v7859 = vpop.f32.mrf.mxu0
        %7860 = vmatprep.mubr.bf16.mxu0 %v7123
        %7861 = vmatmul.mubr.bf16.gmra.mxu0 %v7122
        %v7862 = vpop.f32.mrf.mxu0
        %v7863 = vadd.f32 0.0, %v7862
        %v7864 = vpop.f32.mrf.mxu0
        %v7865 = vpop.f32.mrf.mxu0
        %v7866 = vadd.f32 0.0, %v7865
        %v7867 = vpop.f32.mrf.mxu0
        %7868 = vmatprep.mubr.bf16.mxu0 %v7132
        %7869 = vmatmul.mubr.bf16.gmra.mxu0 %v7131
        %v7870 = vpop.f32.mrf.mxu0
        %v7871 = vadd.f32 0.0, %v7870
        %v7872 = vpop.f32.mrf.mxu0
        %v7873 = vpop.f32.mrf.mxu0
        %v7874 = vadd.f32 0.0, %v7873
        %v7875 = vpop.f32.mrf.mxu0
        %7876 = vdwg.mxu0
        %7877 = vmatprep.subr.bf16.mxu0 0
        %7878 = vmatpush1.bf16.msra.mxu0 %v7595
        %7879 = vmatprep.subr.bf16.mxu0 0
        %7880 = vmatpush1.bf16.msra.mxu0 %v7594
        %7881 = vmatprep.subr.bf16.mxu0 0
        %7882 = vmatpush1.bf16.msra.mxu0 %v7593
        %7883 = vmatprep.subr.bf16.mxu0 0
        %7884 = vmatpush1.bf16.msra.mxu0 %v7592
        %7885 = vmatprep.subr.bf16.mxu0 0
        %7886 = vmatpush1.bf16.msra.mxu0 %v7591
        %7887 = vmatprep.subr.bf16.mxu0 0
        %7888 = vmatpush1.bf16.msra.mxu0 %v7590
        %7889 = vmatprep.subr.bf16.mxu0 0
        %7890 = vmatpush1.bf16.msra.mxu0 %v7589
        %7891 = vmatprep.subr.bf16.mxu0 0
        %7892 = vmatpush1.bf16.msra.mxu0 %v7588
        %7893 = vmatprep.subr.bf16.mxu0 0
        %7894 = vmatpush2.bf16.msra.mxu0 %v7603
        %7895 = vmatprep.subr.bf16.mxu0 0
        %7896 = vmatpush2.bf16.msra.mxu0 %v7602
        %7897 = vmatprep.subr.bf16.mxu0 0
        %7898 = vmatpush2.bf16.msra.mxu0 %v7601
        %7899 = vmatprep.subr.bf16.mxu0 0
        %7900 = vmatpush2.bf16.msra.mxu0 %v7600
        %7901 = vmatprep.subr.bf16.mxu0 0
        %7902 = vmatpush2.bf16.msra.mxu0 %v7599
        %7903 = vmatprep.subr.bf16.mxu0 0
        %7904 = vmatpush2.bf16.msra.mxu0 %v7598
        %7905 = vmatprep.subr.bf16.mxu0 0
        %7906 = vmatpush2.bf16.msra.mxu0 %v7597
        %7907 = vmatprep.subr.bf16.mxu0 0
        %7908 = vmatpush2.bf16.msra.mxu0 %v7596
        %7909 = vmatprep.mubr.bf16.mxu0 %v6999
        %7910 = vmatmul.mubr.bf16.gmra.mxu0 %v6998
        %v7911 = vpop.f32.mrf.mxu0
        %v7912 = vadd.f32 %v7751, %v7911
        %v7913 = vpop.f32.mrf.mxu0
        %v7914 = vpop.f32.mrf.mxu0
        %v7915 = vadd.f32 %v7754, %v7914
        %v7916 = vpop.f32.mrf.mxu0
        %7917 = vmatprep.mubr.bf16.mxu0 %v7008
        %7918 = vmatmul.mubr.bf16.gmra.mxu0 %v7007
        %v7919 = vpop.f32.mrf.mxu0
        %v7920 = vadd.f32 %v7759, %v7919
        %v7921 = vpop.f32.mrf.mxu0
        %v7922 = vpop.f32.mrf.mxu0
        %v7923 = vadd.f32 %v7762, %v7922
        %v7924 = vpop.f32.mrf.mxu0
        %7925 = vmatprep.mubr.bf16.mxu0 %v7017
        %7926 = vmatmul.mubr.bf16.gmra.mxu0 %v7016
        %v7927 = vpop.f32.mrf.mxu0
        %v7928 = vadd.f32 %v7767, %v7927
        %v7929 = vpop.f32.mrf.mxu0
        %v7930 = vpop.f32.mrf.mxu0
        %v7931 = vadd.f32 %v7770, %v7930
        %v7932 = vpop.f32.mrf.mxu0
        %7933 = vmatprep.mubr.bf16.mxu0 %v7026
        %7934 = vmatmul.mubr.bf16.gmra.mxu0 %v7025
        %v7935 = vpop.f32.mrf.mxu0
        %v7936 = vadd.f32 %v7775, %v7935
        %v7937 = vpop.f32.mrf.mxu0
        %v7938 = vpop.f32.mrf.mxu0
        %v7939 = vadd.f32 %v7778, %v7938
        %v7940 = vpop.f32.mrf.mxu0
        %7941 = vmatprep.mubr.bf16.mxu0 %v7035
        %7942 = vmatmul.mubr.bf16.gmra.mxu0 %v7034
        %v7943 = vpop.f32.mrf.mxu0
        %v7944 = vadd.f32 %v7783, %v7943
        %v7945 = vpop.f32.mrf.mxu0
        %v7946 = vpop.f32.mrf.mxu0
        %v7947 = vadd.f32 %v7786, %v7946
        %v7948 = vpop.f32.mrf.mxu0
        %7949 = vmatprep.mubr.bf16.mxu0 %v7044
        %7950 = vmatmul.mubr.bf16.gmra.mxu0 %v7043
        %v7951 = vpop.f32.mrf.mxu0
        %v7952 = vadd.f32 %v7791, %v7951
        %v7953 = vpop.f32.mrf.mxu0
        %v7954 = vpop.f32.mrf.mxu0
        %v7955 = vadd.f32 %v7794, %v7954
        %v7956 = vpop.f32.mrf.mxu0
        %7957 = vmatprep.mubr.bf16.mxu0 %v7053
        %7958 = vmatmul.mubr.bf16.gmra.mxu0 %v7052
        %v7959 = vpop.f32.mrf.mxu0
        %v7960 = vadd.f32 %v7799, %v7959
        %v7961 = vpop.f32.mrf.mxu0
        %v7962 = vpop.f32.mrf.mxu0
        %v7963 = vadd.f32 %v7802, %v7962
        %v7964 = vpop.f32.mrf.mxu0
        %7965 = vmatprep.mubr.bf16.mxu0 %v7062
        %7966 = vmatmul.mubr.bf16.gmra.mxu0 %v7061
        %v7967 = vpop.f32.mrf.mxu0
        %v7968 = vadd.f32 %v7807, %v7967
        %v7969 = vpop.f32.mrf.mxu0
        %v7970 = vpop.f32.mrf.mxu0
        %v7971 = vadd.f32 %v7810, %v7970
        %v7972 = vpop.f32.mrf.mxu0
        %7973 = vmatprep.mubr.bf16.mxu0 %v7071
        %7974 = vmatmul.mubr.bf16.gmra.mxu0 %v7070
        %v7975 = vpop.f32.mrf.mxu0
        %v7976 = vadd.f32 %v7815, %v7975
        %v7977 = vpop.f32.mrf.mxu0
        %v7978 = vpop.f32.mrf.mxu0
        %v7979 = vadd.f32 %v7818, %v7978
        %v7980 = vpop.f32.mrf.mxu0
        %7981 = vmatprep.mubr.bf16.mxu0 %v7080
        %7982 = vmatmul.mubr.bf16.gmra.mxu0 %v7079
        %v7983 = vpop.f32.mrf.mxu0
        %v7984 = vadd.f32 %v7823, %v7983
        %v7985 = vpop.f32.mrf.mxu0
        %v7986 = vpop.f32.mrf.mxu0
        %v7987 = vadd.f32 %v7826, %v7986
        %v7988 = vpop.f32.mrf.mxu0
        %7989 = vmatprep.mubr.bf16.mxu0 %v7089
        %7990 = vmatmul.mubr.bf16.gmra.mxu0 %v7088
        %v7991 = vpop.f32.mrf.mxu0
        %v7992 = vadd.f32 %v7831, %v7991
        %v7993 = vpop.f32.mrf.mxu0
        %v7994 = vpop.f32.mrf.mxu0
        %v7995 = vadd.f32 %v7834, %v7994
        %v7996 = vpop.f32.mrf.mxu0
        %7997 = vmatprep.mubr.bf16.mxu0 %v7098
        %7998 = vmatmul.mubr.bf16.gmra.mxu0 %v7097
        %v7999 = vpop.f32.mrf.mxu0
        %v8000 = vadd.f32 %v7839, %v7999
        %v8001 = vpop.f32.mrf.mxu0
        %v8002 = vpop.f32.mrf.mxu0
        %v8003 = vadd.f32 %v7842, %v8002
        %v8004 = vpop.f32.mrf.mxu0
        %8005 = vmatprep.mubr.bf16.mxu0 %v7107
        %8006 = vmatmul.mubr.bf16.gmra.mxu0 %v7106
        %v8007 = vpop.f32.mrf.mxu0
        %v8008 = vadd.f32 %v7847, %v8007
        %v8009 = vpop.f32.mrf.mxu0
        %v8010 = vpop.f32.mrf.mxu0
        %v8011 = vadd.f32 %v7850, %v8010
        %v8012 = vpop.f32.mrf.mxu0
        %8013 = vmatprep.mubr.bf16.mxu0 %v7116
        %8014 = vmatmul.mubr.bf16.gmra.mxu0 %v7115
        %v8015 = vpop.f32.mrf.mxu0
        %v8016 = vadd.f32 %v7855, %v8015
        %v8017 = vpop.f32.mrf.mxu0
        %v8018 = vpop.f32.mrf.mxu0
        %v8019 = vadd.f32 %v7858, %v8018
        %v8020 = vpop.f32.mrf.mxu0
        %8021 = vmatprep.mubr.bf16.mxu0 %v7125
        %8022 = vmatmul.mubr.bf16.gmra.mxu0 %v7124
        %v8023 = vpop.f32.mrf.mxu0
        %v8024 = vadd.f32 %v7863, %v8023
        %v8025 = vpop.f32.mrf.mxu0
        %v8026 = vpop.f32.mrf.mxu0
        %v8027 = vadd.f32 %v7866, %v8026
        %v8028 = vpop.f32.mrf.mxu0
        %8029 = vmatprep.mubr.bf16.mxu0 %v7134
        %8030 = vmatmul.mubr.bf16.gmra.mxu0 %v7133
        %v8031 = vpop.f32.mrf.mxu0
        %v8032 = vadd.f32 %v7871, %v8031
        %v8033 = vpop.f32.mrf.mxu0
        %v8034 = vpop.f32.mrf.mxu0
        %v8035 = vadd.f32 %v7874, %v8034
        %v8036 = vpop.f32.mrf.mxu0
        %8037 = vdwg.mxu0
        %8038 = vmatprep.subr.bf16.mxu0 0
        %8039 = vmatpush1.bf16.msra.mxu0 %v7611
        %8040 = vmatprep.subr.bf16.mxu0 0
        %8041 = vmatpush1.bf16.msra.mxu0 %v7610
        %8042 = vmatprep.subr.bf16.mxu0 0
        %8043 = vmatpush1.bf16.msra.mxu0 %v7609
        %8044 = vmatprep.subr.bf16.mxu0 0
        %8045 = vmatpush1.bf16.msra.mxu0 %v7608
        %8046 = vmatprep.subr.bf16.mxu0 0
        %8047 = vmatpush1.bf16.msra.mxu0 %v7607
        %8048 = vmatprep.subr.bf16.mxu0 0
        %8049 = vmatpush1.bf16.msra.mxu0 %v7606
        %8050 = vmatprep.subr.bf16.mxu0 0
        %8051 = vmatpush1.bf16.msra.mxu0 %v7605
        %8052 = vmatprep.subr.bf16.mxu0 0
        %8053 = vmatpush1.bf16.msra.mxu0 %v7604
        %8054 = vmatprep.subr.bf16.mxu0 0
        %8055 = vmatpush2.bf16.msra.mxu0 %v7619
        %8056 = vmatprep.subr.bf16.mxu0 0
        %8057 = vmatpush2.bf16.msra.mxu0 %v7618
        %8058 = vmatprep.subr.bf16.mxu0 0
        %8059 = vmatpush2.bf16.msra.mxu0 %v7617
        %8060 = vmatprep.subr.bf16.mxu0 0
        %8061 = vmatpush2.bf16.msra.mxu0 %v7616
        %8062 = vmatprep.subr.bf16.mxu0 0
        %8063 = vmatpush2.bf16.msra.mxu0 %v7615
        %8064 = vmatprep.subr.bf16.mxu0 0
        %8065 = vmatpush2.bf16.msra.mxu0 %v7614
        %8066 = vmatprep.subr.bf16.mxu0 0
        %8067 = vmatpush2.bf16.msra.mxu0 %v7613
        %8068 = vmatprep.subr.bf16.mxu0 0
        %8069 = vmatpush2.bf16.msra.mxu0 %v7612
        %8070 = vmatprep.mubr.bf16.mxu0 %v7001
        %8071 = vmatmul.mubr.bf16.gmra.mxu0 %v7000
        %v8072 = vpop.f32.mrf.mxu0
        %v8073 = vadd.f32 %v7912, %v8072
        %v8074 = vpop.f32.mrf.mxu0
        %v8075 = vpop.f32.mrf.mxu0
        %v8076 = vadd.f32 %v7915, %v8075
        %v8077 = vpop.f32.mrf.mxu0
        %8078 = vmatprep.mubr.bf16.mxu0 %v7010
        %8079 = vmatmul.mubr.bf16.gmra.mxu0 %v7009
        %v8080 = vpop.f32.mrf.mxu0
        %v8081 = vadd.f32 %v7920, %v8080
        %v8082 = vpop.f32.mrf.mxu0
        %v8083 = vpop.f32.mrf.mxu0
        %v8084 = vadd.f32 %v7923, %v8083
        %v8085 = vpop.f32.mrf.mxu0
        %8086 = vmatprep.mubr.bf16.mxu0 %v7019
        %8087 = vmatmul.mubr.bf16.gmra.mxu0 %v7018
        %v8088 = vpop.f32.mrf.mxu0
        %v8089 = vadd.f32 %v7928, %v8088
        %v8090 = vpop.f32.mrf.mxu0
        %v8091 = vpop.f32.mrf.mxu0
        %v8092 = vadd.f32 %v7931, %v8091
        %v8093 = vpop.f32.mrf.mxu0
        %8094 = vmatprep.mubr.bf16.mxu0 %v7028
        %8095 = vmatmul.mubr.bf16.gmra.mxu0 %v7027
        %v8096 = vpop.f32.mrf.mxu0
        %v8097 = vadd.f32 %v7936, %v8096
        %v8098 = vpop.f32.mrf.mxu0
        %v8099 = vpop.f32.mrf.mxu0
        %v8100 = vadd.f32 %v7939, %v8099
        %v8101 = vpop.f32.mrf.mxu0
        %8102 = vmatprep.mubr.bf16.mxu0 %v7037
        %8103 = vmatmul.mubr.bf16.gmra.mxu0 %v7036
        %v8104 = vpop.f32.mrf.mxu0
        %v8105 = vadd.f32 %v7944, %v8104
        %v8106 = vpop.f32.mrf.mxu0
        %v8107 = vpop.f32.mrf.mxu0
        %v8108 = vadd.f32 %v7947, %v8107
        %v8109 = vpop.f32.mrf.mxu0
        %8110 = vmatprep.mubr.bf16.mxu0 %v7046
        %8111 = vmatmul.mubr.bf16.gmra.mxu0 %v7045
        %v8112 = vpop.f32.mrf.mxu0
        %v8113 = vadd.f32 %v7952, %v8112
        %v8114 = vpop.f32.mrf.mxu0
        %v8115 = vpop.f32.mrf.mxu0
        %v8116 = vadd.f32 %v7955, %v8115
        %v8117 = vpop.f32.mrf.mxu0
        %8118 = vmatprep.mubr.bf16.mxu0 %v7055
        %8119 = vmatmul.mubr.bf16.gmra.mxu0 %v7054
        %v8120 = vpop.f32.mrf.mxu0
        %v8121 = vadd.f32 %v7960, %v8120
        %v8122 = vpop.f32.mrf.mxu0
        %v8123 = vpop.f32.mrf.mxu0
        %v8124 = vadd.f32 %v7963, %v8123
        %v8125 = vpop.f32.mrf.mxu0
        %8126 = vmatprep.mubr.bf16.mxu0 %v7064
        %8127 = vmatmul.mubr.bf16.gmra.mxu0 %v7063
        %v8128 = vpop.f32.mrf.mxu0
        %v8129 = vadd.f32 %v7968, %v8128
        %v8130 = vpop.f32.mrf.mxu0
        %v8131 = vpop.f32.mrf.mxu0
        %v8132 = vadd.f32 %v7971, %v8131
        %v8133 = vpop.f32.mrf.mxu0
        %8134 = vmatprep.mubr.bf16.mxu0 %v7073
        %8135 = vmatmul.mubr.bf16.gmra.mxu0 %v7072
        %v8136 = vpop.f32.mrf.mxu0
        %v8137 = vadd.f32 %v7976, %v8136
        %v8138 = vpop.f32.mrf.mxu0
        %v8139 = vpop.f32.mrf.mxu0
        %v8140 = vadd.f32 %v7979, %v8139
        %v8141 = vpop.f32.mrf.mxu0
        %8142 = vmatprep.mubr.bf16.mxu0 %v7082
        %8143 = vmatmul.mubr.bf16.gmra.mxu0 %v7081
        %v8144 = vpop.f32.mrf.mxu0
        %v8145 = vadd.f32 %v7984, %v8144
        %v8146 = vpop.f32.mrf.mxu0
        %v8147 = vpop.f32.mrf.mxu0
        %v8148 = vadd.f32 %v7987, %v8147
        %v8149 = vpop.f32.mrf.mxu0
        %8150 = vmatprep.mubr.bf16.mxu0 %v7091
        %8151 = vmatmul.mubr.bf16.gmra.mxu0 %v7090
        %v8152 = vpop.f32.mrf.mxu0
        %v8153 = vadd.f32 %v7992, %v8152
        %v8154 = vpop.f32.mrf.mxu0
        %v8155 = vpop.f32.mrf.mxu0
        %v8156 = vadd.f32 %v7995, %v8155
        %v8157 = vpop.f32.mrf.mxu0
        %8158 = vmatprep.mubr.bf16.mxu0 %v7100
        %8159 = vmatmul.mubr.bf16.gmra.mxu0 %v7099
        %v8160 = vpop.f32.mrf.mxu0
        %v8161 = vadd.f32 %v8000, %v8160
        %v8162 = vpop.f32.mrf.mxu0
        %v8163 = vpop.f32.mrf.mxu0
        %v8164 = vadd.f32 %v8003, %v8163
        %v8165 = vpop.f32.mrf.mxu0
        %8166 = vmatprep.mubr.bf16.mxu0 %v7109
        %8167 = vmatmul.mubr.bf16.gmra.mxu0 %v7108
        %v8168 = vpop.f32.mrf.mxu0
        %v8169 = vadd.f32 %v8008, %v8168
        %v8170 = vpop.f32.mrf.mxu0
        %v8171 = vpop.f32.mrf.mxu0
        %v8172 = vadd.f32 %v8011, %v8171
        %v8173 = vpop.f32.mrf.mxu0
        %8174 = vmatprep.mubr.bf16.mxu0 %v7118
        %8175 = vmatmul.mubr.bf16.gmra.mxu0 %v7117
        %v8176 = vpop.f32.mrf.mxu0
        %v8177 = vadd.f32 %v8016, %v8176
        %v8178 = vpop.f32.mrf.mxu0
        %v8179 = vpop.f32.mrf.mxu0
        %v8180 = vadd.f32 %v8019, %v8179
        %v8181 = vpop.f32.mrf.mxu0
        %8182 = vmatprep.mubr.bf16.mxu0 %v7127
        %8183 = vmatmul.mubr.bf16.gmra.mxu0 %v7126
        %v8184 = vpop.f32.mrf.mxu0
        %v8185 = vadd.f32 %v8024, %v8184
        %v8186 = vpop.f32.mrf.mxu0
        %v8187 = vpop.f32.mrf.mxu0
        %v8188 = vadd.f32 %v8027, %v8187
        %v8189 = vpop.f32.mrf.mxu0
        %8190 = vmatprep.mubr.bf16.mxu0 %v7136
        %8191 = vmatmul.mubr.bf16.gmra.mxu0 %v7135
        %v8192 = vpop.f32.mrf.mxu0
        %v8193 = vadd.f32 %v8032, %v8192
        %v8194 = vpop.f32.mrf.mxu0
        %v8195 = vpop.f32.mrf.mxu0
        %v8196 = vadd.f32 %v8035, %v8195
        %v8197 = vpop.f32.mrf.mxu0
        %8198 = vdwg.mxu0
        %8199 = vmatprep.subr.bf16.mxu0 0
        %8200 = vmatpush1.bf16.msra.mxu0 %v7627
        %8201 = vmatprep.subr.bf16.mxu0 0
        %8202 = vmatpush1.bf16.msra.mxu0 %v7626
        %8203 = vmatprep.subr.bf16.mxu0 0
        %8204 = vmatpush1.bf16.msra.mxu0 %v7625
        %8205 = vmatprep.subr.bf16.mxu0 0
        %8206 = vmatpush1.bf16.msra.mxu0 %v7624
        %8207 = vmatprep.subr.bf16.mxu0 0
        %8208 = vmatpush1.bf16.msra.mxu0 %v7623
        %8209 = vmatprep.subr.bf16.mxu0 0
        %8210 = vmatpush1.bf16.msra.mxu0 %v7622
        %8211 = vmatprep.subr.bf16.mxu0 0
        %8212 = vmatpush1.bf16.msra.mxu0 %v7621
        %8213 = vmatprep.subr.bf16.mxu0 0
        %8214 = vmatpush1.bf16.msra.mxu0 %v7620
        %8215 = vmatprep.subr.bf16.mxu0 0
        %8216 = vmatpush2.bf16.msra.mxu0 %v7635
        %8217 = vmatprep.subr.bf16.mxu0 0
        %8218 = vmatpush2.bf16.msra.mxu0 %v7634
        %8219 = vmatprep.subr.bf16.mxu0 0
        %8220 = vmatpush2.bf16.msra.mxu0 %v7633
        %8221 = vmatprep.subr.bf16.mxu0 0
        %8222 = vmatpush2.bf16.msra.mxu0 %v7632
        %8223 = vmatprep.subr.bf16.mxu0 0
        %8224 = vmatpush2.bf16.msra.mxu0 %v7631
        %8225 = vmatprep.subr.bf16.mxu0 0
        %8226 = vmatpush2.bf16.msra.mxu0 %v7630
        %8227 = vmatprep.subr.bf16.mxu0 0
        %8228 = vmatpush2.bf16.msra.mxu0 %v7629
        %8229 = vmatprep.subr.bf16.mxu0 0
        %8230 = vmatpush2.bf16.msra.mxu0 %v7628
        %8231 = vmatprep.mubr.bf16.mxu0 %v7003
        %8232 = vmatmul.mubr.bf16.gmra.mxu0 %v7002
        %v8233 = vpop.f32.mrf.mxu0
        %v8234 = vadd.f32 %v8073, %v8233
        %v8235 = vpop.f32.mrf.mxu0
        %v8236 = vpop.f32.mrf.mxu0
        %v8237 = vadd.f32 %v8076, %v8236
        %v8238 = vpop.f32.mrf.mxu0
        %8239 = vmatprep.mubr.bf16.mxu0 %v7012
        %8240 = vmatmul.mubr.bf16.gmra.mxu0 %v7011
        %v8241 = vpop.f32.mrf.mxu0
        %v8242 = vadd.f32 %v8081, %v8241
        %v8243 = vpop.f32.mrf.mxu0
        %v8244 = vpop.f32.mrf.mxu0
        %v8245 = vadd.f32 %v8084, %v8244
        %v8246 = vpop.f32.mrf.mxu0
        %8247 = vmatprep.mubr.bf16.mxu0 %v7021
        %8248 = vmatmul.mubr.bf16.gmra.mxu0 %v7020
        %v8249 = vpop.f32.mrf.mxu0
        %v8250 = vadd.f32 %v8089, %v8249
        %v8251 = vpop.f32.mrf.mxu0
        %v8252 = vpop.f32.mrf.mxu0
        %v8253 = vadd.f32 %v8092, %v8252
        %v8254 = vpop.f32.mrf.mxu0
        %8255 = vmatprep.mubr.bf16.mxu0 %v7030
        %8256 = vmatmul.mubr.bf16.gmra.mxu0 %v7029
        %v8257 = vpop.f32.mrf.mxu0
        %v8258 = vadd.f32 %v8097, %v8257
        %v8259 = vpop.f32.mrf.mxu0
        %v8260 = vpop.f32.mrf.mxu0
        %v8261 = vadd.f32 %v8100, %v8260
        %v8262 = vpop.f32.mrf.mxu0
        %8263 = vmatprep.mubr.bf16.mxu0 %v7039
        %8264 = vmatmul.mubr.bf16.gmra.mxu0 %v7038
        %v8265 = vpop.f32.mrf.mxu0
        %v8266 = vadd.f32 %v8105, %v8265
        %v8267 = vpop.f32.mrf.mxu0
        %v8268 = vpop.f32.mrf.mxu0
        %v8269 = vadd.f32 %v8108, %v8268
        %v8270 = vpop.f32.mrf.mxu0
        %8271 = vmatprep.mubr.bf16.mxu0 %v7048
        %8272 = vmatmul.mubr.bf16.gmra.mxu0 %v7047
        %v8273 = vpop.f32.mrf.mxu0
        %v8274 = vadd.f32 %v8113, %v8273
        %v8275 = vpop.f32.mrf.mxu0
        %v8276 = vpop.f32.mrf.mxu0
        %v8277 = vadd.f32 %v8116, %v8276
        %v8278 = vpop.f32.mrf.mxu0
        %8279 = vmatprep.mubr.bf16.mxu0 %v7057
        %8280 = vmatmul.mubr.bf16.gmra.mxu0 %v7056
        %v8281 = vpop.f32.mrf.mxu0
        %v8282 = vadd.f32 %v8121, %v8281
        %v8283 = vpop.f32.mrf.mxu0
        %v8284 = vpop.f32.mrf.mxu0
        %v8285 = vadd.f32 %v8124, %v8284
        %v8286 = vpop.f32.mrf.mxu0
        %8287 = vmatprep.mubr.bf16.mxu0 %v7066
        %8288 = vmatmul.mubr.bf16.gmra.mxu0 %v7065
        %v8289 = vpop.f32.mrf.mxu0
        %v8290 = vadd.f32 %v8129, %v8289
        %v8291 = vpop.f32.mrf.mxu0
        %v8292 = vpop.f32.mrf.mxu0
        %v8293 = vadd.f32 %v8132, %v8292
        %v8294 = vpop.f32.mrf.mxu0
        %8295 = vmatprep.mubr.bf16.mxu0 %v7075
        %8296 = vmatmul.mubr.bf16.gmra.mxu0 %v7074
        %v8297 = vpop.f32.mrf.mxu0
        %v8298 = vadd.f32 %v8137, %v8297
        %v8299 = vpop.f32.mrf.mxu0
        %v8300 = vpop.f32.mrf.mxu0
        %v8301 = vadd.f32 %v8140, %v8300
        %v8302 = vpop.f32.mrf.mxu0
        %8303 = vmatprep.mubr.bf16.mxu0 %v7084
        %8304 = vmatmul.mubr.bf16.gmra.mxu0 %v7083
        %v8305 = vpop.f32.mrf.mxu0
        %v8306 = vadd.f32 %v8145, %v8305
        %v8307 = vpop.f32.mrf.mxu0
        %v8308 = vpop.f32.mrf.mxu0
        %v8309 = vadd.f32 %v8148, %v8308
        %v8310 = vpop.f32.mrf.mxu0
        %8311 = vmatprep.mubr.bf16.mxu0 %v7093
        %8312 = vmatmul.mubr.bf16.gmra.mxu0 %v7092
        %v8313 = vpop.f32.mrf.mxu0
        %v8314 = vadd.f32 %v8153, %v8313
        %v8315 = vpop.f32.mrf.mxu0
        %v8316 = vpop.f32.mrf.mxu0
        %v8317 = vadd.f32 %v8156, %v8316
        %v8318 = vpop.f32.mrf.mxu0
        %8319 = vmatprep.mubr.bf16.mxu0 %v7102
        %8320 = vmatmul.mubr.bf16.gmra.mxu0 %v7101
        %v8321 = vpop.f32.mrf.mxu0
        %v8322 = vadd.f32 %v8161, %v8321
        %v8323 = vpop.f32.mrf.mxu0
        %v8324 = vpop.f32.mrf.mxu0
        %v8325 = vadd.f32 %v8164, %v8324
        %v8326 = vpop.f32.mrf.mxu0
        %8327 = vmatprep.mubr.bf16.mxu0 %v7111
        %8328 = vmatmul.mubr.bf16.gmra.mxu0 %v7110
        %v8329 = vpop.f32.mrf.mxu0
        %v8330 = vadd.f32 %v8169, %v8329
        %v8331 = vpop.f32.mrf.mxu0
        %v8332 = vpop.f32.mrf.mxu0
        %v8333 = vadd.f32 %v8172, %v8332
        %v8334 = vpop.f32.mrf.mxu0
        %8335 = vmatprep.mubr.bf16.mxu0 %v7120
        %8336 = vmatmul.mubr.bf16.gmra.mxu0 %v7119
        %v8337 = vpop.f32.mrf.mxu0
        %v8338 = vadd.f32 %v8177, %v8337
        %v8339 = vpop.f32.mrf.mxu0
        %v8340 = vpop.f32.mrf.mxu0
        %v8341 = vadd.f32 %v8180, %v8340
        %v8342 = vpop.f32.mrf.mxu0
        %8343 = vmatprep.mubr.bf16.mxu0 %v7129
        %8344 = vmatmul.mubr.bf16.gmra.mxu0 %v7128
        %v8345 = vpop.f32.mrf.mxu0
        %v8346 = vadd.f32 %v8185, %v8345
        %v8347 = vpop.f32.mrf.mxu0
        %v8348 = vpop.f32.mrf.mxu0
        %v8349 = vadd.f32 %v8188, %v8348
        %v8350 = vpop.f32.mrf.mxu0
        %8351 = vmatprep.mubr.bf16.mxu0 %v7138
        %8352 = vmatmul.mubr.bf16.gmra.mxu0 %v7137
        %v8353 = vpop.f32.mrf.mxu0
        %v8354 = vadd.f32 %v8193, %v8353
        %v8355 = vpop.f32.mrf.mxu0
        %v8356 = vpop.f32.mrf.mxu0
        %v8357 = vadd.f32 %v8196, %v8356
        %v8358 = vpop.f32.mrf.mxu0
        %8359 = vdwg.mxu0
        %8360 = vmatprep.subr.bf16.mxu0 0
        %8361 = vmatpush1.bf16.msra.mxu0 %v7643
        %8362 = vmatprep.subr.bf16.mxu0 0
        %8363 = vmatpush1.bf16.msra.mxu0 %v7642
        %8364 = vmatprep.subr.bf16.mxu0 0
        %8365 = vmatpush1.bf16.msra.mxu0 %v7641
        %8366 = vmatprep.subr.bf16.mxu0 0
        %8367 = vmatpush1.bf16.msra.mxu0 %v7640
        %8368 = vmatprep.subr.bf16.mxu0 0
        %8369 = vmatpush1.bf16.msra.mxu0 %v7639
        %8370 = vmatprep.subr.bf16.mxu0 0
        %8371 = vmatpush1.bf16.msra.mxu0 %v7638
        %8372 = vmatprep.subr.bf16.mxu0 0
        %8373 = vmatpush1.bf16.msra.mxu0 %v7637
        %8374 = vmatprep.subr.bf16.mxu0 0
        %8375 = vmatpush1.bf16.msra.mxu0 %v7636
        %8376 = vmatprep.subr.bf16.mxu0 0
        %8377 = vmatpush2.bf16.msra.mxu0 0
        %8378 = vmatprep.subr.bf16.mxu0 0
        %8379 = vmatpush2.bf16.msra.mxu0 0
        %8380 = vmatprep.subr.bf16.mxu0 0
        %8381 = vmatpush2.bf16.msra.mxu0 0
        %8382 = vmatprep.subr.bf16.mxu0 0
        %8383 = vmatpush2.bf16.msra.mxu0 0
        %8384 = vmatprep.subr.bf16.mxu0 0
        %8385 = vmatpush2.bf16.msra.mxu0 0
        %8386 = vmatprep.subr.bf16.mxu0 0
        %8387 = vmatpush2.bf16.msra.mxu0 0
        %8388 = vmatprep.subr.bf16.mxu0 0
        %8389 = vmatpush2.bf16.msra.mxu0 0
        %8390 = vmatprep.subr.bf16.mxu0 0
        %8391 = vmatpush2.bf16.msra.mxu0 0
        %8392 = vmatprep.mubr.bf16.mxu0 0
        %8393 = vmatmul.mubr.bf16.gmra.mxu0 %v7004
        %v8394 = vpop.f32.mrf.mxu0
        %v8395 = vadd.f32 %v8234, %v8394
        %v8396 = vpop.f32.mrf.mxu0
        %v8397 = vpop.f32.mrf.mxu0
        %v8398 = vadd.f32 %v8237, %v8397
        %v8399 = vpop.f32.mrf.mxu0
        %8400 = vmatprep.mubr.bf16.mxu0 0
        %8401 = vmatmul.mubr.bf16.gmra.mxu0 %v7013
        %v8402 = vpop.f32.mrf.mxu0
        %v8403 = vadd.f32 %v8242, %v8402
        %v8404 = vpop.f32.mrf.mxu0
        %v8405 = vpop.f32.mrf.mxu0
        %v8406 = vadd.f32 %v8245, %v8405
        %v8407 = vpop.f32.mrf.mxu0
        %8408 = vmatprep.mubr.bf16.mxu0 0
        %8409 = vmatmul.mubr.bf16.gmra.mxu0 %v7022
        %v8410 = vpop.f32.mrf.mxu0
        %v8411 = vadd.f32 %v8250, %v8410
        %v8412 = vpop.f32.mrf.mxu0
        %v8413 = vpop.f32.mrf.mxu0
        %v8414 = vadd.f32 %v8253, %v8413
        %v8415 = vpop.f32.mrf.mxu0
        %8416 = vmatprep.mubr.bf16.mxu0 0
        %8417 = vmatmul.mubr.bf16.gmra.mxu0 %v7031
        %v8418 = vpop.f32.mrf.mxu0
        %v8419 = vadd.f32 %v8258, %v8418
        %v8420 = vpop.f32.mrf.mxu0
        %v8421 = vpop.f32.mrf.mxu0
        %v8422 = vadd.f32 %v8261, %v8421
        %v8423 = vpop.f32.mrf.mxu0
        %8424 = vmatprep.mubr.bf16.mxu0 0
        %8425 = vmatmul.mubr.bf16.gmra.mxu0 %v7040
        %v8426 = vpop.f32.mrf.mxu0
        %v8427 = vadd.f32 %v8266, %v8426
        %v8428 = vpop.f32.mrf.mxu0
        %v8429 = vpop.f32.mrf.mxu0
        %v8430 = vadd.f32 %v8269, %v8429
        %v8431 = vpop.f32.mrf.mxu0
        %8432 = vmatprep.mubr.bf16.mxu0 0
        %8433 = vmatmul.mubr.bf16.gmra.mxu0 %v7049
        %v8434 = vpop.f32.mrf.mxu0
        %v8435 = vadd.f32 %v8274, %v8434
        %v8436 = vpop.f32.mrf.mxu0
        %v8437 = vpop.f32.mrf.mxu0
        %v8438 = vadd.f32 %v8277, %v8437
        %v8439 = vpop.f32.mrf.mxu0
        %8440 = vmatprep.mubr.bf16.mxu0 0
        %8441 = vmatmul.mubr.bf16.gmra.mxu0 %v7058
        %v8442 = vpop.f32.mrf.mxu0
        %v8443 = vadd.f32 %v8282, %v8442
        %v8444 = vpop.f32.mrf.mxu0
        %v8445 = vpop.f32.mrf.mxu0
        %v8446 = vadd.f32 %v8285, %v8445
        %v8447 = vpop.f32.mrf.mxu0
        %8448 = vmatprep.mubr.bf16.mxu0 0
        %8449 = vmatmul.mubr.bf16.gmra.mxu0 %v7067
        %v8450 = vpop.f32.mrf.mxu0
        %v8451 = vadd.f32 %v8290, %v8450
        %v8452 = vpop.f32.mrf.mxu0
        %v8453 = vpop.f32.mrf.mxu0
        %v8454 = vadd.f32 %v8293, %v8453
        %v8455 = vpop.f32.mrf.mxu0
        %8456 = vmatprep.mubr.bf16.mxu0 0
        %8457 = vmatmul.mubr.bf16.gmra.mxu0 %v7076
        %v8458 = vpop.f32.mrf.mxu0
        %v8459 = vadd.f32 %v8298, %v8458
        %v8460 = vpop.f32.mrf.mxu0
        %v8461 = vpop.f32.mrf.mxu0
        %v8462 = vadd.f32 %v8301, %v8461
        %v8463 = vpop.f32.mrf.mxu0
        %8464 = vmatprep.mubr.bf16.mxu0 0
        %8465 = vmatmul.mubr.bf16.gmra.mxu0 %v7085
        %v8466 = vpop.f32.mrf.mxu0
        %v8467 = vadd.f32 %v8306, %v8466
        %v8468 = vpop.f32.mrf.mxu0
        %v8469 = vpop.f32.mrf.mxu0
        %v8470 = vadd.f32 %v8309, %v8469
        %v8471 = vpop.f32.mrf.mxu0
        %8472 = vmatprep.mubr.bf16.mxu0 0
        %8473 = vmatmul.mubr.bf16.gmra.mxu0 %v7094
        %v8474 = vpop.f32.mrf.mxu0
        %v8475 = vadd.f32 %v8314, %v8474
        %v8476 = vpop.f32.mrf.mxu0
        %v8477 = vpop.f32.mrf.mxu0
        %v8478 = vadd.f32 %v8317, %v8477
        %v8479 = vpop.f32.mrf.mxu0
        %8480 = vmatprep.mubr.bf16.mxu0 0
        %8481 = vmatmul.mubr.bf16.gmra.mxu0 %v7103
        %v8482 = vpop.f32.mrf.mxu0
        %v8483 = vadd.f32 %v8322, %v8482
        %v8484 = vpop.f32.mrf.mxu0
        %v8485 = vpop.f32.mrf.mxu0
        %v8486 = vadd.f32 %v8325, %v8485
        %v8487 = vpop.f32.mrf.mxu0
        %8488 = vmatprep.mubr.bf16.mxu0 0
        %8489 = vmatmul.mubr.bf16.gmra.mxu0 %v7112
        %v8490 = vpop.f32.mrf.mxu0
        %v8491 = vadd.f32 %v8330, %v8490
        %v8492 = vpop.f32.mrf.mxu0
        %v8493 = vpop.f32.mrf.mxu0
        %v8494 = vadd.f32 %v8333, %v8493
        %v8495 = vpop.f32.mrf.mxu0
        %8496 = vmatprep.mubr.bf16.mxu0 0
        %8497 = vmatmul.mubr.bf16.gmra.mxu0 %v7121
        %v8498 = vpop.f32.mrf.mxu0
        %v8499 = vadd.f32 %v8338, %v8498
        %v8500 = vpop.f32.mrf.mxu0
        %v8501 = vpop.f32.mrf.mxu0
        %v8502 = vadd.f32 %v8341, %v8501
        %v8503 = vpop.f32.mrf.mxu0
        %8504 = vmatprep.mubr.bf16.mxu0 0
        %8505 = vmatmul.mubr.bf16.gmra.mxu0 %v7130
        %v8506 = vpop.f32.mrf.mxu0
        %v8507 = vadd.f32 %v8346, %v8506
        %v8508 = vpop.f32.mrf.mxu0
        %v8509 = vpop.f32.mrf.mxu0
        %v8510 = vadd.f32 %v8349, %v8509
        %v8511 = vpop.f32.mrf.mxu0
        %8512 = vmatprep.mubr.bf16.mxu0 0
        %8513 = vmatmul.mubr.bf16.gmra.mxu0 %v7139
        %v8514 = vpop.f32.mrf.mxu0
        %v8515 = vadd.f32 %v8354, %v8514
        %v8516 = vpop.f32.mrf.mxu0
        %v8517 = vpop.f32.mrf.mxu0
        %v8518 = vadd.f32 %v8357, %v8517
        %v8519 = vpop.f32.mrf.mxu0
        %8520 = vdwg.mxu0
        %v8553 = vunpack.c.l.b16 %v6204
        %v8554 = vunpack.c.l.b16 %v6205
        %v8555 = vunpack.c.l.b16 %v6206
        %v8556 = vunpack.c.l.b16 %v6207
        %v8557 = vunpack.c.l.b16 %v6208
        %v8558 = vunpack.c.l.b16 %v6209
        %v8559 = vunpack.c.l.b16 %v6210
        %v8560 = vunpack.c.l.b16 %v6211
        %v8561 = vunpack.c.l.b16 %v6212
        %v8562 = vunpack.c.l.b16 %v6213
        %v8563 = vunpack.c.l.b16 %v6214
        %v8564 = vunpack.c.l.b16 %v6215
        %v8565 = vunpack.c.l.b16 %v6216
        %v8566 = vunpack.c.l.b16 %v6217
        %v8567 = vunpack.c.l.b16 %v6218
        %v8568 = vunpack.c.l.b16 %v6219
        %v8569 = vunpack.c.l.b16 %v6220
        %v8570 = vunpack.c.l.b16 %v6221
        %v8571 = vunpack.c.l.b16 %v6222
        %v8572 = vunpack.c.l.b16 %v6223
        %v8573 = vunpack.c.l.b16 %v6224
        %v8574 = vunpack.c.l.b16 %v6225
        %v8575 = vunpack.c.l.b16 %v6226
        %v8576 = vunpack.c.l.b16 %v6227
        %v8577 = vunpack.c.l.b16 %v6228
        %v8578 = vunpack.c.l.b16 %v6229
        %v8579 = vunpack.c.l.b16 %v6230
        %v8580 = vunpack.c.l.b16 %v6231
        %v8581 = vunpack.c.l.b16 %v6232
        %v8582 = vunpack.c.l.b16 %v6233
        %v8583 = vunpack.c.l.b16 %v6234
        %v8584 = vunpack.c.l.b16 %v6235
        %v8585 = vpack.c.b16 %v8554, %v8553
        %v8586 = vpack.c.b16 %v8556, %v8555
        %v8587 = vpack.c.b16 %v8558, %v8557
        %v8588 = vpack.c.b16 %v8560, %v8559
        %v8589 = vpack.c.b16 %v8562, %v8561
        %v8590 = vpack.c.b16 %v8564, %v8563
        %v8591 = vpack.c.b16 %v8566, %v8565
        %v8592 = vpack.c.b16 %v8568, %v8567
        %v8593 = vpack.c.b16 %v8570, %v8569
        %v8594 = vpack.c.b16 %v8572, %v8571
        %v8595 = vpack.c.b16 %v8574, %v8573
        %v8596 = vpack.c.b16 %v8576, %v8575
        %v8597 = vpack.c.b16 %v8578, %v8577
        %v8598 = vpack.c.b16 %v8580, %v8579
        %v8599 = vpack.c.b16 %v8582, %v8581
        %v8600 = vpack.c.b16 %v8584, %v8583
        %v8609 = vunpack.c.l.b16 %v6236
        %v8610 = vunpack.c.l.b16 %v6237
        %v8611 = vunpack.c.l.b16 %v6238
        %v8612 = vunpack.c.l.b16 %v6239
        %v8613 = vunpack.c.l.b16 %v6240
        %v8614 = vunpack.c.l.b16 %v6241
        %v8615 = vunpack.c.l.b16 %v6242
        %v8616 = vunpack.c.l.b16 %v6243
        %v8617 = vpack.c.b16 %v8610, %v8609
        %v8618 = vpack.c.b16 %v8612, %v8611
        %v8619 = vpack.c.b16 %v8614, %v8613
        %v8620 = vpack.c.b16 %v8616, %v8615
        %v8626 = vsel %vm3839, %v8585, 0
        %v8629 = vsel %vm3839, %v8586, 0
        %v8632 = vsel %vm3839, %v8587, 0
        %v8635 = vsel %vm3839, %v8588, 0
        %v8638 = vsel %vm3839, %v8589, 0
        %v8641 = vsel %vm3839, %v8590, 0
        %v8644 = vsel %vm3839, %v8591, 0
        %v8647 = vsel %vm3839, %v8592, 0
        %v8650 = vsel %vm3839, %v8593, 0
        %v8653 = vsel %vm3839, %v8594, 0
        %v8656 = vsel %vm3839, %v8595, 0
        %v8659 = vsel %vm3839, %v8596, 0
        %v8662 = vsel %vm3839, %v8597, 0
        %v8665 = vsel %vm3839, %v8598, 0
        %v8668 = vsel %vm3839, %v8599, 0
        %v8671 = vsel %vm3839, %v8600, 0
        %8673 = vmatprep.subr.bf16.mxu0 0
        %8674 = vmatpush1.bf16.msra.mxu0 0
        %8675 = vmatprep.subr.bf16.mxu0 0
        %8676 = vmatpush1.bf16.msra.mxu0 0
        %8677 = vmatprep.subr.bf16.mxu0 0
        %8678 = vmatpush1.bf16.msra.mxu0 0
        %8679 = vmatprep.subr.bf16.mxu0 0
        %8680 = vmatpush1.bf16.msra.mxu0 0
        %8681 = vmatprep.subr.bf16.mxu0 0
        %8682 = vmatpush1.bf16.msra.mxu0 %v8620
        %8683 = vmatprep.subr.bf16.mxu0 0
        %8684 = vmatpush1.bf16.msra.mxu0 %v8619
        %8685 = vmatprep.subr.bf16.mxu0 0
        %8686 = vmatpush1.bf16.msra.mxu0 %v8618
        %8687 = vmatprep.subr.bf16.mxu0 0
        %8688 = vmatpush1.bf16.msra.mxu0 %v8617
        %8689 = vmatprep.subr.bf16.mxu0 0
        %8690 = vmatpush2.bf16.msra.mxu0 0
        %8691 = vmatprep.subr.bf16.mxu0 0
        %8692 = vmatpush2.bf16.msra.mxu0 0
        %8693 = vmatprep.subr.bf16.mxu0 0
        %8694 = vmatpush2.bf16.msra.mxu0 0
        %8695 = vmatprep.subr.bf16.mxu0 0
        %8696 = vmatpush2.bf16.msra.mxu0 0
        %8697 = vmatprep.subr.bf16.mxu0 0
        %8698 = vmatpush2.bf16.msra.mxu0 0
        %8699 = vmatprep.subr.bf16.mxu0 0
        %8700 = vmatpush2.bf16.msra.mxu0 0
        %8701 = vmatprep.subr.bf16.mxu0 0
        %8702 = vmatpush2.bf16.msra.mxu0 0
        %8703 = vmatprep.subr.bf16.mxu0 0
        %8704 = vmatpush2.bf16.msra.mxu0 0
        %8705 = vmatprep.mubr.bf16.mxu0 0
        %8706 = vmatmul.mubr.bf16.gmra.mxu0 %v8626
        %v8707 = vpop.f32.mrf.mxu0
        %v8708 = vadd.f32 %v8395, %v8707
        %v8709 = vpop.f32.mrf.mxu0
        %v8710 = vpop.f32.mrf.mxu0
        %v8711 = vadd.f32 %v8398, %v8710
        %v8712 = vpop.f32.mrf.mxu0
        %8713 = vmatprep.mubr.bf16.mxu0 0
        %8714 = vmatmul.mubr.bf16.gmra.mxu0 %v8629
        %v8715 = vpop.f32.mrf.mxu0
        %v8716 = vadd.f32 %v8403, %v8715
        %v8717 = vpop.f32.mrf.mxu0
        %v8718 = vpop.f32.mrf.mxu0
        %v8719 = vadd.f32 %v8406, %v8718
        %v8720 = vpop.f32.mrf.mxu0
        %8721 = vmatprep.mubr.bf16.mxu0 0
        %8722 = vmatmul.mubr.bf16.gmra.mxu0 %v8632
        %v8723 = vpop.f32.mrf.mxu0
        %v8724 = vadd.f32 %v8411, %v8723
        %v8725 = vpop.f32.mrf.mxu0
        %v8726 = vpop.f32.mrf.mxu0
        %v8727 = vadd.f32 %v8414, %v8726
        %v8728 = vpop.f32.mrf.mxu0
        %8729 = vmatprep.mubr.bf16.mxu0 0
        %8730 = vmatmul.mubr.bf16.gmra.mxu0 %v8635
        %v8731 = vpop.f32.mrf.mxu0
        %v8732 = vadd.f32 %v8419, %v8731
        %v8733 = vpop.f32.mrf.mxu0
        %v8734 = vpop.f32.mrf.mxu0
        %v8735 = vadd.f32 %v8422, %v8734
        %v8736 = vpop.f32.mrf.mxu0
        %8737 = vmatprep.mubr.bf16.mxu0 0
        %8738 = vmatmul.mubr.bf16.gmra.mxu0 %v8638
        %v8739 = vpop.f32.mrf.mxu0
        %v8740 = vadd.f32 %v8427, %v8739
        %v8741 = vpop.f32.mrf.mxu0
        %v8742 = vpop.f32.mrf.mxu0
        %v8743 = vadd.f32 %v8430, %v8742
        %v8744 = vpop.f32.mrf.mxu0
        %8745 = vmatprep.mubr.bf16.mxu0 0
        %8746 = vmatmul.mubr.bf16.gmra.mxu0 %v8641
        %v8747 = vpop.f32.mrf.mxu0
        %v8748 = vadd.f32 %v8435, %v8747
        %v8749 = vpop.f32.mrf.mxu0
        %v8750 = vpop.f32.mrf.mxu0
        %v8751 = vadd.f32 %v8438, %v8750
        %v8752 = vpop.f32.mrf.mxu0
        %8753 = vmatprep.mubr.bf16.mxu0 0
        %8754 = vmatmul.mubr.bf16.gmra.mxu0 %v8644
        %v8755 = vpop.f32.mrf.mxu0
        %v8756 = vadd.f32 %v8443, %v8755
        %v8757 = vpop.f32.mrf.mxu0
        %v8758 = vpop.f32.mrf.mxu0
        %v8759 = vadd.f32 %v8446, %v8758
        %v8760 = vpop.f32.mrf.mxu0
        %8761 = vmatprep.mubr.bf16.mxu0 0
        %8762 = vmatmul.mubr.bf16.gmra.mxu0 %v8647
        %v8763 = vpop.f32.mrf.mxu0
        %v8764 = vadd.f32 %v8451, %v8763
        %v8765 = vpop.f32.mrf.mxu0
        %v8766 = vpop.f32.mrf.mxu0
        %v8767 = vadd.f32 %v8454, %v8766
        %v8768 = vpop.f32.mrf.mxu0
        %8769 = vmatprep.mubr.bf16.mxu0 0
        %8770 = vmatmul.mubr.bf16.gmra.mxu0 %v8650
        %v8771 = vpop.f32.mrf.mxu0
        %v8772 = vadd.f32 %v8459, %v8771
        %v8773 = vpop.f32.mrf.mxu0
        %v8774 = vpop.f32.mrf.mxu0
        %v8775 = vadd.f32 %v8462, %v8774
        %v8776 = vpop.f32.mrf.mxu0
        %8777 = vmatprep.mubr.bf16.mxu0 0
        %8778 = vmatmul.mubr.bf16.gmra.mxu0 %v8653
        %v8779 = vpop.f32.mrf.mxu0
        %v8780 = vadd.f32 %v8467, %v8779
        %v8781 = vpop.f32.mrf.mxu0
        %v8782 = vpop.f32.mrf.mxu0
        %v8783 = vadd.f32 %v8470, %v8782
        %v8784 = vpop.f32.mrf.mxu0
        %8785 = vmatprep.mubr.bf16.mxu0 0
        %8786 = vmatmul.mubr.bf16.gmra.mxu0 %v8656
        %v8787 = vpop.f32.mrf.mxu0
        %v8788 = vadd.f32 %v8475, %v8787
        %v8789 = vpop.f32.mrf.mxu0
        %v8790 = vpop.f32.mrf.mxu0
        %v8791 = vadd.f32 %v8478, %v8790
        %v8792 = vpop.f32.mrf.mxu0
        %8793 = vmatprep.mubr.bf16.mxu0 0
        %8794 = vmatmul.mubr.bf16.gmra.mxu0 %v8659
        %v8795 = vpop.f32.mrf.mxu0
        %v8796 = vadd.f32 %v8483, %v8795
        %v8797 = vpop.f32.mrf.mxu0
        %v8798 = vpop.f32.mrf.mxu0
        %v8799 = vadd.f32 %v8486, %v8798
        %v8800 = vpop.f32.mrf.mxu0
        %8801 = vmatprep.mubr.bf16.mxu0 0
        %8802 = vmatmul.mubr.bf16.gmra.mxu0 %v8662
        %v8803 = vpop.f32.mrf.mxu0
        %v8804 = vadd.f32 %v8491, %v8803
        %v8805 = vpop.f32.mrf.mxu0
        %v8806 = vpop.f32.mrf.mxu0
        %v8807 = vadd.f32 %v8494, %v8806
        %v8808 = vpop.f32.mrf.mxu0
        %8809 = vmatprep.mubr.bf16.mxu0 0
        %8810 = vmatmul.mubr.bf16.gmra.mxu0 %v8665
        %v8811 = vpop.f32.mrf.mxu0
        %v8812 = vadd.f32 %v8499, %v8811
        %v8813 = vpop.f32.mrf.mxu0
        %v8814 = vpop.f32.mrf.mxu0
        %v8815 = vadd.f32 %v8502, %v8814
        %v8816 = vpop.f32.mrf.mxu0
        %8817 = vmatprep.mubr.bf16.mxu0 0
        %8818 = vmatmul.mubr.bf16.gmra.mxu0 %v8668
        %v8819 = vpop.f32.mrf.mxu0
        %v8820 = vadd.f32 %v8507, %v8819
        %v8821 = vpop.f32.mrf.mxu0
        %v8822 = vpop.f32.mrf.mxu0
        %v8823 = vadd.f32 %v8510, %v8822
        %v8824 = vpop.f32.mrf.mxu0
        %8825 = vmatprep.mubr.bf16.mxu0 0
        %8826 = vmatmul.mubr.bf16.gmra.mxu0 %v8671
        %v8827 = vpop.f32.mrf.mxu0
        %v8828 = vadd.f32 %v8515, %v8827
        %v8829 = vpop.f32.mrf.mxu0
        %v8830 = vpop.f32.mrf.mxu0
        %v8831 = vadd.f32 %v8518, %v8830
        %v8832 = vpop.f32.mrf.mxu0
        %8833 = vdwg.mxu0
        %v8834 = vld [vmem:[%s4 + $0x1] sm:$0x1]
        %v8835 = vlaneseq
        %v8836 = vshrl.u32 %v8835, 7
        %v8837 = vsub.s32 0, %v8836
        %v8838 = vrot.slane %v8834, %v8837
        %v8839 = vadd.f32 %v8708, %v8838
        %v8840 = vadd.f32 %v8711, %v8838
        %v8841 = vadd.f32 %v8716, %v8838
        %v8842 = vadd.f32 %v8719, %v8838
        %v8843 = vadd.f32 %v8724, %v8838
        %v8844 = vadd.f32 %v8727, %v8838
        %v8845 = vadd.f32 %v8732, %v8838
        %v8846 = vadd.f32 %v8735, %v8838
        %v8847 = vadd.f32 %v8740, %v8838
        %v8848 = vadd.f32 %v8743, %v8838
        %v8849 = vadd.f32 %v8748, %v8838
        %v8850 = vadd.f32 %v8751, %v8838
        %v8851 = vadd.f32 %v8756, %v8838
        %v8852 = vadd.f32 %v8759, %v8838
        %v8853 = vadd.f32 %v8764, %v8838
        %v8854 = vadd.f32 %v8767, %v8838
        %v8855 = vadd.f32 %v8772, %v8838
        %v8856 = vadd.f32 %v8775, %v8838
        %v8857 = vadd.f32 %v8780, %v8838
        %v8858 = vadd.f32 %v8783, %v8838
        %v8859 = vadd.f32 %v8788, %v8838
        %v8860 = vadd.f32 %v8791, %v8838
        %v8861 = vadd.f32 %v8796, %v8838
        %v8862 = vadd.f32 %v8799, %v8838
        %v8863 = vadd.f32 %v8804, %v8838
        %v8864 = vadd.f32 %v8807, %v8838
        %v8865 = vadd.f32 %v8812, %v8838
        %v8866 = vadd.f32 %v8815, %v8838
        %v8867 = vadd.f32 %v8820, %v8838
        %v8868 = vadd.f32 %v8823, %v8838
        %v8869 = vadd.f32 %v8828, %v8838
        %v8870 = vadd.f32 %v8831, %v8838
        %v8871 = vmax.f32 %v8839, 0.0
        %v8872 = vmax.f32 %v8840, 0.0
        %v8873 = vmax.f32 %v8841, 0.0
        %v8874 = vmax.f32 %v8842, 0.0
        %v8875 = vmax.f32 %v8843, 0.0
        %v8876 = vmax.f32 %v8844, 0.0
        %v8877 = vmax.f32 %v8845, 0.0
        %v8878 = vmax.f32 %v8846, 0.0
        %v8879 = vmax.f32 %v8847, 0.0
        %v8880 = vmax.f32 %v8848, 0.0
        %v8881 = vmax.f32 %v8849, 0.0
        %v8882 = vmax.f32 %v8850, 0.0
        %v8883 = vmax.f32 %v8851, 0.0
        %v8884 = vmax.f32 %v8852, 0.0
        %v8885 = vmax.f32 %v8853, 0.0
        %v8886 = vmax.f32 %v8854, 0.0
        %v8887 = vmax.f32 %v8855, 0.0
        %v8888 = vmax.f32 %v8856, 0.0
        %v8889 = vmax.f32 %v8857, 0.0
        %v8890 = vmax.f32 %v8858, 0.0
        %v8891 = vmax.f32 %v8859, 0.0
        %v8892 = vmax.f32 %v8860, 0.0
        %v8893 = vmax.f32 %v8861, 0.0
        %v8894 = vmax.f32 %v8862, 0.0
        %v8895 = vmax.f32 %v8863, 0.0
        %v8896 = vmax.f32 %v8864, 0.0
        %v8897 = vmax.f32 %v8865, 0.0
        %v8898 = vmax.f32 %v8866, 0.0
        %v8899 = vmax.f32 %v8867, 0.0
        %v8900 = vmax.f32 %v8868, 0.0
        %v8901 = vmax.f32 %v8869, 0.0
        %v8902 = vmax.f32 %v8870, 0.0
        %8903 = vst [vmem:[%s217] sm:$0xff] %v8871
        %8904 = vst [vmem:[%s217 + $0x8] sm:$0xff] %v8872
        %8905 = vst [vmem:[%s217 + $0x10] sm:$0xff] %v8873
        %8906 = vst [vmem:[%s217 + $0x18] sm:$0xff] %v8874
        %8907 = vst [vmem:[%s217 + $0x20] sm:$0xff] %v8875
        %8908 = vst [vmem:[%s217 + $0x28] sm:$0xff] %v8876
        %8909 = vst [vmem:[%s217 + $0x30] sm:$0xff] %v8877
        %8910 = vst [vmem:[%s217 + $0x38] sm:$0xff] %v8878
        %8911 = vst [vmem:[%s217 + $0x40] sm:$0xff] %v8879
        %8912 = vst [vmem:[%s217 + $0x48] sm:$0xff] %v8880
        %8913 = vst [vmem:[%s217 + $0x50] sm:$0xff] %v8881
        %8914 = vst [vmem:[%s217 + $0x58] sm:$0xff] %v8882
        %8915 = vst [vmem:[%s217 + $0x60] sm:$0xff] %v8883
        %8916 = vst [vmem:[%s217 + $0x68] sm:$0xff] %v8884
        %8917 = vst [vmem:[%s217 + $0x70] sm:$0xff] %v8885
        %8918 = vst [vmem:[%s217 + $0x78] sm:$0xff] %v8886
        %8919 = vst [vmem:[%s217 + $0x80] sm:$0xff] %v8887
        %8920 = vst [vmem:[%s217 + $0x88] sm:$0xff] %v8888
        %8921 = vst [vmem:[%s217 + $0x90] sm:$0xff] %v8889
        %8922 = vst [vmem:[%s217 + $0x98] sm:$0xff] %v8890
        %8923 = vst [vmem:[%s217 + $0xa0] sm:$0xff] %v8891
        %8924 = vst [vmem:[%s217 + $0xa8] sm:$0xff] %v8892
        %8925 = vst [vmem:[%s217 + $0xb0] sm:$0xff] %v8893
        %8926 = vst [vmem:[%s217 + $0xb8] sm:$0xff] %v8894
        %8927 = vst [vmem:[%s217 + $0xc0] sm:$0xff] %v8895
        %8928 = vst [vmem:[%s217 + $0xc8] sm:$0xff] %v8896
        %8929 = vst [vmem:[%s217 + $0xd0] sm:$0xff] %v8897
        %8930 = vst [vmem:[%s217 + $0xd8] sm:$0xff] %v8898
        %8931 = vst [vmem:[%s217 + $0xe0] sm:$0xff] %v8899
        %8932 = vst [vmem:[%s217 + $0xe8] sm:$0xff] %v8900
        %8933 = vst [vmem:[%s217 + $0xf0] sm:$0xff] %v8901
        %8934 = vst [vmem:[%s217 + $0xf8] sm:$0xff] %v8902
        %s8935 = sand.u32 %s137, 1
        %s8936 = scalar_lea.sflag [#allocation6], %s8935
        %s8937 = sand.u32 %s137, 1
        %s8938 = smul.addr %s8937, 256
        %s8939 = scalar_lea.vmem [#allocation5], %s8938
        // Predicated region
        $region41: #{residual_block_forward.1} parent=39 // pred_check
          %p8940 = pneg %p147
        $region42: #{residual_block_forward.1} parent=39 // pred_check_branch
          %8942 = sbr.rel (%p8940) target = $region44
        $region43: #{residual_block_forward.1} parent=39 // pred_region
          %s8944 = ssub.s32 4096, 4096
          %8945 = vsyncadd %s8936, %s8944
          %s8946 = smul.addr %s19, 32
          %s8947 = smul.addr %s8946, 128
          %s8948 = scalar_lea.hbm %s5, %s8947
          %s8949 = sshll.u32 %s8939, 4
          %s8950 = int_to_ptr.vmem [resolvable:$true] %s8949
          %8955 = dma.vmem_to_hbm [thread:$0]  %s8950, 4096, %s8948, %s8936, 128, 128, 8
        $region44: #{residual_block_forward.1} parent=39 // pred_fallthru
          _
      $region40: #{residual_block_forward.1} parent=5 // pred_fallthru
        _
      %p8956 = scmp.le.s32.totalorder 2, %s14
      // Predicated region
      $region45: #{residual_block_forward.1} parent=5 // pred_check
        %p8957 = pneg %p8956
      $region46: #{residual_block_forward.1} parent=5 // pred_check_branch
        %8959 = sbr.rel (%p8957) target = $region48
      $region47: #{residual_block_forward.1} parent=5 // pred_region
        %s8960 = ssub.s32 %s14, 2
        // Predicated region
        $region49: #{residual_block_forward.1} parent=47 // pred_check
          %p8961 = pneg %p153
        $region50: #{residual_block_forward.1} parent=47 // pred_check_branch
          %8963 = sbr.rel (%p8961) target = $region52
        $region51: #{residual_block_forward.1} parent=47 // pred_region
          %s8964 = sand.u32 %s138, 1
          %s8965 = scalar_lea.sflag [#allocation6], %s8964
          %s8966 = sand.u32 %s138, 1
          %s8967 = smul.addr %s8966, 256
          %s8968 = scalar_lea.vmem [#allocation5], %s8967
          %8969 = dma.done %s8965, 4096
        $region52: #{residual_block_forward.1} parent=47 // pred_fallthru
          _
      $region48: #{residual_block_forward.1} parent=5 // pred_fallthru
        _
    $region6: #{residual_block_forward.1} parent=1 // loop_footer
      %s18 = sadd.s32 1, %s14
    $region7: #{residual_block_forward.1} parent=1 // loop_footer_branch
      %13 = sbr.rel target = $region3
    $region8: #{residual_block_forward.1} parent=1 // loop_exit
      _
    %8970 = vsyncpa [#allocation6], 1
    %s8971 = scalar_lea.sflag [#allocation6], 1
    %8972 = vsyncpa %s8971, 1

</llo_original>
